<compile_context>
chip_gen: v5e
topology: v5e:2x2
jax: 0.10.0
libtpu: 0.0.40
codegen_flags: <defaults>
</compile_context>

<pallas_src>
import functools

import numpy as np
import jax
import jax.numpy as jnp
from jax import lax
from jax.experimental import pallas as pl
from jax.experimental.pallas import tpu as pltpu

# DQN conv architecture (dqn_cnn): Conv(k=8,s=4,32) -> Conv(k=4,s=2,64) -> Conv(k=4,s=2,64)
ARCH_KERNELS = (8, 4, 4)
ARCH_STRIDES = (4, 2, 2)
ARCH_CHANNELS = (32, 64, 64)
FC_WIDTH = 512
MM_DTYPE = jnp.bfloat16        # MXU input dtype; accumulation stays float32


def _conv_out(n, k, s):
    return (n - k) // s + 1


# ------------------------------ phase-major row bookkeeping ---------------------------------
def _phase_order(n_rows, stride):
    """Row order grouped by (row % stride): all rows of phase 0, then phase 1, ..."""
    return [h for p in range(stride) for h in range(p, n_rows, stride)]


def _phase_pos(n_rows, stride):
    """pos[h] = position of row h in phase-major order."""
    pos = [0] * n_rows
    for j, h in enumerate(_phase_order(n_rows, stride)):
        pos[h] = j
    return pos


def _tap_starts(h_in, k, s):
    """Start position (in phase-major row units) of the contiguous slab used by tap kh.

    With the input rows stored phase-major w.r.t. stride s, the rows needed by tap kh
    (kh, kh+s, kh+2s, ...) are OH consecutive rows starting at sizes[:p].sum() + kh//s.
    """
    sizes = [(h_in - p + s - 1) // s for p in range(s)]
    starts = []
    for kh in range(k):
        p, q = kh % s, kh // s
        starts.append(int(sum(sizes[:p]) + q))
    return starts


# --------------------------------------------------------------------------------------------
# Fused Pallas kernel: entire DQN forward for one batch tile, everything VMEM resident
# --------------------------------------------------------------------------------------------
def dqn_fused_kernel(obs_ref, t1_ref, b1_ref, t2_ref, b2_ref, t3_ref, b3_ref,
                     fcw_ref, fcb_ref, hw_ref, hb_ref, out_ref,
                     xs_ref, a1_ref, a2_ref, *, geom, mm_dtype):
    """Whole DQN forward for one batch tile.

    obs_ref : (H, TB, W*C) int8  raw uint8 bytes, rows pre-permuted (in the wrapper) into
                                 phase-major order for conv1's stride.
    t*_ref  : (K, row_in, OW*Cout) bf16  per-tap Toeplitz weights (1/255 folded into t1).
    b*_ref  : (1, OW*Cout) f32           biases tiled over OW.
    fcw/fcb : (fc_in, 512) bf16 / (1, 512) f32.
    hw/hb   : fused pi|value head, lane-padded to a multiple of 128.
    out_ref : (TB, n_pad) f32   cols [:num_outputs] = logits, col [num_outputs] = value.
    xs/a1/a2: (rows*TB, row_w) bf16 VMEM scratch; row order is phase-major w.r.t. the
              stride of the layer that consumes it.
    """
    (oh1, oh2, oh3), (starts1, starts2, starts3), (pos1, pos2) = geom
    tb = out_ref.shape[0]
    h_rows = obs_ref.shape[0]

    # --- uint8 bytes -> bf16 rows (the /255 is folded into t1; only the signed fix-up here)
    for h in range(h_rows):
        row = obs_ref[h].astype(jnp.float32)                    # (TB, W*C)
        row = jnp.where(row < 0.0, row + 256.0, row)            # undo int8 reinterpretation
        xs_ref[pl.ds(h * tb, tb)] = row.astype(mm_dtype)

    def conv_layer(x_ref, t_ref, b_ref, tap_starts, oh):
        # acc = sum_kh  x[rows of tap kh] @ T_kh ; each tap's rows are one contiguous slab,
        # so every conv weight is streamed through the MXU exactly once per layer.
        acc = None
        for kh, st in enumerate(tap_starts):
            lhs = x_ref[pl.ds(st * tb, oh * tb)]                 # (oh*TB, row_in) bf16
            part = jnp.dot(lhs, t_ref[kh], preferred_element_type=jnp.float32)
            acc = part if acc is None else acc + part
        return jnp.maximum(acc + b_ref[...], 0.0)                # bias hoisted out of tap loop

    def store_rows(dst_ref, acc, oh, pos):
        # write output rows into the phase-major order expected by the next layer
        for oi in range(oh):
            dst_ref[pl.ds(pos[oi] * tb, tb)] = (
                acc[oi * tb:(oi + 1) * tb].astype(dst_ref.dtype))

    a1 = conv_layer(xs_ref, t1_ref, b1_ref, starts1, oh1)        # (oh1*TB, OW1*C1) f32
    store_rows(a1_ref, a1, oh1, pos1)
    a2 = conv_layer(a1_ref, t2_ref, b2_ref, starts2, oh2)        # (oh2*TB, OW2*C2) f32
    store_rows(a2_ref, a2, oh2, pos2)
    x3 = conv_layer(a2_ref, t3_ref, b3_ref, starts3, oh3)        # (oh3*TB, OW3*C3) f32

    # flatten conv3 output to (TB, oh3*OW3*C3); oh3 == 1 for DQN-sized observations.
    if oh3 == 1:
        feat = x3
    else:
        feat = jnp.concatenate([x3[oi * tb:(oi + 1) * tb] for oi in range(oh3)], axis=-1)

    # fc = Sequential(ReLU, Linear, ReLU): leading ReLU is a no-op on ReLU'd input -> dropped.
    h = jnp.dot(feat.astype(mm_dtype), fcw_ref[...], preferred_element_type=jnp.float32)
    h = jnp.maximum(h + fcb_ref[...], 0.0)

    # fused pi / value heads, one lane-dense (128-padded) store
    out = jnp.dot(h.astype(mm_dtype), hw_ref[...], preferred_element_type=jnp.float32)
    out_ref[...] = out + hb_ref[...]


# --------------------------------------------------------------------------------------------
# Parameter init (xavier_uniform weights, bias = 0.01, as in the PyTorch code)
# --------------------------------------------------------------------------------------------
def _xavier_uniform(key, shape, fan_in, fan_out):
    bound = float(np.sqrt(6.0 / (fan_in + fan_out)))
    return jax.random.uniform(key, shape, jnp.float32, -bound, bound)


def init_params(key, obs_shape, num_outputs):
    H, W, C = obs_shape
    oh, ow = H, W
    for k, s in zip(ARCH_KERNELS, ARCH_STRIDES):
        oh, ow = _conv_out(oh, k, s), _conv_out(ow, k, s)
    fc_in = oh * ow * ARCH_CHANNELS[-1]                  # int(np.prod(out_shp))

    ks = jax.random.split(key, 6)
    p = {}
    cin = C
    for i, (k, s, cout) in enumerate(zip(ARCH_KERNELS, ARCH_STRIDES, ARCH_CHANNELS)):
        p[f"w{i + 1}"] = _xavier_uniform(ks[i], (k, k, cin, cout),
                                         cin * k * k, cout * k * k)         # HWIO
        p[f"b{i + 1}"] = jnp.full((cout,), 0.01, jnp.float32)
        cin = cout
    p["fc_w"] = _xavier_uniform(ks[3], (fc_in, FC_WIDTH), fc_in, FC_WIDTH)
    p["fc_b"] = jnp.full((FC_WIDTH,), 0.01, jnp.float32)
    p["pi_w"] = _xavier_uniform(ks[4], (FC_WIDTH, num_outputs), FC_WIDTH, num_outputs)
    p["pi_b"] = jnp.full((num_outputs,), 0.01, jnp.float32)
    p["v_w"] = _xavier_uniform(ks[5], (FC_WIDTH, 1), FC_WIDTH, 1)
    p["v_b"] = jnp.full((1,), 0.01, jnp.float32)
    return p


# --------------------------------------------------------------------------------------------
# One-time param packing for the fused kernel: per-tap Toeplitz conv weights (with 1/255
# folded into layer 1), tiled biases, bf16 matmul weights, fused + lane-padded head.
# --------------------------------------------------------------------------------------------
def _tap_toeplitz(w_hwio, w_in, stride):
    """T[kh] maps one full input row (W_in*Cin lanes) to one full output row (OW*Cout lanes);
    summing over kh reproduces the 2-D VALID convolution."""
    khs, kws, cin, cout = w_hwio.shape
    ow = _conv_out(w_in, kws, stride)
    w = np.asarray(w_hwio, np.float32)
    t = np.zeros((khs, w_in * cin, ow * cout), np.float32)
    for kh in range(khs):
        blk = w[kh].reshape(kws * cin, cout)
        for oj in range(ow):
            r0 = stride * oj * cin
            t[kh, r0:r0 + kws * cin, oj * cout:(oj + 1) * cout] = blk
    return t


def prepare_params(params, obs_shape, num_outputs, mm_dtype=MM_DTYPE):
    H, W, C = obs_shape
    kp = {}
    w_in = W
    for i, (k, s, cout) in enumerate(zip(ARCH_KERNELS, ARCH_STRIDES, ARCH_CHANNELS)):
        ow = _conv_out(w_in, k, s)
        t = _tap_toeplitz(params[f"w{i + 1}"], w_in, s)
        if i == 0:
            t = t * (1.0 / 255.0)                         # fold obs normalization into conv1
        kp[f"t{i + 1}"] = jnp.asarray(t, mm_dtype)
        kp[f"b{i + 1}"] = jnp.tile(params[f"b{i + 1}"], ow).reshape(1, ow * cout)
        w_in = ow
    kp["fc_w"] = params["fc_w"].astype(mm_dtype)
    kp["fc_b"] = params["fc_b"].reshape(1, -1)

    n_head = num_outputs + 1
    n_pad = ((n_head + 127) // 128) * 128                 # lane-dense output width
    hw = jnp.zeros((FC_WIDTH, n_pad), jnp.float32)
    hw = hw.at[:, :num_outputs].set(params["pi_w"])
    hw = hw.at[:, num_outputs:n_head].set(params["v_w"])
    hb = jnp.zeros((n_pad,), jnp.float32)
    hb = hb.at[:num_outputs].set(params["pi_b"])
    hb = hb.at[num_outputs:n_head].set(params["v_b"])
    kp["head_w"] = hw.astype(mm_dtype)
    kp["head_b"] = hb.reshape(1, -1)
    return kp


# --------------------------------------------------------------------------------------------
# Forward pass: obs (uint8, NHWC) -> (logits, value), a single pallas_call with a batch grid
# --------------------------------------------------------------------------------------------
def _pick_batch_tile(batch, batch_tile):
    # largest divisor of batch <= batch_tile that is either the full batch or sublane-aligned
    for d in range(min(batch, batch_tile), 0, -1):
        if batch % d == 0 and (d == batch or d % 8 == 0):
            return d
    return batch


def dqn_forward(obs, kp, num_outputs, *, batch_tile=64):
    B, H, W, C = obs.shape
    (k1, k2, k3), (s1, s2, s3) = ARCH_KERNELS, ARCH_STRIDES
    c1, c2, c3 = ARCH_CHANNELS
    oh1, ow1 = _conv_out(H, k1, s1), _conv_out(W, k1, s1)
    oh2, ow2 = _conv_out(oh1, k2, s2), _conv_out(ow1, k2, s2)
    oh3, ow3 = _conv_out(oh2, k3, s3), _conv_out(ow2, k3, s3)
    n_pad = kp["head_b"].shape[1]

    tb = _pick_batch_tile(B, batch_tile)
    grid = (B // tb,)

    # Raw bytes into the kernel (fix-up happens in-kernel; /255 folded into t1); rows leading
    # and pre-permuted into phase-major order for conv1's stride so every tap slab is
    # contiguous inside the kernel.
    x = lax.bitcast_convert_type(obs, jnp.int8)
    x = jnp.transpose(x, (1, 0, 2, 3)).reshape(H, B, W * C)
    x = jnp.take(x, jnp.asarray(_phase_order(H, s1), dtype=jnp.int32), axis=0)

    geom = ((oh1, oh2, oh3),
            (tuple(_tap_starts(H, k1, s1)),
             tuple(_tap_starts(oh1, k2, s2)),
             tuple(_tap_starts(oh2, k3, s3))),
            (tuple(_phase_pos(oh1, s2)), tuple(_phase_pos(oh2, s3))))

    kernel = functools.partial(dqn_fused_kernel, geom=geom, mm_dtype=MM_DTYPE)

    weight_args = (kp["t1"], kp["b1"], kp["t2"], kp["b2"], kp["t3"], kp["b3"],
                   kp["fc_w"], kp["fc_b"], kp["head_w"], kp["head_b"])

    def const_spec(a):
        # weights: single full block, constant index_map -> DMA'd once, VMEM-resident
        nd = a.ndim
        return pl.BlockSpec(a.shape, lambda i, _nd=nd: (0,) * _nd)

    in_specs = ([pl.BlockSpec((H, tb, W * C), lambda i: (0, i, 0))] +
                [const_spec(a) for a in weight_args])
    out_specs = pl.BlockSpec((tb, n_pad), lambda i: (i, 0))

    macs = (oh1 * ow1 * c1 * k1 * k1 * C + oh2 * ow2 * c2 * k2 * k2 * c1 +
            oh3 * ow3 * c3 * k3 * k3 * c2 + oh3 * ow3 * c3 * FC_WIDTH + FC_WIDTH * n_pad)
    weight_bytes = sum(int(np.prod(a.shape)) * a.dtype.itemsize for a in weight_args)
    cost = pl.CostEstimate(flops=2 * B * macs, transcendentals=0,
                           bytes_accessed=int(obs.size) + weight_bytes + B * n_pad * 4)

    out = pl.pallas_call(
        kernel,
        out_shape=jax.ShapeDtypeStruct((B, n_pad), jnp.float32),
        grid=grid,
        in_specs=in_specs,
        out_specs=out_specs,
        scratch_shapes=[
            pltpu.VMEM((H * tb, W * C), MM_DTYPE),        # normalized obs rows (phase-major)
            pltpu.VMEM((oh1 * tb, ow1 * c1), MM_DTYPE),   # conv1 rows (phase-major for s2)
            pltpu.VMEM((oh2 * tb, ow2 * c2), MM_DTYPE),   # conv2 rows (phase-major for s3)
        ],
        compiler_params=pltpu.CompilerParams(dimension_semantics=("parallel",)),
        cost_estimate=cost,
    )(x, *weight_args)

    logits = out[:, :num_outputs]
    value = out[:, num_outputs]                           # v_layer(...).squeeze(1)
    return logits, value


# --------------------------------------------------------------------------------------------
# Pure-JAX float32 reference of the PyTorch forward (for a loose sanity check)
# --------------------------------------------------------------------------------------------
def dqn_reference(obs, params):
    x = obs.astype(jnp.float32) / 255.0
    for i, s in enumerate(ARCH_STRIDES):
        x = lax.conv_general_dilated(
            x, params[f"w{i + 1}"], window_strides=(s, s), padding="VALID",
            dimension_numbers=("NHWC", "HWIO", "NHWC"))
        x = jnp.maximum(x + params[f"b{i + 1}"], 0.0)
    x = x.reshape(x.shape[0], -1)
    h = jnp.maximum(x @ params["fc_w"] + params["fc_b"], 0.0)
    logits = h @ params["pi_w"] + params["pi_b"]
    value = (h @ params["v_w"] + params["v_b"])[:, 0]
    return logits, value


if __name__ == "__main__":
    # 52x52x4 obs -> conv1 12x12x32 -> conv2 5x5x64 -> conv3 1x1x64 -> fc 512 -> (pi, v)
    batch, H, W, C = 2, 52, 52, 4
    num_outputs = 6

    key = jax.random.PRNGKey(0)
    k_obs, k_params = jax.random.split(key)
    obs = jax.random.randint(k_obs, (batch, H, W, C), 0, 256, dtype=jnp.int32).astype(jnp.uint8)

    params = init_params(k_params, (H, W, C), num_outputs)
    kparams = prepare_params(params, (H, W, C), num_outputs)

    fwd = jax.jit(functools.partial(dqn_forward, num_outputs=num_outputs))
    logits, value = fwd(obs, kparams)
    jax.block_until_ready((logits, value))

    assert logits.shape == (batch, num_outputs)
    assert value.shape == (batch,)

    # sanity-check vs. the float32 reference (bf16 MXU inputs => loose tolerance)
    ref_logits, ref_value = jax.jit(dqn_reference)(obs, params)
    np.testing.assert_allclose(np.asarray(logits), np.asarray(ref_logits), rtol=2e-2, atol=2e-2)
    np.testing.assert_allclose(np.asarray(value), np.asarray(ref_value), rtol=2e-2, atol=2e-2)

    print("KERNEL_OK")
</pallas_src>

<mosaic_0001>
module attributes {stable_mosaic.version = 11 : i64} {
  func.func @dqn_fused_kernel(%arg0: i32, %arg1: memref<52x2x208xi8, #tpu.memory_space<vmem>>, %arg2: memref<8x208x384xbf16, #tpu.memory_space<vmem>>, %arg3: memref<1x384xf32, #tpu.memory_space<vmem>>, %arg4: memref<4x384x320xbf16, #tpu.memory_space<vmem>>, %arg5: memref<1x320xf32, #tpu.memory_space<vmem>>, %arg6: memref<4x320x64xbf16, #tpu.memory_space<vmem>>, %arg7: memref<1x64xf32, #tpu.memory_space<vmem>>, %arg8: memref<64x512xbf16, #tpu.memory_space<vmem>>, %arg9: memref<1x512xf32, #tpu.memory_space<vmem>>, %arg10: memref<512x128xbf16, #tpu.memory_space<vmem>>, %arg11: memref<1x128xf32, #tpu.memory_space<vmem>>, %arg12: memref<2x128xf32, #tpu.memory_space<vmem>>, %arg13: memref<104x208xbf16, #tpu.memory_space<vmem>>, %arg14: memref<24x384xbf16, #tpu.memory_space<vmem>>, %arg15: memref<10x320xbf16, #tpu.memory_space<vmem>>) attributes {dimension_semantics = [#tpu.dimension_semantics<parallel>], iteration_bounds = array<i64: 1>, scalar_prefetch = 0 : i64, scratch_operands = 3 : i64, tpu.core_type = #tpu.core_type<tc>, window_params = [{transform_indices = @transform_0, window_bounds = array<i64: 52, 2, 208>}, {pipeline_mode = #tpu.pipeline_mode<synchronous>, transform_indices = @transform_1, window_bounds = array<i64: 8, 208, 384>}, {pipeline_mode = #tpu.pipeline_mode<synchronous>, transform_indices = @transform_2, window_bounds = array<i64: 1, 384>}, {pipeline_mode = #tpu.pipeline_mode<synchronous>, transform_indices = @transform_3, window_bounds = array<i64: 4, 384, 320>}, {pipeline_mode = #tpu.pipeline_mode<synchronous>, transform_indices = @transform_4, window_bounds = array<i64: 1, 320>}, {pipeline_mode = #tpu.pipeline_mode<synchronous>, transform_indices = @transform_5, window_bounds = array<i64: 4, 320, 64>}, {pipeline_mode = #tpu.pipeline_mode<synchronous>, transform_indices = @transform_6, window_bounds = array<i64: 1, 64>}, {pipeline_mode = #tpu.pipeline_mode<synchronous>, transform_indices = @transform_7, window_bounds = array<i64: 64, 512>}, {pipeline_mode = #tpu.pipeline_mode<synchronous>, transform_indices = @transform_8, window_bounds = array<i64: 1, 512>}, {pipeline_mode = #tpu.pipeline_mode<synchronous>, transform_indices = @transform_9, window_bounds = array<i64: 512, 128>}, {pipeline_mode = #tpu.pipeline_mode<synchronous>, transform_indices = @transform_10, window_bounds = array<i64: 1, 128>}, {transform_indices = @transform_11, window_bounds = array<i64: 2, 128>}]} {
    %c0 = arith.constant 0 : index
    %c0_0 = arith.constant 0 : index
    %c0_1 = arith.constant 0 : index
    %0 = vector.load %arg1[%c0, %c0_0, %c0_1] : memref<52x2x208xi8, #tpu.memory_space<vmem>>, vector<1x2x208xi8>
    %1 = vector.shape_cast %0 : vector<1x2x208xi8> to vector<2x208xi8>
    %2 = arith.sitofp %1 : vector<2x208xi8> to vector<2x208xf32>
    %cst = arith.constant 0.000000e+00 : f32
    %3 = vector.broadcast %cst : f32 to vector<2x208xf32>
    %4 = arith.cmpf olt, %2, %3 : vector<2x208xf32>
    %cst_2 = arith.constant 2.560000e+02 : f32
    %5 = vector.broadcast %cst_2 : f32 to vector<2x208xf32>
    %6 = arith.addf %2, %5 : vector<2x208xf32>
    %7 = arith.select %4, %6, %2 : vector<2x208xi1>, vector<2x208xf32>
    %8 = arith.truncf %7 : vector<2x208xf32> to vector<2x208xbf16>
    %c0_3 = arith.constant 0 : index
    %c0_4 = arith.constant 0 : index
    %9 = vector.load %arg13[%c0_3, %c0_4] : memref<104x208xbf16, #tpu.memory_space<vmem>>, vector<2x208xbf16>
    tpu.vector_store %arg13[%c0_3, %c0_4], %8 {strides = array<i32>} : memref<104x208xbf16, #tpu.memory_space<vmem>>, vector<2x208xbf16>,
    %c1 = arith.constant 1 : index
    %c0_5 = arith.constant 0 : index
    %c0_6 = arith.constant 0 : index
    %10 = vector.load %arg1[%c1, %c0_5, %c0_6] : memref<52x2x208xi8, #tpu.memory_space<vmem>>, vector<1x2x208xi8>
    %11 = vector.shape_cast %10 : vector<1x2x208xi8> to vector<2x208xi8>
    %12 = arith.sitofp %11 : vector<2x208xi8> to vector<2x208xf32>
    %cst_7 = arith.constant 0.000000e+00 : f32
    %13 = vector.broadcast %cst_7 : f32 to vector<2x208xf32>
    %14 = arith.cmpf olt, %12, %13 : vector<2x208xf32>
    %cst_8 = arith.constant 2.560000e+02 : f32
    %15 = vector.broadcast %cst_8 : f32 to vector<2x208xf32>
    %16 = arith.addf %12, %15 : vector<2x208xf32>
    %17 = arith.select %14, %16, %12 : vector<2x208xi1>, vector<2x208xf32>
    %18 = arith.truncf %17 : vector<2x208xf32> to vector<2x208xbf16>
    %c2 = arith.constant 2 : index
    %c0_9 = arith.constant 0 : index
    %19 = vector.load %arg13[%c2, %c0_9] : memref<104x208xbf16, #tpu.memory_space<vmem>>, vector<2x208xbf16>
    tpu.vector_store %arg13[%c2, %c0_9], %18 {strides = array<i32>} : memref<104x208xbf16, #tpu.memory_space<vmem>>, vector<2x208xbf16>,
    %c2_10 = arith.constant 2 : index
    %c0_11 = arith.constant 0 : index
    %c0_12 = arith.constant 0 : index
    %20 = vector.load %arg1[%c2_10, %c0_11, %c0_12] : memref<52x2x208xi8, #tpu.memory_space<vmem>>, vector<1x2x208xi8>
    %21 = vector.shape_cast %20 : vector<1x2x208xi8> to vector<2x208xi8>
    %22 = arith.sitofp %21 : vector<2x208xi8> to vector<2x208xf32>
    %cst_13 = arith.constant 0.000000e+00 : f32
    %23 = vector.broadcast %cst_13 : f32 to vector<2x208xf32>
    %24 = arith.cmpf olt, %22, %23 : vector<2x208xf32>
    %cst_14 = arith.constant 2.560000e+02 : f32
    %25 = vector.broadcast %cst_14 : f32 to vector<2x208xf32>
    %26 = arith.addf %22, %25 : vector<2x208xf32>
    %27 = arith.select %24, %26, %22 : vector<2x208xi1>, vector<2x208xf32>
    %28 = arith.truncf %27 : vector<2x208xf32> to vector<2x208xbf16>
    %c4 = arith.constant 4 : index
    %c0_15 = arith.constant 0 : index
    %29 = vector.load %arg13[%c4, %c0_15] : memref<104x208xbf16, #tpu.memory_space<vmem>>, vector<2x208xbf16>
    tpu.vector_store %arg13[%c4, %c0_15], %28 {strides = array<i32>} : memref<104x208xbf16, #tpu.memory_space<vmem>>, vector<2x208xbf16>,
    %c3 = arith.constant 3 : index
    %c0_16 = arith.constant 0 : index
    %c0_17 = arith.constant 0 : index
    %30 = vector.load %arg1[%c3, %c0_16, %c0_17] : memref<52x2x208xi8, #tpu.memory_space<vmem>>, vector<1x2x208xi8>
    %31 = vector.shape_cast %30 : vector<1x2x208xi8> to vector<2x208xi8>
    %32 = arith.sitofp %31 : vector<2x208xi8> to vector<2x208xf32>
    %cst_18 = arith.constant 0.000000e+00 : f32
    %33 = vector.broadcast %cst_18 : f32 to vector<2x208xf32>
    %34 = arith.cmpf olt, %32, %33 : vector<2x208xf32>
    %cst_19 = arith.constant 2.560000e+02 : f32
    %35 = vector.broadcast %cst_19 : f32 to vector<2x208xf32>
    %36 = arith.addf %32, %35 : vector<2x208xf32>
    %37 = arith.select %34, %36, %32 : vector<2x208xi1>, vector<2x208xf32>
    %38 = arith.truncf %37 : vector<2x208xf32> to vector<2x208xbf16>
    %c6 = arith.constant 6 : index
    %c0_20 = arith.constant 0 : index
    %39 = vector.load %arg13[%c6, %c0_20] : memref<104x208xbf16, #tpu.memory_space<vmem>>, vector<2x208xbf16>
    tpu.vector_store %arg13[%c6, %c0_20], %38 {strides = array<i32>} : memref<104x208xbf16, #tpu.memory_space<vmem>>, vector<2x208xbf16>,
    %c4_21 = arith.constant 4 : index
    %c0_22 = arith.constant 0 : index
    %c0_23 = arith.constant 0 : index
    %40 = vector.load %arg1[%c4_21, %c0_22, %c0_23] : memref<52x2x208xi8, #tpu.memory_space<vmem>>, vector<1x2x208xi8>
    %41 = vector.shape_cast %40 : vector<1x2x208xi8> to vector<2x208xi8>
    %42 = arith.sitofp %41 : vector<2x208xi8> to vector<2x208xf32>
    %cst_24 = arith.constant 0.000000e+00 : f32
    %43 = vector.broadcast %cst_24 : f32 to vector<2x208xf32>
    %44 = arith.cmpf olt, %42, %43 : vector<2x208xf32>
    %cst_25 = arith.constant 2.560000e+02 : f32
    %45 = vector.broadcast %cst_25 : f32 to vector<2x208xf32>
    %46 = arith.addf %42, %45 : vector<2x208xf32>
    %47 = arith.select %44, %46, %42 : vector<2x208xi1>, vector<2x208xf32>
    %48 = arith.truncf %47 : vector<2x208xf32> to vector<2x208xbf16>
    %c8 = arith.constant 8 : index
    %c0_26 = arith.constant 0 : index
    %49 = vector.load %arg13[%c8, %c0_26] : memref<104x208xbf16, #tpu.memory_space<vmem>>, vector<2x208xbf16>
    tpu.vector_store %arg13[%c8, %c0_26], %48 {strides = array<i32>} : memref<104x208xbf16, #tpu.memory_space<vmem>>, vector<2x208xbf16>,
    %c5 = arith.constant 5 : index
    %c0_27 = arith.constant 0 : index
    %c0_28 = arith.constant 0 : index
    %50 = vector.load %arg1[%c5, %c0_27, %c0_28] : memref<52x2x208xi8, #tpu.memory_space<vmem>>, vector<1x2x208xi8>
    %51 = vector.shape_cast %50 : vector<1x2x208xi8> to vector<2x208xi8>
    %52 = arith.sitofp %51 : vector<2x208xi8> to vector<2x208xf32>
    %cst_29 = arith.constant 0.000000e+00 : f32
    %53 = vector.broadcast %cst_29 : f32 to vector<2x208xf32>
    %54 = arith.cmpf olt, %52, %53 : vector<2x208xf32>
    %cst_30 = arith.constant 2.560000e+02 : f32
    %55 = vector.broadcast %cst_30 : f32 to vector<2x208xf32>
    %56 = arith.addf %52, %55 : vector<2x208xf32>
    %57 = arith.select %54, %56, %52 : vector<2x208xi1>, vector<2x208xf32>
    %58 = arith.truncf %57 : vector<2x208xf32> to vector<2x208xbf16>
    %c10 = arith.constant 10 : index
    %c0_31 = arith.constant 0 : index
    %59 = vector.load %arg13[%c10, %c0_31] : memref<104x208xbf16, #tpu.memory_space<vmem>>, vector<2x208xbf16>
    tpu.vector_store %arg13[%c10, %c0_31], %58 {strides = array<i32>} : memref<104x208xbf16, #tpu.memory_space<vmem>>, vector<2x208xbf16>,
    %c6_32 = arith.constant 6 : index
    %c0_33 = arith.constant 0 : index
    %c0_34 = arith.constant 0 : index
    %60 = vector.load %arg1[%c6_32, %c0_33, %c0_34] : memref<52x2x208xi8, #tpu.memory_space<vmem>>, vector<1x2x208xi8>
    %61 = vector.shape_cast %60 : vector<1x2x208xi8> to vector<2x208xi8>
    %62 = arith.sitofp %61 : vector<2x208xi8> to vector<2x208xf32>
    %cst_35 = arith.constant 0.000000e+00 : f32
    %63 = vector.broadcast %cst_35 : f32 to vector<2x208xf32>
    %64 = arith.cmpf olt, %62, %63 : vector<2x208xf32>
    %cst_36 = arith.constant 2.560000e+02 : f32
    %65 = vector.broadcast %cst_36 : f32 to vector<2x208xf32>
    %66 = arith.addf %62, %65 : vector<2x208xf32>
    %67 = arith.select %64, %66, %62 : vector<2x208xi1>, vector<2x208xf32>
    %68 = arith.truncf %67 : vector<2x208xf32> to vector<2x208xbf16>
    %c12 = arith.constant 12 : index
    %c0_37 = arith.constant 0 : index
    %69 = vector.load %arg13[%c12, %c0_37] : memref<104x208xbf16, #tpu.memory_space<vmem>>, vector<2x208xbf16>
    tpu.vector_store %arg13[%c12, %c0_37], %68 {strides = array<i32>} : memref<104x208xbf16, #tpu.memory_space<vmem>>, vector<2x208xbf16>,
    %c7 = arith.constant 7 : index
    %c0_38 = arith.constant 0 : index
    %c0_39 = arith.constant 0 : index
    %70 = vector.load %arg1[%c7, %c0_38, %c0_39] : memref<52x2x208xi8, #tpu.memory_space<vmem>>, vector<1x2x208xi8>
    %71 = vector.shape_cast %70 : vector<1x2x208xi8> to vector<2x208xi8>
    %72 = arith.sitofp %71 : vector<2x208xi8> to vector<2x208xf32>
    %cst_40 = arith.constant 0.000000e+00 : f32
    %73 = vector.broadcast %cst_40 : f32 to vector<2x208xf32>
    %74 = arith.cmpf olt, %72, %73 : vector<2x208xf32>
    %cst_41 = arith.constant 2.560000e+02 : f32
    %75 = vector.broadcast %cst_41 : f32 to vector<2x208xf32>
    %76 = arith.addf %72, %75 : vector<2x208xf32>
    %77 = arith.select %74, %76, %72 : vector<2x208xi1>, vector<2x208xf32>
    %78 = arith.truncf %77 : vector<2x208xf32> to vector<2x208xbf16>
    %c14 = arith.constant 14 : index
    %c0_42 = arith.constant 0 : index
    %79 = vector.load %arg13[%c14, %c0_42] : memref<104x208xbf16, #tpu.memory_space<vmem>>, vector<2x208xbf16>
    tpu.vector_store %arg13[%c14, %c0_42], %78 {strides = array<i32>} : memref<104x208xbf16, #tpu.memory_space<vmem>>, vector<2x208xbf16>,
    %c8_43 = arith.constant 8 : index
    %c0_44 = arith.constant 0 : index
    %c0_45 = arith.constant 0 : index
    %80 = vector.load %arg1[%c8_43, %c0_44, %c0_45] : memref<52x2x208xi8, #tpu.memory_space<vmem>>, vector<1x2x208xi8>
    %81 = vector.shape_cast %80 : vector<1x2x208xi8> to vector<2x208xi8>
    %82 = arith.sitofp %81 : vector<2x208xi8> to vector<2x208xf32>
    %cst_46 = arith.constant 0.000000e+00 : f32
    %83 = vector.broadcast %cst_46 : f32 to vector<2x208xf32>
    %84 = arith.cmpf olt, %82, %83 : vector<2x208xf32>
    %cst_47 = arith.constant 2.560000e+02 : f32
    %85 = vector.broadcast %cst_47 : f32 to vector<2x208xf32>
    %86 = arith.addf %82, %85 : vector<2x208xf32>
    %87 = arith.select %84, %86, %82 : vector<2x208xi1>, vector<2x208xf32>
    %88 = arith.truncf %87 : vector<2x208xf32> to vector<2x208xbf16>
    %c16 = arith.constant 16 : index
    %c0_48 = arith.constant 0 : index
    %89 = vector.load %arg13[%c16, %c0_48] : memref<104x208xbf16, #tpu.memory_space<vmem>>, vector<2x208xbf16>
    tpu.vector_store %arg13[%c16, %c0_48], %88 {strides = array<i32>} : memref<104x208xbf16, #tpu.memory_space<vmem>>, vector<2x208xbf16>,
    %c9 = arith.constant 9 : index
    %c0_49 = arith.constant 0 : index
    %c0_50 = arith.constant 0 : index
    %90 = vector.load %arg1[%c9, %c0_49, %c0_50] : memref<52x2x208xi8, #tpu.memory_space<vmem>>, vector<1x2x208xi8>
    %91 = vector.shape_cast %90 : vector<1x2x208xi8> to vector<2x208xi8>
    %92 = arith.sitofp %91 : vector<2x208xi8> to vector<2x208xf32>
    %cst_51 = arith.constant 0.000000e+00 : f32
    %93 = vector.broadcast %cst_51 : f32 to vector<2x208xf32>
    %94 = arith.cmpf olt, %92, %93 : vector<2x208xf32>
    %cst_52 = arith.constant 2.560000e+02 : f32
    %95 = vector.broadcast %cst_52 : f32 to vector<2x208xf32>
    %96 = arith.addf %92, %95 : vector<2x208xf32>
    %97 = arith.select %94, %96, %92 : vector<2x208xi1>, vector<2x208xf32>
    %98 = arith.truncf %97 : vector<2x208xf32> to vector<2x208xbf16>
    %c18 = arith.constant 18 : index
    %c0_53 = arith.constant 0 : index
    %99 = vector.load %arg13[%c18, %c0_53] : memref<104x208xbf16, #tpu.memory_space<vmem>>, vector<2x208xbf16>
    tpu.vector_store %arg13[%c18, %c0_53], %98 {strides = array<i32>} : memref<104x208xbf16, #tpu.memory_space<vmem>>, vector<2x208xbf16>,
    %c10_54 = arith.constant 10 : index
    %c0_55 = arith.constant 0 : index
    %c0_56 = arith.constant 0 : index
    %100 = vector.load %arg1[%c10_54, %c0_55, %c0_56] : memref<52x2x208xi8, #tpu.memory_space<vmem>>, vector<1x2x208xi8>
    %101 = vector.shape_cast %100 : vector<1x2x208xi8> to vector<2x208xi8>
    %102 = arith.sitofp %101 : vector<2x208xi8> to vector<2x208xf32>
    %cst_57 = arith.constant 0.000000e+00 : f32
    %103 = vector.broadcast %cst_57 : f32 to vector<2x208xf32>
    %104 = arith.cmpf olt, %102, %103 : vector<2x208xf32>
    %cst_58 = arith.constant 2.560000e+02 : f32
    %105 = vector.broadcast %cst_58 : f32 to vector<2x208xf32>
    %106 = arith.addf %102, %105 : vector<2x208xf32>
    %107 = arith.select %104, %106, %102 : vector<2x208xi1>, vector<2x208xf32>
    %108 = arith.truncf %107 : vector<2x208xf32> to vector<2x208xbf16>
    %c20 = arith.constant 20 : index
    %c0_59 = arith.constant 0 : index
    %109 = vector.load %arg13[%c20, %c0_59] : memref<104x208xbf16, #tpu.memory_space<vmem>>, vector<2x208xbf16>
    tpu.vector_store %arg13[%c20, %c0_59], %108 {strides = array<i32>} : memref<104x208xbf16, #tpu.memory_space<vmem>>, vector<2x208xbf16>,
    %c11 = arith.constant 11 : index
    %c0_60 = arith.constant 0 : index
    %c0_61 = arith.constant 0 : index
    %110 = vector.load %arg1[%c11, %c0_60, %c0_61] : memref<52x2x208xi8, #tpu.memory_space<vmem>>, vector<1x2x208xi8>
    %111 = vector.shape_cast %110 : vector<1x2x208xi8> to vector<2x208xi8>
    %112 = arith.sitofp %111 : vector<2x208xi8> to vector<2x208xf32>
    %cst_62 = arith.constant 0.000000e+00 : f32
    %113 = vector.broadcast %cst_62 : f32 to vector<2x208xf32>
    %114 = arith.cmpf olt, %112, %113 : vector<2x208xf32>
    %cst_63 = arith.constant 2.560000e+02 : f32
    %115 = vector.broadcast %cst_63 : f32 to vector<2x208xf32>
    %116 = arith.addf %112, %115 : vector<2x208xf32>
    %117 = arith.select %114, %116, %112 : vector<2x208xi1>, vector<2x208xf32>
    %118 = arith.truncf %117 : vector<2x208xf32> to vector<2x208xbf16>
    %c22 = arith.constant 22 : index
    %c0_64 = arith.constant 0 : index
    %119 = vector.load %arg13[%c22, %c0_64] : memref<104x208xbf16, #tpu.memory_space<vmem>>, vector<2x208xbf16>
    tpu.vector_store %arg13[%c22, %c0_64], %118 {strides = array<i32>} : memref<104x208xbf16, #tpu.memory_space<vmem>>, vector<2x208xbf16>,
    %c12_65 = arith.constant 12 : index
    %c0_66 = arith.constant 0 : index
    %c0_67 = arith.constant 0 : index
    %120 = vector.load %arg1[%c12_65, %c0_66, %c0_67] : memref<52x2x208xi8, #tpu.memory_space<vmem>>, vector<1x2x208xi8>
    %121 = vector.shape_cast %120 : vector<1x2x208xi8> to vector<2x208xi8>
    %122 = arith.sitofp %121 : vector<2x208xi8> to vector<2x208xf32>
    %cst_68 = arith.constant 0.000000e+00 : f32
    %123 = vector.broadcast %cst_68 : f32 to vector<2x208xf32>
    %124 = arith.cmpf olt, %122, %123 : vector<2x208xf32>
    %cst_69 = arith.constant 2.560000e+02 : f32
    %125 = vector.broadcast %cst_69 : f32 to vector<2x208xf32>
    %126 = arith.addf %122, %125 : vector<2x208xf32>
    %127 = arith.select %124, %126, %122 : vector<2x208xi1>, vector<2x208xf32>
    %128 = arith.truncf %127 : vector<2x208xf32> to vector<2x208xbf16>
    %c24 = arith.constant 24 : index
    %c0_70 = arith.constant 0 : index
    %129 = vector.load %arg13[%c24, %c0_70] : memref<104x208xbf16, #tpu.memory_space<vmem>>, vector<2x208xbf16>
    tpu.vector_store %arg13[%c24, %c0_70], %128 {strides = array<i32>} : memref<104x208xbf16, #tpu.memory_space<vmem>>, vector<2x208xbf16>,
    %c13 = arith.constant 13 : index
    %c0_71 = arith.constant 0 : index
    %c0_72 = arith.constant 0 : index
    %130 = vector.load %arg1[%c13, %c0_71, %c0_72] : memref<52x2x208xi8, #tpu.memory_space<vmem>>, vector<1x2x208xi8>
    %131 = vector.shape_cast %130 : vector<1x2x208xi8> to vector<2x208xi8>
    %132 = arith.sitofp %131 : vector<2x208xi8> to vector<2x208xf32>
    %cst_73 = arith.constant 0.000000e+00 : f32
    %133 = vector.broadcast %cst_73 : f32 to vector<2x208xf32>
    %134 = arith.cmpf olt, %132, %133 : vector<2x208xf32>
    %cst_74 = arith.constant 2.560000e+02 : f32
    %135 = vector.broadcast %cst_74 : f32 to vector<2x208xf32>
    %136 = arith.addf %132, %135 : vector<2x208xf32>
    %137 = arith.select %134, %136, %132 : vector<2x208xi1>, vector<2x208xf32>
    %138 = arith.truncf %137 : vector<2x208xf32> to vector<2x208xbf16>
    %c26 = arith.constant 26 : index
    %c0_75 = arith.constant 0 : index
    %139 = vector.load %arg13[%c26, %c0_75] : memref<104x208xbf16, #tpu.memory_space<vmem>>, vector<2x208xbf16>
    tpu.vector_store %arg13[%c26, %c0_75], %138 {strides = array<i32>} : memref<104x208xbf16, #tpu.memory_space<vmem>>, vector<2x208xbf16>,
    %c14_76 = arith.constant 14 : index
    %c0_77 = arith.constant 0 : index
    %c0_78 = arith.constant 0 : index
    %140 = vector.load %arg1[%c14_76, %c0_77, %c0_78] : memref<52x2x208xi8, #tpu.memory_space<vmem>>, vector<1x2x208xi8>
    %141 = vector.shape_cast %140 : vector<1x2x208xi8> to vector<2x208xi8>
    %142 = arith.sitofp %141 : vector<2x208xi8> to vector<2x208xf32>
    %cst_79 = arith.constant 0.000000e+00 : f32
    %143 = vector.broadcast %cst_79 : f32 to vector<2x208xf32>
    %144 = arith.cmpf olt, %142, %143 : vector<2x208xf32>
    %cst_80 = arith.constant 2.560000e+02 : f32
    %145 = vector.broadcast %cst_80 : f32 to vector<2x208xf32>
    %146 = arith.addf %142, %145 : vector<2x208xf32>
    %147 = arith.select %144, %146, %142 : vector<2x208xi1>, vector<2x208xf32>
    %148 = arith.truncf %147 : vector<2x208xf32> to vector<2x208xbf16>
    %c28 = arith.constant 28 : index
    %c0_81 = arith.constant 0 : index
    %149 = vector.load %arg13[%c28, %c0_81] : memref<104x208xbf16, #tpu.memory_space<vmem>>, vector<2x208xbf16>
    tpu.vector_store %arg13[%c28, %c0_81], %148 {strides = array<i32>} : memref<104x208xbf16, #tpu.memory_space<vmem>>, vector<2x208xbf16>,
    %c15 = arith.constant 15 : index
    %c0_82 = arith.constant 0 : index
    %c0_83 = arith.constant 0 : index
    %150 = vector.load %arg1[%c15, %c0_82, %c0_83] : memref<52x2x208xi8, #tpu.memory_space<vmem>>, vector<1x2x208xi8>
    %151 = vector.shape_cast %150 : vector<1x2x208xi8> to vector<2x208xi8>
    %152 = arith.sitofp %151 : vector<2x208xi8> to vector<2x208xf32>
    %cst_84 = arith.constant 0.000000e+00 : f32
    %153 = vector.broadcast %cst_84 : f32 to vector<2x208xf32>
    %154 = arith.cmpf olt, %152, %153 : vector<2x208xf32>
    %cst_85 = arith.constant 2.560000e+02 : f32
    %155 = vector.broadcast %cst_85 : f32 to vector<2x208xf32>
    %156 = arith.addf %152, %155 : vector<2x208xf32>
    %157 = arith.select %154, %156, %152 : vector<2x208xi1>, vector<2x208xf32>
    %158 = arith.truncf %157 : vector<2x208xf32> to vector<2x208xbf16>
    %c30 = arith.constant 30 : index
    %c0_86 = arith.constant 0 : index
    %159 = vector.load %arg13[%c30, %c0_86] : memref<104x208xbf16, #tpu.memory_space<vmem>>, vector<2x208xbf16>
    tpu.vector_store %arg13[%c30, %c0_86], %158 {strides = array<i32>} : memref<104x208xbf16, #tpu.memory_space<vmem>>, vector<2x208xbf16>,
    %c16_87 = arith.constant 16 : index
    %c0_88 = arith.constant 0 : index
    %c0_89 = arith.constant 0 : index
    %160 = vector.load %arg1[%c16_87, %c0_88, %c0_89] : memref<52x2x208xi8, #tpu.memory_space<vmem>>, vector<1x2x208xi8>
    %161 = vector.shape_cast %160 : vector<1x2x208xi8> to vector<2x208xi8>
    %162 = arith.sitofp %161 : vector<2x208xi8> to vector<2x208xf32>
    %cst_90 = arith.constant 0.000000e+00 : f32
    %163 = vector.broadcast %cst_90 : f32 to vector<2x208xf32>
    %164 = arith.cmpf olt, %162, %163 : vector<2x208xf32>
    %cst_91 = arith.constant 2.560000e+02 : f32
    %165 = vector.broadcast %cst_91 : f32 to vector<2x208xf32>
    %166 = arith.addf %162, %165 : vector<2x208xf32>
    %167 = arith.select %164, %166, %162 : vector<2x208xi1>, vector<2x208xf32>
    %168 = arith.truncf %167 : vector<2x208xf32> to vector<2x208xbf16>
    %c32 = arith.constant 32 : index
    %c0_92 = arith.constant 0 : index
    %169 = vector.load %arg13[%c32, %c0_92] : memref<104x208xbf16, #tpu.memory_space<vmem>>, vector<2x208xbf16>
    tpu.vector_store %arg13[%c32, %c0_92], %168 {strides = array<i32>} : memref<104x208xbf16, #tpu.memory_space<vmem>>, vector<2x208xbf16>,
    %c17 = arith.constant 17 : index
    %c0_93 = arith.constant 0 : index
    %c0_94 = arith.constant 0 : index
    %170 = vector.load %arg1[%c17, %c0_93, %c0_94] : memref<52x2x208xi8, #tpu.memory_space<vmem>>, vector<1x2x208xi8>
    %171 = vector.shape_cast %170 : vector<1x2x208xi8> to vector<2x208xi8>
    %172 = arith.sitofp %171 : vector<2x208xi8> to vector<2x208xf32>
    %cst_95 = arith.constant 0.000000e+00 : f32
    %173 = vector.broadcast %cst_95 : f32 to vector<2x208xf32>
    %174 = arith.cmpf olt, %172, %173 : vector<2x208xf32>
    %cst_96 = arith.constant 2.560000e+02 : f32
    %175 = vector.broadcast %cst_96 : f32 to vector<2x208xf32>
    %176 = arith.addf %172, %175 : vector<2x208xf32>
    %177 = arith.select %174, %176, %172 : vector<2x208xi1>, vector<2x208xf32>
    %178 = arith.truncf %177 : vector<2x208xf32> to vector<2x208xbf16>
    %c34 = arith.constant 34 : index
    %c0_97 = arith.constant 0 : index
    %179 = vector.load %arg13[%c34, %c0_97] : memref<104x208xbf16, #tpu.memory_space<vmem>>, vector<2x208xbf16>
    tpu.vector_store %arg13[%c34, %c0_97], %178 {strides = array<i32>} : memref<104x208xbf16, #tpu.memory_space<vmem>>, vector<2x208xbf16>,
    %c18_98 = arith.constant 18 : index
    %c0_99 = arith.constant 0 : index
    %c0_100 = arith.constant 0 : index
    %180 = vector.load %arg1[%c18_98, %c0_99, %c0_100] : memref<52x2x208xi8, #tpu.memory_space<vmem>>, vector<1x2x208xi8>
    %181 = vector.shape_cast %180 : vector<1x2x208xi8> to vector<2x208xi8>
    %182 = arith.sitofp %181 : vector<2x208xi8> to vector<2x208xf32>
    %cst_101 = arith.constant 0.000000e+00 : f32
    %183 = vector.broadcast %cst_101 : f32 to vector<2x208xf32>
    %184 = arith.cmpf olt, %182, %183 : vector<2x208xf32>
    %cst_102 = arith.constant 2.560000e+02 : f32
    %185 = vector.broadcast %cst_102 : f32 to vector<2x208xf32>
    %186 = arith.addf %182, %185 : vector<2x208xf32>
    %187 = arith.select %184, %186, %182 : vector<2x208xi1>, vector<2x208xf32>
    %188 = arith.truncf %187 : vector<2x208xf32> to vector<2x208xbf16>
    %c36 = arith.constant 36 : index
    %c0_103 = arith.constant 0 : index
    %189 = vector.load %arg13[%c36, %c0_103] : memref<104x208xbf16, #tpu.memory_space<vmem>>, vector<2x208xbf16>
    tpu.vector_store %arg13[%c36, %c0_103], %188 {strides = array<i32>} : memref<104x208xbf16, #tpu.memory_space<vmem>>, vector<2x208xbf16>,
    %c19 = arith.constant 19 : index
    %c0_104 = arith.constant 0 : index
    %c0_105 = arith.constant 0 : index
    %190 = vector.load %arg1[%c19, %c0_104, %c0_105] : memref<52x2x208xi8, #tpu.memory_space<vmem>>, vector<1x2x208xi8>
    %191 = vector.shape_cast %190 : vector<1x2x208xi8> to vector<2x208xi8>
    %192 = arith.sitofp %191 : vector<2x208xi8> to vector<2x208xf32>
    %cst_106 = arith.constant 0.000000e+00 : f32
    %193 = vector.broadcast %cst_106 : f32 to vector<2x208xf32>
    %194 = arith.cmpf olt, %192, %193 : vector<2x208xf32>
    %cst_107 = arith.constant 2.560000e+02 : f32
    %195 = vector.broadcast %cst_107 : f32 to vector<2x208xf32>
    %196 = arith.addf %192, %195 : vector<2x208xf32>
    %197 = arith.select %194, %196, %192 : vector<2x208xi1>, vector<2x208xf32>
    %198 = arith.truncf %197 : vector<2x208xf32> to vector<2x208xbf16>
    %c38 = arith.constant 38 : index
    %c0_108 = arith.constant 0 : index
    %199 = vector.load %arg13[%c38, %c0_108] : memref<104x208xbf16, #tpu.memory_space<vmem>>, vector<2x208xbf16>
    tpu.vector_store %arg13[%c38, %c0_108], %198 {strides = array<i32>} : memref<104x208xbf16, #tpu.memory_space<vmem>>, vector<2x208xbf16>,
    %c20_109 = arith.constant 20 : index
    %c0_110 = arith.constant 0 : index
    %c0_111 = arith.constant 0 : index
    %200 = vector.load %arg1[%c20_109, %c0_110, %c0_111] : memref<52x2x208xi8, #tpu.memory_space<vmem>>, vector<1x2x208xi8>
    %201 = vector.shape_cast %200 : vector<1x2x208xi8> to vector<2x208xi8>
    %202 = arith.sitofp %201 : vector<2x208xi8> to vector<2x208xf32>
    %cst_112 = arith.constant 0.000000e+00 : f32
    %203 = vector.broadcast %cst_112 : f32 to vector<2x208xf32>
    %204 = arith.cmpf olt, %202, %203 : vector<2x208xf32>
    %cst_113 = arith.constant 2.560000e+02 : f32
    %205 = vector.broadcast %cst_113 : f32 to vector<2x208xf32>
    %206 = arith.addf %202, %205 : vector<2x208xf32>
    %207 = arith.select %204, %206, %202 : vector<2x208xi1>, vector<2x208xf32>
    %208 = arith.truncf %207 : vector<2x208xf32> to vector<2x208xbf16>
    %c40 = arith.constant 40 : index
    %c0_114 = arith.constant 0 : index
    %209 = vector.load %arg13[%c40, %c0_114] : memref<104x208xbf16, #tpu.memory_space<vmem>>, vector<2x208xbf16>
    tpu.vector_store %arg13[%c40, %c0_114], %208 {strides = array<i32>} : memref<104x208xbf16, #tpu.memory_space<vmem>>, vector<2x208xbf16>,
    %c21 = arith.constant 21 : index
    %c0_115 = arith.constant 0 : index
    %c0_116 = arith.constant 0 : index
    %210 = vector.load %arg1[%c21, %c0_115, %c0_116] : memref<52x2x208xi8, #tpu.memory_space<vmem>>, vector<1x2x208xi8>
    %211 = vector.shape_cast %210 : vector<1x2x208xi8> to vector<2x208xi8>
    %212 = arith.sitofp %211 : vector<2x208xi8> to vector<2x208xf32>
    %cst_117 = arith.constant 0.000000e+00 : f32
    %213 = vector.broadcast %cst_117 : f32 to vector<2x208xf32>
    %214 = arith.cmpf olt, %212, %213 : vector<2x208xf32>
    %cst_118 = arith.constant 2.560000e+02 : f32
    %215 = vector.broadcast %cst_118 : f32 to vector<2x208xf32>
    %216 = arith.addf %212, %215 : vector<2x208xf32>
    %217 = arith.select %214, %216, %212 : vector<2x208xi1>, vector<2x208xf32>
    %218 = arith.truncf %217 : vector<2x208xf32> to vector<2x208xbf16>
    %c42 = arith.constant 42 : index
    %c0_119 = arith.constant 0 : index
    %219 = vector.load %arg13[%c42, %c0_119] : memref<104x208xbf16, #tpu.memory_space<vmem>>, vector<2x208xbf16>
    tpu.vector_store %arg13[%c42, %c0_119], %218 {strides = array<i32>} : memref<104x208xbf16, #tpu.memory_space<vmem>>, vector<2x208xbf16>,
    %c22_120 = arith.constant 22 : index
    %c0_121 = arith.constant 0 : index
    %c0_122 = arith.constant 0 : index
    %220 = vector.load %arg1[%c22_120, %c0_121, %c0_122] : memref<52x2x208xi8, #tpu.memory_space<vmem>>, vector<1x2x208xi8>
    %221 = vector.shape_cast %220 : vector<1x2x208xi8> to vector<2x208xi8>
    %222 = arith.sitofp %221 : vector<2x208xi8> to vector<2x208xf32>
    %cst_123 = arith.constant 0.000000e+00 : f32
    %223 = vector.broadcast %cst_123 : f32 to vector<2x208xf32>
    %224 = arith.cmpf olt, %222, %223 : vector<2x208xf32>
    %cst_124 = arith.constant 2.560000e+02 : f32
    %225 = vector.broadcast %cst_124 : f32 to vector<2x208xf32>
    %226 = arith.addf %222, %225 : vector<2x208xf32>
    %227 = arith.select %224, %226, %222 : vector<2x208xi1>, vector<2x208xf32>
    %228 = arith.truncf %227 : vector<2x208xf32> to vector<2x208xbf16>
    %c44 = arith.constant 44 : index
    %c0_125 = arith.constant 0 : index
    %229 = vector.load %arg13[%c44, %c0_125] : memref<104x208xbf16, #tpu.memory_space<vmem>>, vector<2x208xbf16>
    tpu.vector_store %arg13[%c44, %c0_125], %228 {strides = array<i32>} : memref<104x208xbf16, #tpu.memory_space<vmem>>, vector<2x208xbf16>,
    %c23 = arith.constant 23 : index
    %c0_126 = arith.constant 0 : index
    %c0_127 = arith.constant 0 : index
    %230 = vector.load %arg1[%c23, %c0_126, %c0_127] : memref<52x2x208xi8, #tpu.memory_space<vmem>>, vector<1x2x208xi8>
    %231 = vector.shape_cast %230 : vector<1x2x208xi8> to vector<2x208xi8>
    %232 = arith.sitofp %231 : vector<2x208xi8> to vector<2x208xf32>
    %cst_128 = arith.constant 0.000000e+00 : f32
    %233 = vector.broadcast %cst_128 : f32 to vector<2x208xf32>
    %234 = arith.cmpf olt, %232, %233 : vector<2x208xf32>
    %cst_129 = arith.constant 2.560000e+02 : f32
    %235 = vector.broadcast %cst_129 : f32 to vector<2x208xf32>
    %236 = arith.addf %232, %235 : vector<2x208xf32>
    %237 = arith.select %234, %236, %232 : vector<2x208xi1>, vector<2x208xf32>
    %238 = arith.truncf %237 : vector<2x208xf32> to vector<2x208xbf16>
    %c46 = arith.constant 46 : index
    %c0_130 = arith.constant 0 : index
    %239 = vector.load %arg13[%c46, %c0_130] : memref<104x208xbf16, #tpu.memory_space<vmem>>, vector<2x208xbf16>
    tpu.vector_store %arg13[%c46, %c0_130], %238 {strides = array<i32>} : memref<104x208xbf16, #tpu.memory_space<vmem>>, vector<2x208xbf16>,
    %c24_131 = arith.constant 24 : index
    %c0_132 = arith.constant 0 : index
    %c0_133 = arith.constant 0 : index
    %240 = vector.load %arg1[%c24_131, %c0_132, %c0_133] : memref<52x2x208xi8, #tpu.memory_space<vmem>>, vector<1x2x208xi8>
    %241 = vector.shape_cast %240 : vector<1x2x208xi8> to vector<2x208xi8>
    %242 = arith.sitofp %241 : vector<2x208xi8> to vector<2x208xf32>
    %cst_134 = arith.constant 0.000000e+00 : f32
    %243 = vector.broadcast %cst_134 : f32 to vector<2x208xf32>
    %244 = arith.cmpf olt, %242, %243 : vector<2x208xf32>
    %cst_135 = arith.constant 2.560000e+02 : f32
    %245 = vector.broadcast %cst_135 : f32 to vector<2x208xf32>
    %246 = arith.addf %242, %245 : vector<2x208xf32>
    %247 = arith.select %244, %246, %242 : vector<2x208xi1>, vector<2x208xf32>
    %248 = arith.truncf %247 : vector<2x208xf32> to vector<2x208xbf16>
    %c48 = arith.constant 48 : index
    %c0_136 = arith.constant 0 : index
    %249 = vector.load %arg13[%c48, %c0_136] : memref<104x208xbf16, #tpu.memory_space<vmem>>, vector<2x208xbf16>
    tpu.vector_store %arg13[%c48, %c0_136], %248 {strides = array<i32>} : memref<104x208xbf16, #tpu.memory_space<vmem>>, vector<2x208xbf16>,
    %c25 = arith.constant 25 : index
    %c0_137 = arith.constant 0 : index
    %c0_138 = arith.constant 0 : index
    %250 = vector.load %arg1[%c25, %c0_137, %c0_138] : memref<52x2x208xi8, #tpu.memory_space<vmem>>, vector<1x2x208xi8>
    %251 = vector.shape_cast %250 : vector<1x2x208xi8> to vector<2x208xi8>
    %252 = arith.sitofp %251 : vector<2x208xi8> to vector<2x208xf32>
    %cst_139 = arith.constant 0.000000e+00 : f32
    %253 = vector.broadcast %cst_139 : f32 to vector<2x208xf32>
    %254 = arith.cmpf olt, %252, %253 : vector<2x208xf32>
    %cst_140 = arith.constant 2.560000e+02 : f32
    %255 = vector.broadcast %cst_140 : f32 to vector<2x208xf32>
    %256 = arith.addf %252, %255 : vector<2x208xf32>
    %257 = arith.select %254, %256, %252 : vector<2x208xi1>, vector<2x208xf32>
    %258 = arith.truncf %257 : vector<2x208xf32> to vector<2x208xbf16>
    %c50 = arith.constant 50 : index
    %c0_141 = arith.constant 0 : index
    %259 = vector.load %arg13[%c50, %c0_141] : memref<104x208xbf16, #tpu.memory_space<vmem>>, vector<2x208xbf16>
    tpu.vector_store %arg13[%c50, %c0_141], %258 {strides = array<i32>} : memref<104x208xbf16, #tpu.memory_space<vmem>>, vector<2x208xbf16>,
    %c26_142 = arith.constant 26 : index
    %c0_143 = arith.constant 0 : index
    %c0_144 = arith.constant 0 : index
    %260 = vector.load %arg1[%c26_142, %c0_143, %c0_144] : memref<52x2x208xi8, #tpu.memory_space<vmem>>, vector<1x2x208xi8>
    %261 = vector.shape_cast %260 : vector<1x2x208xi8> to vector<2x208xi8>
    %262 = arith.sitofp %261 : vector<2x208xi8> to vector<2x208xf32>
    %cst_145 = arith.constant 0.000000e+00 : f32
    %263 = vector.broadcast %cst_145 : f32 to vector<2x208xf32>
    %264 = arith.cmpf olt, %262, %263 : vector<2x208xf32>
    %cst_146 = arith.constant 2.560000e+02 : f32
    %265 = vector.broadcast %cst_146 : f32 to vector<2x208xf32>
    %266 = arith.addf %262, %265 : vector<2x208xf32>
    %267 = arith.select %264, %266, %262 : vector<2x208xi1>, vector<2x208xf32>
    %268 = arith.truncf %267 : vector<2x208xf32> to vector<2x208xbf16>
    %c52 = arith.constant 52 : index
    %c0_147 = arith.constant 0 : index
    %269 = vector.load %arg13[%c52, %c0_147] : memref<104x208xbf16, #tpu.memory_space<vmem>>, vector<2x208xbf16>
    tpu.vector_store %arg13[%c52, %c0_147], %268 {strides = array<i32>} : memref<104x208xbf16, #tpu.memory_space<vmem>>, vector<2x208xbf16>,
    %c27 = arith.constant 27 : index
    %c0_148 = arith.constant 0 : index
    %c0_149 = arith.constant 0 : index
    %270 = vector.load %arg1[%c27, %c0_148, %c0_149] : memref<52x2x208xi8, #tpu.memory_space<vmem>>, vector<1x2x208xi8>
    %271 = vector.shape_cast %270 : vector<1x2x208xi8> to vector<2x208xi8>
    %272 = arith.sitofp %271 : vector<2x208xi8> to vector<2x208xf32>
    %cst_150 = arith.constant 0.000000e+00 : f32
    %273 = vector.broadcast %cst_150 : f32 to vector<2x208xf32>
    %274 = arith.cmpf olt, %272, %273 : vector<2x208xf32>
    %cst_151 = arith.constant 2.560000e+02 : f32
    %275 = vector.broadcast %cst_151 : f32 to vector<2x208xf32>
    %276 = arith.addf %272, %275 : vector<2x208xf32>
    %277 = arith.select %274, %276, %272 : vector<2x208xi1>, vector<2x208xf32>
    %278 = arith.truncf %277 : vector<2x208xf32> to vector<2x208xbf16>
    %c54 = arith.constant 54 : index
    %c0_152 = arith.constant 0 : index
    %279 = vector.load %arg13[%c54, %c0_152] : memref<104x208xbf16, #tpu.memory_space<vmem>>, vector<2x208xbf16>
    tpu.vector_store %arg13[%c54, %c0_152], %278 {strides = array<i32>} : memref<104x208xbf16, #tpu.memory_space<vmem>>, vector<2x208xbf16>,
    %c28_153 = arith.constant 28 : index
    %c0_154 = arith.constant 0 : index
    %c0_155 = arith.constant 0 : index
    %280 = vector.load %arg1[%c28_153, %c0_154, %c0_155] : memref<52x2x208xi8, #tpu.memory_space<vmem>>, vector<1x2x208xi8>
    %281 = vector.shape_cast %280 : vector<1x2x208xi8> to vector<2x208xi8>
    %282 = arith.sitofp %281 : vector<2x208xi8> to vector<2x208xf32>
    %cst_156 = arith.constant 0.000000e+00 : f32
    %283 = vector.broadcast %cst_156 : f32 to vector<2x208xf32>
    %284 = arith.cmpf olt, %282, %283 : vector<2x208xf32>
    %cst_157 = arith.constant 2.560000e+02 : f32
    %285 = vector.broadcast %cst_157 : f32 to vector<2x208xf32>
    %286 = arith.addf %282, %285 : vector<2x208xf32>
    %287 = arith.select %284, %286, %282 : vector<2x208xi1>, vector<2x208xf32>
    %288 = arith.truncf %287 : vector<2x208xf32> to vector<2x208xbf16>
    %c56 = arith.constant 56 : index
    %c0_158 = arith.constant 0 : index
    %289 = vector.load %arg13[%c56, %c0_158] : memref<104x208xbf16, #tpu.memory_space<vmem>>, vector<2x208xbf16>
    tpu.vector_store %arg13[%c56, %c0_158], %288 {strides = array<i32>} : memref<104x208xbf16, #tpu.memory_space<vmem>>, vector<2x208xbf16>,
    %c29 = arith.constant 29 : index
    %c0_159 = arith.constant 0 : index
    %c0_160 = arith.constant 0 : index
    %290 = vector.load %arg1[%c29, %c0_159, %c0_160] : memref<52x2x208xi8, #tpu.memory_space<vmem>>, vector<1x2x208xi8>
    %291 = vector.shape_cast %290 : vector<1x2x208xi8> to vector<2x208xi8>
    %292 = arith.sitofp %291 : vector<2x208xi8> to vector<2x208xf32>
    %cst_161 = arith.constant 0.000000e+00 : f32
    %293 = vector.broadcast %cst_161 : f32 to vector<2x208xf32>
    %294 = arith.cmpf olt, %292, %293 : vector<2x208xf32>
    %cst_162 = arith.constant 2.560000e+02 : f32
    %295 = vector.broadcast %cst_162 : f32 to vector<2x208xf32>
    %296 = arith.addf %292, %295 : vector<2x208xf32>
    %297 = arith.select %294, %296, %292 : vector<2x208xi1>, vector<2x208xf32>
    %298 = arith.truncf %297 : vector<2x208xf32> to vector<2x208xbf16>
    %c58 = arith.constant 58 : index
    %c0_163 = arith.constant 0 : index
    %299 = vector.load %arg13[%c58, %c0_163] : memref<104x208xbf16, #tpu.memory_space<vmem>>, vector<2x208xbf16>
    tpu.vector_store %arg13[%c58, %c0_163], %298 {strides = array<i32>} : memref<104x208xbf16, #tpu.memory_space<vmem>>, vector<2x208xbf16>,
    %c30_164 = arith.constant 30 : index
    %c0_165 = arith.constant 0 : index
    %c0_166 = arith.constant 0 : index
    %300 = vector.load %arg1[%c30_164, %c0_165, %c0_166] : memref<52x2x208xi8, #tpu.memory_space<vmem>>, vector<1x2x208xi8>
    %301 = vector.shape_cast %300 : vector<1x2x208xi8> to vector<2x208xi8>
    %302 = arith.sitofp %301 : vector<2x208xi8> to vector<2x208xf32>
    %cst_167 = arith.constant 0.000000e+00 : f32
    %303 = vector.broadcast %cst_167 : f32 to vector<2x208xf32>
    %304 = arith.cmpf olt, %302, %303 : vector<2x208xf32>
    %cst_168 = arith.constant 2.560000e+02 : f32
    %305 = vector.broadcast %cst_168 : f32 to vector<2x208xf32>
    %306 = arith.addf %302, %305 : vector<2x208xf32>
    %307 = arith.select %304, %306, %302 : vector<2x208xi1>, vector<2x208xf32>
    %308 = arith.truncf %307 : vector<2x208xf32> to vector<2x208xbf16>
    %c60 = arith.constant 60 : index
    %c0_169 = arith.constant 0 : index
    %309 = vector.load %arg13[%c60, %c0_169] : memref<104x208xbf16, #tpu.memory_space<vmem>>, vector<2x208xbf16>
    tpu.vector_store %arg13[%c60, %c0_169], %308 {strides = array<i32>} : memref<104x208xbf16, #tpu.memory_space<vmem>>, vector<2x208xbf16>,
    %c31 = arith.constant 31 : index
    %c0_170 = arith.constant 0 : index
    %c0_171 = arith.constant 0 : index
    %310 = vector.load %arg1[%c31, %c0_170, %c0_171] : memref<52x2x208xi8, #tpu.memory_space<vmem>>, vector<1x2x208xi8>
    %311 = vector.shape_cast %310 : vector<1x2x208xi8> to vector<2x208xi8>
    %312 = arith.sitofp %311 : vector<2x208xi8> to vector<2x208xf32>
    %cst_172 = arith.constant 0.000000e+00 : f32
    %313 = vector.broadcast %cst_172 : f32 to vector<2x208xf32>
    %314 = arith.cmpf olt, %312, %313 : vector<2x208xf32>
    %cst_173 = arith.constant 2.560000e+02 : f32
    %315 = vector.broadcast %cst_173 : f32 to vector<2x208xf32>
    %316 = arith.addf %312, %315 : vector<2x208xf32>
    %317 = arith.select %314, %316, %312 : vector<2x208xi1>, vector<2x208xf32>
    %318 = arith.truncf %317 : vector<2x208xf32> to vector<2x208xbf16>
    %c62 = arith.constant 62 : index
    %c0_174 = arith.constant 0 : index
    %319 = vector.load %arg13[%c62, %c0_174] : memref<104x208xbf16, #tpu.memory_space<vmem>>, vector<2x208xbf16>
    tpu.vector_store %arg13[%c62, %c0_174], %318 {strides = array<i32>} : memref<104x208xbf16, #tpu.memory_space<vmem>>, vector<2x208xbf16>,
    %c32_175 = arith.constant 32 : index
    %c0_176 = arith.constant 0 : index
    %c0_177 = arith.constant 0 : index
    %320 = vector.load %arg1[%c32_175, %c0_176, %c0_177] : memref<52x2x208xi8, #tpu.memory_space<vmem>>, vector<1x2x208xi8>
    %321 = vector.shape_cast %320 : vector<1x2x208xi8> to vector<2x208xi8>
    %322 = arith.sitofp %321 : vector<2x208xi8> to vector<2x208xf32>
    %cst_178 = arith.constant 0.000000e+00 : f32
    %323 = vector.broadcast %cst_178 : f32 to vector<2x208xf32>
    %324 = arith.cmpf olt, %322, %323 : vector<2x208xf32>
    %cst_179 = arith.constant 2.560000e+02 : f32
    %325 = vector.broadcast %cst_179 : f32 to vector<2x208xf32>
    %326 = arith.addf %322, %325 : vector<2x208xf32>
    %327 = arith.select %324, %326, %322 : vector<2x208xi1>, vector<2x208xf32>
    %328 = arith.truncf %327 : vector<2x208xf32> to vector<2x208xbf16>
    %c64 = arith.constant 64 : index
    %c0_180 = arith.constant 0 : index
    %329 = vector.load %arg13[%c64, %c0_180] : memref<104x208xbf16, #tpu.memory_space<vmem>>, vector<2x208xbf16>
    tpu.vector_store %arg13[%c64, %c0_180], %328 {strides = array<i32>} : memref<104x208xbf16, #tpu.memory_space<vmem>>, vector<2x208xbf16>,
    %c33 = arith.constant 33 : index
    %c0_181 = arith.constant 0 : index
    %c0_182 = arith.constant 0 : index
    %330 = vector.load %arg1[%c33, %c0_181, %c0_182] : memref<52x2x208xi8, #tpu.memory_space<vmem>>, vector<1x2x208xi8>
    %331 = vector.shape_cast %330 : vector<1x2x208xi8> to vector<2x208xi8>
    %332 = arith.sitofp %331 : vector<2x208xi8> to vector<2x208xf32>
    %cst_183 = arith.constant 0.000000e+00 : f32
    %333 = vector.broadcast %cst_183 : f32 to vector<2x208xf32>
    %334 = arith.cmpf olt, %332, %333 : vector<2x208xf32>
    %cst_184 = arith.constant 2.560000e+02 : f32
    %335 = vector.broadcast %cst_184 : f32 to vector<2x208xf32>
    %336 = arith.addf %332, %335 : vector<2x208xf32>
    %337 = arith.select %334, %336, %332 : vector<2x208xi1>, vector<2x208xf32>
    %338 = arith.truncf %337 : vector<2x208xf32> to vector<2x208xbf16>
    %c66 = arith.constant 66 : index
    %c0_185 = arith.constant 0 : index
    %339 = vector.load %arg13[%c66, %c0_185] : memref<104x208xbf16, #tpu.memory_space<vmem>>, vector<2x208xbf16>
    tpu.vector_store %arg13[%c66, %c0_185], %338 {strides = array<i32>} : memref<104x208xbf16, #tpu.memory_space<vmem>>, vector<2x208xbf16>,
    %c34_186 = arith.constant 34 : index
    %c0_187 = arith.constant 0 : index
    %c0_188 = arith.constant 0 : index
    %340 = vector.load %arg1[%c34_186, %c0_187, %c0_188] : memref<52x2x208xi8, #tpu.memory_space<vmem>>, vector<1x2x208xi8>
    %341 = vector.shape_cast %340 : vector<1x2x208xi8> to vector<2x208xi8>
    %342 = arith.sitofp %341 : vector<2x208xi8> to vector<2x208xf32>
    %cst_189 = arith.constant 0.000000e+00 : f32
    %343 = vector.broadcast %cst_189 : f32 to vector<2x208xf32>
    %344 = arith.cmpf olt, %342, %343 : vector<2x208xf32>
    %cst_190 = arith.constant 2.560000e+02 : f32
    %345 = vector.broadcast %cst_190 : f32 to vector<2x208xf32>
    %346 = arith.addf %342, %345 : vector<2x208xf32>
    %347 = arith.select %344, %346, %342 : vector<2x208xi1>, vector<2x208xf32>
    %348 = arith.truncf %347 : vector<2x208xf32> to vector<2x208xbf16>
    %c68 = arith.constant 68 : index
    %c0_191 = arith.constant 0 : index
    %349 = vector.load %arg13[%c68, %c0_191] : memref<104x208xbf16, #tpu.memory_space<vmem>>, vector<2x208xbf16>
    tpu.vector_store %arg13[%c68, %c0_191], %348 {strides = array<i32>} : memref<104x208xbf16, #tpu.memory_space<vmem>>, vector<2x208xbf16>,
    %c35 = arith.constant 35 : index
    %c0_192 = arith.constant 0 : index
    %c0_193 = arith.constant 0 : index
    %350 = vector.load %arg1[%c35, %c0_192, %c0_193] : memref<52x2x208xi8, #tpu.memory_space<vmem>>, vector<1x2x208xi8>
    %351 = vector.shape_cast %350 : vector<1x2x208xi8> to vector<2x208xi8>
    %352 = arith.sitofp %351 : vector<2x208xi8> to vector<2x208xf32>
    %cst_194 = arith.constant 0.000000e+00 : f32
    %353 = vector.broadcast %cst_194 : f32 to vector<2x208xf32>
    %354 = arith.cmpf olt, %352, %353 : vector<2x208xf32>
    %cst_195 = arith.constant 2.560000e+02 : f32
    %355 = vector.broadcast %cst_195 : f32 to vector<2x208xf32>
    %356 = arith.addf %352, %355 : vector<2x208xf32>
    %357 = arith.select %354, %356, %352 : vector<2x208xi1>, vector<2x208xf32>
    %358 = arith.truncf %357 : vector<2x208xf32> to vector<2x208xbf16>
    %c70 = arith.constant 70 : index
    %c0_196 = arith.constant 0 : index
    %359 = vector.load %arg13[%c70, %c0_196] : memref<104x208xbf16, #tpu.memory_space<vmem>>, vector<2x208xbf16>
    tpu.vector_store %arg13[%c70, %c0_196], %358 {strides = array<i32>} : memref<104x208xbf16, #tpu.memory_space<vmem>>, vector<2x208xbf16>,
    %c36_197 = arith.constant 36 : index
    %c0_198 = arith.constant 0 : index
    %c0_199 = arith.constant 0 : index
    %360 = vector.load %arg1[%c36_197, %c0_198, %c0_199] : memref<52x2x208xi8, #tpu.memory_space<vmem>>, vector<1x2x208xi8>
    %361 = vector.shape_cast %360 : vector<1x2x208xi8> to vector<2x208xi8>
    %362 = arith.sitofp %361 : vector<2x208xi8> to vector<2x208xf32>
    %cst_200 = arith.constant 0.000000e+00 : f32
    %363 = vector.broadcast %cst_200 : f32 to vector<2x208xf32>
    %364 = arith.cmpf olt, %362, %363 : vector<2x208xf32>
    %cst_201 = arith.constant 2.560000e+02 : f32
    %365 = vector.broadcast %cst_201 : f32 to vector<2x208xf32>
    %366 = arith.addf %362, %365 : vector<2x208xf32>
    %367 = arith.select %364, %366, %362 : vector<2x208xi1>, vector<2x208xf32>
    %368 = arith.truncf %367 : vector<2x208xf32> to vector<2x208xbf16>
    %c72 = arith.constant 72 : index
    %c0_202 = arith.constant 0 : index
    %369 = vector.load %arg13[%c72, %c0_202] : memref<104x208xbf16, #tpu.memory_space<vmem>>, vector<2x208xbf16>
    tpu.vector_store %arg13[%c72, %c0_202], %368 {strides = array<i32>} : memref<104x208xbf16, #tpu.memory_space<vmem>>, vector<2x208xbf16>,
    %c37 = arith.constant 37 : index
    %c0_203 = arith.constant 0 : index
    %c0_204 = arith.constant 0 : index
    %370 = vector.load %arg1[%c37, %c0_203, %c0_204] : memref<52x2x208xi8, #tpu.memory_space<vmem>>, vector<1x2x208xi8>
    %371 = vector.shape_cast %370 : vector<1x2x208xi8> to vector<2x208xi8>
    %372 = arith.sitofp %371 : vector<2x208xi8> to vector<2x208xf32>
    %cst_205 = arith.constant 0.000000e+00 : f32
    %373 = vector.broadcast %cst_205 : f32 to vector<2x208xf32>
    %374 = arith.cmpf olt, %372, %373 : vector<2x208xf32>
    %cst_206 = arith.constant 2.560000e+02 : f32
    %375 = vector.broadcast %cst_206 : f32 to vector<2x208xf32>
    %376 = arith.addf %372, %375 : vector<2x208xf32>
    %377 = arith.select %374, %376, %372 : vector<2x208xi1>, vector<2x208xf32>
    %378 = arith.truncf %377 : vector<2x208xf32> to vector<2x208xbf16>
    %c74 = arith.constant 74 : index
    %c0_207 = arith.constant 0 : index
    %379 = vector.load %arg13[%c74, %c0_207] : memref<104x208xbf16, #tpu.memory_space<vmem>>, vector<2x208xbf16>
    tpu.vector_store %arg13[%c74, %c0_207], %378 {strides = array<i32>} : memref<104x208xbf16, #tpu.memory_space<vmem>>, vector<2x208xbf16>,
    %c38_208 = arith.constant 38 : index
    %c0_209 = arith.constant 0 : index
    %c0_210 = arith.constant 0 : index
    %380 = vector.load %arg1[%c38_208, %c0_209, %c0_210] : memref<52x2x208xi8, #tpu.memory_space<vmem>>, vector<1x2x208xi8>
    %381 = vector.shape_cast %380 : vector<1x2x208xi8> to vector<2x208xi8>
    %382 = arith.sitofp %381 : vector<2x208xi8> to vector<2x208xf32>
    %cst_211 = arith.constant 0.000000e+00 : f32
    %383 = vector.broadcast %cst_211 : f32 to vector<2x208xf32>
    %384 = arith.cmpf olt, %382, %383 : vector<2x208xf32>
    %cst_212 = arith.constant 2.560000e+02 : f32
    %385 = vector.broadcast %cst_212 : f32 to vector<2x208xf32>
    %386 = arith.addf %382, %385 : vector<2x208xf32>
    %387 = arith.select %384, %386, %382 : vector<2x208xi1>, vector<2x208xf32>
    %388 = arith.truncf %387 : vector<2x208xf32> to vector<2x208xbf16>
    %c76 = arith.constant 76 : index
    %c0_213 = arith.constant 0 : index
    %389 = vector.load %arg13[%c76, %c0_213] : memref<104x208xbf16, #tpu.memory_space<vmem>>, vector<2x208xbf16>
    tpu.vector_store %arg13[%c76, %c0_213], %388 {strides = array<i32>} : memref<104x208xbf16, #tpu.memory_space<vmem>>, vector<2x208xbf16>,
    %c39 = arith.constant 39 : index
    %c0_214 = arith.constant 0 : index
    %c0_215 = arith.constant 0 : index
    %390 = vector.load %arg1[%c39, %c0_214, %c0_215] : memref<52x2x208xi8, #tpu.memory_space<vmem>>, vector<1x2x208xi8>
    %391 = vector.shape_cast %390 : vector<1x2x208xi8> to vector<2x208xi8>
    %392 = arith.sitofp %391 : vector<2x208xi8> to vector<2x208xf32>
    %cst_216 = arith.constant 0.000000e+00 : f32
    %393 = vector.broadcast %cst_216 : f32 to vector<2x208xf32>
    %394 = arith.cmpf olt, %392, %393 : vector<2x208xf32>
    %cst_217 = arith.constant 2.560000e+02 : f32
    %395 = vector.broadcast %cst_217 : f32 to vector<2x208xf32>
    %396 = arith.addf %392, %395 : vector<2x208xf32>
    %397 = arith.select %394, %396, %392 : vector<2x208xi1>, vector<2x208xf32>
    %398 = arith.truncf %397 : vector<2x208xf32> to vector<2x208xbf16>
    %c78 = arith.constant 78 : index
    %c0_218 = arith.constant 0 : index
    %399 = vector.load %arg13[%c78, %c0_218] : memref<104x208xbf16, #tpu.memory_space<vmem>>, vector<2x208xbf16>
    tpu.vector_store %arg13[%c78, %c0_218], %398 {strides = array<i32>} : memref<104x208xbf16, #tpu.memory_space<vmem>>, vector<2x208xbf16>,
    %c40_219 = arith.constant 40 : index
    %c0_220 = arith.constant 0 : index
    %c0_221 = arith.constant 0 : index
    %400 = vector.load %arg1[%c40_219, %c0_220, %c0_221] : memref<52x2x208xi8, #tpu.memory_space<vmem>>, vector<1x2x208xi8>
    %401 = vector.shape_cast %400 : vector<1x2x208xi8> to vector<2x208xi8>
    %402 = arith.sitofp %401 : vector<2x208xi8> to vector<2x208xf32>
    %cst_222 = arith.constant 0.000000e+00 : f32
    %403 = vector.broadcast %cst_222 : f32 to vector<2x208xf32>
    %404 = arith.cmpf olt, %402, %403 : vector<2x208xf32>
    %cst_223 = arith.constant 2.560000e+02 : f32
    %405 = vector.broadcast %cst_223 : f32 to vector<2x208xf32>
    %406 = arith.addf %402, %405 : vector<2x208xf32>
    %407 = arith.select %404, %406, %402 : vector<2x208xi1>, vector<2x208xf32>
    %408 = arith.truncf %407 : vector<2x208xf32> to vector<2x208xbf16>
    %c80 = arith.constant 80 : index
    %c0_224 = arith.constant 0 : index
    %409 = vector.load %arg13[%c80, %c0_224] : memref<104x208xbf16, #tpu.memory_space<vmem>>, vector<2x208xbf16>
    tpu.vector_store %arg13[%c80, %c0_224], %408 {strides = array<i32>} : memref<104x208xbf16, #tpu.memory_space<vmem>>, vector<2x208xbf16>,
    %c41 = arith.constant 41 : index
    %c0_225 = arith.constant 0 : index
    %c0_226 = arith.constant 0 : index
    %410 = vector.load %arg1[%c41, %c0_225, %c0_226] : memref<52x2x208xi8, #tpu.memory_space<vmem>>, vector<1x2x208xi8>
    %411 = vector.shape_cast %410 : vector<1x2x208xi8> to vector<2x208xi8>
    %412 = arith.sitofp %411 : vector<2x208xi8> to vector<2x208xf32>
    %cst_227 = arith.constant 0.000000e+00 : f32
    %413 = vector.broadcast %cst_227 : f32 to vector<2x208xf32>
    %414 = arith.cmpf olt, %412, %413 : vector<2x208xf32>
    %cst_228 = arith.constant 2.560000e+02 : f32
    %415 = vector.broadcast %cst_228 : f32 to vector<2x208xf32>
    %416 = arith.addf %412, %415 : vector<2x208xf32>
    %417 = arith.select %414, %416, %412 : vector<2x208xi1>, vector<2x208xf32>
    %418 = arith.truncf %417 : vector<2x208xf32> to vector<2x208xbf16>
    %c82 = arith.constant 82 : index
    %c0_229 = arith.constant 0 : index
    %419 = vector.load %arg13[%c82, %c0_229] : memref<104x208xbf16, #tpu.memory_space<vmem>>, vector<2x208xbf16>
    tpu.vector_store %arg13[%c82, %c0_229], %418 {strides = array<i32>} : memref<104x208xbf16, #tpu.memory_space<vmem>>, vector<2x208xbf16>,
    %c42_230 = arith.constant 42 : index
    %c0_231 = arith.constant 0 : index
    %c0_232 = arith.constant 0 : index
    %420 = vector.load %arg1[%c42_230, %c0_231, %c0_232] : memref<52x2x208xi8, #tpu.memory_space<vmem>>, vector<1x2x208xi8>
    %421 = vector.shape_cast %420 : vector<1x2x208xi8> to vector<2x208xi8>
    %422 = arith.sitofp %421 : vector<2x208xi8> to vector<2x208xf32>
    %cst_233 = arith.constant 0.000000e+00 : f32
    %423 = vector.broadcast %cst_233 : f32 to vector<2x208xf32>
    %424 = arith.cmpf olt, %422, %423 : vector<2x208xf32>
    %cst_234 = arith.constant 2.560000e+02 : f32
    %425 = vector.broadcast %cst_234 : f32 to vector<2x208xf32>
    %426 = arith.addf %422, %425 : vector<2x208xf32>
    %427 = arith.select %424, %426, %422 : vector<2x208xi1>, vector<2x208xf32>
    %428 = arith.truncf %427 : vector<2x208xf32> to vector<2x208xbf16>
    %c84 = arith.constant 84 : index
    %c0_235 = arith.constant 0 : index
    %429 = vector.load %arg13[%c84, %c0_235] : memref<104x208xbf16, #tpu.memory_space<vmem>>, vector<2x208xbf16>
    tpu.vector_store %arg13[%c84, %c0_235], %428 {strides = array<i32>} : memref<104x208xbf16, #tpu.memory_space<vmem>>, vector<2x208xbf16>,
    %c43 = arith.constant 43 : index
    %c0_236 = arith.constant 0 : index
    %c0_237 = arith.constant 0 : index
    %430 = vector.load %arg1[%c43, %c0_236, %c0_237] : memref<52x2x208xi8, #tpu.memory_space<vmem>>, vector<1x2x208xi8>
    %431 = vector.shape_cast %430 : vector<1x2x208xi8> to vector<2x208xi8>
    %432 = arith.sitofp %431 : vector<2x208xi8> to vector<2x208xf32>
    %cst_238 = arith.constant 0.000000e+00 : f32
    %433 = vector.broadcast %cst_238 : f32 to vector<2x208xf32>
    %434 = arith.cmpf olt, %432, %433 : vector<2x208xf32>
    %cst_239 = arith.constant 2.560000e+02 : f32
    %435 = vector.broadcast %cst_239 : f32 to vector<2x208xf32>
    %436 = arith.addf %432, %435 : vector<2x208xf32>
    %437 = arith.select %434, %436, %432 : vector<2x208xi1>, vector<2x208xf32>
    %438 = arith.truncf %437 : vector<2x208xf32> to vector<2x208xbf16>
    %c86 = arith.constant 86 : index
    %c0_240 = arith.constant 0 : index
    %439 = vector.load %arg13[%c86, %c0_240] : memref<104x208xbf16, #tpu.memory_space<vmem>>, vector<2x208xbf16>
    tpu.vector_store %arg13[%c86, %c0_240], %438 {strides = array<i32>} : memref<104x208xbf16, #tpu.memory_space<vmem>>, vector<2x208xbf16>,
    %c44_241 = arith.constant 44 : index
    %c0_242 = arith.constant 0 : index
    %c0_243 = arith.constant 0 : index
    %440 = vector.load %arg1[%c44_241, %c0_242, %c0_243] : memref<52x2x208xi8, #tpu.memory_space<vmem>>, vector<1x2x208xi8>
    %441 = vector.shape_cast %440 : vector<1x2x208xi8> to vector<2x208xi8>
    %442 = arith.sitofp %441 : vector<2x208xi8> to vector<2x208xf32>
    %cst_244 = arith.constant 0.000000e+00 : f32
    %443 = vector.broadcast %cst_244 : f32 to vector<2x208xf32>
    %444 = arith.cmpf olt, %442, %443 : vector<2x208xf32>
    %cst_245 = arith.constant 2.560000e+02 : f32
    %445 = vector.broadcast %cst_245 : f32 to vector<2x208xf32>
    %446 = arith.addf %442, %445 : vector<2x208xf32>
    %447 = arith.select %444, %446, %442 : vector<2x208xi1>, vector<2x208xf32>
    %448 = arith.truncf %447 : vector<2x208xf32> to vector<2x208xbf16>
    %c88 = arith.constant 88 : index
    %c0_246 = arith.constant 0 : index
    %449 = vector.load %arg13[%c88, %c0_246] : memref<104x208xbf16, #tpu.memory_space<vmem>>, vector<2x208xbf16>
    tpu.vector_store %arg13[%c88, %c0_246], %448 {strides = array<i32>} : memref<104x208xbf16, #tpu.memory_space<vmem>>, vector<2x208xbf16>,
    %c45 = arith.constant 45 : index
    %c0_247 = arith.constant 0 : index
    %c0_248 = arith.constant 0 : index
    %450 = vector.load %arg1[%c45, %c0_247, %c0_248] : memref<52x2x208xi8, #tpu.memory_space<vmem>>, vector<1x2x208xi8>
    %451 = vector.shape_cast %450 : vector<1x2x208xi8> to vector<2x208xi8>
    %452 = arith.sitofp %451 : vector<2x208xi8> to vector<2x208xf32>
    %cst_249 = arith.constant 0.000000e+00 : f32
    %453 = vector.broadcast %cst_249 : f32 to vector<2x208xf32>
    %454 = arith.cmpf olt, %452, %453 : vector<2x208xf32>
    %cst_250 = arith.constant 2.560000e+02 : f32
    %455 = vector.broadcast %cst_250 : f32 to vector<2x208xf32>
    %456 = arith.addf %452, %455 : vector<2x208xf32>
    %457 = arith.select %454, %456, %452 : vector<2x208xi1>, vector<2x208xf32>
    %458 = arith.truncf %457 : vector<2x208xf32> to vector<2x208xbf16>
    %c90 = arith.constant 90 : index
    %c0_251 = arith.constant 0 : index
    %459 = vector.load %arg13[%c90, %c0_251] : memref<104x208xbf16, #tpu.memory_space<vmem>>, vector<2x208xbf16>
    tpu.vector_store %arg13[%c90, %c0_251], %458 {strides = array<i32>} : memref<104x208xbf16, #tpu.memory_space<vmem>>, vector<2x208xbf16>,
    %c46_252 = arith.constant 46 : index
    %c0_253 = arith.constant 0 : index
    %c0_254 = arith.constant 0 : index
    %460 = vector.load %arg1[%c46_252, %c0_253, %c0_254] : memref<52x2x208xi8, #tpu.memory_space<vmem>>, vector<1x2x208xi8>
    %461 = vector.shape_cast %460 : vector<1x2x208xi8> to vector<2x208xi8>
    %462 = arith.sitofp %461 : vector<2x208xi8> to vector<2x208xf32>
    %cst_255 = arith.constant 0.000000e+00 : f32
    %463 = vector.broadcast %cst_255 : f32 to vector<2x208xf32>
    %464 = arith.cmpf olt, %462, %463 : vector<2x208xf32>
    %cst_256 = arith.constant 2.560000e+02 : f32
    %465 = vector.broadcast %cst_256 : f32 to vector<2x208xf32>
    %466 = arith.addf %462, %465 : vector<2x208xf32>
    %467 = arith.select %464, %466, %462 : vector<2x208xi1>, vector<2x208xf32>
    %468 = arith.truncf %467 : vector<2x208xf32> to vector<2x208xbf16>
    %c92 = arith.constant 92 : index
    %c0_257 = arith.constant 0 : index
    %469 = vector.load %arg13[%c92, %c0_257] : memref<104x208xbf16, #tpu.memory_space<vmem>>, vector<2x208xbf16>
    tpu.vector_store %arg13[%c92, %c0_257], %468 {strides = array<i32>} : memref<104x208xbf16, #tpu.memory_space<vmem>>, vector<2x208xbf16>,
    %c47 = arith.constant 47 : index
    %c0_258 = arith.constant 0 : index
    %c0_259 = arith.constant 0 : index
    %470 = vector.load %arg1[%c47, %c0_258, %c0_259] : memref<52x2x208xi8, #tpu.memory_space<vmem>>, vector<1x2x208xi8>
    %471 = vector.shape_cast %470 : vector<1x2x208xi8> to vector<2x208xi8>
    %472 = arith.sitofp %471 : vector<2x208xi8> to vector<2x208xf32>
    %cst_260 = arith.constant 0.000000e+00 : f32
    %473 = vector.broadcast %cst_260 : f32 to vector<2x208xf32>
    %474 = arith.cmpf olt, %472, %473 : vector<2x208xf32>
    %cst_261 = arith.constant 2.560000e+02 : f32
    %475 = vector.broadcast %cst_261 : f32 to vector<2x208xf32>
    %476 = arith.addf %472, %475 : vector<2x208xf32>
    %477 = arith.select %474, %476, %472 : vector<2x208xi1>, vector<2x208xf32>
    %478 = arith.truncf %477 : vector<2x208xf32> to vector<2x208xbf16>
    %c94 = arith.constant 94 : index
    %c0_262 = arith.constant 0 : index
    %479 = vector.load %arg13[%c94, %c0_262] : memref<104x208xbf16, #tpu.memory_space<vmem>>, vector<2x208xbf16>
    tpu.vector_store %arg13[%c94, %c0_262], %478 {strides = array<i32>} : memref<104x208xbf16, #tpu.memory_space<vmem>>, vector<2x208xbf16>,
    %c48_263 = arith.constant 48 : index
    %c0_264 = arith.constant 0 : index
    %c0_265 = arith.constant 0 : index
    %480 = vector.load %arg1[%c48_263, %c0_264, %c0_265] : memref<52x2x208xi8, #tpu.memory_space<vmem>>, vector<1x2x208xi8>
    %481 = vector.shape_cast %480 : vector<1x2x208xi8> to vector<2x208xi8>
    %482 = arith.sitofp %481 : vector<2x208xi8> to vector<2x208xf32>
    %cst_266 = arith.constant 0.000000e+00 : f32
    %483 = vector.broadcast %cst_266 : f32 to vector<2x208xf32>
    %484 = arith.cmpf olt, %482, %483 : vector<2x208xf32>
    %cst_267 = arith.constant 2.560000e+02 : f32
    %485 = vector.broadcast %cst_267 : f32 to vector<2x208xf32>
    %486 = arith.addf %482, %485 : vector<2x208xf32>
    %487 = arith.select %484, %486, %482 : vector<2x208xi1>, vector<2x208xf32>
    %488 = arith.truncf %487 : vector<2x208xf32> to vector<2x208xbf16>
    %c96 = arith.constant 96 : index
    %c0_268 = arith.constant 0 : index
    %489 = vector.load %arg13[%c96, %c0_268] : memref<104x208xbf16, #tpu.memory_space<vmem>>, vector<2x208xbf16>
    tpu.vector_store %arg13[%c96, %c0_268], %488 {strides = array<i32>} : memref<104x208xbf16, #tpu.memory_space<vmem>>, vector<2x208xbf16>,
    %c49 = arith.constant 49 : index
    %c0_269 = arith.constant 0 : index
    %c0_270 = arith.constant 0 : index
    %490 = vector.load %arg1[%c49, %c0_269, %c0_270] : memref<52x2x208xi8, #tpu.memory_space<vmem>>, vector<1x2x208xi8>
    %491 = vector.shape_cast %490 : vector<1x2x208xi8> to vector<2x208xi8>
    %492 = arith.sitofp %491 : vector<2x208xi8> to vector<2x208xf32>
    %cst_271 = arith.constant 0.000000e+00 : f32
    %493 = vector.broadcast %cst_271 : f32 to vector<2x208xf32>
    %494 = arith.cmpf olt, %492, %493 : vector<2x208xf32>
    %cst_272 = arith.constant 2.560000e+02 : f32
    %495 = vector.broadcast %cst_272 : f32 to vector<2x208xf32>
    %496 = arith.addf %492, %495 : vector<2x208xf32>
    %497 = arith.select %494, %496, %492 : vector<2x208xi1>, vector<2x208xf32>
    %498 = arith.truncf %497 : vector<2x208xf32> to vector<2x208xbf16>
    %c98 = arith.constant 98 : index
    %c0_273 = arith.constant 0 : index
    %499 = vector.load %arg13[%c98, %c0_273] : memref<104x208xbf16, #tpu.memory_space<vmem>>, vector<2x208xbf16>
    tpu.vector_store %arg13[%c98, %c0_273], %498 {strides = array<i32>} : memref<104x208xbf16, #tpu.memory_space<vmem>>, vector<2x208xbf16>,
    %c50_274 = arith.constant 50 : index
    %c0_275 = arith.constant 0 : index
    %c0_276 = arith.constant 0 : index
    %500 = vector.load %arg1[%c50_274, %c0_275, %c0_276] : memref<52x2x208xi8, #tpu.memory_space<vmem>>, vector<1x2x208xi8>
    %501 = vector.shape_cast %500 : vector<1x2x208xi8> to vector<2x208xi8>
    %502 = arith.sitofp %501 : vector<2x208xi8> to vector<2x208xf32>
    %cst_277 = arith.constant 0.000000e+00 : f32
    %503 = vector.broadcast %cst_277 : f32 to vector<2x208xf32>
    %504 = arith.cmpf olt, %502, %503 : vector<2x208xf32>
    %cst_278 = arith.constant 2.560000e+02 : f32
    %505 = vector.broadcast %cst_278 : f32 to vector<2x208xf32>
    %506 = arith.addf %502, %505 : vector<2x208xf32>
    %507 = arith.select %504, %506, %502 : vector<2x208xi1>, vector<2x208xf32>
    %508 = arith.truncf %507 : vector<2x208xf32> to vector<2x208xbf16>
    %c100 = arith.constant 100 : index
    %c0_279 = arith.constant 0 : index
    %509 = vector.load %arg13[%c100, %c0_279] : memref<104x208xbf16, #tpu.memory_space<vmem>>, vector<2x208xbf16>
    tpu.vector_store %arg13[%c100, %c0_279], %508 {strides = array<i32>} : memref<104x208xbf16, #tpu.memory_space<vmem>>, vector<2x208xbf16>,
    %c51 = arith.constant 51 : index
    %c0_280 = arith.constant 0 : index
    %c0_281 = arith.constant 0 : index
    %510 = vector.load %arg1[%c51, %c0_280, %c0_281] : memref<52x2x208xi8, #tpu.memory_space<vmem>>, vector<1x2x208xi8>
    %511 = vector.shape_cast %510 : vector<1x2x208xi8> to vector<2x208xi8>
    %512 = arith.sitofp %511 : vector<2x208xi8> to vector<2x208xf32>
    %cst_282 = arith.constant 0.000000e+00 : f32
    %513 = vector.broadcast %cst_282 : f32 to vector<2x208xf32>
    %514 = arith.cmpf olt, %512, %513 : vector<2x208xf32>
    %cst_283 = arith.constant 2.560000e+02 : f32
    %515 = vector.broadcast %cst_283 : f32 to vector<2x208xf32>
    %516 = arith.addf %512, %515 : vector<2x208xf32>
    %517 = arith.select %514, %516, %512 : vector<2x208xi1>, vector<2x208xf32>
    %518 = arith.truncf %517 : vector<2x208xf32> to vector<2x208xbf16>
    %c102 = arith.constant 102 : index
    %c0_284 = arith.constant 0 : index
    %519 = vector.load %arg13[%c102, %c0_284] : memref<104x208xbf16, #tpu.memory_space<vmem>>, vector<2x208xbf16>
    tpu.vector_store %arg13[%c102, %c0_284], %518 {strides = array<i32>} : memref<104x208xbf16, #tpu.memory_space<vmem>>, vector<2x208xbf16>,
    %c0_285 = arith.constant 0 : index
    %c0_286 = arith.constant 0 : index
    %520 = vector.load %arg13[%c0_285, %c0_286] : memref<104x208xbf16, #tpu.memory_space<vmem>>, vector<24x208xbf16>
    %c0_287 = arith.constant 0 : index
    %c0_288 = arith.constant 0 : index
    %c0_289 = arith.constant 0 : index
    %521 = vector.load %arg2[%c0_287, %c0_288, %c0_289] : memref<8x208x384xbf16, #tpu.memory_space<vmem>>, vector<1x208x384xbf16>
    %522 = vector.shape_cast %521 : vector<1x208x384xbf16> to vector<208x384xbf16>
    %cst_290 = arith.constant dense<0.000000e+00> : vector<24x384xf32>
    %523 = tpu.matmul %520, %522, %cst_290 {dimension_numbers = #tpu.dot_dimension_numbers<[1], [0], [0], [1], [0, 0, 1, 1], [], []>} : vector<24x208xbf16>, vector<208x384xbf16>, vector<24x384xf32> -> vector<24x384xf32>
    %c26_291 = arith.constant 26 : index
    %c0_292 = arith.constant 0 : index
    %524 = vector.load %arg13[%c26_291, %c0_292] : memref<104x208xbf16, #tpu.memory_space<vmem>>, vector<24x208xbf16>
    %c1_293 = arith.constant 1 : index
    %c0_294 = arith.constant 0 : index
    %c0_295 = arith.constant 0 : index
    %525 = vector.load %arg2[%c1_293, %c0_294, %c0_295] : memref<8x208x384xbf16, #tpu.memory_space<vmem>>, vector<1x208x384xbf16>
    %526 = vector.shape_cast %525 : vector<1x208x384xbf16> to vector<208x384xbf16>
    %cst_296 = arith.constant dense<0.000000e+00> : vector<24x384xf32>
    %527 = tpu.matmul %524, %526, %cst_296 {dimension_numbers = #tpu.dot_dimension_numbers<[1], [0], [0], [1], [0, 0, 1, 1], [], []>} : vector<24x208xbf16>, vector<208x384xbf16>, vector<24x384xf32> -> vector<24x384xf32>
    %528 = arith.addf %523, %527 : vector<24x384xf32>
    %c52_297 = arith.constant 52 : index
    %c0_298 = arith.constant 0 : index
    %529 = vector.load %arg13[%c52_297, %c0_298] : memref<104x208xbf16, #tpu.memory_space<vmem>>, vector<24x208xbf16>
    %c2_299 = arith.constant 2 : index
    %c0_300 = arith.constant 0 : index
    %c0_301 = arith.constant 0 : index
    %530 = vector.load %arg2[%c2_299, %c0_300, %c0_301] : memref<8x208x384xbf16, #tpu.memory_space<vmem>>, vector<1x208x384xbf16>
    %531 = vector.shape_cast %530 : vector<1x208x384xbf16> to vector<208x384xbf16>
    %cst_302 = arith.constant dense<0.000000e+00> : vector<24x384xf32>
    %532 = tpu.matmul %529, %531, %cst_302 {dimension_numbers = #tpu.dot_dimension_numbers<[1], [0], [0], [1], [0, 0, 1, 1], [], []>} : vector<24x208xbf16>, vector<208x384xbf16>, vector<24x384xf32> -> vector<24x384xf32>
    %533 = arith.addf %528, %532 : vector<24x384xf32>
    %c78_303 = arith.constant 78 : index
    %c0_304 = arith.constant 0 : index
    %534 = vector.load %arg13[%c78_303, %c0_304] : memref<104x208xbf16, #tpu.memory_space<vmem>>, vector<24x208xbf16>
    %c3_305 = arith.constant 3 : index
    %c0_306 = arith.constant 0 : index
    %c0_307 = arith.constant 0 : index
    %535 = vector.load %arg2[%c3_305, %c0_306, %c0_307] : memref<8x208x384xbf16, #tpu.memory_space<vmem>>, vector<1x208x384xbf16>
    %536 = vector.shape_cast %535 : vector<1x208x384xbf16> to vector<208x384xbf16>
    %cst_308 = arith.constant dense<0.000000e+00> : vector<24x384xf32>
    %537 = tpu.matmul %534, %536, %cst_308 {dimension_numbers = #tpu.dot_dimension_numbers<[1], [0], [0], [1], [0, 0, 1, 1], [], []>} : vector<24x208xbf16>, vector<208x384xbf16>, vector<24x384xf32> -> vector<24x384xf32>
    %538 = arith.addf %533, %537 : vector<24x384xf32>
    %c2_309 = arith.constant 2 : index
    %c0_310 = arith.constant 0 : index
    %539 = vector.load %arg13[%c2_309, %c0_310] : memref<104x208xbf16, #tpu.memory_space<vmem>>, vector<24x208xbf16>
    %c4_311 = arith.constant 4 : index
    %c0_312 = arith.constant 0 : index
    %c0_313 = arith.constant 0 : index
    %540 = vector.load %arg2[%c4_311, %c0_312, %c0_313] : memref<8x208x384xbf16, #tpu.memory_space<vmem>>, vector<1x208x384xbf16>
    %541 = vector.shape_cast %540 : vector<1x208x384xbf16> to vector<208x384xbf16>
    %cst_314 = arith.constant dense<0.000000e+00> : vector<24x384xf32>
    %542 = tpu.matmul %539, %541, %cst_314 {dimension_numbers = #tpu.dot_dimension_numbers<[1], [0], [0], [1], [0, 0, 1, 1], [], []>} : vector<24x208xbf16>, vector<208x384xbf16>, vector<24x384xf32> -> vector<24x384xf32>
    %543 = arith.addf %538, %542 : vector<24x384xf32>
    %c28_315 = arith.constant 28 : index
    %c0_316 = arith.constant 0 : index
    %544 = vector.load %arg13[%c28_315, %c0_316] : memref<104x208xbf16, #tpu.memory_space<vmem>>, vector<24x208xbf16>
    %c5_317 = arith.constant 5 : index
    %c0_318 = arith.constant 0 : index
    %c0_319 = arith.constant 0 : index
    %545 = vector.load %arg2[%c5_317, %c0_318, %c0_319] : memref<8x208x384xbf16, #tpu.memory_space<vmem>>, vector<1x208x384xbf16>
    %546 = vector.shape_cast %545 : vector<1x208x384xbf16> to vector<208x384xbf16>
    %cst_320 = arith.constant dense<0.000000e+00> : vector<24x384xf32>
    %547 = tpu.matmul %544, %546, %cst_320 {dimension_numbers = #tpu.dot_dimension_numbers<[1], [0], [0], [1], [0, 0, 1, 1], [], []>} : vector<24x208xbf16>, vector<208x384xbf16>, vector<24x384xf32> -> vector<24x384xf32>
    %548 = arith.addf %543, %547 : vector<24x384xf32>
    %c54_321 = arith.constant 54 : index
    %c0_322 = arith.constant 0 : index
    %549 = vector.load %arg13[%c54_321, %c0_322] : memref<104x208xbf16, #tpu.memory_space<vmem>>, vector<24x208xbf16>
    %c6_323 = arith.constant 6 : index
    %c0_324 = arith.constant 0 : index
    %c0_325 = arith.constant 0 : index
    %550 = vector.load %arg2[%c6_323, %c0_324, %c0_325] : memref<8x208x384xbf16, #tpu.memory_space<vmem>>, vector<1x208x384xbf16>
    %551 = vector.shape_cast %550 : vector<1x208x384xbf16> to vector<208x384xbf16>
    %cst_326 = arith.constant dense<0.000000e+00> : vector<24x384xf32>
    %552 = tpu.matmul %549, %551, %cst_326 {dimension_numbers = #tpu.dot_dimension_numbers<[1], [0], [0], [1], [0, 0, 1, 1], [], []>} : vector<24x208xbf16>, vector<208x384xbf16>, vector<24x384xf32> -> vector<24x384xf32>
    %553 = arith.addf %548, %552 : vector<24x384xf32>
    %c80_327 = arith.constant 80 : index
    %c0_328 = arith.constant 0 : index
    %554 = vector.load %arg13[%c80_327, %c0_328] : memref<104x208xbf16, #tpu.memory_space<vmem>>, vector<24x208xbf16>
    %c7_329 = arith.constant 7 : index
    %c0_330 = arith.constant 0 : index
    %c0_331 = arith.constant 0 : index
    %555 = vector.load %arg2[%c7_329, %c0_330, %c0_331] : memref<8x208x384xbf16, #tpu.memory_space<vmem>>, vector<1x208x384xbf16>
    %556 = vector.shape_cast %555 : vector<1x208x384xbf16> to vector<208x384xbf16>
    %cst_332 = arith.constant dense<0.000000e+00> : vector<24x384xf32>
    %557 = tpu.matmul %554, %556, %cst_332 {dimension_numbers = #tpu.dot_dimension_numbers<[1], [0], [0], [1], [0, 0, 1, 1], [], []>} : vector<24x208xbf16>, vector<208x384xbf16>, vector<24x384xf32> -> vector<24x384xf32>
    %558 = arith.addf %553, %557 : vector<24x384xf32>
    %c0_333 = arith.constant 0 : index
    %c0_334 = arith.constant 0 : index
    %559 = vector.load %arg3[%c0_333, %c0_334] : memref<1x384xf32, #tpu.memory_space<vmem>>, vector<1x384xf32>
    %560 = vector.broadcast %559 : vector<1x384xf32> to vector<24x384xf32>
    %561 = arith.addf %558, %560 : vector<24x384xf32>
    %cst_335 = arith.constant 0.000000e+00 : f32
    %562 = vector.broadcast %cst_335 : f32 to vector<24x384xf32>
    %563 = arith.maximumf %561, %562 : vector<24x384xf32>
    %564 = vector.extract_strided_slice %563 {offsets = [0, 0], sizes = [2, 384], strides = [1, 1]} : vector<24x384xf32> to vector<2x384xf32>
    %565 = arith.truncf %564 : vector<2x384xf32> to vector<2x384xbf16>
    %c0_336 = arith.constant 0 : index
    %c0_337 = arith.constant 0 : index
    %566 = vector.load %arg14[%c0_336, %c0_337] : memref<24x384xbf16, #tpu.memory_space<vmem>>, vector<2x384xbf16>
    tpu.vector_store %arg14[%c0_336, %c0_337], %565 {strides = array<i32>} : memref<24x384xbf16, #tpu.memory_space<vmem>>, vector<2x384xbf16>,
    %567 = vector.extract_strided_slice %563 {offsets = [2, 0], sizes = [2, 384], strides = [1, 1]} : vector<24x384xf32> to vector<2x384xf32>
    %568 = arith.truncf %567 : vector<2x384xf32> to vector<2x384xbf16>
    %c12_338 = arith.constant 12 : index
    %c0_339 = arith.constant 0 : index
    %569 = vector.load %arg14[%c12_338, %c0_339] : memref<24x384xbf16, #tpu.memory_space<vmem>>, vector<2x384xbf16>
    tpu.vector_store %arg14[%c12_338, %c0_339], %568 {strides = array<i32>} : memref<24x384xbf16, #tpu.memory_space<vmem>>, vector<2x384xbf16>,
    %570 = vector.extract_strided_slice %563 {offsets = [4, 0], sizes = [2, 384], strides = [1, 1]} : vector<24x384xf32> to vector<2x384xf32>
    %571 = arith.truncf %570 : vector<2x384xf32> to vector<2x384xbf16>
    %c2_340 = arith.constant 2 : index
    %c0_341 = arith.constant 0 : index
    %572 = vector.load %arg14[%c2_340, %c0_341] : memref<24x384xbf16, #tpu.memory_space<vmem>>, vector<2x384xbf16>
    tpu.vector_store %arg14[%c2_340, %c0_341], %571 {strides = array<i32>} : memref<24x384xbf16, #tpu.memory_space<vmem>>, vector<2x384xbf16>,
    %573 = vector.extract_strided_slice %563 {offsets = [6, 0], sizes = [2, 384], strides = [1, 1]} : vector<24x384xf32> to vector<2x384xf32>
    %574 = arith.truncf %573 : vector<2x384xf32> to vector<2x384xbf16>
    %c14_342 = arith.constant 14 : index
    %c0_343 = arith.constant 0 : index
    %575 = vector.load %arg14[%c14_342, %c0_343] : memref<24x384xbf16, #tpu.memory_space<vmem>>, vector<2x384xbf16>
    tpu.vector_store %arg14[%c14_342, %c0_343], %574 {strides = array<i32>} : memref<24x384xbf16, #tpu.memory_space<vmem>>, vector<2x384xbf16>,
    %576 = vector.extract_strided_slice %563 {offsets = [8, 0], sizes = [2, 384], strides = [1, 1]} : vector<24x384xf32> to vector<2x384xf32>
    %577 = arith.truncf %576 : vector<2x384xf32> to vector<2x384xbf16>
    %c4_344 = arith.constant 4 : index
    %c0_345 = arith.constant 0 : index
    %578 = vector.load %arg14[%c4_344, %c0_345] : memref<24x384xbf16, #tpu.memory_space<vmem>>, vector<2x384xbf16>
    tpu.vector_store %arg14[%c4_344, %c0_345], %577 {strides = array<i32>} : memref<24x384xbf16, #tpu.memory_space<vmem>>, vector<2x384xbf16>,
    %579 = vector.extract_strided_slice %563 {offsets = [10, 0], sizes = [2, 384], strides = [1, 1]} : vector<24x384xf32> to vector<2x384xf32>
    %580 = arith.truncf %579 : vector<2x384xf32> to vector<2x384xbf16>
    %c16_346 = arith.constant 16 : index
    %c0_347 = arith.constant 0 : index
    %581 = vector.load %arg14[%c16_346, %c0_347] : memref<24x384xbf16, #tpu.memory_space<vmem>>, vector<2x384xbf16>
    tpu.vector_store %arg14[%c16_346, %c0_347], %580 {strides = array<i32>} : memref<24x384xbf16, #tpu.memory_space<vmem>>, vector<2x384xbf16>,
    %582 = vector.extract_strided_slice %563 {offsets = [12, 0], sizes = [2, 384], strides = [1, 1]} : vector<24x384xf32> to vector<2x384xf32>
    %583 = arith.truncf %582 : vector<2x384xf32> to vector<2x384xbf16>
    %c6_348 = arith.constant 6 : index
    %c0_349 = arith.constant 0 : index
    %584 = vector.load %arg14[%c6_348, %c0_349] : memref<24x384xbf16, #tpu.memory_space<vmem>>, vector<2x384xbf16>
    tpu.vector_store %arg14[%c6_348, %c0_349], %583 {strides = array<i32>} : memref<24x384xbf16, #tpu.memory_space<vmem>>, vector<2x384xbf16>,
    %585 = vector.extract_strided_slice %563 {offsets = [14, 0], sizes = [2, 384], strides = [1, 1]} : vector<24x384xf32> to vector<2x384xf32>
    %586 = arith.truncf %585 : vector<2x384xf32> to vector<2x384xbf16>
    %c18_350 = arith.constant 18 : index
    %c0_351 = arith.constant 0 : index
    %587 = vector.load %arg14[%c18_350, %c0_351] : memref<24x384xbf16, #tpu.memory_space<vmem>>, vector<2x384xbf16>
    tpu.vector_store %arg14[%c18_350, %c0_351], %586 {strides = array<i32>} : memref<24x384xbf16, #tpu.memory_space<vmem>>, vector<2x384xbf16>,
    %588 = vector.extract_strided_slice %563 {offsets = [16, 0], sizes = [2, 384], strides = [1, 1]} : vector<24x384xf32> to vector<2x384xf32>
    %589 = arith.truncf %588 : vector<2x384xf32> to vector<2x384xbf16>
    %c8_352 = arith.constant 8 : index
    %c0_353 = arith.constant 0 : index
    %590 = vector.load %arg14[%c8_352, %c0_353] : memref<24x384xbf16, #tpu.memory_space<vmem>>, vector<2x384xbf16>
    tpu.vector_store %arg14[%c8_352, %c0_353], %589 {strides = array<i32>} : memref<24x384xbf16, #tpu.memory_space<vmem>>, vector<2x384xbf16>,
    %591 = vector.extract_strided_slice %563 {offsets = [18, 0], sizes = [2, 384], strides = [1, 1]} : vector<24x384xf32> to vector<2x384xf32>
    %592 = arith.truncf %591 : vector<2x384xf32> to vector<2x384xbf16>
    %c20_354 = arith.constant 20 : index
    %c0_355 = arith.constant 0 : index
    %593 = vector.load %arg14[%c20_354, %c0_355] : memref<24x384xbf16, #tpu.memory_space<vmem>>, vector<2x384xbf16>
    tpu.vector_store %arg14[%c20_354, %c0_355], %592 {strides = array<i32>} : memref<24x384xbf16, #tpu.memory_space<vmem>>, vector<2x384xbf16>,
    %594 = vector.extract_strided_slice %563 {offsets = [20, 0], sizes = [2, 384], strides = [1, 1]} : vector<24x384xf32> to vector<2x384xf32>
    %595 = arith.truncf %594 : vector<2x384xf32> to vector<2x384xbf16>
    %c10_356 = arith.constant 10 : index
    %c0_357 = arith.constant 0 : index
    %596 = vector.load %arg14[%c10_356, %c0_357] : memref<24x384xbf16, #tpu.memory_space<vmem>>, vector<2x384xbf16>
    tpu.vector_store %arg14[%c10_356, %c0_357], %595 {strides = array<i32>} : memref<24x384xbf16, #tpu.memory_space<vmem>>, vector<2x384xbf16>,
    %597 = vector.extract_strided_slice %563 {offsets = [22, 0], sizes = [2, 384], strides = [1, 1]} : vector<24x384xf32> to vector<2x384xf32>
    %598 = arith.truncf %597 : vector<2x384xf32> to vector<2x384xbf16>
    %c22_358 = arith.constant 22 : index
    %c0_359 = arith.constant 0 : index
    %599 = vector.load %arg14[%c22_358, %c0_359] : memref<24x384xbf16, #tpu.memory_space<vmem>>, vector<2x384xbf16>
    tpu.vector_store %arg14[%c22_358, %c0_359], %598 {strides = array<i32>} : memref<24x384xbf16, #tpu.memory_space<vmem>>, vector<2x384xbf16>,
    %c0_360 = arith.constant 0 : index
    %c0_361 = arith.constant 0 : index
    %600 = vector.load %arg14[%c0_360, %c0_361] : memref<24x384xbf16, #tpu.memory_space<vmem>>, vector<10x384xbf16>
    %c0_362 = arith.constant 0 : index
    %c0_363 = arith.constant 0 : index
    %c0_364 = arith.constant 0 : index
    %601 = vector.load %arg4[%c0_362, %c0_363, %c0_364] : memref<4x384x320xbf16, #tpu.memory_space<vmem>>, vector<1x384x320xbf16>
    %602 = vector.shape_cast %601 : vector<1x384x320xbf16> to vector<384x320xbf16>
    %cst_365 = arith.constant dense<0.000000e+00> : vector<10x320xf32>
    %603 = tpu.matmul %600, %602, %cst_365 {dimension_numbers = #tpu.dot_dimension_numbers<[1], [0], [0], [1], [0, 0, 1, 1], [], []>} : vector<10x384xbf16>, vector<384x320xbf16>, vector<10x320xf32> -> vector<10x320xf32>
    %c12_366 = arith.constant 12 : index
    %c0_367 = arith.constant 0 : index
    %604 = vector.load %arg14[%c12_366, %c0_367] : memref<24x384xbf16, #tpu.memory_space<vmem>>, vector<10x384xbf16>
    %c1_368 = arith.constant 1 : index
    %c0_369 = arith.constant 0 : index
    %c0_370 = arith.constant 0 : index
    %605 = vector.load %arg4[%c1_368, %c0_369, %c0_370] : memref<4x384x320xbf16, #tpu.memory_space<vmem>>, vector<1x384x320xbf16>
    %606 = vector.shape_cast %605 : vector<1x384x320xbf16> to vector<384x320xbf16>
    %cst_371 = arith.constant dense<0.000000e+00> : vector<10x320xf32>
    %607 = tpu.matmul %604, %606, %cst_371 {dimension_numbers = #tpu.dot_dimension_numbers<[1], [0], [0], [1], [0, 0, 1, 1], [], []>} : vector<10x384xbf16>, vector<384x320xbf16>, vector<10x320xf32> -> vector<10x320xf32>
    %608 = arith.addf %603, %607 : vector<10x320xf32>
    %c2_372 = arith.constant 2 : index
    %c0_373 = arith.constant 0 : index
    %609 = vector.load %arg14[%c2_372, %c0_373] : memref<24x384xbf16, #tpu.memory_space<vmem>>, vector<10x384xbf16>
    %c2_374 = arith.constant 2 : index
    %c0_375 = arith.constant 0 : index
    %c0_376 = arith.constant 0 : index
    %610 = vector.load %arg4[%c2_374, %c0_375, %c0_376] : memref<4x384x320xbf16, #tpu.memory_space<vmem>>, vector<1x384x320xbf16>
    %611 = vector.shape_cast %610 : vector<1x384x320xbf16> to vector<384x320xbf16>
    %cst_377 = arith.constant dense<0.000000e+00> : vector<10x320xf32>
    %612 = tpu.matmul %609, %611, %cst_377 {dimension_numbers = #tpu.dot_dimension_numbers<[1], [0], [0], [1], [0, 0, 1, 1], [], []>} : vector<10x384xbf16>, vector<384x320xbf16>, vector<10x320xf32> -> vector<10x320xf32>
    %613 = arith.addf %608, %612 : vector<10x320xf32>
    %c14_378 = arith.constant 14 : index
    %c0_379 = arith.constant 0 : index
    %614 = vector.load %arg14[%c14_378, %c0_379] : memref<24x384xbf16, #tpu.memory_space<vmem>>, vector<10x384xbf16>
    %c3_380 = arith.constant 3 : index
    %c0_381 = arith.constant 0 : index
    %c0_382 = arith.constant 0 : index
    %615 = vector.load %arg4[%c3_380, %c0_381, %c0_382] : memref<4x384x320xbf16, #tpu.memory_space<vmem>>, vector<1x384x320xbf16>
    %616 = vector.shape_cast %615 : vector<1x384x320xbf16> to vector<384x320xbf16>
    %cst_383 = arith.constant dense<0.000000e+00> : vector<10x320xf32>
    %617 = tpu.matmul %614, %616, %cst_383 {dimension_numbers = #tpu.dot_dimension_numbers<[1], [0], [0], [1], [0, 0, 1, 1], [], []>} : vector<10x384xbf16>, vector<384x320xbf16>, vector<10x320xf32> -> vector<10x320xf32>
    %618 = arith.addf %613, %617 : vector<10x320xf32>
    %c0_384 = arith.constant 0 : index
    %c0_385 = arith.constant 0 : index
    %619 = vector.load %arg5[%c0_384, %c0_385] : memref<1x320xf32, #tpu.memory_space<vmem>>, vector<1x320xf32>
    %620 = vector.broadcast %619 : vector<1x320xf32> to vector<10x320xf32>
    %621 = arith.addf %618, %620 : vector<10x320xf32>
    %cst_386 = arith.constant 0.000000e+00 : f32
    %622 = vector.broadcast %cst_386 : f32 to vector<10x320xf32>
    %623 = arith.maximumf %621, %622 : vector<10x320xf32>
    %624 = vector.extract_strided_slice %623 {offsets = [0, 0], sizes = [2, 320], strides = [1, 1]} : vector<10x320xf32> to vector<2x320xf32>
    %625 = arith.truncf %624 : vector<2x320xf32> to vector<2x320xbf16>
    %c0_387 = arith.constant 0 : index
    %c0_388 = arith.constant 0 : index
    %626 = vector.load %arg15[%c0_387, %c0_388] : memref<10x320xbf16, #tpu.memory_space<vmem>>, vector<2x320xbf16>
    tpu.vector_store %arg15[%c0_387, %c0_388], %625 {strides = array<i32>} : memref<10x320xbf16, #tpu.memory_space<vmem>>, vector<2x320xbf16>,
    %627 = vector.extract_strided_slice %623 {offsets = [2, 0], sizes = [2, 320], strides = [1, 1]} : vector<10x320xf32> to vector<2x320xf32>
    %628 = arith.truncf %627 : vector<2x320xf32> to vector<2x320xbf16>
    %c6_389 = arith.constant 6 : index
    %c0_390 = arith.constant 0 : index
    %629 = vector.load %arg15[%c6_389, %c0_390] : memref<10x320xbf16, #tpu.memory_space<vmem>>, vector<2x320xbf16>
    tpu.vector_store %arg15[%c6_389, %c0_390], %628 {strides = array<i32>} : memref<10x320xbf16, #tpu.memory_space<vmem>>, vector<2x320xbf16>,
    %630 = vector.extract_strided_slice %623 {offsets = [4, 0], sizes = [2, 320], strides = [1, 1]} : vector<10x320xf32> to vector<2x320xf32>
    %631 = arith.truncf %630 : vector<2x320xf32> to vector<2x320xbf16>
    %c2_391 = arith.constant 2 : index
    %c0_392 = arith.constant 0 : index
    %632 = vector.load %arg15[%c2_391, %c0_392] : memref<10x320xbf16, #tpu.memory_space<vmem>>, vector<2x320xbf16>
    tpu.vector_store %arg15[%c2_391, %c0_392], %631 {strides = array<i32>} : memref<10x320xbf16, #tpu.memory_space<vmem>>, vector<2x320xbf16>,
    %633 = vector.extract_strided_slice %623 {offsets = [6, 0], sizes = [2, 320], strides = [1, 1]} : vector<10x320xf32> to vector<2x320xf32>
    %634 = arith.truncf %633 : vector<2x320xf32> to vector<2x320xbf16>
    %c8_393 = arith.constant 8 : index
    %c0_394 = arith.constant 0 : index
    %635 = vector.load %arg15[%c8_393, %c0_394] : memref<10x320xbf16, #tpu.memory_space<vmem>>, vector<2x320xbf16>
    tpu.vector_store %arg15[%c8_393, %c0_394], %634 {strides = array<i32>} : memref<10x320xbf16, #tpu.memory_space<vmem>>, vector<2x320xbf16>,
    %636 = vector.extract_strided_slice %623 {offsets = [8, 0], sizes = [2, 320], strides = [1, 1]} : vector<10x320xf32> to vector<2x320xf32>
    %637 = arith.truncf %636 : vector<2x320xf32> to vector<2x320xbf16>
    %c4_395 = arith.constant 4 : index
    %c0_396 = arith.constant 0 : index
    %638 = vector.load %arg15[%c4_395, %c0_396] : memref<10x320xbf16, #tpu.memory_space<vmem>>, vector<2x320xbf16>
    tpu.vector_store %arg15[%c4_395, %c0_396], %637 {strides = array<i32>} : memref<10x320xbf16, #tpu.memory_space<vmem>>, vector<2x320xbf16>,
    %c0_397 = arith.constant 0 : index
    %c0_398 = arith.constant 0 : index
    %639 = vector.load %arg15[%c0_397, %c0_398] : memref<10x320xbf16, #tpu.memory_space<vmem>>, vector<2x320xbf16>
    %c0_399 = arith.constant 0 : index
    %c0_400 = arith.constant 0 : index
    %c0_401 = arith.constant 0 : index
    %640 = vector.load %arg6[%c0_399, %c0_400, %c0_401] : memref<4x320x64xbf16, #tpu.memory_space<vmem>>, vector<1x320x64xbf16>
    %641 = vector.shape_cast %640 : vector<1x320x64xbf16> to vector<320x64xbf16>
    %cst_402 = arith.constant dense<0.000000e+00> : vector<2x64xf32>
    %642 = tpu.matmul %639, %641, %cst_402 {dimension_numbers = #tpu.dot_dimension_numbers<[1], [0], [0], [1], [0, 0, 1, 1], [], []>} : vector<2x320xbf16>, vector<320x64xbf16>, vector<2x64xf32> -> vector<2x64xf32>
    %c6_403 = arith.constant 6 : index
    %c0_404 = arith.constant 0 : index
    %643 = vector.load %arg15[%c6_403, %c0_404] : memref<10x320xbf16, #tpu.memory_space<vmem>>, vector<2x320xbf16>
    %c1_405 = arith.constant 1 : index
    %c0_406 = arith.constant 0 : index
    %c0_407 = arith.constant 0 : index
    %644 = vector.load %arg6[%c1_405, %c0_406, %c0_407] : memref<4x320x64xbf16, #tpu.memory_space<vmem>>, vector<1x320x64xbf16>
    %645 = vector.shape_cast %644 : vector<1x320x64xbf16> to vector<320x64xbf16>
    %cst_408 = arith.constant dense<0.000000e+00> : vector<2x64xf32>
    %646 = tpu.matmul %643, %645, %cst_408 {dimension_numbers = #tpu.dot_dimension_numbers<[1], [0], [0], [1], [0, 0, 1, 1], [], []>} : vector<2x320xbf16>, vector<320x64xbf16>, vector<2x64xf32> -> vector<2x64xf32>
    %647 = arith.addf %642, %646 : vector<2x64xf32>
    %c2_409 = arith.constant 2 : index
    %c0_410 = arith.constant 0 : index
    %648 = vector.load %arg15[%c2_409, %c0_410] : memref<10x320xbf16, #tpu.memory_space<vmem>>, vector<2x320xbf16>
    %c2_411 = arith.constant 2 : index
    %c0_412 = arith.constant 0 : index
    %c0_413 = arith.constant 0 : index
    %649 = vector.load %arg6[%c2_411, %c0_412, %c0_413] : memref<4x320x64xbf16, #tpu.memory_space<vmem>>, vector<1x320x64xbf16>
    %650 = vector.shape_cast %649 : vector<1x320x64xbf16> to vector<320x64xbf16>
    %cst_414 = arith.constant dense<0.000000e+00> : vector<2x64xf32>
    %651 = tpu.matmul %648, %650, %cst_414 {dimension_numbers = #tpu.dot_dimension_numbers<[1], [0], [0], [1], [0, 0, 1, 1], [], []>} : vector<2x320xbf16>, vector<320x64xbf16>, vector<2x64xf32> -> vector<2x64xf32>
    %652 = arith.addf %647, %651 : vector<2x64xf32>
    %c8_415 = arith.constant 8 : index
    %c0_416 = arith.constant 0 : index
    %653 = vector.load %arg15[%c8_415, %c0_416] : memref<10x320xbf16, #tpu.memory_space<vmem>>, vector<2x320xbf16>
    %c3_417 = arith.constant 3 : index
    %c0_418 = arith.constant 0 : index
    %c0_419 = arith.constant 0 : index
    %654 = vector.load %arg6[%c3_417, %c0_418, %c0_419] : memref<4x320x64xbf16, #tpu.memory_space<vmem>>, vector<1x320x64xbf16>
    %655 = vector.shape_cast %654 : vector<1x320x64xbf16> to vector<320x64xbf16>
    %cst_420 = arith.constant dense<0.000000e+00> : vector<2x64xf32>
    %656 = tpu.matmul %653, %655, %cst_420 {dimension_numbers = #tpu.dot_dimension_numbers<[1], [0], [0], [1], [0, 0, 1, 1], [], []>} : vector<2x320xbf16>, vector<320x64xbf16>, vector<2x64xf32> -> vector<2x64xf32>
    %657 = arith.addf %652, %656 : vector<2x64xf32>
    %c0_421 = arith.constant 0 : index
    %c0_422 = arith.constant 0 : index
    %658 = vector.load %arg7[%c0_421, %c0_422] : memref<1x64xf32, #tpu.memory_space<vmem>>, vector<1x64xf32>
    %659 = vector.broadcast %658 : vector<1x64xf32> to vector<2x64xf32>
    %660 = arith.addf %657, %659 : vector<2x64xf32>
    %cst_423 = arith.constant 0.000000e+00 : f32
    %661 = vector.broadcast %cst_423 : f32 to vector<2x64xf32>
    %662 = arith.maximumf %660, %661 : vector<2x64xf32>
    %663 = arith.truncf %662 : vector<2x64xf32> to vector<2x64xbf16>
    %c0_424 = arith.constant 0 : index
    %c0_425 = arith.constant 0 : index
    %664 = vector.load %arg8[%c0_424, %c0_425] : memref<64x512xbf16, #tpu.memory_space<vmem>>, vector<64x512xbf16>
    %cst_426 = arith.constant dense<0.000000e+00> : vector<2x512xf32>
    %665 = tpu.matmul %663, %664, %cst_426 {dimension_numbers = #tpu.dot_dimension_numbers<[1], [0], [0], [1], [0, 0, 1, 1], [], []>} : vector<2x64xbf16>, vector<64x512xbf16>, vector<2x512xf32> -> vector<2x512xf32>
    %c0_427 = arith.constant 0 : index
    %c0_428 = arith.constant 0 : index
    %666 = vector.load %arg9[%c0_427, %c0_428] : memref<1x512xf32, #tpu.memory_space<vmem>>, vector<1x512xf32>
    %667 = vector.broadcast %666 : vector<1x512xf32> to vector<2x512xf32>
    %668 = arith.addf %665, %667 : vector<2x512xf32>
    %cst_429 = arith.constant 0.000000e+00 : f32
    %669 = vector.broadcast %cst_429 : f32 to vector<2x512xf32>
    %670 = arith.maximumf %668, %669 : vector<2x512xf32>
    %671 = arith.truncf %670 : vector<2x512xf32> to vector<2x512xbf16>
    %c0_430 = arith.constant 0 : index
    %c0_431 = arith.constant 0 : index
    %672 = vector.load %arg10[%c0_430, %c0_431] : memref<512x128xbf16, #tpu.memory_space<vmem>>, vector<512x128xbf16>
    %cst_432 = arith.constant dense<0.000000e+00> : vector<2x128xf32>
    %673 = tpu.matmul %671, %672, %cst_432 {dimension_numbers = #tpu.dot_dimension_numbers<[1], [0], [0], [1], [0, 0, 1, 1], [], []>} : vector<2x512xbf16>, vector<512x128xbf16>, vector<2x128xf32> -> vector<2x128xf32>
    %c0_433 = arith.constant 0 : index
    %c0_434 = arith.constant 0 : index
    %674 = vector.load %arg11[%c0_433, %c0_434] : memref<1x128xf32, #tpu.memory_space<vmem>>, vector<1x128xf32>
    %675 = vector.broadcast %674 : vector<1x128xf32> to vector<2x128xf32>
    %676 = arith.addf %673, %675 : vector<2x128xf32>
    %c0_435 = arith.constant 0 : index
    %c0_436 = arith.constant 0 : index
    %677 = vector.load %arg12[%c0_435, %c0_436] : memref<2x128xf32, #tpu.memory_space<vmem>>, vector<2x128xf32>
    tpu.vector_store %arg12[%c0_435, %c0_436], %676 {strides = array<i32>} : memref<2x128xf32, #tpu.memory_space<vmem>>, vector<2x128xf32>,
    return
  }
  func.func @transform_0(%arg0: i32) -> (i32, i32, i32) {
    %c0_i32 = arith.constant 0 : i32
    %c0_i32_0 = arith.constant 0 : i32
    %c0_i32_1 = arith.constant 0 : i32
    return %c0_i32, %arg0, %c0_i32_0 : i32, i32, i32
  }
  func.func @transform_1(%arg0: i32) -> (i32, i32, i32) {
    %c0_i32 = arith.constant 0 : i32
    %c0_i32_0 = arith.constant 0 : i32
    %c0_i32_1 = arith.constant 0 : i32
    %c0_i32_2 = arith.constant 0 : i32
    return %c0_i32, %c0_i32_0, %c0_i32_1 : i32, i32, i32
  }
  func.func @transform_2(%arg0: i32) -> (i32, i32) {
    %c0_i32 = arith.constant 0 : i32
    %c0_i32_0 = arith.constant 0 : i32
    %c0_i32_1 = arith.constant 0 : i32
    return %c0_i32, %c0_i32_0 : i32, i32
  }
  func.func @transform_3(%arg0: i32) -> (i32, i32, i32) {
    %c0_i32 = arith.constant 0 : i32
    %c0_i32_0 = arith.constant 0 : i32
    %c0_i32_1 = arith.constant 0 : i32
    %c0_i32_2 = arith.constant 0 : i32
    return %c0_i32, %c0_i32_0, %c0_i32_1 : i32, i32, i32
  }
  func.func @transform_4(%arg0: i32) -> (i32, i32) {
    %c0_i32 = arith.constant 0 : i32
    %c0_i32_0 = arith.constant 0 : i32
    %c0_i32_1 = arith.constant 0 : i32
    return %c0_i32, %c0_i32_0 : i32, i32
  }
  func.func @transform_5(%arg0: i32) -> (i32, i32, i32) {
    %c0_i32 = arith.constant 0 : i32
    %c0_i32_0 = arith.constant 0 : i32
    %c0_i32_1 = arith.constant 0 : i32
    %c0_i32_2 = arith.constant 0 : i32
    return %c0_i32, %c0_i32_0, %c0_i32_1 : i32, i32, i32
  }
  func.func @transform_6(%arg0: i32) -> (i32, i32) {
    %c0_i32 = arith.constant 0 : i32
    %c0_i32_0 = arith.constant 0 : i32
    %c0_i32_1 = arith.constant 0 : i32
    return %c0_i32, %c0_i32_0 : i32, i32
  }
  func.func @transform_7(%arg0: i32) -> (i32, i32) {
    %c0_i32 = arith.constant 0 : i32
    %c0_i32_0 = arith.constant 0 : i32
    %c0_i32_1 = arith.constant 0 : i32
    return %c0_i32, %c0_i32_0 : i32, i32
  }
  func.func @transform_8(%arg0: i32) -> (i32, i32) {
    %c0_i32 = arith.constant 0 : i32
    %c0_i32_0 = arith.constant 0 : i32
    %c0_i32_1 = arith.constant 0 : i32
    return %c0_i32, %c0_i32_0 : i32, i32
  }
  func.func @transform_9(%arg0: i32) -> (i32, i32) {
    %c0_i32 = arith.constant 0 : i32
    %c0_i32_0 = arith.constant 0 : i32
    %c0_i32_1 = arith.constant 0 : i32
    return %c0_i32, %c0_i32_0 : i32, i32
  }
  func.func @transform_10(%arg0: i32) -> (i32, i32) {
    %c0_i32 = arith.constant 0 : i32
    %c0_i32_0 = arith.constant 0 : i32
    %c0_i32_1 = arith.constant 0 : i32
    return %c0_i32, %c0_i32_0 : i32, i32
  }
  func.func @transform_11(%arg0: i32) -> (i32, i32) {
    %c0_i32 = arith.constant 0 : i32
    %c0_i32_0 = arith.constant 0 : i32
    return %arg0, %c0_i32 : i32, i32
  }
}

</mosaic_0001>

<llo_original>
// kernel: dqn_forward.1
$region0: #{dqn_forward.1}
  #allocation0 [shape = 'u32[]', space=smem, size = 0x4, offset = 0x4, fixed_abs, tag = 'smem constant byte address 0x4 - core index']
  #allocation1 [shape = 'u32[72,128]{1,0:T(1,128)}', space=vmem, size = 0x9000, scoped, tag = 'internal scratch']
  #allocation2 [shape = 'bf16[104,208]{1,0:T(8,128)(2,1)}', space=vmem, size = 0xd000, scoped, tag = 'scratch operand']
  #allocation3 [shape = 'bf16[24,384]{1,0:T(8,128)(2,1)}', space=vmem, size = 0x4800, scoped, tag = 'scratch operand']
  #allocation4 [shape = 'bf16[10,320]{1,0:T(8,128)(2,1)}', space=vmem, size = 0x3000, scoped, tag = 'scratch operand']
  %s0 = inlined_call_operand.vmem [shape: s8[52,2,208], index: 0, kind: input, shape index: {}]
  %s1 = inlined_call_operand.vmem [shape: bf16[8,208,384], index: 1, kind: input, shape index: {}]
  %s2 = inlined_call_operand.vmem [shape: f32[1,384], index: 2, kind: input, shape index: {}]
  %s3 = inlined_call_operand.vmem [shape: bf16[4,384,320], index: 3, kind: input, shape index: {}]
  %s4 = inlined_call_operand.vmem [shape: f32[1,320], index: 4, kind: input, shape index: {}]
  %s5 = inlined_call_operand.vmem [shape: bf16[4,320,64], index: 5, kind: input, shape index: {}]
  %s6 = inlined_call_operand.vmem [shape: f32[1,64], index: 6, kind: input, shape index: {}]
  %s7 = inlined_call_operand.vmem [shape: bf16[64,512], index: 7, kind: input, shape index: {}]
  %s8 = inlined_call_operand.vmem [shape: f32[1,512], index: 8, kind: input, shape index: {}]
  %s9 = inlined_call_operand.vmem [shape: bf16[512,128], index: 9, kind: input, shape index: {}]
  %s10 = inlined_call_operand.vmem [shape: f32[1,128], index: 10, kind: input, shape index: {}]
  %s11 = inlined_call_operand.vmem [shape: f32[2,128], index: 11, kind: output, shape index: {}]
  %s12 = sld [smem:[#allocation0]]
  $region54: #{dqn_forward.1} parent=0
    _
  %s14 = ssub.s32 1, %s12
  %s15 = scalar_select 0, %s14, %s12
  // Predicated region
  $region2: #{dqn_forward.1} parent=0 // pred_check
    _
  $region3: #{dqn_forward.1} parent=0 // pred_check_branch
    %17 = sbr.rel (0) target = $region5
  $region4: #{dqn_forward.1} parent=0 // pred_region
    _
  $region5: #{dqn_forward.1} parent=0 // pred_fallthru
    _
  // Predicated region
  $region6: #{dqn_forward.1} parent=0 // pred_check
    _
  $region7: #{dqn_forward.1} parent=0 // pred_check_branch
    %19 = sbr.rel (0) target = $region9
  $region8: #{dqn_forward.1} parent=0 // pred_region
    _
  $region9: #{dqn_forward.1} parent=0 // pred_fallthru
    _
  // Predicated region
  $region10: #{dqn_forward.1} parent=0 // pred_check
    _
  $region11: #{dqn_forward.1} parent=0 // pred_check_branch
    %21 = sbr.rel (0) target = $region13
  $region12: #{dqn_forward.1} parent=0 // pred_region
    _
  $region13: #{dqn_forward.1} parent=0 // pred_fallthru
    _
  // Predicated region
  $region14: #{dqn_forward.1} parent=0 // pred_check
    _
  $region15: #{dqn_forward.1} parent=0 // pred_check_branch
    %23 = sbr.rel (0) target = $region17
  $region16: #{dqn_forward.1} parent=0 // pred_region
    _
  $region17: #{dqn_forward.1} parent=0 // pred_fallthru
    _
  // Predicated region
  $region18: #{dqn_forward.1} parent=0 // pred_check
    _
  $region19: #{dqn_forward.1} parent=0 // pred_check_branch
    %25 = sbr.rel (0) target = $region21
  $region20: #{dqn_forward.1} parent=0 // pred_region
    _
  $region21: #{dqn_forward.1} parent=0 // pred_fallthru
    _
  // Predicated region
  $region22: #{dqn_forward.1} parent=0 // pred_check
    _
  $region23: #{dqn_forward.1} parent=0 // pred_check_branch
    %27 = sbr.rel (0) target = $region25
  $region24: #{dqn_forward.1} parent=0 // pred_region
    _
  $region25: #{dqn_forward.1} parent=0 // pred_fallthru
    _
  // Predicated region
  $region26: #{dqn_forward.1} parent=0 // pred_check
    _
  $region27: #{dqn_forward.1} parent=0 // pred_check_branch
    %29 = sbr.rel (0) target = $region29
  $region28: #{dqn_forward.1} parent=0 // pred_region
    _
  $region29: #{dqn_forward.1} parent=0 // pred_fallthru
    _
  // Predicated region
  $region30: #{dqn_forward.1} parent=0 // pred_check
    _
  $region31: #{dqn_forward.1} parent=0 // pred_check_branch
    %31 = sbr.rel (0) target = $region33
  $region32: #{dqn_forward.1} parent=0 // pred_region
    _
  $region33: #{dqn_forward.1} parent=0 // pred_fallthru
    _
  // Predicated region
  $region34: #{dqn_forward.1} parent=0 // pred_check
    _
  $region35: #{dqn_forward.1} parent=0 // pred_check_branch
    %33 = sbr.rel (0) target = $region37
  $region36: #{dqn_forward.1} parent=0 // pred_region
    _
  $region37: #{dqn_forward.1} parent=0 // pred_fallthru
    _
  // Predicated region
  $region38: #{dqn_forward.1} parent=0 // pred_check
    _
  $region39: #{dqn_forward.1} parent=0 // pred_check_branch
    %35 = sbr.rel (0) target = $region41
  $region40: #{dqn_forward.1} parent=0 // pred_region
    _
  $region41: #{dqn_forward.1} parent=0 // pred_fallthru
    _
  // Predicated region
  $region42: #{dqn_forward.1} parent=0 // pred_check
    _
  $region43: #{dqn_forward.1} parent=0 // pred_check_branch
    %37 = sbr.rel (0) target = $region45
  $region44: #{dqn_forward.1} parent=0 // pred_region
    _
  $region45: #{dqn_forward.1} parent=0 // pred_fallthru
    _
  %v39 = vld [vmem:[%s0] sm:$0x3]
  %v40 = vunpack.c.0.s8 %v39
  %v41 = vcvt.s32.f32 %v40
  %vm42 = vcmp.lt.f32.partialorder %v41, 0.0
  %v43 = vadd.f32 %v41, 256.0
  %v44 = vsel %vm42, %v43, %v41
  %46 = vst [vmem:[#allocation1] ss:$2 sm:$0xff] %v44
  %v47 = vld.sshfl [vmem:[#allocation1] sm:$0xff pattern:$0x75316420]
  %v48 = vld.sshfl [vmem:[#allocation1 + $0x8] sm:$0xff pattern:$0x75316420]
  %v51 = vpack.c.bf16 %v48, %v47
  %vm52 = vcmask 1040384
  %vm53 = vcmask 651268
  %vm54 = vmor %vm53, %vm52
  %55 = vst.msk [vmem:[#allocation2] sm:$0x11] %vm54, %v51
  %s56 = scalar_lea.vmem %s0, 2
  %v57 = vld [vmem:[%s56] sm:$0x3]
  %v58 = vunpack.c.0.s8 %v57
  %v59 = vcvt.s32.f32 %v58
  %vm60 = vcmp.lt.f32.partialorder %v59, 0.0
  %v61 = vadd.f32 %v59, 256.0
  %v62 = vsel %vm60, %v61, %v59
  %64 = vst [vmem:[#allocation1] ss:$2 sm:$0xff] %v62
  %v65 = vld.sshfl [vmem:[#allocation1] sm:$0xff pattern:$0x75316420]
  %v66 = vld.sshfl [vmem:[#allocation1 + $0x8] sm:$0xff pattern:$0x75316420]
  %v69 = vpack.c.bf16 %v66, %v65
  %v71 = vrot.slane %v69, 7
  %vm73 = vcmask 1041409
  %vm74 = vcmask 652293
  %vm75 = vmor %vm74, %vm73
  %76 = vst.msk [vmem:[#allocation2] sm:$0x22] %vm75, %v71
  %s77 = scalar_lea.vmem %s0, 4
  %v78 = vld [vmem:[%s77] sm:$0x3]
  %v79 = vunpack.c.0.s8 %v78
  %v80 = vcvt.s32.f32 %v79
  %vm81 = vcmp.lt.f32.partialorder %v80, 0.0
  %v82 = vadd.f32 %v80, 256.0
  %v83 = vsel %vm81, %v82, %v80
  %85 = vst [vmem:[#allocation1] ss:$2 sm:$0xff] %v83
  %v86 = vld.sshfl [vmem:[#allocation1] sm:$0xff pattern:$0x75316420]
  %v87 = vld.sshfl [vmem:[#allocation1 + $0x8] sm:$0xff pattern:$0x75316420]
  %v90 = vpack.c.bf16 %v87, %v86
  %v92 = vrot.slane %v90, 6
  %vm94 = vcmask 1042434
  %vm95 = vcmask 653318
  %vm96 = vmor %vm95, %vm94
  %97 = vst.msk [vmem:[#allocation2] sm:$0x44] %vm96, %v92
  %s98 = scalar_lea.vmem %s0, 6
  %v99 = vld [vmem:[%s98] sm:$0x3]
  %v100 = vunpack.c.0.s8 %v99
  %v101 = vcvt.s32.f32 %v100
  %vm102 = vcmp.lt.f32.partialorder %v101, 0.0
  %v103 = vadd.f32 %v101, 256.0
  %v104 = vsel %vm102, %v103, %v101
  %106 = vst [vmem:[#allocation1] ss:$2 sm:$0xff] %v104
  %v107 = vld.sshfl [vmem:[#allocation1] sm:$0xff pattern:$0x75316420]
  %v108 = vld.sshfl [vmem:[#allocation1 + $0x8] sm:$0xff pattern:$0x75316420]
  %v111 = vpack.c.bf16 %v108, %v107
  %v113 = vrot.slane %v111, 5
  %vm115 = vcmask 1043459
  %vm116 = vcmask 654343
  %vm117 = vmor %vm116, %vm115
  %118 = vst.msk [vmem:[#allocation2] sm:$0x88] %vm117, %v113
  %s119 = scalar_lea.vmem %s0, 8
  %v120 = vld [vmem:[%s119] sm:$0x3]
  %v121 = vunpack.c.0.s8 %v120
  %v122 = vcvt.s32.f32 %v121
  %vm123 = vcmp.lt.f32.partialorder %v122, 0.0
  %v124 = vadd.f32 %v122, 256.0
  %v125 = vsel %vm123, %v124, %v122
  %127 = vst [vmem:[#allocation1] ss:$2 sm:$0xff] %v125
  %v128 = vld.sshfl [vmem:[#allocation1] sm:$0xff pattern:$0x75316420]
  %v129 = vld.sshfl [vmem:[#allocation1 + $0x8] sm:$0xff pattern:$0x75316420]
  %v132 = vpack.c.bf16 %v129, %v128
  %133 = vst.msk [vmem:[#allocation2 + $0x8] sm:$0x11] %vm54, %v132
  %s134 = scalar_lea.vmem %s0, 10
  %v135 = vld [vmem:[%s134] sm:$0x3]
  %v136 = vunpack.c.0.s8 %v135
  %v137 = vcvt.s32.f32 %v136
  %vm138 = vcmp.lt.f32.partialorder %v137, 0.0
  %v139 = vadd.f32 %v137, 256.0
  %v140 = vsel %vm138, %v139, %v137
  %142 = vst [vmem:[#allocation1] ss:$2 sm:$0xff] %v140
  %v143 = vld.sshfl [vmem:[#allocation1] sm:$0xff pattern:$0x75316420]
  %v144 = vld.sshfl [vmem:[#allocation1 + $0x8] sm:$0xff pattern:$0x75316420]
  %v147 = vpack.c.bf16 %v144, %v143
  %v149 = vrot.slane %v147, 7
  %151 = vst.msk [vmem:[#allocation2 + $0x8] sm:$0x22] %vm75, %v149
  %s152 = scalar_lea.vmem %s0, 12
  %v153 = vld [vmem:[%s152] sm:$0x3]
  %v154 = vunpack.c.0.s8 %v153
  %v155 = vcvt.s32.f32 %v154
  %vm156 = vcmp.lt.f32.partialorder %v155, 0.0
  %v157 = vadd.f32 %v155, 256.0
  %v158 = vsel %vm156, %v157, %v155
  %160 = vst [vmem:[#allocation1] ss:$2 sm:$0xff] %v158
  %v161 = vld.sshfl [vmem:[#allocation1] sm:$0xff pattern:$0x75316420]
  %v162 = vld.sshfl [vmem:[#allocation1 + $0x8] sm:$0xff pattern:$0x75316420]
  %v165 = vpack.c.bf16 %v162, %v161
  %v167 = vrot.slane %v165, 6
  %169 = vst.msk [vmem:[#allocation2 + $0x8] sm:$0x44] %vm96, %v167
  %s170 = scalar_lea.vmem %s0, 14
  %v171 = vld [vmem:[%s170] sm:$0x3]
  %v172 = vunpack.c.0.s8 %v171
  %v173 = vcvt.s32.f32 %v172
  %vm174 = vcmp.lt.f32.partialorder %v173, 0.0
  %v175 = vadd.f32 %v173, 256.0
  %v176 = vsel %vm174, %v175, %v173
  %178 = vst [vmem:[#allocation1] ss:$2 sm:$0xff] %v176
  %v179 = vld.sshfl [vmem:[#allocation1] sm:$0xff pattern:$0x75316420]
  %v180 = vld.sshfl [vmem:[#allocation1 + $0x8] sm:$0xff pattern:$0x75316420]
  %v183 = vpack.c.bf16 %v180, %v179
  %v185 = vrot.slane %v183, 5
  %187 = vst.msk [vmem:[#allocation2 + $0x8] sm:$0x88] %vm117, %v185
  %s188 = scalar_lea.vmem %s0, 16
  %v189 = vld [vmem:[%s188] sm:$0x3]
  %v190 = vunpack.c.0.s8 %v189
  %v191 = vcvt.s32.f32 %v190
  %vm192 = vcmp.lt.f32.partialorder %v191, 0.0
  %v193 = vadd.f32 %v191, 256.0
  %v194 = vsel %vm192, %v193, %v191
  %196 = vst [vmem:[#allocation1] ss:$2 sm:$0xff] %v194
  %v197 = vld.sshfl [vmem:[#allocation1] sm:$0xff pattern:$0x75316420]
  %v198 = vld.sshfl [vmem:[#allocation1 + $0x8] sm:$0xff pattern:$0x75316420]
  %v201 = vpack.c.bf16 %v198, %v197
  %202 = vst.msk [vmem:[#allocation2 + $0x10] sm:$0x11] %vm54, %v201
  %s203 = scalar_lea.vmem %s0, 18
  %v204 = vld [vmem:[%s203] sm:$0x3]
  %v205 = vunpack.c.0.s8 %v204
  %v206 = vcvt.s32.f32 %v205
  %vm207 = vcmp.lt.f32.partialorder %v206, 0.0
  %v208 = vadd.f32 %v206, 256.0
  %v209 = vsel %vm207, %v208, %v206
  %211 = vst [vmem:[#allocation1] ss:$2 sm:$0xff] %v209
  %v212 = vld.sshfl [vmem:[#allocation1] sm:$0xff pattern:$0x75316420]
  %v213 = vld.sshfl [vmem:[#allocation1 + $0x8] sm:$0xff pattern:$0x75316420]
  %v216 = vpack.c.bf16 %v213, %v212
  %v218 = vrot.slane %v216, 7
  %220 = vst.msk [vmem:[#allocation2 + $0x10] sm:$0x22] %vm75, %v218
  %s221 = scalar_lea.vmem %s0, 20
  %v222 = vld [vmem:[%s221] sm:$0x3]
  %v223 = vunpack.c.0.s8 %v222
  %v224 = vcvt.s32.f32 %v223
  %vm225 = vcmp.lt.f32.partialorder %v224, 0.0
  %v226 = vadd.f32 %v224, 256.0
  %v227 = vsel %vm225, %v226, %v224
  %229 = vst [vmem:[#allocation1] ss:$2 sm:$0xff] %v227
  %v230 = vld.sshfl [vmem:[#allocation1] sm:$0xff pattern:$0x75316420]
  %v231 = vld.sshfl [vmem:[#allocation1 + $0x8] sm:$0xff pattern:$0x75316420]
  %v234 = vpack.c.bf16 %v231, %v230
  %v236 = vrot.slane %v234, 6
  %238 = vst.msk [vmem:[#allocation2 + $0x10] sm:$0x44] %vm96, %v236
  %s239 = scalar_lea.vmem %s0, 22
  %v240 = vld [vmem:[%s239] sm:$0x3]
  %v241 = vunpack.c.0.s8 %v240
  %v242 = vcvt.s32.f32 %v241
  %vm243 = vcmp.lt.f32.partialorder %v242, 0.0
  %v244 = vadd.f32 %v242, 256.0
  %v245 = vsel %vm243, %v244, %v242
  %247 = vst [vmem:[#allocation1] ss:$2 sm:$0xff] %v245
  %v248 = vld.sshfl [vmem:[#allocation1] sm:$0xff pattern:$0x75316420]
  %v249 = vld.sshfl [vmem:[#allocation1 + $0x8] sm:$0xff pattern:$0x75316420]
  %v252 = vpack.c.bf16 %v249, %v248
  %v254 = vrot.slane %v252, 5
  %256 = vst.msk [vmem:[#allocation2 + $0x10] sm:$0x88] %vm117, %v254
  %s257 = scalar_lea.vmem %s0, 24
  %v258 = vld [vmem:[%s257] sm:$0x3]
  %v259 = vunpack.c.0.s8 %v258
  %v260 = vcvt.s32.f32 %v259
  %vm261 = vcmp.lt.f32.partialorder %v260, 0.0
  %v262 = vadd.f32 %v260, 256.0
  %v263 = vsel %vm261, %v262, %v260
  %265 = vst [vmem:[#allocation1] ss:$2 sm:$0xff] %v263
  %v266 = vld.sshfl [vmem:[#allocation1] sm:$0xff pattern:$0x75316420]
  %v267 = vld.sshfl [vmem:[#allocation1 + $0x8] sm:$0xff pattern:$0x75316420]
  %v270 = vpack.c.bf16 %v267, %v266
  %271 = vst.msk [vmem:[#allocation2 + $0x18] sm:$0x11] %vm54, %v270
  %s272 = scalar_lea.vmem %s0, 26
  %v273 = vld [vmem:[%s272] sm:$0x3]
  %v274 = vunpack.c.0.s8 %v273
  %v275 = vcvt.s32.f32 %v274
  %vm276 = vcmp.lt.f32.partialorder %v275, 0.0
  %v277 = vadd.f32 %v275, 256.0
  %v278 = vsel %vm276, %v277, %v275
  %280 = vst [vmem:[#allocation1] ss:$2 sm:$0xff] %v278
  %v281 = vld.sshfl [vmem:[#allocation1] sm:$0xff pattern:$0x75316420]
  %v282 = vld.sshfl [vmem:[#allocation1 + $0x8] sm:$0xff pattern:$0x75316420]
  %v285 = vpack.c.bf16 %v282, %v281
  %v287 = vrot.slane %v285, 7
  %289 = vst.msk [vmem:[#allocation2 + $0x18] sm:$0x22] %vm75, %v287
  %s290 = scalar_lea.vmem %s0, 28
  %v291 = vld [vmem:[%s290] sm:$0x3]
  %v292 = vunpack.c.0.s8 %v291
  %v293 = vcvt.s32.f32 %v292
  %vm294 = vcmp.lt.f32.partialorder %v293, 0.0
  %v295 = vadd.f32 %v293, 256.0
  %v296 = vsel %vm294, %v295, %v293
  %298 = vst [vmem:[#allocation1] ss:$2 sm:$0xff] %v296
  %v299 = vld.sshfl [vmem:[#allocation1] sm:$0xff pattern:$0x75316420]
  %v300 = vld.sshfl [vmem:[#allocation1 + $0x8] sm:$0xff pattern:$0x75316420]
  %v303 = vpack.c.bf16 %v300, %v299
  %v305 = vrot.slane %v303, 6
  %307 = vst.msk [vmem:[#allocation2 + $0x18] sm:$0x44] %vm96, %v305
  %s308 = scalar_lea.vmem %s0, 30
  %v309 = vld [vmem:[%s308] sm:$0x3]
  %v310 = vunpack.c.0.s8 %v309
  %v311 = vcvt.s32.f32 %v310
  %vm312 = vcmp.lt.f32.partialorder %v311, 0.0
  %v313 = vadd.f32 %v311, 256.0
  %v314 = vsel %vm312, %v313, %v311
  %316 = vst [vmem:[#allocation1] ss:$2 sm:$0xff] %v314
  %v317 = vld.sshfl [vmem:[#allocation1] sm:$0xff pattern:$0x75316420]
  %v318 = vld.sshfl [vmem:[#allocation1 + $0x8] sm:$0xff pattern:$0x75316420]
  %v321 = vpack.c.bf16 %v318, %v317
  %v323 = vrot.slane %v321, 5
  %325 = vst.msk [vmem:[#allocation2 + $0x18] sm:$0x88] %vm117, %v323
  %s326 = scalar_lea.vmem %s0, 32
  %v327 = vld [vmem:[%s326] sm:$0x3]
  %v328 = vunpack.c.0.s8 %v327
  %v329 = vcvt.s32.f32 %v328
  %vm330 = vcmp.lt.f32.partialorder %v329, 0.0
  %v331 = vadd.f32 %v329, 256.0
  %v332 = vsel %vm330, %v331, %v329
  %334 = vst [vmem:[#allocation1] ss:$2 sm:$0xff] %v332
  %v335 = vld.sshfl [vmem:[#allocation1] sm:$0xff pattern:$0x75316420]
  %v336 = vld.sshfl [vmem:[#allocation1 + $0x8] sm:$0xff pattern:$0x75316420]
  %v339 = vpack.c.bf16 %v336, %v335
  %340 = vst.msk [vmem:[#allocation2 + $0x20] sm:$0x11] %vm54, %v339
  %s341 = scalar_lea.vmem %s0, 34
  %v342 = vld [vmem:[%s341] sm:$0x3]
  %v343 = vunpack.c.0.s8 %v342
  %v344 = vcvt.s32.f32 %v343
  %vm345 = vcmp.lt.f32.partialorder %v344, 0.0
  %v346 = vadd.f32 %v344, 256.0
  %v347 = vsel %vm345, %v346, %v344
  %349 = vst [vmem:[#allocation1] ss:$2 sm:$0xff] %v347
  %v350 = vld.sshfl [vmem:[#allocation1] sm:$0xff pattern:$0x75316420]
  %v351 = vld.sshfl [vmem:[#allocation1 + $0x8] sm:$0xff pattern:$0x75316420]
  %v354 = vpack.c.bf16 %v351, %v350
  %v356 = vrot.slane %v354, 7
  %358 = vst.msk [vmem:[#allocation2 + $0x20] sm:$0x22] %vm75, %v356
  %s359 = scalar_lea.vmem %s0, 36
  %v360 = vld [vmem:[%s359] sm:$0x3]
  %v361 = vunpack.c.0.s8 %v360
  %v362 = vcvt.s32.f32 %v361
  %vm363 = vcmp.lt.f32.partialorder %v362, 0.0
  %v364 = vadd.f32 %v362, 256.0
  %v365 = vsel %vm363, %v364, %v362
  %367 = vst [vmem:[#allocation1] ss:$2 sm:$0xff] %v365
  %v368 = vld.sshfl [vmem:[#allocation1] sm:$0xff pattern:$0x75316420]
  %v369 = vld.sshfl [vmem:[#allocation1 + $0x8] sm:$0xff pattern:$0x75316420]
  %v372 = vpack.c.bf16 %v369, %v368
  %v374 = vrot.slane %v372, 6
  %376 = vst.msk [vmem:[#allocation2 + $0x20] sm:$0x44] %vm96, %v374
  %s377 = scalar_lea.vmem %s0, 38
  %v378 = vld [vmem:[%s377] sm:$0x3]
  %v379 = vunpack.c.0.s8 %v378
  %v380 = vcvt.s32.f32 %v379
  %vm381 = vcmp.lt.f32.partialorder %v380, 0.0
  %v382 = vadd.f32 %v380, 256.0
  %v383 = vsel %vm381, %v382, %v380
  %385 = vst [vmem:[#allocation1] ss:$2 sm:$0xff] %v383
  %v386 = vld.sshfl [vmem:[#allocation1] sm:$0xff pattern:$0x75316420]
  %v387 = vld.sshfl [vmem:[#allocation1 + $0x8] sm:$0xff pattern:$0x75316420]
  %v390 = vpack.c.bf16 %v387, %v386
  %v392 = vrot.slane %v390, 5
  %394 = vst.msk [vmem:[#allocation2 + $0x20] sm:$0x88] %vm117, %v392
  %s395 = scalar_lea.vmem %s0, 40
  %v396 = vld [vmem:[%s395] sm:$0x3]
  %v397 = vunpack.c.0.s8 %v396
  %v398 = vcvt.s32.f32 %v397
  %vm399 = vcmp.lt.f32.partialorder %v398, 0.0
  %v400 = vadd.f32 %v398, 256.0
  %v401 = vsel %vm399, %v400, %v398
  %403 = vst [vmem:[#allocation1] ss:$2 sm:$0xff] %v401
  %v404 = vld.sshfl [vmem:[#allocation1] sm:$0xff pattern:$0x75316420]
  %v405 = vld.sshfl [vmem:[#allocation1 + $0x8] sm:$0xff pattern:$0x75316420]
  %v408 = vpack.c.bf16 %v405, %v404
  %409 = vst.msk [vmem:[#allocation2 + $0x28] sm:$0x11] %vm54, %v408
  %s410 = scalar_lea.vmem %s0, 42
  %v411 = vld [vmem:[%s410] sm:$0x3]
  %v412 = vunpack.c.0.s8 %v411
  %v413 = vcvt.s32.f32 %v412
  %vm414 = vcmp.lt.f32.partialorder %v413, 0.0
  %v415 = vadd.f32 %v413, 256.0
  %v416 = vsel %vm414, %v415, %v413
  %418 = vst [vmem:[#allocation1] ss:$2 sm:$0xff] %v416
  %v419 = vld.sshfl [vmem:[#allocation1] sm:$0xff pattern:$0x75316420]
  %v420 = vld.sshfl [vmem:[#allocation1 + $0x8] sm:$0xff pattern:$0x75316420]
  %v423 = vpack.c.bf16 %v420, %v419
  %v425 = vrot.slane %v423, 7
  %427 = vst.msk [vmem:[#allocation2 + $0x28] sm:$0x22] %vm75, %v425
  %s428 = scalar_lea.vmem %s0, 44
  %v429 = vld [vmem:[%s428] sm:$0x3]
  %v430 = vunpack.c.0.s8 %v429
  %v431 = vcvt.s32.f32 %v430
  %vm432 = vcmp.lt.f32.partialorder %v431, 0.0
  %v433 = vadd.f32 %v431, 256.0
  %v434 = vsel %vm432, %v433, %v431
  %436 = vst [vmem:[#allocation1] ss:$2 sm:$0xff] %v434
  %v437 = vld.sshfl [vmem:[#allocation1] sm:$0xff pattern:$0x75316420]
  %v438 = vld.sshfl [vmem:[#allocation1 + $0x8] sm:$0xff pattern:$0x75316420]
  %v441 = vpack.c.bf16 %v438, %v437
  %v443 = vrot.slane %v441, 6
  %445 = vst.msk [vmem:[#allocation2 + $0x28] sm:$0x44] %vm96, %v443
  %s446 = scalar_lea.vmem %s0, 46
  %v447 = vld [vmem:[%s446] sm:$0x3]
  %v448 = vunpack.c.0.s8 %v447
  %v449 = vcvt.s32.f32 %v448
  %vm450 = vcmp.lt.f32.partialorder %v449, 0.0
  %v451 = vadd.f32 %v449, 256.0
  %v452 = vsel %vm450, %v451, %v449
  %454 = vst [vmem:[#allocation1] ss:$2 sm:$0xff] %v452
  %v455 = vld.sshfl [vmem:[#allocation1] sm:$0xff pattern:$0x75316420]
  %v456 = vld.sshfl [vmem:[#allocation1 + $0x8] sm:$0xff pattern:$0x75316420]
  %v459 = vpack.c.bf16 %v456, %v455
  %v461 = vrot.slane %v459, 5
  %463 = vst.msk [vmem:[#allocation2 + $0x28] sm:$0x88] %vm117, %v461
  %s464 = scalar_lea.vmem %s0, 48
  %v465 = vld [vmem:[%s464] sm:$0x3]
  %v466 = vunpack.c.0.s8 %v465
  %v467 = vcvt.s32.f32 %v466
  %vm468 = vcmp.lt.f32.partialorder %v467, 0.0
  %v469 = vadd.f32 %v467, 256.0
  %v470 = vsel %vm468, %v469, %v467
  %472 = vst [vmem:[#allocation1] ss:$2 sm:$0xff] %v470
  %v473 = vld.sshfl [vmem:[#allocation1] sm:$0xff pattern:$0x75316420]
  %v474 = vld.sshfl [vmem:[#allocation1 + $0x8] sm:$0xff pattern:$0x75316420]
  %v477 = vpack.c.bf16 %v474, %v473
  %478 = vst.msk [vmem:[#allocation2 + $0x30] sm:$0x11] %vm54, %v477
  %s479 = scalar_lea.vmem %s0, 50
  %v480 = vld [vmem:[%s479] sm:$0x3]
  %v481 = vunpack.c.0.s8 %v480
  %v482 = vcvt.s32.f32 %v481
  %vm483 = vcmp.lt.f32.partialorder %v482, 0.0
  %v484 = vadd.f32 %v482, 256.0
  %v485 = vsel %vm483, %v484, %v482
  %487 = vst [vmem:[#allocation1] ss:$2 sm:$0xff] %v485
  %v488 = vld.sshfl [vmem:[#allocation1] sm:$0xff pattern:$0x75316420]
  %v489 = vld.sshfl [vmem:[#allocation1 + $0x8] sm:$0xff pattern:$0x75316420]
  %v492 = vpack.c.bf16 %v489, %v488
  %v494 = vrot.slane %v492, 7
  %496 = vst.msk [vmem:[#allocation2 + $0x30] sm:$0x22] %vm75, %v494
  %s497 = scalar_lea.vmem %s0, 52
  %v498 = vld [vmem:[%s497] sm:$0x3]
  %v499 = vunpack.c.0.s8 %v498
  %v500 = vcvt.s32.f32 %v499
  %vm501 = vcmp.lt.f32.partialorder %v500, 0.0
  %v502 = vadd.f32 %v500, 256.0
  %v503 = vsel %vm501, %v502, %v500
  %505 = vst [vmem:[#allocation1] ss:$2 sm:$0xff] %v503
  %v506 = vld.sshfl [vmem:[#allocation1] sm:$0xff pattern:$0x75316420]
  %v507 = vld.sshfl [vmem:[#allocation1 + $0x8] sm:$0xff pattern:$0x75316420]
  %v510 = vpack.c.bf16 %v507, %v506
  %v512 = vrot.slane %v510, 6
  %514 = vst.msk [vmem:[#allocation2 + $0x30] sm:$0x44] %vm96, %v512
  %s515 = scalar_lea.vmem %s0, 54
  %v516 = vld [vmem:[%s515] sm:$0x3]
  %v517 = vunpack.c.0.s8 %v516
  %v518 = vcvt.s32.f32 %v517
  %vm519 = vcmp.lt.f32.partialorder %v518, 0.0
  %v520 = vadd.f32 %v518, 256.0
  %v521 = vsel %vm519, %v520, %v518
  %523 = vst [vmem:[#allocation1] ss:$2 sm:$0xff] %v521
  %v524 = vld.sshfl [vmem:[#allocation1] sm:$0xff pattern:$0x75316420]
  %v525 = vld.sshfl [vmem:[#allocation1 + $0x8] sm:$0xff pattern:$0x75316420]
  %v528 = vpack.c.bf16 %v525, %v524
  %v530 = vrot.slane %v528, 5
  %532 = vst.msk [vmem:[#allocation2 + $0x30] sm:$0x88] %vm117, %v530
  %s533 = scalar_lea.vmem %s0, 56
  %v534 = vld [vmem:[%s533] sm:$0x3]
  %v535 = vunpack.c.0.s8 %v534
  %v536 = vcvt.s32.f32 %v535
  %vm537 = vcmp.lt.f32.partialorder %v536, 0.0
  %v538 = vadd.f32 %v536, 256.0
  %v539 = vsel %vm537, %v538, %v536
  %541 = vst [vmem:[#allocation1] ss:$2 sm:$0xff] %v539
  %v542 = vld.sshfl [vmem:[#allocation1] sm:$0xff pattern:$0x75316420]
  %v543 = vld.sshfl [vmem:[#allocation1 + $0x8] sm:$0xff pattern:$0x75316420]
  %v546 = vpack.c.bf16 %v543, %v542
  %547 = vst.msk [vmem:[#allocation2 + $0x38] sm:$0x11] %vm54, %v546
  %s548 = scalar_lea.vmem %s0, 58
  %v549 = vld [vmem:[%s548] sm:$0x3]
  %v550 = vunpack.c.0.s8 %v549
  %v551 = vcvt.s32.f32 %v550
  %vm552 = vcmp.lt.f32.partialorder %v551, 0.0
  %v553 = vadd.f32 %v551, 256.0
  %v554 = vsel %vm552, %v553, %v551
  %556 = vst [vmem:[#allocation1] ss:$2 sm:$0xff] %v554
  %v557 = vld.sshfl [vmem:[#allocation1] sm:$0xff pattern:$0x75316420]
  %v558 = vld.sshfl [vmem:[#allocation1 + $0x8] sm:$0xff pattern:$0x75316420]
  %v561 = vpack.c.bf16 %v558, %v557
  %v563 = vrot.slane %v561, 7
  %565 = vst.msk [vmem:[#allocation2 + $0x38] sm:$0x22] %vm75, %v563
  %s566 = scalar_lea.vmem %s0, 60
  %v567 = vld [vmem:[%s566] sm:$0x3]
  %v568 = vunpack.c.0.s8 %v567
  %v569 = vcvt.s32.f32 %v568
  %vm570 = vcmp.lt.f32.partialorder %v569, 0.0
  %v571 = vadd.f32 %v569, 256.0
  %v572 = vsel %vm570, %v571, %v569
  %574 = vst [vmem:[#allocation1] ss:$2 sm:$0xff] %v572
  %v575 = vld.sshfl [vmem:[#allocation1] sm:$0xff pattern:$0x75316420]
  %v576 = vld.sshfl [vmem:[#allocation1 + $0x8] sm:$0xff pattern:$0x75316420]
  %v579 = vpack.c.bf16 %v576, %v575
  %v581 = vrot.slane %v579, 6
  %583 = vst.msk [vmem:[#allocation2 + $0x38] sm:$0x44] %vm96, %v581
  %s584 = scalar_lea.vmem %s0, 62
  %v585 = vld [vmem:[%s584] sm:$0x3]
  %v586 = vunpack.c.0.s8 %v585
  %v587 = vcvt.s32.f32 %v586
  %vm588 = vcmp.lt.f32.partialorder %v587, 0.0
  %v589 = vadd.f32 %v587, 256.0
  %v590 = vsel %vm588, %v589, %v587
  %592 = vst [vmem:[#allocation1] ss:$2 sm:$0xff] %v590
  %v593 = vld.sshfl [vmem:[#allocation1] sm:$0xff pattern:$0x75316420]
  %v594 = vld.sshfl [vmem:[#allocation1 + $0x8] sm:$0xff pattern:$0x75316420]
  %v597 = vpack.c.bf16 %v594, %v593
  %v599 = vrot.slane %v597, 5
  %601 = vst.msk [vmem:[#allocation2 + $0x38] sm:$0x88] %vm117, %v599
  %s602 = scalar_lea.vmem %s0, 64
  %v603 = vld [vmem:[%s602] sm:$0x3]
  %v604 = vunpack.c.0.s8 %v603
  %v605 = vcvt.s32.f32 %v604
  %vm606 = vcmp.lt.f32.partialorder %v605, 0.0
  %v607 = vadd.f32 %v605, 256.0
  %v608 = vsel %vm606, %v607, %v605
  %610 = vst [vmem:[#allocation1] ss:$2 sm:$0xff] %v608
  %v611 = vld.sshfl [vmem:[#allocation1] sm:$0xff pattern:$0x75316420]
  %v612 = vld.sshfl [vmem:[#allocation1 + $0x8] sm:$0xff pattern:$0x75316420]
  %v615 = vpack.c.bf16 %v612, %v611
  %616 = vst.msk [vmem:[#allocation2 + $0x40] sm:$0x11] %vm54, %v615
  %s617 = scalar_lea.vmem %s0, 66
  %v618 = vld [vmem:[%s617] sm:$0x3]
  %v619 = vunpack.c.0.s8 %v618
  %v620 = vcvt.s32.f32 %v619
  %vm621 = vcmp.lt.f32.partialorder %v620, 0.0
  %v622 = vadd.f32 %v620, 256.0
  %v623 = vsel %vm621, %v622, %v620
  %625 = vst [vmem:[#allocation1] ss:$2 sm:$0xff] %v623
  %v626 = vld.sshfl [vmem:[#allocation1] sm:$0xff pattern:$0x75316420]
  %v627 = vld.sshfl [vmem:[#allocation1 + $0x8] sm:$0xff pattern:$0x75316420]
  %v630 = vpack.c.bf16 %v627, %v626
  %v632 = vrot.slane %v630, 7
  %634 = vst.msk [vmem:[#allocation2 + $0x40] sm:$0x22] %vm75, %v632
  %s635 = scalar_lea.vmem %s0, 68
  %v636 = vld [vmem:[%s635] sm:$0x3]
  %v637 = vunpack.c.0.s8 %v636
  %v638 = vcvt.s32.f32 %v637
  %vm639 = vcmp.lt.f32.partialorder %v638, 0.0
  %v640 = vadd.f32 %v638, 256.0
  %v641 = vsel %vm639, %v640, %v638
  %643 = vst [vmem:[#allocation1] ss:$2 sm:$0xff] %v641
  %v644 = vld.sshfl [vmem:[#allocation1] sm:$0xff pattern:$0x75316420]
  %v645 = vld.sshfl [vmem:[#allocation1 + $0x8] sm:$0xff pattern:$0x75316420]
  %v648 = vpack.c.bf16 %v645, %v644
  %v650 = vrot.slane %v648, 6
  %652 = vst.msk [vmem:[#allocation2 + $0x40] sm:$0x44] %vm96, %v650
  %s653 = scalar_lea.vmem %s0, 70
  %v654 = vld [vmem:[%s653] sm:$0x3]
  %v655 = vunpack.c.0.s8 %v654
  %v656 = vcvt.s32.f32 %v655
  %vm657 = vcmp.lt.f32.partialorder %v656, 0.0
  %v658 = vadd.f32 %v656, 256.0
  %v659 = vsel %vm657, %v658, %v656
  %661 = vst [vmem:[#allocation1] ss:$2 sm:$0xff] %v659
  %v662 = vld.sshfl [vmem:[#allocation1] sm:$0xff pattern:$0x75316420]
  %v663 = vld.sshfl [vmem:[#allocation1 + $0x8] sm:$0xff pattern:$0x75316420]
  %v666 = vpack.c.bf16 %v663, %v662
  %v668 = vrot.slane %v666, 5
  %670 = vst.msk [vmem:[#allocation2 + $0x40] sm:$0x88] %vm117, %v668
  %s671 = scalar_lea.vmem %s0, 72
  %v672 = vld [vmem:[%s671] sm:$0x3]
  %v673 = vunpack.c.0.s8 %v672
  %v674 = vcvt.s32.f32 %v673
  %vm675 = vcmp.lt.f32.partialorder %v674, 0.0
  %v676 = vadd.f32 %v674, 256.0
  %v677 = vsel %vm675, %v676, %v674
  %679 = vst [vmem:[#allocation1] ss:$2 sm:$0xff] %v677
  %v680 = vld.sshfl [vmem:[#allocation1] sm:$0xff pattern:$0x75316420]
  %v681 = vld.sshfl [vmem:[#allocation1 + $0x8] sm:$0xff pattern:$0x75316420]
  %v684 = vpack.c.bf16 %v681, %v680
  %685 = vst.msk [vmem:[#allocation2 + $0x48] sm:$0x11] %vm54, %v684
  %s686 = scalar_lea.vmem %s0, 74
  %v687 = vld [vmem:[%s686] sm:$0x3]
  %v688 = vunpack.c.0.s8 %v687
  %v689 = vcvt.s32.f32 %v688
  %vm690 = vcmp.lt.f32.partialorder %v689, 0.0
  %v691 = vadd.f32 %v689, 256.0
  %v692 = vsel %vm690, %v691, %v689
  %694 = vst [vmem:[#allocation1] ss:$2 sm:$0xff] %v692
  %v695 = vld.sshfl [vmem:[#allocation1] sm:$0xff pattern:$0x75316420]
  %v696 = vld.sshfl [vmem:[#allocation1 + $0x8] sm:$0xff pattern:$0x75316420]
  %v699 = vpack.c.bf16 %v696, %v695
  %v701 = vrot.slane %v699, 7
  %703 = vst.msk [vmem:[#allocation2 + $0x48] sm:$0x22] %vm75, %v701
  %s704 = scalar_lea.vmem %s0, 76
  %v705 = vld [vmem:[%s704] sm:$0x3]
  %v706 = vunpack.c.0.s8 %v705
  %v707 = vcvt.s32.f32 %v706
  %vm708 = vcmp.lt.f32.partialorder %v707, 0.0
  %v709 = vadd.f32 %v707, 256.0
  %v710 = vsel %vm708, %v709, %v707
  %712 = vst [vmem:[#allocation1] ss:$2 sm:$0xff] %v710
  %v713 = vld.sshfl [vmem:[#allocation1] sm:$0xff pattern:$0x75316420]
  %v714 = vld.sshfl [vmem:[#allocation1 + $0x8] sm:$0xff pattern:$0x75316420]
  %v717 = vpack.c.bf16 %v714, %v713
  %v719 = vrot.slane %v717, 6
  %721 = vst.msk [vmem:[#allocation2 + $0x48] sm:$0x44] %vm96, %v719
  %s722 = scalar_lea.vmem %s0, 78
  %v723 = vld [vmem:[%s722] sm:$0x3]
  %v724 = vunpack.c.0.s8 %v723
  %v725 = vcvt.s32.f32 %v724
  %vm726 = vcmp.lt.f32.partialorder %v725, 0.0
  %v727 = vadd.f32 %v725, 256.0
  %v728 = vsel %vm726, %v727, %v725
  %730 = vst [vmem:[#allocation1] ss:$2 sm:$0xff] %v728
  %v731 = vld.sshfl [vmem:[#allocation1] sm:$0xff pattern:$0x75316420]
  %v732 = vld.sshfl [vmem:[#allocation1 + $0x8] sm:$0xff pattern:$0x75316420]
  %v735 = vpack.c.bf16 %v732, %v731
  %v737 = vrot.slane %v735, 5
  %739 = vst.msk [vmem:[#allocation2 + $0x48] sm:$0x88] %vm117, %v737
  %s740 = scalar_lea.vmem %s0, 80
  %v741 = vld [vmem:[%s740] sm:$0x3]
  %v742 = vunpack.c.0.s8 %v741
  %v743 = vcvt.s32.f32 %v742
  %vm744 = vcmp.lt.f32.partialorder %v743, 0.0
  %v745 = vadd.f32 %v743, 256.0
  %v746 = vsel %vm744, %v745, %v743
  %748 = vst [vmem:[#allocation1] ss:$2 sm:$0xff] %v746
  %v749 = vld.sshfl [vmem:[#allocation1] sm:$0xff pattern:$0x75316420]
  %v750 = vld.sshfl [vmem:[#allocation1 + $0x8] sm:$0xff pattern:$0x75316420]
  %v753 = vpack.c.bf16 %v750, %v749
  %754 = vst.msk [vmem:[#allocation2 + $0x50] sm:$0x11] %vm54, %v753
  %s755 = scalar_lea.vmem %s0, 82
  %v756 = vld [vmem:[%s755] sm:$0x3]
  %v757 = vunpack.c.0.s8 %v756
  %v758 = vcvt.s32.f32 %v757
  %vm759 = vcmp.lt.f32.partialorder %v758, 0.0
  %v760 = vadd.f32 %v758, 256.0
  %v761 = vsel %vm759, %v760, %v758
  %763 = vst [vmem:[#allocation1] ss:$2 sm:$0xff] %v761
  %v764 = vld.sshfl [vmem:[#allocation1] sm:$0xff pattern:$0x75316420]
  %v765 = vld.sshfl [vmem:[#allocation1 + $0x8] sm:$0xff pattern:$0x75316420]
  %v768 = vpack.c.bf16 %v765, %v764
  %v770 = vrot.slane %v768, 7
  %772 = vst.msk [vmem:[#allocation2 + $0x50] sm:$0x22] %vm75, %v770
  %s773 = scalar_lea.vmem %s0, 84
  %v774 = vld [vmem:[%s773] sm:$0x3]
  %v775 = vunpack.c.0.s8 %v774
  %v776 = vcvt.s32.f32 %v775
  %vm777 = vcmp.lt.f32.partialorder %v776, 0.0
  %v778 = vadd.f32 %v776, 256.0
  %v779 = vsel %vm777, %v778, %v776
  %781 = vst [vmem:[#allocation1] ss:$2 sm:$0xff] %v779
  %v782 = vld.sshfl [vmem:[#allocation1] sm:$0xff pattern:$0x75316420]
  %v783 = vld.sshfl [vmem:[#allocation1 + $0x8] sm:$0xff pattern:$0x75316420]
  %v786 = vpack.c.bf16 %v783, %v782
  %v788 = vrot.slane %v786, 6
  %790 = vst.msk [vmem:[#allocation2 + $0x50] sm:$0x44] %vm96, %v788
  %s791 = scalar_lea.vmem %s0, 86
  %v792 = vld [vmem:[%s791] sm:$0x3]
  %v793 = vunpack.c.0.s8 %v792
  %v794 = vcvt.s32.f32 %v793
  %vm795 = vcmp.lt.f32.partialorder %v794, 0.0
  %v796 = vadd.f32 %v794, 256.0
  %v797 = vsel %vm795, %v796, %v794
  %799 = vst [vmem:[#allocation1] ss:$2 sm:$0xff] %v797
  %v800 = vld.sshfl [vmem:[#allocation1] sm:$0xff pattern:$0x75316420]
  %v801 = vld.sshfl [vmem:[#allocation1 + $0x8] sm:$0xff pattern:$0x75316420]
  %v804 = vpack.c.bf16 %v801, %v800
  %v806 = vrot.slane %v804, 5
  %808 = vst.msk [vmem:[#allocation2 + $0x50] sm:$0x88] %vm117, %v806
  %s809 = scalar_lea.vmem %s0, 88
  %v810 = vld [vmem:[%s809] sm:$0x3]
  %v811 = vunpack.c.0.s8 %v810
  %v812 = vcvt.s32.f32 %v811
  %vm813 = vcmp.lt.f32.partialorder %v812, 0.0
  %v814 = vadd.f32 %v812, 256.0
  %v815 = vsel %vm813, %v814, %v812
  %817 = vst [vmem:[#allocation1] ss:$2 sm:$0xff] %v815
  %v818 = vld.sshfl [vmem:[#allocation1] sm:$0xff pattern:$0x75316420]
  %v819 = vld.sshfl [vmem:[#allocation1 + $0x8] sm:$0xff pattern:$0x75316420]
  %v822 = vpack.c.bf16 %v819, %v818
  %823 = vst.msk [vmem:[#allocation2 + $0x58] sm:$0x11] %vm54, %v822
  %s824 = scalar_lea.vmem %s0, 90
  %v825 = vld [vmem:[%s824] sm:$0x3]
  %v826 = vunpack.c.0.s8 %v825
  %v827 = vcvt.s32.f32 %v826
  %vm828 = vcmp.lt.f32.partialorder %v827, 0.0
  %v829 = vadd.f32 %v827, 256.0
  %v830 = vsel %vm828, %v829, %v827
  %832 = vst [vmem:[#allocation1] ss:$2 sm:$0xff] %v830
  %v833 = vld.sshfl [vmem:[#allocation1] sm:$0xff pattern:$0x75316420]
  %v834 = vld.sshfl [vmem:[#allocation1 + $0x8] sm:$0xff pattern:$0x75316420]
  %v837 = vpack.c.bf16 %v834, %v833
  %v839 = vrot.slane %v837, 7
  %841 = vst.msk [vmem:[#allocation2 + $0x58] sm:$0x22] %vm75, %v839
  %s842 = scalar_lea.vmem %s0, 92
  %v843 = vld [vmem:[%s842] sm:$0x3]
  %v844 = vunpack.c.0.s8 %v843
  %v845 = vcvt.s32.f32 %v844
  %vm846 = vcmp.lt.f32.partialorder %v845, 0.0
  %v847 = vadd.f32 %v845, 256.0
  %v848 = vsel %vm846, %v847, %v845
  %850 = vst [vmem:[#allocation1] ss:$2 sm:$0xff] %v848
  %v851 = vld.sshfl [vmem:[#allocation1] sm:$0xff pattern:$0x75316420]
  %v852 = vld.sshfl [vmem:[#allocation1 + $0x8] sm:$0xff pattern:$0x75316420]
  %v855 = vpack.c.bf16 %v852, %v851
  %v857 = vrot.slane %v855, 6
  %859 = vst.msk [vmem:[#allocation2 + $0x58] sm:$0x44] %vm96, %v857
  %s860 = scalar_lea.vmem %s0, 94
  %v861 = vld [vmem:[%s860] sm:$0x3]
  %v862 = vunpack.c.0.s8 %v861
  %v863 = vcvt.s32.f32 %v862
  %vm864 = vcmp.lt.f32.partialorder %v863, 0.0
  %v865 = vadd.f32 %v863, 256.0
  %v866 = vsel %vm864, %v865, %v863
  %868 = vst [vmem:[#allocation1] ss:$2 sm:$0xff] %v866
  %v869 = vld.sshfl [vmem:[#allocation1] sm:$0xff pattern:$0x75316420]
  %v870 = vld.sshfl [vmem:[#allocation1 + $0x8] sm:$0xff pattern:$0x75316420]
  %v873 = vpack.c.bf16 %v870, %v869
  %v875 = vrot.slane %v873, 5
  %877 = vst.msk [vmem:[#allocation2 + $0x58] sm:$0x88] %vm117, %v875
  %s878 = scalar_lea.vmem %s0, 96
  %v879 = vld [vmem:[%s878] sm:$0x3]
  %v880 = vunpack.c.0.s8 %v879
  %v881 = vcvt.s32.f32 %v880
  %vm882 = vcmp.lt.f32.partialorder %v881, 0.0
  %v883 = vadd.f32 %v881, 256.0
  %v884 = vsel %vm882, %v883, %v881
  %886 = vst [vmem:[#allocation1] ss:$2 sm:$0xff] %v884
  %v887 = vld.sshfl [vmem:[#allocation1] sm:$0xff pattern:$0x75316420]
  %v888 = vld.sshfl [vmem:[#allocation1 + $0x8] sm:$0xff pattern:$0x75316420]
  %v891 = vpack.c.bf16 %v888, %v887
  %892 = vst.msk [vmem:[#allocation2 + $0x60] sm:$0x11] %vm54, %v891
  %s893 = scalar_lea.vmem %s0, 98
  %v894 = vld [vmem:[%s893] sm:$0x3]
  %v895 = vunpack.c.0.s8 %v894
  %v896 = vcvt.s32.f32 %v895
  %vm897 = vcmp.lt.f32.partialorder %v896, 0.0
  %v898 = vadd.f32 %v896, 256.0
  %v899 = vsel %vm897, %v898, %v896
  %901 = vst [vmem:[#allocation1] ss:$2 sm:$0xff] %v899
  %v902 = vld.sshfl [vmem:[#allocation1] sm:$0xff pattern:$0x75316420]
  %v903 = vld.sshfl [vmem:[#allocation1 + $0x8] sm:$0xff pattern:$0x75316420]
  %v906 = vpack.c.bf16 %v903, %v902
  %v908 = vrot.slane %v906, 7
  %910 = vst.msk [vmem:[#allocation2 + $0x60] sm:$0x22] %vm75, %v908
  %s911 = scalar_lea.vmem %s0, 100
  %v912 = vld [vmem:[%s911] sm:$0x3]
  %v913 = vunpack.c.0.s8 %v912
  %v914 = vcvt.s32.f32 %v913
  %vm915 = vcmp.lt.f32.partialorder %v914, 0.0
  %v916 = vadd.f32 %v914, 256.0
  %v917 = vsel %vm915, %v916, %v914
  %919 = vst [vmem:[#allocation1] ss:$2 sm:$0xff] %v917
  %v920 = vld.sshfl [vmem:[#allocation1] sm:$0xff pattern:$0x75316420]
  %v921 = vld.sshfl [vmem:[#allocation1 + $0x8] sm:$0xff pattern:$0x75316420]
  %v924 = vpack.c.bf16 %v921, %v920
  %v926 = vrot.slane %v924, 6
  %928 = vst.msk [vmem:[#allocation2 + $0x60] sm:$0x44] %vm96, %v926
  %s929 = scalar_lea.vmem %s0, 102
  %v930 = vld [vmem:[%s929] sm:$0x3]
  %v931 = vunpack.c.0.s8 %v930
  %v932 = vcvt.s32.f32 %v931
  %vm933 = vcmp.lt.f32.partialorder %v932, 0.0
  %v934 = vadd.f32 %v932, 256.0
  %v935 = vsel %vm933, %v934, %v932
  %937 = vst [vmem:[#allocation1] ss:$2 sm:$0xff] %v935
  %v938 = vld.sshfl [vmem:[#allocation1] sm:$0xff pattern:$0x75316420]
  %v939 = vld.sshfl [vmem:[#allocation1 + $0x8] sm:$0xff pattern:$0x75316420]
  %v942 = vpack.c.bf16 %v939, %v938
  %v944 = vrot.slane %v942, 5
  %946 = vst.msk [vmem:[#allocation2 + $0x60] sm:$0x88] %vm117, %v944
  %v947 = vld [vmem:[#allocation2] sm:$0xff]
  %v948 = vld [vmem:[#allocation2 + $0x8] sm:$0xff]
  %v949 = vld [vmem:[#allocation2 + $0x10] sm:$0xff]
  %v950 = vld [vmem:[%s1] sm:$0xff]
  %v951 = vld [vmem:[%s1 + $0x8] sm:$0xf]
  %v952 = vld [vmem:[%s1 + $0xc] sm:$0xff]
  %v953 = vld [vmem:[%s1 + $0x14] sm:$0xf]
  %v954 = vld [vmem:[%s1 + $0x18] sm:$0xff]
  %v955 = vld [vmem:[%s1 + $0x20] sm:$0xf]
  %v956 = vld [vmem:[%s1 + $0x24] sm:$0xff]
  %v957 = vld [vmem:[%s1 + $0x2c] sm:$0xf]
  %v958 = vld [vmem:[%s1 + $0x30] sm:$0xff]
  %v959 = vld [vmem:[%s1 + $0x38] sm:$0xf]
  %v960 = vld [vmem:[%s1 + $0x3c] sm:$0xff]
  %v961 = vld [vmem:[%s1 + $0x44] sm:$0xf]
  %v962 = vld [vmem:[%s1 + $0x48] sm:$0xff]
  %v963 = vld [vmem:[%s1 + $0x50] sm:$0xf]
  %v964 = vld [vmem:[%s1 + $0x54] sm:$0xff]
  %v965 = vld [vmem:[%s1 + $0x5c] sm:$0xf]
  %v966 = vld [vmem:[%s1 + $0x60] sm:$0xff]
  %v967 = vld [vmem:[%s1 + $0x68] sm:$0xf]
  %v968 = vld [vmem:[%s1 + $0x6c] sm:$0xff]
  %v969 = vld [vmem:[%s1 + $0x74] sm:$0xf]
  %v970 = vld [vmem:[%s1 + $0x78] sm:$0xff]
  %v971 = vld [vmem:[%s1 + $0x80] sm:$0xf]
  %v972 = vld [vmem:[%s1 + $0x84] sm:$0xff]
  %v973 = vld [vmem:[%s1 + $0x8c] sm:$0xf]
  %v974 = vld [vmem:[%s1 + $0x90] sm:$0xff]
  %v975 = vld [vmem:[%s1 + $0x98] sm:$0xf]
  %v976 = vld [vmem:[%s1 + $0x9c] sm:$0xff]
  %v977 = vld [vmem:[%s1 + $0xa4] sm:$0xf]
  %v978 = vld [vmem:[%s1 + $0xa8] sm:$0xff]
  %v979 = vld [vmem:[%s1 + $0xb0] sm:$0xf]
  %v980 = vld [vmem:[%s1 + $0xb4] sm:$0xff]
  %v981 = vld [vmem:[%s1 + $0xbc] sm:$0xf]
  %v982 = vld [vmem:[%s1 + $0xc0] sm:$0xff]
  %v983 = vld [vmem:[%s1 + $0xc8] sm:$0xf]
  %v984 = vld [vmem:[%s1 + $0xcc] sm:$0xff]
  %v985 = vld [vmem:[%s1 + $0xd4] sm:$0xf]
  %v986 = vld [vmem:[%s1 + $0xd8] sm:$0xff]
  %v987 = vld [vmem:[%s1 + $0xe0] sm:$0xf]
  %v988 = vld [vmem:[%s1 + $0xe4] sm:$0xff]
  %v989 = vld [vmem:[%s1 + $0xec] sm:$0xf]
  %v990 = vld [vmem:[%s1 + $0xf0] sm:$0xff]
  %v991 = vld [vmem:[%s1 + $0xf8] sm:$0xf]
  %v992 = vld [vmem:[%s1 + $0xfc] sm:$0xff]
  %v993 = vld [vmem:[%s1 + $0x104] sm:$0xf]
  %v994 = vld [vmem:[%s1 + $0x108] sm:$0xff]
  %v995 = vld [vmem:[%s1 + $0x110] sm:$0xf]
  %v996 = vld [vmem:[%s1 + $0x114] sm:$0xff]
  %v997 = vld [vmem:[%s1 + $0x11c] sm:$0xf]
  %v998 = vld [vmem:[%s1 + $0x120] sm:$0xff]
  %v999 = vld [vmem:[%s1 + $0x128] sm:$0xf]
  %v1000 = vld [vmem:[%s1 + $0x12c] sm:$0xff]
  %v1001 = vld [vmem:[%s1 + $0x134] sm:$0xf]
  %v1002 = vld [vmem:[#allocation2 + $0x18] sm:$0xee]
  %v1003 = vld [vmem:[#allocation2 + $0x20] sm:$0xff]
  %v1004 = vld [vmem:[#allocation2 + $0x28] sm:$0xff]
  %v1005 = vld [vmem:[#allocation2 + $0x30] sm:$0x11]
  %s1006 = scalar_lea.vmem %s1, 312
  %v1007 = vld [vmem:[%s1006] sm:$0xff]
  %v1008 = vld [vmem:[%s1006 + $0x8] sm:$0xf]
  %v1009 = vld [vmem:[%s1006 + $0xc] sm:$0xff]
  %v1010 = vld [vmem:[%s1006 + $0x14] sm:$0xf]
  %v1011 = vld [vmem:[%s1006 + $0x18] sm:$0xff]
  %v1012 = vld [vmem:[%s1006 + $0x20] sm:$0xf]
  %v1013 = vld [vmem:[%s1006 + $0x24] sm:$0xff]
  %v1014 = vld [vmem:[%s1006 + $0x2c] sm:$0xf]
  %v1015 = vld [vmem:[%s1006 + $0x30] sm:$0xff]
  %v1016 = vld [vmem:[%s1006 + $0x38] sm:$0xf]
  %v1017 = vld [vmem:[%s1006 + $0x3c] sm:$0xff]
  %v1018 = vld [vmem:[%s1006 + $0x44] sm:$0xf]
  %v1019 = vld [vmem:[%s1006 + $0x48] sm:$0xff]
  %v1020 = vld [vmem:[%s1006 + $0x50] sm:$0xf]
  %v1021 = vld [vmem:[%s1006 + $0x54] sm:$0xff]
  %v1022 = vld [vmem:[%s1006 + $0x5c] sm:$0xf]
  %v1023 = vld [vmem:[%s1006 + $0x60] sm:$0xff]
  %v1024 = vld [vmem:[%s1006 + $0x68] sm:$0xf]
  %v1025 = vld [vmem:[%s1006 + $0x6c] sm:$0xff]
  %v1026 = vld [vmem:[%s1006 + $0x74] sm:$0xf]
  %v1027 = vld [vmem:[%s1006 + $0x78] sm:$0xff]
  %v1028 = vld [vmem:[%s1006 + $0x80] sm:$0xf]
  %v1029 = vld [vmem:[%s1006 + $0x84] sm:$0xff]
  %v1030 = vld [vmem:[%s1006 + $0x8c] sm:$0xf]
  %v1031 = vld [vmem:[%s1006 + $0x90] sm:$0xff]
  %v1032 = vld [vmem:[%s1006 + $0x98] sm:$0xf]
  %v1033 = vld [vmem:[%s1006 + $0x9c] sm:$0xff]
  %v1034 = vld [vmem:[%s1006 + $0xa4] sm:$0xf]
  %v1035 = vld [vmem:[%s1006 + $0xa8] sm:$0xff]
  %v1036 = vld [vmem:[%s1006 + $0xb0] sm:$0xf]
  %v1037 = vld [vmem:[%s1006 + $0xb4] sm:$0xff]
  %v1038 = vld [vmem:[%s1006 + $0xbc] sm:$0xf]
  %v1039 = vld [vmem:[%s1006 + $0xc0] sm:$0xff]
  %v1040 = vld [vmem:[%s1006 + $0xc8] sm:$0xf]
  %v1041 = vld [vmem:[%s1006 + $0xcc] sm:$0xff]
  %v1042 = vld [vmem:[%s1006 + $0xd4] sm:$0xf]
  %v1043 = vld [vmem:[%s1006 + $0xd8] sm:$0xff]
  %v1044 = vld [vmem:[%s1006 + $0xe0] sm:$0xf]
  %v1045 = vld [vmem:[%s1006 + $0xe4] sm:$0xff]
  %v1046 = vld [vmem:[%s1006 + $0xec] sm:$0xf]
  %v1047 = vld [vmem:[%s1006 + $0xf0] sm:$0xff]
  %v1048 = vld [vmem:[%s1006 + $0xf8] sm:$0xf]
  %v1049 = vld [vmem:[%s1006 + $0xfc] sm:$0xff]
  %v1050 = vld [vmem:[%s1006 + $0x104] sm:$0xf]
  %v1051 = vld [vmem:[%s1006 + $0x108] sm:$0xff]
  %v1052 = vld [vmem:[%s1006 + $0x110] sm:$0xf]
  %v1053 = vld [vmem:[%s1006 + $0x114] sm:$0xff]
  %v1054 = vld [vmem:[%s1006 + $0x11c] sm:$0xf]
  %v1055 = vld [vmem:[%s1006 + $0x120] sm:$0xff]
  %v1056 = vld [vmem:[%s1006 + $0x128] sm:$0xf]
  %v1057 = vld [vmem:[%s1006 + $0x12c] sm:$0xff]
  %v1058 = vld [vmem:[%s1006 + $0x134] sm:$0xf]
  %v1063 = vunpack.c.l.b16 %v1002
  %v1064 = vunpack.c.h.b16 %v1002
  %v1065 = vunpack.c.l.b16 %v1003
  %v1066 = vunpack.c.h.b16 %v1003
  %v1067 = vunpack.c.l.b16 %v1004
  %v1068 = vunpack.c.h.b16 %v1004
  %v1069 = vunpack.c.l.b16 %v1005
  %v1070 = vunpack.c.h.b16 %v1005
  %v1071 = vpack.c.b16 %v1065, %v1063
  %v1072 = vpack.c.b16 %v1066, %v1064
  %v1073 = vpack.c.b16 %v1069, %v1067
  %v1074 = vpack.c.b16 %v1070, %v1068
  %vm1075 = vcmask 1046528
  %v1076 = vrot.slane %v1071, 1
  %v1077 = vrot.slane %v1073, 1
  %v1078 = vsel %vm1075, %v1076, %v1077
  %v1079 = vrot.slane %v1072, 1
  %v1080 = vrot.slane %v1074, 1
  %v1081 = vsel %vm1075, %v1079, %v1080
  %v1136 = vunpack.c.l.b16 %v1007
  %v1137 = vunpack.c.h.b16 %v1007
  %v1138 = vunpack.c.l.b16 %v1008
  %v1139 = vunpack.c.l.b16 %v1009
  %v1140 = vunpack.c.h.b16 %v1009
  %v1141 = vunpack.c.l.b16 %v1010
  %v1142 = vunpack.c.l.b16 %v1011
  %v1143 = vunpack.c.h.b16 %v1011
  %v1144 = vunpack.c.l.b16 %v1012
  %v1145 = vunpack.c.l.b16 %v1013
  %v1146 = vunpack.c.h.b16 %v1013
  %v1147 = vunpack.c.l.b16 %v1014
  %v1148 = vunpack.c.l.b16 %v1015
  %v1149 = vunpack.c.h.b16 %v1015
  %v1150 = vunpack.c.l.b16 %v1016
  %v1151 = vunpack.c.l.b16 %v1017
  %v1152 = vunpack.c.h.b16 %v1017
  %v1153 = vunpack.c.l.b16 %v1018
  %v1154 = vunpack.c.l.b16 %v1019
  %v1155 = vunpack.c.h.b16 %v1019
  %v1156 = vunpack.c.l.b16 %v1020
  %v1157 = vunpack.c.l.b16 %v1021
  %v1158 = vunpack.c.h.b16 %v1021
  %v1159 = vunpack.c.l.b16 %v1022
  %v1160 = vunpack.c.l.b16 %v1023
  %v1161 = vunpack.c.h.b16 %v1023
  %v1162 = vunpack.c.l.b16 %v1024
  %v1163 = vunpack.c.l.b16 %v1025
  %v1164 = vunpack.c.h.b16 %v1025
  %v1165 = vunpack.c.l.b16 %v1026
  %v1166 = vunpack.c.l.b16 %v1027
  %v1167 = vunpack.c.h.b16 %v1027
  %v1168 = vunpack.c.l.b16 %v1028
  %v1169 = vunpack.c.l.b16 %v1029
  %v1170 = vunpack.c.h.b16 %v1029
  %v1171 = vunpack.c.l.b16 %v1030
  %v1172 = vunpack.c.l.b16 %v1031
  %v1173 = vunpack.c.h.b16 %v1031
  %v1174 = vunpack.c.l.b16 %v1032
  %v1175 = vunpack.c.l.b16 %v1033
  %v1176 = vunpack.c.h.b16 %v1033
  %v1177 = vunpack.c.l.b16 %v1034
  %v1178 = vunpack.c.l.b16 %v1035
  %v1179 = vunpack.c.h.b16 %v1035
  %v1180 = vunpack.c.l.b16 %v1036
  %v1181 = vunpack.c.l.b16 %v1037
  %v1182 = vunpack.c.h.b16 %v1037
  %v1183 = vunpack.c.l.b16 %v1038
  %v1184 = vunpack.c.l.b16 %v1039
  %v1185 = vunpack.c.h.b16 %v1039
  %v1186 = vunpack.c.l.b16 %v1040
  %v1187 = vunpack.c.l.b16 %v1041
  %v1188 = vunpack.c.h.b16 %v1041
  %v1189 = vunpack.c.l.b16 %v1042
  %v1190 = vunpack.c.l.b16 %v1043
  %v1191 = vunpack.c.h.b16 %v1043
  %v1192 = vunpack.c.l.b16 %v1044
  %v1193 = vunpack.c.l.b16 %v1045
  %v1194 = vunpack.c.h.b16 %v1045
  %v1195 = vunpack.c.l.b16 %v1046
  %v1196 = vunpack.c.l.b16 %v1047
  %v1197 = vunpack.c.h.b16 %v1047
  %v1198 = vunpack.c.l.b16 %v1048
  %v1199 = vunpack.c.l.b16 %v1049
  %v1200 = vunpack.c.h.b16 %v1049
  %v1201 = vunpack.c.l.b16 %v1050
  %v1202 = vunpack.c.l.b16 %v1051
  %v1203 = vunpack.c.h.b16 %v1051
  %v1204 = vunpack.c.l.b16 %v1052
  %v1205 = vunpack.c.l.b16 %v1053
  %v1206 = vunpack.c.h.b16 %v1053
  %v1207 = vunpack.c.l.b16 %v1054
  %v1208 = vunpack.c.l.b16 %v1055
  %v1209 = vunpack.c.h.b16 %v1055
  %v1210 = vunpack.c.l.b16 %v1056
  %v1211 = vunpack.c.l.b16 %v1057
  %v1212 = vunpack.c.h.b16 %v1057
  %v1213 = vunpack.c.l.b16 %v1058
  %v1214 = vpack.c.b16 %v1139, %v1136
  %v1215 = vpack.c.b16 %v1140, %v1137
  %v1216 = vpack.c.b16 %v1141, %v1138
  %v1217 = vpack.c.b16 %v1145, %v1142
  %v1218 = vpack.c.b16 %v1146, %v1143
  %v1219 = vpack.c.b16 %v1147, %v1144
  %v1220 = vpack.c.b16 %v1151, %v1148
  %v1221 = vpack.c.b16 %v1152, %v1149
  %v1222 = vpack.c.b16 %v1153, %v1150
  %v1223 = vpack.c.b16 %v1157, %v1154
  %v1224 = vpack.c.b16 %v1158, %v1155
  %v1225 = vpack.c.b16 %v1159, %v1156
  %v1226 = vpack.c.b16 %v1163, %v1160
  %v1227 = vpack.c.b16 %v1164, %v1161
  %v1228 = vpack.c.b16 %v1165, %v1162
  %v1229 = vpack.c.b16 %v1169, %v1166
  %v1230 = vpack.c.b16 %v1170, %v1167
  %v1231 = vpack.c.b16 %v1171, %v1168
  %v1232 = vpack.c.b16 %v1175, %v1172
  %v1233 = vpack.c.b16 %v1176, %v1173
  %v1234 = vpack.c.b16 %v1177, %v1174
  %v1235 = vpack.c.b16 %v1181, %v1178
  %v1236 = vpack.c.b16 %v1182, %v1179
  %v1237 = vpack.c.b16 %v1183, %v1180
  %v1238 = vpack.c.b16 %v1187, %v1184
  %v1239 = vpack.c.b16 %v1188, %v1185
  %v1240 = vpack.c.b16 %v1189, %v1186
  %v1241 = vpack.c.b16 %v1193, %v1190
  %v1242 = vpack.c.b16 %v1194, %v1191
  %v1243 = vpack.c.b16 %v1195, %v1192
  %v1244 = vpack.c.b16 %v1199, %v1196
  %v1245 = vpack.c.b16 %v1200, %v1197
  %v1246 = vpack.c.b16 %v1201, %v1198
  %v1247 = vpack.c.b16 %v1205, %v1202
  %v1248 = vpack.c.b16 %v1206, %v1203
  %v1249 = vpack.c.b16 %v1207, %v1204
  %v1250 = vpack.c.b16 %v1211, %v1208
  %v1251 = vpack.c.b16 %v1212, %v1209
  %v1252 = vpack.c.b16 %v1213, %v1210
  %vm1292 = vcmask 654336
  %v1294 = vsel %vm1292, %v1081, 0
  %v1297 = vsel %vm1292, %v1080, 0
  %1299 = vmatpush.bf16.msra.mxu0 %v1235
  %1300 = vmatpush.bf16.msra.mxu0 %v1232
  %1301 = vmatpush.bf16.msra.mxu0 %v1229
  %1302 = vmatpush.bf16.msra.mxu0 %v1226
  %1303 = vmatpush.bf16.msra.mxu0 %v1223
  %1304 = vmatpush.bf16.msra.mxu0 %v1220
  %1305 = vmatpush.bf16.msra.mxu0 %v1217
  %1306 = vmatpush.bf16.msra.mxu0 %v1214
  %1307 = vmatmul.bf16.gmra.mxu0 %v1078
  %v1308 = vpop.f32.mrf.mxu0
  %v1309 = vadd.f32 0.0, %v1308
  %v1310 = vpop.f32.mrf.mxu0
  %v1311 = vadd.f32 0.0, %v1310
  %1312 = vmatmul.bf16.gmra.mxu0 %v1077
  %v1313 = vpop.f32.mrf.mxu0
  %v1314 = vadd.f32 0.0, %v1313
  %v1315 = vpop.f32.mrf.mxu0
  %1316 = vdwg.mxu0
  %1317 = vmatpush.bf16.msra.mxu0 0
  %1318 = vmatpush.bf16.msra.mxu0 0
  %1319 = vmatpush.bf16.msra.mxu0 0
  %1320 = vmatpush.bf16.msra.mxu0 %v1250
  %1321 = vmatpush.bf16.msra.mxu0 %v1247
  %1322 = vmatpush.bf16.msra.mxu0 %v1244
  %1323 = vmatpush.bf16.msra.mxu0 %v1241
  %1324 = vmatpush.bf16.msra.mxu0 %v1238
  %1325 = vmatmul.bf16.gmra.mxu0 %v1294
  %v1326 = vpop.f32.mrf.mxu0
  %v1327 = vadd.f32 %v1309, %v1326
  %v1328 = vpop.f32.mrf.mxu0
  %v1329 = vadd.f32 %v1311, %v1328
  %1330 = vmatmul.bf16.gmra.mxu0 %v1297
  %v1331 = vpop.f32.mrf.mxu0
  %v1332 = vadd.f32 %v1314, %v1331
  %v1333 = vpop.f32.mrf.mxu0
  %1334 = vdwg.mxu0
  %1335 = vmatpush.bf16.msra.mxu0 %v1236
  %1336 = vmatpush.bf16.msra.mxu0 %v1233
  %1337 = vmatpush.bf16.msra.mxu0 %v1230
  %1338 = vmatpush.bf16.msra.mxu0 %v1227
  %1339 = vmatpush.bf16.msra.mxu0 %v1224
  %1340 = vmatpush.bf16.msra.mxu0 %v1221
  %1341 = vmatpush.bf16.msra.mxu0 %v1218
  %1342 = vmatpush.bf16.msra.mxu0 %v1215
  %1343 = vmatmul.bf16.gmra.mxu0 %v1078
  %v1344 = vpop.f32.mrf.mxu0
  %v1345 = vadd.f32 0.0, %v1344
  %v1346 = vpop.f32.mrf.mxu0
  %v1347 = vadd.f32 0.0, %v1346
  %1348 = vmatmul.bf16.gmra.mxu0 %v1077
  %v1349 = vpop.f32.mrf.mxu0
  %v1350 = vadd.f32 0.0, %v1349
  %v1351 = vpop.f32.mrf.mxu0
  %1352 = vdwg.mxu0
  %1353 = vmatpush.bf16.msra.mxu0 0
  %1354 = vmatpush.bf16.msra.mxu0 0
  %1355 = vmatpush.bf16.msra.mxu0 0
  %1356 = vmatpush.bf16.msra.mxu0 %v1251
  %1357 = vmatpush.bf16.msra.mxu0 %v1248
  %1358 = vmatpush.bf16.msra.mxu0 %v1245
  %1359 = vmatpush.bf16.msra.mxu0 %v1242
  %1360 = vmatpush.bf16.msra.mxu0 %v1239
  %1361 = vmatmul.bf16.gmra.mxu0 %v1294
  %v1362 = vpop.f32.mrf.mxu0
  %v1363 = vadd.f32 %v1345, %v1362
  %v1364 = vpop.f32.mrf.mxu0
  %v1365 = vadd.f32 %v1347, %v1364
  %1366 = vmatmul.bf16.gmra.mxu0 %v1297
  %v1367 = vpop.f32.mrf.mxu0
  %v1368 = vadd.f32 %v1350, %v1367
  %v1369 = vpop.f32.mrf.mxu0
  %1370 = vdwg.mxu0
  %1371 = vmatpush.bf16.msra.mxu0 %v1237
  %1372 = vmatpush.bf16.msra.mxu0 %v1234
  %1373 = vmatpush.bf16.msra.mxu0 %v1231
  %1374 = vmatpush.bf16.msra.mxu0 %v1228
  %1375 = vmatpush.bf16.msra.mxu0 %v1225
  %1376 = vmatpush.bf16.msra.mxu0 %v1222
  %1377 = vmatpush.bf16.msra.mxu0 %v1219
  %1378 = vmatpush.bf16.msra.mxu0 %v1216
  %1379 = vmatmul.bf16.gmra.mxu0 %v1078
  %v1380 = vpop.f32.mrf.mxu0
  %v1381 = vadd.f32 0.0, %v1380
  %v1382 = vpop.f32.mrf.mxu0
  %v1383 = vadd.f32 0.0, %v1382
  %1384 = vmatmul.bf16.gmra.mxu0 %v1077
  %v1385 = vpop.f32.mrf.mxu0
  %v1386 = vadd.f32 0.0, %v1385
  %v1387 = vpop.f32.mrf.mxu0
  %1388 = vdwg.mxu0
  %1389 = vmatpush.bf16.msra.mxu0 0
  %1390 = vmatpush.bf16.msra.mxu0 0
  %1391 = vmatpush.bf16.msra.mxu0 0
  %1392 = vmatpush.bf16.msra.mxu0 %v1252
  %1393 = vmatpush.bf16.msra.mxu0 %v1249
  %1394 = vmatpush.bf16.msra.mxu0 %v1246
  %1395 = vmatpush.bf16.msra.mxu0 %v1243
  %1396 = vmatpush.bf16.msra.mxu0 %v1240
  %1397 = vmatmul.bf16.gmra.mxu0 %v1294
  %v1398 = vpop.f32.mrf.mxu0
  %v1399 = vadd.f32 %v1381, %v1398
  %v1400 = vpop.f32.mrf.mxu0
  %v1401 = vadd.f32 %v1383, %v1400
  %1402 = vmatmul.bf16.gmra.mxu0 %v1297
  %v1403 = vpop.f32.mrf.mxu0
  %v1404 = vadd.f32 %v1386, %v1403
  %v1405 = vpop.f32.mrf.mxu0
  %1406 = vdwg.mxu0
  %v1410 = vunpack.c.l.b16 %v947
  %v1411 = vunpack.c.h.b16 %v947
  %v1412 = vunpack.c.l.b16 %v948
  %v1413 = vunpack.c.h.b16 %v948
  %v1414 = vunpack.c.l.b16 %v949
  %v1415 = vunpack.c.h.b16 %v949
  %v1416 = vpack.c.b16 %v1412, %v1410
  %v1417 = vpack.c.b16 %v1413, %v1411
  %v1418 = vpack.c.b16 %v1414, %v1414
  %v1419 = vpack.c.b16 %v1415, %v1415
  %v1474 = vunpack.c.l.b16 %v950
  %v1475 = vunpack.c.h.b16 %v950
  %v1476 = vunpack.c.l.b16 %v951
  %v1477 = vunpack.c.l.b16 %v952
  %v1478 = vunpack.c.h.b16 %v952
  %v1479 = vunpack.c.l.b16 %v953
  %v1480 = vunpack.c.l.b16 %v954
  %v1481 = vunpack.c.h.b16 %v954
  %v1482 = vunpack.c.l.b16 %v955
  %v1483 = vunpack.c.l.b16 %v956
  %v1484 = vunpack.c.h.b16 %v956
  %v1485 = vunpack.c.l.b16 %v957
  %v1486 = vunpack.c.l.b16 %v958
  %v1487 = vunpack.c.h.b16 %v958
  %v1488 = vunpack.c.l.b16 %v959
  %v1489 = vunpack.c.l.b16 %v960
  %v1490 = vunpack.c.h.b16 %v960
  %v1491 = vunpack.c.l.b16 %v961
  %v1492 = vunpack.c.l.b16 %v962
  %v1493 = vunpack.c.h.b16 %v962
  %v1494 = vunpack.c.l.b16 %v963
  %v1495 = vunpack.c.l.b16 %v964
  %v1496 = vunpack.c.h.b16 %v964
  %v1497 = vunpack.c.l.b16 %v965
  %v1498 = vunpack.c.l.b16 %v966
  %v1499 = vunpack.c.h.b16 %v966
  %v1500 = vunpack.c.l.b16 %v967
  %v1501 = vunpack.c.l.b16 %v968
  %v1502 = vunpack.c.h.b16 %v968
  %v1503 = vunpack.c.l.b16 %v969
  %v1504 = vunpack.c.l.b16 %v970
  %v1505 = vunpack.c.h.b16 %v970
  %v1506 = vunpack.c.l.b16 %v971
  %v1507 = vunpack.c.l.b16 %v972
  %v1508 = vunpack.c.h.b16 %v972
  %v1509 = vunpack.c.l.b16 %v973
  %v1510 = vunpack.c.l.b16 %v974
  %v1511 = vunpack.c.h.b16 %v974
  %v1512 = vunpack.c.l.b16 %v975
  %v1513 = vunpack.c.l.b16 %v976
  %v1514 = vunpack.c.h.b16 %v976
  %v1515 = vunpack.c.l.b16 %v977
  %v1516 = vunpack.c.l.b16 %v978
  %v1517 = vunpack.c.h.b16 %v978
  %v1518 = vunpack.c.l.b16 %v979
  %v1519 = vunpack.c.l.b16 %v980
  %v1520 = vunpack.c.h.b16 %v980
  %v1521 = vunpack.c.l.b16 %v981
  %v1522 = vunpack.c.l.b16 %v982
  %v1523 = vunpack.c.h.b16 %v982
  %v1524 = vunpack.c.l.b16 %v983
  %v1525 = vunpack.c.l.b16 %v984
  %v1526 = vunpack.c.h.b16 %v984
  %v1527 = vunpack.c.l.b16 %v985
  %v1528 = vunpack.c.l.b16 %v986
  %v1529 = vunpack.c.h.b16 %v986
  %v1530 = vunpack.c.l.b16 %v987
  %v1531 = vunpack.c.l.b16 %v988
  %v1532 = vunpack.c.h.b16 %v988
  %v1533 = vunpack.c.l.b16 %v989
  %v1534 = vunpack.c.l.b16 %v990
  %v1535 = vunpack.c.h.b16 %v990
  %v1536 = vunpack.c.l.b16 %v991
  %v1537 = vunpack.c.l.b16 %v992
  %v1538 = vunpack.c.h.b16 %v992
  %v1539 = vunpack.c.l.b16 %v993
  %v1540 = vunpack.c.l.b16 %v994
  %v1541 = vunpack.c.h.b16 %v994
  %v1542 = vunpack.c.l.b16 %v995
  %v1543 = vunpack.c.l.b16 %v996
  %v1544 = vunpack.c.h.b16 %v996
  %v1545 = vunpack.c.l.b16 %v997
  %v1546 = vunpack.c.l.b16 %v998
  %v1547 = vunpack.c.h.b16 %v998
  %v1548 = vunpack.c.l.b16 %v999
  %v1549 = vunpack.c.l.b16 %v1000
  %v1550 = vunpack.c.h.b16 %v1000
  %v1551 = vunpack.c.l.b16 %v1001
  %v1552 = vpack.c.b16 %v1477, %v1474
  %v1553 = vpack.c.b16 %v1478, %v1475
  %v1554 = vpack.c.b16 %v1479, %v1476
  %v1555 = vpack.c.b16 %v1483, %v1480
  %v1556 = vpack.c.b16 %v1484, %v1481
  %v1557 = vpack.c.b16 %v1485, %v1482
  %v1558 = vpack.c.b16 %v1489, %v1486
  %v1559 = vpack.c.b16 %v1490, %v1487
  %v1560 = vpack.c.b16 %v1491, %v1488
  %v1561 = vpack.c.b16 %v1495, %v1492
  %v1562 = vpack.c.b16 %v1496, %v1493
  %v1563 = vpack.c.b16 %v1497, %v1494
  %v1564 = vpack.c.b16 %v1501, %v1498
  %v1565 = vpack.c.b16 %v1502, %v1499
  %v1566 = vpack.c.b16 %v1503, %v1500
  %v1567 = vpack.c.b16 %v1507, %v1504
  %v1568 = vpack.c.b16 %v1508, %v1505
  %v1569 = vpack.c.b16 %v1509, %v1506
  %v1570 = vpack.c.b16 %v1513, %v1510
  %v1571 = vpack.c.b16 %v1514, %v1511
  %v1572 = vpack.c.b16 %v1515, %v1512
  %v1573 = vpack.c.b16 %v1519, %v1516
  %v1574 = vpack.c.b16 %v1520, %v1517
  %v1575 = vpack.c.b16 %v1521, %v1518
  %v1576 = vpack.c.b16 %v1525, %v1522
  %v1577 = vpack.c.b16 %v1526, %v1523
  %v1578 = vpack.c.b16 %v1527, %v1524
  %v1579 = vpack.c.b16 %v1531, %v1528
  %v1580 = vpack.c.b16 %v1532, %v1529
  %v1581 = vpack.c.b16 %v1533, %v1530
  %v1582 = vpack.c.b16 %v1537, %v1534
  %v1583 = vpack.c.b16 %v1538, %v1535
  %v1584 = vpack.c.b16 %v1539, %v1536
  %v1585 = vpack.c.b16 %v1543, %v1540
  %v1586 = vpack.c.b16 %v1544, %v1541
  %v1587 = vpack.c.b16 %v1545, %v1542
  %v1588 = vpack.c.b16 %v1549, %v1546
  %v1589 = vpack.c.b16 %v1550, %v1547
  %v1590 = vpack.c.b16 %v1551, %v1548
  %v1631 = vsel %vm1292, %v1417, 0
  %v1634 = vsel %vm1292, %v1419, 0
  %1636 = vmatpush.bf16.msra.mxu0 %v1573
  %1637 = vmatpush.bf16.msra.mxu0 %v1570
  %1638 = vmatpush.bf16.msra.mxu0 %v1567
  %1639 = vmatpush.bf16.msra.mxu0 %v1564
  %1640 = vmatpush.bf16.msra.mxu0 %v1561
  %1641 = vmatpush.bf16.msra.mxu0 %v1558
  %1642 = vmatpush.bf16.msra.mxu0 %v1555
  %1643 = vmatpush.bf16.msra.mxu0 %v1552
  %1644 = vmatmul.bf16.gmra.mxu0 %v1416
  %v1645 = vpop.f32.mrf.mxu0
  %v1646 = vadd.f32 %v1327, %v1645
  %v1647 = vpop.f32.mrf.mxu0
  %v1648 = vadd.f32 %v1329, %v1647
  %1649 = vmatmul.bf16.gmra.mxu0 %v1418
  %v1650 = vpop.f32.mrf.mxu0
  %v1651 = vadd.f32 %v1332, %v1650
  %v1652 = vpop.f32.mrf.mxu0
  %1653 = vdwg.mxu0
  %1654 = vmatpush.bf16.msra.mxu0 0
  %1655 = vmatpush.bf16.msra.mxu0 0
  %1656 = vmatpush.bf16.msra.mxu0 0
  %1657 = vmatpush.bf16.msra.mxu0 %v1588
  %1658 = vmatpush.bf16.msra.mxu0 %v1585
  %1659 = vmatpush.bf16.msra.mxu0 %v1582
  %1660 = vmatpush.bf16.msra.mxu0 %v1579
  %1661 = vmatpush.bf16.msra.mxu0 %v1576
  %1662 = vmatmul.bf16.gmra.mxu0 %v1631
  %v1663 = vpop.f32.mrf.mxu0
  %v1664 = vadd.f32 %v1646, %v1663
  %v1665 = vpop.f32.mrf.mxu0
  %v1666 = vadd.f32 %v1648, %v1665
  %1667 = vmatmul.bf16.gmra.mxu0 %v1634
  %v1668 = vpop.f32.mrf.mxu0
  %v1669 = vadd.f32 %v1651, %v1668
  %v1670 = vpop.f32.mrf.mxu0
  %1671 = vdwg.mxu0
  %1672 = vmatpush.bf16.msra.mxu0 %v1574
  %1673 = vmatpush.bf16.msra.mxu0 %v1571
  %1674 = vmatpush.bf16.msra.mxu0 %v1568
  %1675 = vmatpush.bf16.msra.mxu0 %v1565
  %1676 = vmatpush.bf16.msra.mxu0 %v1562
  %1677 = vmatpush.bf16.msra.mxu0 %v1559
  %1678 = vmatpush.bf16.msra.mxu0 %v1556
  %1679 = vmatpush.bf16.msra.mxu0 %v1553
  %1680 = vmatmul.bf16.gmra.mxu0 %v1416
  %v1681 = vpop.f32.mrf.mxu0
  %v1682 = vadd.f32 %v1363, %v1681
  %v1683 = vpop.f32.mrf.mxu0
  %v1684 = vadd.f32 %v1365, %v1683
  %1685 = vmatmul.bf16.gmra.mxu0 %v1418
  %v1686 = vpop.f32.mrf.mxu0
  %v1687 = vadd.f32 %v1368, %v1686
  %v1688 = vpop.f32.mrf.mxu0
  %1689 = vdwg.mxu0
  %1690 = vmatpush.bf16.msra.mxu0 0
  %1691 = vmatpush.bf16.msra.mxu0 0
  %1692 = vmatpush.bf16.msra.mxu0 0
  %1693 = vmatpush.bf16.msra.mxu0 %v1589
  %1694 = vmatpush.bf16.msra.mxu0 %v1586
  %1695 = vmatpush.bf16.msra.mxu0 %v1583
  %1696 = vmatpush.bf16.msra.mxu0 %v1580
  %1697 = vmatpush.bf16.msra.mxu0 %v1577
  %1698 = vmatmul.bf16.gmra.mxu0 %v1631
  %v1699 = vpop.f32.mrf.mxu0
  %v1700 = vadd.f32 %v1682, %v1699
  %v1701 = vpop.f32.mrf.mxu0
  %v1702 = vadd.f32 %v1684, %v1701
  %1703 = vmatmul.bf16.gmra.mxu0 %v1634
  %v1704 = vpop.f32.mrf.mxu0
  %v1705 = vadd.f32 %v1687, %v1704
  %v1706 = vpop.f32.mrf.mxu0
  %1707 = vdwg.mxu0
  %1708 = vmatpush.bf16.msra.mxu0 %v1575
  %1709 = vmatpush.bf16.msra.mxu0 %v1572
  %1710 = vmatpush.bf16.msra.mxu0 %v1569
  %1711 = vmatpush.bf16.msra.mxu0 %v1566
  %1712 = vmatpush.bf16.msra.mxu0 %v1563
  %1713 = vmatpush.bf16.msra.mxu0 %v1560
  %1714 = vmatpush.bf16.msra.mxu0 %v1557
  %1715 = vmatpush.bf16.msra.mxu0 %v1554
  %1716 = vmatmul.bf16.gmra.mxu0 %v1416
  %v1717 = vpop.f32.mrf.mxu0
  %v1718 = vadd.f32 %v1399, %v1717
  %v1719 = vpop.f32.mrf.mxu0
  %v1720 = vadd.f32 %v1401, %v1719
  %1721 = vmatmul.bf16.gmra.mxu0 %v1418
  %v1722 = vpop.f32.mrf.mxu0
  %v1723 = vadd.f32 %v1404, %v1722
  %v1724 = vpop.f32.mrf.mxu0
  %1725 = vdwg.mxu0
  %1726 = vmatpush.bf16.msra.mxu0 0
  %1727 = vmatpush.bf16.msra.mxu0 0
  %1728 = vmatpush.bf16.msra.mxu0 0
  %1729 = vmatpush.bf16.msra.mxu0 %v1590
  %1730 = vmatpush.bf16.msra.mxu0 %v1587
  %1731 = vmatpush.bf16.msra.mxu0 %v1584
  %1732 = vmatpush.bf16.msra.mxu0 %v1581
  %1733 = vmatpush.bf16.msra.mxu0 %v1578
  %1734 = vmatmul.bf16.gmra.mxu0 %v1631
  %v1735 = vpop.f32.mrf.mxu0
  %v1736 = vadd.f32 %v1718, %v1735
  %v1737 = vpop.f32.mrf.mxu0
  %v1738 = vadd.f32 %v1720, %v1737
  %1739 = vmatmul.bf16.gmra.mxu0 %v1634
  %v1740 = vpop.f32.mrf.mxu0
  %v1741 = vadd.f32 %v1723, %v1740
  %v1742 = vpop.f32.mrf.mxu0
  %1743 = vdwg.mxu0
  %v1744 = vld [vmem:[#allocation2 + $0x30] sm:$0xcc]
  %v1745 = vld [vmem:[#allocation2 + $0x38] sm:$0xff]
  %v1746 = vld [vmem:[#allocation2 + $0x40] sm:$0xff]
  %v1747 = vld [vmem:[#allocation2 + $0x48] sm:$0x33]
  %s1748 = scalar_lea.vmem %s1, 624
  %v1749 = vld [vmem:[%s1748] sm:$0xff]
  %v1750 = vld [vmem:[%s1748 + $0x8] sm:$0xf]
  %v1751 = vld [vmem:[%s1748 + $0xc] sm:$0xff]
  %v1752 = vld [vmem:[%s1748 + $0x14] sm:$0xf]
  %v1753 = vld [vmem:[%s1748 + $0x18] sm:$0xff]
  %v1754 = vld [vmem:[%s1748 + $0x20] sm:$0xf]
  %v1755 = vld [vmem:[%s1748 + $0x24] sm:$0xff]
  %v1756 = vld [vmem:[%s1748 + $0x2c] sm:$0xf]
  %v1757 = vld [vmem:[%s1748 + $0x30] sm:$0xff]
  %v1758 = vld [vmem:[%s1748 + $0x38] sm:$0xf]
  %v1759 = vld [vmem:[%s1748 + $0x3c] sm:$0xff]
  %v1760 = vld [vmem:[%s1748 + $0x44] sm:$0xf]
  %v1761 = vld [vmem:[%s1748 + $0x48] sm:$0xff]
  %v1762 = vld [vmem:[%s1748 + $0x50] sm:$0xf]
  %v1763 = vld [vmem:[%s1748 + $0x54] sm:$0xff]
  %v1764 = vld [vmem:[%s1748 + $0x5c] sm:$0xf]
  %v1765 = vld [vmem:[%s1748 + $0x60] sm:$0xff]
  %v1766 = vld [vmem:[%s1748 + $0x68] sm:$0xf]
  %v1767 = vld [vmem:[%s1748 + $0x6c] sm:$0xff]
  %v1768 = vld [vmem:[%s1748 + $0x74] sm:$0xf]
  %v1769 = vld [vmem:[%s1748 + $0x78] sm:$0xff]
  %v1770 = vld [vmem:[%s1748 + $0x80] sm:$0xf]
  %v1771 = vld [vmem:[%s1748 + $0x84] sm:$0xff]
  %v1772 = vld [vmem:[%s1748 + $0x8c] sm:$0xf]
  %v1773 = vld [vmem:[%s1748 + $0x90] sm:$0xff]
  %v1774 = vld [vmem:[%s1748 + $0x98] sm:$0xf]
  %v1775 = vld [vmem:[%s1748 + $0x9c] sm:$0xff]
  %v1776 = vld [vmem:[%s1748 + $0xa4] sm:$0xf]
  %v1777 = vld [vmem:[%s1748 + $0xa8] sm:$0xff]
  %v1778 = vld [vmem:[%s1748 + $0xb0] sm:$0xf]
  %v1779 = vld [vmem:[%s1748 + $0xb4] sm:$0xff]
  %v1780 = vld [vmem:[%s1748 + $0xbc] sm:$0xf]
  %v1781 = vld [vmem:[%s1748 + $0xc0] sm:$0xff]
  %v1782 = vld [vmem:[%s1748 + $0xc8] sm:$0xf]
  %v1783 = vld [vmem:[%s1748 + $0xcc] sm:$0xff]
  %v1784 = vld [vmem:[%s1748 + $0xd4] sm:$0xf]
  %v1785 = vld [vmem:[%s1748 + $0xd8] sm:$0xff]
  %v1786 = vld [vmem:[%s1748 + $0xe0] sm:$0xf]
  %v1787 = vld [vmem:[%s1748 + $0xe4] sm:$0xff]
  %v1788 = vld [vmem:[%s1748 + $0xec] sm:$0xf]
  %v1789 = vld [vmem:[%s1748 + $0xf0] sm:$0xff]
  %v1790 = vld [vmem:[%s1748 + $0xf8] sm:$0xf]
  %v1791 = vld [vmem:[%s1748 + $0xfc] sm:$0xff]
  %v1792 = vld [vmem:[%s1748 + $0x104] sm:$0xf]
  %v1793 = vld [vmem:[%s1748 + $0x108] sm:$0xff]
  %v1794 = vld [vmem:[%s1748 + $0x110] sm:$0xf]
  %v1795 = vld [vmem:[%s1748 + $0x114] sm:$0xff]
  %v1796 = vld [vmem:[%s1748 + $0x11c] sm:$0xf]
  %v1797 = vld [vmem:[%s1748 + $0x120] sm:$0xff]
  %v1798 = vld [vmem:[%s1748 + $0x128] sm:$0xf]
  %v1799 = vld [vmem:[%s1748 + $0x12c] sm:$0xff]
  %v1800 = vld [vmem:[%s1748 + $0x134] sm:$0xf]
  %v1805 = vunpack.c.l.b16 %v1744
  %v1806 = vunpack.c.h.b16 %v1744
  %v1807 = vunpack.c.l.b16 %v1745
  %v1808 = vunpack.c.h.b16 %v1745
  %v1809 = vunpack.c.l.b16 %v1746
  %v1810 = vunpack.c.h.b16 %v1746
  %v1811 = vunpack.c.l.b16 %v1747
  %v1812 = vunpack.c.h.b16 %v1747
  %v1813 = vpack.c.b16 %v1807, %v1805
  %v1814 = vpack.c.b16 %v1808, %v1806
  %v1815 = vpack.c.b16 %v1811, %v1809
  %v1816 = vpack.c.b16 %v1812, %v1810
  %vm1817 = vcmask 1045504
  %v1818 = vrot.slane %v1813, 2
  %v1819 = vrot.slane %v1815, 2
  %v1820 = vsel %vm1817, %v1818, %v1819
  %v1821 = vrot.slane %v1814, 2
  %v1822 = vrot.slane %v1816, 2
  %v1823 = vsel %vm1817, %v1821, %v1822
  %v1878 = vunpack.c.l.b16 %v1749
  %v1879 = vunpack.c.h.b16 %v1749
  %v1880 = vunpack.c.l.b16 %v1750
  %v1881 = vunpack.c.l.b16 %v1751
  %v1882 = vunpack.c.h.b16 %v1751
  %v1883 = vunpack.c.l.b16 %v1752
  %v1884 = vunpack.c.l.b16 %v1753
  %v1885 = vunpack.c.h.b16 %v1753
  %v1886 = vunpack.c.l.b16 %v1754
  %v1887 = vunpack.c.l.b16 %v1755
  %v1888 = vunpack.c.h.b16 %v1755
  %v1889 = vunpack.c.l.b16 %v1756
  %v1890 = vunpack.c.l.b16 %v1757
  %v1891 = vunpack.c.h.b16 %v1757
  %v1892 = vunpack.c.l.b16 %v1758
  %v1893 = vunpack.c.l.b16 %v1759
  %v1894 = vunpack.c.h.b16 %v1759
  %v1895 = vunpack.c.l.b16 %v1760
  %v1896 = vunpack.c.l.b16 %v1761
  %v1897 = vunpack.c.h.b16 %v1761
  %v1898 = vunpack.c.l.b16 %v1762
  %v1899 = vunpack.c.l.b16 %v1763
  %v1900 = vunpack.c.h.b16 %v1763
  %v1901 = vunpack.c.l.b16 %v1764
  %v1902 = vunpack.c.l.b16 %v1765
  %v1903 = vunpack.c.h.b16 %v1765
  %v1904 = vunpack.c.l.b16 %v1766
  %v1905 = vunpack.c.l.b16 %v1767
  %v1906 = vunpack.c.h.b16 %v1767
  %v1907 = vunpack.c.l.b16 %v1768
  %v1908 = vunpack.c.l.b16 %v1769
  %v1909 = vunpack.c.h.b16 %v1769
  %v1910 = vunpack.c.l.b16 %v1770
  %v1911 = vunpack.c.l.b16 %v1771
  %v1912 = vunpack.c.h.b16 %v1771
  %v1913 = vunpack.c.l.b16 %v1772
  %v1914 = vunpack.c.l.b16 %v1773
  %v1915 = vunpack.c.h.b16 %v1773
  %v1916 = vunpack.c.l.b16 %v1774
  %v1917 = vunpack.c.l.b16 %v1775
  %v1918 = vunpack.c.h.b16 %v1775
  %v1919 = vunpack.c.l.b16 %v1776
  %v1920 = vunpack.c.l.b16 %v1777
  %v1921 = vunpack.c.h.b16 %v1777
  %v1922 = vunpack.c.l.b16 %v1778
  %v1923 = vunpack.c.l.b16 %v1779
  %v1924 = vunpack.c.h.b16 %v1779
  %v1925 = vunpack.c.l.b16 %v1780
  %v1926 = vunpack.c.l.b16 %v1781
  %v1927 = vunpack.c.h.b16 %v1781
  %v1928 = vunpack.c.l.b16 %v1782
  %v1929 = vunpack.c.l.b16 %v1783
  %v1930 = vunpack.c.h.b16 %v1783
  %v1931 = vunpack.c.l.b16 %v1784
  %v1932 = vunpack.c.l.b16 %v1785
  %v1933 = vunpack.c.h.b16 %v1785
  %v1934 = vunpack.c.l.b16 %v1786
  %v1935 = vunpack.c.l.b16 %v1787
  %v1936 = vunpack.c.h.b16 %v1787
  %v1937 = vunpack.c.l.b16 %v1788
  %v1938 = vunpack.c.l.b16 %v1789
  %v1939 = vunpack.c.h.b16 %v1789
  %v1940 = vunpack.c.l.b16 %v1790
  %v1941 = vunpack.c.l.b16 %v1791
  %v1942 = vunpack.c.h.b16 %v1791
  %v1943 = vunpack.c.l.b16 %v1792
  %v1944 = vunpack.c.l.b16 %v1793
  %v1945 = vunpack.c.h.b16 %v1793
  %v1946 = vunpack.c.l.b16 %v1794
  %v1947 = vunpack.c.l.b16 %v1795
  %v1948 = vunpack.c.h.b16 %v1795
  %v1949 = vunpack.c.l.b16 %v1796
  %v1950 = vunpack.c.l.b16 %v1797
  %v1951 = vunpack.c.h.b16 %v1797
  %v1952 = vunpack.c.l.b16 %v1798
  %v1953 = vunpack.c.l.b16 %v1799
  %v1954 = vunpack.c.h.b16 %v1799
  %v1955 = vunpack.c.l.b16 %v1800
  %v1956 = vpack.c.b16 %v1881, %v1878
  %v1957 = vpack.c.b16 %v1882, %v1879
  %v1958 = vpack.c.b16 %v1883, %v1880
  %v1959 = vpack.c.b16 %v1887, %v1884
  %v1960 = vpack.c.b16 %v1888, %v1885
  %v1961 = vpack.c.b16 %v1889, %v1886
  %v1962 = vpack.c.b16 %v1893, %v1890
  %v1963 = vpack.c.b16 %v1894, %v1891
  %v1964 = vpack.c.b16 %v1895, %v1892
  %v1965 = vpack.c.b16 %v1899, %v1896
  %v1966 = vpack.c.b16 %v1900, %v1897
  %v1967 = vpack.c.b16 %v1901, %v1898
  %v1968 = vpack.c.b16 %v1905, %v1902
  %v1969 = vpack.c.b16 %v1906, %v1903
  %v1970 = vpack.c.b16 %v1907, %v1904
  %v1971 = vpack.c.b16 %v1911, %v1908
  %v1972 = vpack.c.b16 %v1912, %v1909
  %v1973 = vpack.c.b16 %v1913, %v1910
  %v1974 = vpack.c.b16 %v1917, %v1914
  %v1975 = vpack.c.b16 %v1918, %v1915
  %v1976 = vpack.c.b16 %v1919, %v1916
  %v1977 = vpack.c.b16 %v1923, %v1920
  %v1978 = vpack.c.b16 %v1924, %v1921
  %v1979 = vpack.c.b16 %v1925, %v1922
  %v1980 = vpack.c.b16 %v1929, %v1926
  %v1981 = vpack.c.b16 %v1930, %v1927
  %v1982 = vpack.c.b16 %v1931, %v1928
  %v1983 = vpack.c.b16 %v1935, %v1932
  %v1984 = vpack.c.b16 %v1936, %v1933
  %v1985 = vpack.c.b16 %v1937, %v1934
  %v1986 = vpack.c.b16 %v1941, %v1938
  %v1987 = vpack.c.b16 %v1942, %v1939
  %v1988 = vpack.c.b16 %v1943, %v1940
  %v1989 = vpack.c.b16 %v1947, %v1944
  %v1990 = vpack.c.b16 %v1948, %v1945
  %v1991 = vpack.c.b16 %v1949, %v1946
  %v1992 = vpack.c.b16 %v1953, %v1950
  %v1993 = vpack.c.b16 %v1954, %v1951
  %v1994 = vpack.c.b16 %v1955, %v1952
  %v2035 = vsel %vm1292, %v1823, 0
  %v2038 = vsel %vm1292, %v1822, 0
  %2040 = vmatpush.bf16.msra.mxu0 %v1977
  %2041 = vmatpush.bf16.msra.mxu0 %v1974
  %2042 = vmatpush.bf16.msra.mxu0 %v1971
  %2043 = vmatpush.bf16.msra.mxu0 %v1968
  %2044 = vmatpush.bf16.msra.mxu0 %v1965
  %2045 = vmatpush.bf16.msra.mxu0 %v1962
  %2046 = vmatpush.bf16.msra.mxu0 %v1959
  %2047 = vmatpush.bf16.msra.mxu0 %v1956
  %2048 = vmatmul.bf16.gmra.mxu0 %v1820
  %v2049 = vpop.f32.mrf.mxu0
  %v2050 = vadd.f32 0.0, %v2049
  %v2051 = vpop.f32.mrf.mxu0
  %v2052 = vadd.f32 0.0, %v2051
  %2053 = vmatmul.bf16.gmra.mxu0 %v1819
  %v2054 = vpop.f32.mrf.mxu0
  %v2055 = vadd.f32 0.0, %v2054
  %v2056 = vpop.f32.mrf.mxu0
  %2057 = vdwg.mxu0
  %2058 = vmatpush.bf16.msra.mxu0 0
  %2059 = vmatpush.bf16.msra.mxu0 0
  %2060 = vmatpush.bf16.msra.mxu0 0
  %2061 = vmatpush.bf16.msra.mxu0 %v1992
  %2062 = vmatpush.bf16.msra.mxu0 %v1989
  %2063 = vmatpush.bf16.msra.mxu0 %v1986
  %2064 = vmatpush.bf16.msra.mxu0 %v1983
  %2065 = vmatpush.bf16.msra.mxu0 %v1980
  %2066 = vmatmul.bf16.gmra.mxu0 %v2035
  %v2067 = vpop.f32.mrf.mxu0
  %v2068 = vadd.f32 %v2050, %v2067
  %v2069 = vpop.f32.mrf.mxu0
  %v2070 = vadd.f32 %v2052, %v2069
  %2071 = vmatmul.bf16.gmra.mxu0 %v2038
  %v2072 = vpop.f32.mrf.mxu0
  %v2073 = vadd.f32 %v2055, %v2072
  %v2074 = vpop.f32.mrf.mxu0
  %2075 = vdwg.mxu0
  %2076 = vmatpush.bf16.msra.mxu0 %v1978
  %2077 = vmatpush.bf16.msra.mxu0 %v1975
  %2078 = vmatpush.bf16.msra.mxu0 %v1972
  %2079 = vmatpush.bf16.msra.mxu0 %v1969
  %2080 = vmatpush.bf16.msra.mxu0 %v1966
  %2081 = vmatpush.bf16.msra.mxu0 %v1963
  %2082 = vmatpush.bf16.msra.mxu0 %v1960
  %2083 = vmatpush.bf16.msra.mxu0 %v1957
  %2084 = vmatmul.bf16.gmra.mxu0 %v1820
  %v2085 = vpop.f32.mrf.mxu0
  %v2086 = vadd.f32 0.0, %v2085
  %v2087 = vpop.f32.mrf.mxu0
  %v2088 = vadd.f32 0.0, %v2087
  %2089 = vmatmul.bf16.gmra.mxu0 %v1819
  %v2090 = vpop.f32.mrf.mxu0
  %v2091 = vadd.f32 0.0, %v2090
  %v2092 = vpop.f32.mrf.mxu0
  %2093 = vdwg.mxu0
  %2094 = vmatpush.bf16.msra.mxu0 0
  %2095 = vmatpush.bf16.msra.mxu0 0
  %2096 = vmatpush.bf16.msra.mxu0 0
  %2097 = vmatpush.bf16.msra.mxu0 %v1993
  %2098 = vmatpush.bf16.msra.mxu0 %v1990
  %2099 = vmatpush.bf16.msra.mxu0 %v1987
  %2100 = vmatpush.bf16.msra.mxu0 %v1984
  %2101 = vmatpush.bf16.msra.mxu0 %v1981
  %2102 = vmatmul.bf16.gmra.mxu0 %v2035
  %v2103 = vpop.f32.mrf.mxu0
  %v2104 = vadd.f32 %v2086, %v2103
  %v2105 = vpop.f32.mrf.mxu0
  %v2106 = vadd.f32 %v2088, %v2105
  %2107 = vmatmul.bf16.gmra.mxu0 %v2038
  %v2108 = vpop.f32.mrf.mxu0
  %v2109 = vadd.f32 %v2091, %v2108
  %v2110 = vpop.f32.mrf.mxu0
  %2111 = vdwg.mxu0
  %2112 = vmatpush.bf16.msra.mxu0 %v1979
  %2113 = vmatpush.bf16.msra.mxu0 %v1976
  %2114 = vmatpush.bf16.msra.mxu0 %v1973
  %2115 = vmatpush.bf16.msra.mxu0 %v1970
  %2116 = vmatpush.bf16.msra.mxu0 %v1967
  %2117 = vmatpush.bf16.msra.mxu0 %v1964
  %2118 = vmatpush.bf16.msra.mxu0 %v1961
  %2119 = vmatpush.bf16.msra.mxu0 %v1958
  %2120 = vmatmul.bf16.gmra.mxu0 %v1820
  %v2121 = vpop.f32.mrf.mxu0
  %v2122 = vadd.f32 0.0, %v2121
  %v2123 = vpop.f32.mrf.mxu0
  %v2124 = vadd.f32 0.0, %v2123
  %2125 = vmatmul.bf16.gmra.mxu0 %v1819
  %v2126 = vpop.f32.mrf.mxu0
  %v2127 = vadd.f32 0.0, %v2126
  %v2128 = vpop.f32.mrf.mxu0
  %2129 = vdwg.mxu0
  %2130 = vmatpush.bf16.msra.mxu0 0
  %2131 = vmatpush.bf16.msra.mxu0 0
  %2132 = vmatpush.bf16.msra.mxu0 0
  %2133 = vmatpush.bf16.msra.mxu0 %v1994
  %2134 = vmatpush.bf16.msra.mxu0 %v1991
  %2135 = vmatpush.bf16.msra.mxu0 %v1988
  %2136 = vmatpush.bf16.msra.mxu0 %v1985
  %2137 = vmatpush.bf16.msra.mxu0 %v1982
  %2138 = vmatmul.bf16.gmra.mxu0 %v2035
  %v2139 = vpop.f32.mrf.mxu0
  %v2140 = vadd.f32 %v2122, %v2139
  %v2141 = vpop.f32.mrf.mxu0
  %v2142 = vadd.f32 %v2124, %v2141
  %2143 = vmatmul.bf16.gmra.mxu0 %v2038
  %v2144 = vpop.f32.mrf.mxu0
  %v2145 = vadd.f32 %v2127, %v2144
  %v2146 = vpop.f32.mrf.mxu0
  %2147 = vdwg.mxu0
  %v2148 = vadd.f32 %v1664, %v2068
  %v2149 = vadd.f32 %v1700, %v2104
  %v2150 = vadd.f32 %v1736, %v2140
  %v2151 = vadd.f32 %v1666, %v2070
  %v2152 = vadd.f32 %v1702, %v2106
  %v2153 = vadd.f32 %v1738, %v2142
  %v2154 = vadd.f32 %v1669, %v2073
  %v2155 = vadd.f32 %v1705, %v2109
  %v2156 = vadd.f32 %v1741, %v2145
  %v2157 = vld [vmem:[#allocation2 + $0x48] sm:$0x88]
  %v2158 = vld [vmem:[#allocation2 + $0x50] sm:$0xff]
  %v2159 = vld [vmem:[#allocation2 + $0x58] sm:$0xff]
  %v2160 = vld [vmem:[#allocation2 + $0x60] sm:$0x77]
  %s2161 = scalar_lea.vmem %s1, 936
  %v2162 = vld [vmem:[%s2161] sm:$0xff]
  %v2163 = vld [vmem:[%s2161 + $0x8] sm:$0xf]
  %v2164 = vld [vmem:[%s2161 + $0xc] sm:$0xff]
  %v2165 = vld [vmem:[%s2161 + $0x14] sm:$0xf]
  %v2166 = vld [vmem:[%s2161 + $0x18] sm:$0xff]
  %v2167 = vld [vmem:[%s2161 + $0x20] sm:$0xf]
  %v2168 = vld [vmem:[%s2161 + $0x24] sm:$0xff]
  %v2169 = vld [vmem:[%s2161 + $0x2c] sm:$0xf]
  %v2170 = vld [vmem:[%s2161 + $0x30] sm:$0xff]
  %v2171 = vld [vmem:[%s2161 + $0x38] sm:$0xf]
  %v2172 = vld [vmem:[%s2161 + $0x3c] sm:$0xff]
  %v2173 = vld [vmem:[%s2161 + $0x44] sm:$0xf]
  %v2174 = vld [vmem:[%s2161 + $0x48] sm:$0xff]
  %v2175 = vld [vmem:[%s2161 + $0x50] sm:$0xf]
  %v2176 = vld [vmem:[%s2161 + $0x54] sm:$0xff]
  %v2177 = vld [vmem:[%s2161 + $0x5c] sm:$0xf]
  %v2178 = vld [vmem:[%s2161 + $0x60] sm:$0xff]
  %v2179 = vld [vmem:[%s2161 + $0x68] sm:$0xf]
  %v2180 = vld [vmem:[%s2161 + $0x6c] sm:$0xff]
  %v2181 = vld [vmem:[%s2161 + $0x74] sm:$0xf]
  %v2182 = vld [vmem:[%s2161 + $0x78] sm:$0xff]
  %v2183 = vld [vmem:[%s2161 + $0x80] sm:$0xf]
  %v2184 = vld [vmem:[%s2161 + $0x84] sm:$0xff]
  %v2185 = vld [vmem:[%s2161 + $0x8c] sm:$0xf]
  %v2186 = vld [vmem:[%s2161 + $0x90] sm:$0xff]
  %v2187 = vld [vmem:[%s2161 + $0x98] sm:$0xf]
  %v2188 = vld [vmem:[%s2161 + $0x9c] sm:$0xff]
  %v2189 = vld [vmem:[%s2161 + $0xa4] sm:$0xf]
  %v2190 = vld [vmem:[%s2161 + $0xa8] sm:$0xff]
  %v2191 = vld [vmem:[%s2161 + $0xb0] sm:$0xf]
  %v2192 = vld [vmem:[%s2161 + $0xb4] sm:$0xff]
  %v2193 = vld [vmem:[%s2161 + $0xbc] sm:$0xf]
  %v2194 = vld [vmem:[%s2161 + $0xc0] sm:$0xff]
  %v2195 = vld [vmem:[%s2161 + $0xc8] sm:$0xf]
  %v2196 = vld [vmem:[%s2161 + $0xcc] sm:$0xff]
  %v2197 = vld [vmem:[%s2161 + $0xd4] sm:$0xf]
  %v2198 = vld [vmem:[%s2161 + $0xd8] sm:$0xff]
  %v2199 = vld [vmem:[%s2161 + $0xe0] sm:$0xf]
  %v2200 = vld [vmem:[%s2161 + $0xe4] sm:$0xff]
  %v2201 = vld [vmem:[%s2161 + $0xec] sm:$0xf]
  %v2202 = vld [vmem:[%s2161 + $0xf0] sm:$0xff]
  %v2203 = vld [vmem:[%s2161 + $0xf8] sm:$0xf]
  %v2204 = vld [vmem:[%s2161 + $0xfc] sm:$0xff]
  %v2205 = vld [vmem:[%s2161 + $0x104] sm:$0xf]
  %v2206 = vld [vmem:[%s2161 + $0x108] sm:$0xff]
  %v2207 = vld [vmem:[%s2161 + $0x110] sm:$0xf]
  %v2208 = vld [vmem:[%s2161 + $0x114] sm:$0xff]
  %v2209 = vld [vmem:[%s2161 + $0x11c] sm:$0xf]
  %v2210 = vld [vmem:[%s2161 + $0x120] sm:$0xff]
  %v2211 = vld [vmem:[%s2161 + $0x128] sm:$0xf]
  %v2212 = vld [vmem:[%s2161 + $0x12c] sm:$0xff]
  %v2213 = vld [vmem:[%s2161 + $0x134] sm:$0xf]
  %v2218 = vunpack.c.l.b16 %v2157
  %v2219 = vunpack.c.h.b16 %v2157
  %v2220 = vunpack.c.l.b16 %v2158
  %v2221 = vunpack.c.h.b16 %v2158
  %v2222 = vunpack.c.l.b16 %v2159
  %v2223 = vunpack.c.h.b16 %v2159
  %v2224 = vunpack.c.l.b16 %v2160
  %v2225 = vunpack.c.h.b16 %v2160
  %v2226 = vpack.c.b16 %v2220, %v2218
  %v2227 = vpack.c.b16 %v2221, %v2219
  %v2228 = vpack.c.b16 %v2224, %v2222
  %v2229 = vpack.c.b16 %v2225, %v2223
  %vm2230 = vcmask 1044480
  %v2231 = vrot.slane %v2226, 3
  %v2232 = vrot.slane %v2228, 3
  %v2233 = vsel %vm2230, %v2231, %v2232
  %v2234 = vrot.slane %v2227, 3
  %v2235 = vrot.slane %v2229, 3
  %v2236 = vsel %vm2230, %v2234, %v2235
  %v2291 = vunpack.c.l.b16 %v2162
  %v2292 = vunpack.c.h.b16 %v2162
  %v2293 = vunpack.c.l.b16 %v2163
  %v2294 = vunpack.c.l.b16 %v2164
  %v2295 = vunpack.c.h.b16 %v2164
  %v2296 = vunpack.c.l.b16 %v2165
  %v2297 = vunpack.c.l.b16 %v2166
  %v2298 = vunpack.c.h.b16 %v2166
  %v2299 = vunpack.c.l.b16 %v2167
  %v2300 = vunpack.c.l.b16 %v2168
  %v2301 = vunpack.c.h.b16 %v2168
  %v2302 = vunpack.c.l.b16 %v2169
  %v2303 = vunpack.c.l.b16 %v2170
  %v2304 = vunpack.c.h.b16 %v2170
  %v2305 = vunpack.c.l.b16 %v2171
  %v2306 = vunpack.c.l.b16 %v2172
  %v2307 = vunpack.c.h.b16 %v2172
  %v2308 = vunpack.c.l.b16 %v2173
  %v2309 = vunpack.c.l.b16 %v2174
  %v2310 = vunpack.c.h.b16 %v2174
  %v2311 = vunpack.c.l.b16 %v2175
  %v2312 = vunpack.c.l.b16 %v2176
  %v2313 = vunpack.c.h.b16 %v2176
  %v2314 = vunpack.c.l.b16 %v2177
  %v2315 = vunpack.c.l.b16 %v2178
  %v2316 = vunpack.c.h.b16 %v2178
  %v2317 = vunpack.c.l.b16 %v2179
  %v2318 = vunpack.c.l.b16 %v2180
  %v2319 = vunpack.c.h.b16 %v2180
  %v2320 = vunpack.c.l.b16 %v2181
  %v2321 = vunpack.c.l.b16 %v2182
  %v2322 = vunpack.c.h.b16 %v2182
  %v2323 = vunpack.c.l.b16 %v2183
  %v2324 = vunpack.c.l.b16 %v2184
  %v2325 = vunpack.c.h.b16 %v2184
  %v2326 = vunpack.c.l.b16 %v2185
  %v2327 = vunpack.c.l.b16 %v2186
  %v2328 = vunpack.c.h.b16 %v2186
  %v2329 = vunpack.c.l.b16 %v2187
  %v2330 = vunpack.c.l.b16 %v2188
  %v2331 = vunpack.c.h.b16 %v2188
  %v2332 = vunpack.c.l.b16 %v2189
  %v2333 = vunpack.c.l.b16 %v2190
  %v2334 = vunpack.c.h.b16 %v2190
  %v2335 = vunpack.c.l.b16 %v2191
  %v2336 = vunpack.c.l.b16 %v2192
  %v2337 = vunpack.c.h.b16 %v2192
  %v2338 = vunpack.c.l.b16 %v2193
  %v2339 = vunpack.c.l.b16 %v2194
  %v2340 = vunpack.c.h.b16 %v2194
  %v2341 = vunpack.c.l.b16 %v2195
  %v2342 = vunpack.c.l.b16 %v2196
  %v2343 = vunpack.c.h.b16 %v2196
  %v2344 = vunpack.c.l.b16 %v2197
  %v2345 = vunpack.c.l.b16 %v2198
  %v2346 = vunpack.c.h.b16 %v2198
  %v2347 = vunpack.c.l.b16 %v2199
  %v2348 = vunpack.c.l.b16 %v2200
  %v2349 = vunpack.c.h.b16 %v2200
  %v2350 = vunpack.c.l.b16 %v2201
  %v2351 = vunpack.c.l.b16 %v2202
  %v2352 = vunpack.c.h.b16 %v2202
  %v2353 = vunpack.c.l.b16 %v2203
  %v2354 = vunpack.c.l.b16 %v2204
  %v2355 = vunpack.c.h.b16 %v2204
  %v2356 = vunpack.c.l.b16 %v2205
  %v2357 = vunpack.c.l.b16 %v2206
  %v2358 = vunpack.c.h.b16 %v2206
  %v2359 = vunpack.c.l.b16 %v2207
  %v2360 = vunpack.c.l.b16 %v2208
  %v2361 = vunpack.c.h.b16 %v2208
  %v2362 = vunpack.c.l.b16 %v2209
  %v2363 = vunpack.c.l.b16 %v2210
  %v2364 = vunpack.c.h.b16 %v2210
  %v2365 = vunpack.c.l.b16 %v2211
  %v2366 = vunpack.c.l.b16 %v2212
  %v2367 = vunpack.c.h.b16 %v2212
  %v2368 = vunpack.c.l.b16 %v2213
  %v2369 = vpack.c.b16 %v2294, %v2291
  %v2370 = vpack.c.b16 %v2295, %v2292
  %v2371 = vpack.c.b16 %v2296, %v2293
  %v2372 = vpack.c.b16 %v2300, %v2297
  %v2373 = vpack.c.b16 %v2301, %v2298
  %v2374 = vpack.c.b16 %v2302, %v2299
  %v2375 = vpack.c.b16 %v2306, %v2303
  %v2376 = vpack.c.b16 %v2307, %v2304
  %v2377 = vpack.c.b16 %v2308, %v2305
  %v2378 = vpack.c.b16 %v2312, %v2309
  %v2379 = vpack.c.b16 %v2313, %v2310
  %v2380 = vpack.c.b16 %v2314, %v2311
  %v2381 = vpack.c.b16 %v2318, %v2315
  %v2382 = vpack.c.b16 %v2319, %v2316
  %v2383 = vpack.c.b16 %v2320, %v2317
  %v2384 = vpack.c.b16 %v2324, %v2321
  %v2385 = vpack.c.b16 %v2325, %v2322
  %v2386 = vpack.c.b16 %v2326, %v2323
  %v2387 = vpack.c.b16 %v2330, %v2327
  %v2388 = vpack.c.b16 %v2331, %v2328
  %v2389 = vpack.c.b16 %v2332, %v2329
  %v2390 = vpack.c.b16 %v2336, %v2333
  %v2391 = vpack.c.b16 %v2337, %v2334
  %v2392 = vpack.c.b16 %v2338, %v2335
  %v2393 = vpack.c.b16 %v2342, %v2339
  %v2394 = vpack.c.b16 %v2343, %v2340
  %v2395 = vpack.c.b16 %v2344, %v2341
  %v2396 = vpack.c.b16 %v2348, %v2345
  %v2397 = vpack.c.b16 %v2349, %v2346
  %v2398 = vpack.c.b16 %v2350, %v2347
  %v2399 = vpack.c.b16 %v2354, %v2351
  %v2400 = vpack.c.b16 %v2355, %v2352
  %v2401 = vpack.c.b16 %v2356, %v2353
  %v2402 = vpack.c.b16 %v2360, %v2357
  %v2403 = vpack.c.b16 %v2361, %v2358
  %v2404 = vpack.c.b16 %v2362, %v2359
  %v2405 = vpack.c.b16 %v2366, %v2363
  %v2406 = vpack.c.b16 %v2367, %v2364
  %v2407 = vpack.c.b16 %v2368, %v2365
  %v2448 = vsel %vm1292, %v2236, 0
  %v2451 = vsel %vm1292, %v2235, 0
  %2453 = vmatpush.bf16.msra.mxu0 %v2390
  %2454 = vmatpush.bf16.msra.mxu0 %v2387
  %2455 = vmatpush.bf16.msra.mxu0 %v2384
  %2456 = vmatpush.bf16.msra.mxu0 %v2381
  %2457 = vmatpush.bf16.msra.mxu0 %v2378
  %2458 = vmatpush.bf16.msra.mxu0 %v2375
  %2459 = vmatpush.bf16.msra.mxu0 %v2372
  %2460 = vmatpush.bf16.msra.mxu0 %v2369
  %2461 = vmatmul.bf16.gmra.mxu0 %v2233
  %v2462 = vpop.f32.mrf.mxu0
  %v2463 = vadd.f32 0.0, %v2462
  %v2464 = vpop.f32.mrf.mxu0
  %v2465 = vadd.f32 0.0, %v2464
  %2466 = vmatmul.bf16.gmra.mxu0 %v2232
  %v2467 = vpop.f32.mrf.mxu0
  %v2468 = vadd.f32 0.0, %v2467
  %v2469 = vpop.f32.mrf.mxu0
  %2470 = vdwg.mxu0
  %2471 = vmatpush.bf16.msra.mxu0 0
  %2472 = vmatpush.bf16.msra.mxu0 0
  %2473 = vmatpush.bf16.msra.mxu0 0
  %2474 = vmatpush.bf16.msra.mxu0 %v2405
  %2475 = vmatpush.bf16.msra.mxu0 %v2402
  %2476 = vmatpush.bf16.msra.mxu0 %v2399
  %2477 = vmatpush.bf16.msra.mxu0 %v2396
  %2478 = vmatpush.bf16.msra.mxu0 %v2393
  %2479 = vmatmul.bf16.gmra.mxu0 %v2448
  %v2480 = vpop.f32.mrf.mxu0
  %v2481 = vadd.f32 %v2463, %v2480
  %v2482 = vpop.f32.mrf.mxu0
  %v2483 = vadd.f32 %v2465, %v2482
  %2484 = vmatmul.bf16.gmra.mxu0 %v2451
  %v2485 = vpop.f32.mrf.mxu0
  %v2486 = vadd.f32 %v2468, %v2485
  %v2487 = vpop.f32.mrf.mxu0
  %2488 = vdwg.mxu0
  %2489 = vmatpush.bf16.msra.mxu0 %v2391
  %2490 = vmatpush.bf16.msra.mxu0 %v2388
  %2491 = vmatpush.bf16.msra.mxu0 %v2385
  %2492 = vmatpush.bf16.msra.mxu0 %v2382
  %2493 = vmatpush.bf16.msra.mxu0 %v2379
  %2494 = vmatpush.bf16.msra.mxu0 %v2376
  %2495 = vmatpush.bf16.msra.mxu0 %v2373
  %2496 = vmatpush.bf16.msra.mxu0 %v2370
  %2497 = vmatmul.bf16.gmra.mxu0 %v2233
  %v2498 = vpop.f32.mrf.mxu0
  %v2499 = vadd.f32 0.0, %v2498
  %v2500 = vpop.f32.mrf.mxu0
  %v2501 = vadd.f32 0.0, %v2500
  %2502 = vmatmul.bf16.gmra.mxu0 %v2232
  %v2503 = vpop.f32.mrf.mxu0
  %v2504 = vadd.f32 0.0, %v2503
  %v2505 = vpop.f32.mrf.mxu0
  %2506 = vdwg.mxu0
  %2507 = vmatpush.bf16.msra.mxu0 0
  %2508 = vmatpush.bf16.msra.mxu0 0
  %2509 = vmatpush.bf16.msra.mxu0 0
  %2510 = vmatpush.bf16.msra.mxu0 %v2406
  %2511 = vmatpush.bf16.msra.mxu0 %v2403
  %2512 = vmatpush.bf16.msra.mxu0 %v2400
  %2513 = vmatpush.bf16.msra.mxu0 %v2397
  %2514 = vmatpush.bf16.msra.mxu0 %v2394
  %2515 = vmatmul.bf16.gmra.mxu0 %v2448
  %v2516 = vpop.f32.mrf.mxu0
  %v2517 = vadd.f32 %v2499, %v2516
  %v2518 = vpop.f32.mrf.mxu0
  %v2519 = vadd.f32 %v2501, %v2518
  %2520 = vmatmul.bf16.gmra.mxu0 %v2451
  %v2521 = vpop.f32.mrf.mxu0
  %v2522 = vadd.f32 %v2504, %v2521
  %v2523 = vpop.f32.mrf.mxu0
  %2524 = vdwg.mxu0
  %2525 = vmatpush.bf16.msra.mxu0 %v2392
  %2526 = vmatpush.bf16.msra.mxu0 %v2389
  %2527 = vmatpush.bf16.msra.mxu0 %v2386
  %2528 = vmatpush.bf16.msra.mxu0 %v2383
  %2529 = vmatpush.bf16.msra.mxu0 %v2380
  %2530 = vmatpush.bf16.msra.mxu0 %v2377
  %2531 = vmatpush.bf16.msra.mxu0 %v2374
  %2532 = vmatpush.bf16.msra.mxu0 %v2371
  %2533 = vmatmul.bf16.gmra.mxu0 %v2233
  %v2534 = vpop.f32.mrf.mxu0
  %v2535 = vadd.f32 0.0, %v2534
  %v2536 = vpop.f32.mrf.mxu0
  %v2537 = vadd.f32 0.0, %v2536
  %2538 = vmatmul.bf16.gmra.mxu0 %v2232
  %v2539 = vpop.f32.mrf.mxu0
  %v2540 = vadd.f32 0.0, %v2539
  %v2541 = vpop.f32.mrf.mxu0
  %2542 = vdwg.mxu0
  %2543 = vmatpush.bf16.msra.mxu0 0
  %2544 = vmatpush.bf16.msra.mxu0 0
  %2545 = vmatpush.bf16.msra.mxu0 0
  %2546 = vmatpush.bf16.msra.mxu0 %v2407
  %2547 = vmatpush.bf16.msra.mxu0 %v2404
  %2548 = vmatpush.bf16.msra.mxu0 %v2401
  %2549 = vmatpush.bf16.msra.mxu0 %v2398
  %2550 = vmatpush.bf16.msra.mxu0 %v2395
  %2551 = vmatmul.bf16.gmra.mxu0 %v2448
  %v2552 = vpop.f32.mrf.mxu0
  %v2553 = vadd.f32 %v2535, %v2552
  %v2554 = vpop.f32.mrf.mxu0
  %v2555 = vadd.f32 %v2537, %v2554
  %2556 = vmatmul.bf16.gmra.mxu0 %v2451
  %v2557 = vpop.f32.mrf.mxu0
  %v2558 = vadd.f32 %v2540, %v2557
  %v2559 = vpop.f32.mrf.mxu0
  %2560 = vdwg.mxu0
  %v2561 = vadd.f32 %v2148, %v2481
  %v2562 = vadd.f32 %v2149, %v2517
  %v2563 = vadd.f32 %v2150, %v2553
  %v2564 = vadd.f32 %v2151, %v2483
  %v2565 = vadd.f32 %v2152, %v2519
  %v2566 = vadd.f32 %v2153, %v2555
  %v2567 = vadd.f32 %v2154, %v2486
  %v2568 = vadd.f32 %v2155, %v2522
  %v2569 = vadd.f32 %v2156, %v2558
  %v2570 = vld [vmem:[#allocation2] sm:$0xee]
  %v2571 = vld [vmem:[#allocation2 + $0x8] sm:$0xff]
  %v2572 = vld [vmem:[#allocation2 + $0x10] sm:$0xff]
  %v2573 = vld [vmem:[#allocation2 + $0x18] sm:$0x11]
  %s2574 = scalar_lea.vmem %s1, 1248
  %v2575 = vld [vmem:[%s2574] sm:$0xff]
  %v2576 = vld [vmem:[%s2574 + $0x8] sm:$0xf]
  %v2577 = vld [vmem:[%s2574 + $0xc] sm:$0xff]
  %v2578 = vld [vmem:[%s2574 + $0x14] sm:$0xf]
  %v2579 = vld [vmem:[%s2574 + $0x18] sm:$0xff]
  %v2580 = vld [vmem:[%s2574 + $0x20] sm:$0xf]
  %v2581 = vld [vmem:[%s2574 + $0x24] sm:$0xff]
  %v2582 = vld [vmem:[%s2574 + $0x2c] sm:$0xf]
  %v2583 = vld [vmem:[%s2574 + $0x30] sm:$0xff]
  %v2584 = vld [vmem:[%s2574 + $0x38] sm:$0xf]
  %v2585 = vld [vmem:[%s2574 + $0x3c] sm:$0xff]
  %v2586 = vld [vmem:[%s2574 + $0x44] sm:$0xf]
  %v2587 = vld [vmem:[%s2574 + $0x48] sm:$0xff]
  %v2588 = vld [vmem:[%s2574 + $0x50] sm:$0xf]
  %v2589 = vld [vmem:[%s2574 + $0x54] sm:$0xff]
  %v2590 = vld [vmem:[%s2574 + $0x5c] sm:$0xf]
  %v2591 = vld [vmem:[%s2574 + $0x60] sm:$0xff]
  %v2592 = vld [vmem:[%s2574 + $0x68] sm:$0xf]
  %v2593 = vld [vmem:[%s2574 + $0x6c] sm:$0xff]
  %v2594 = vld [vmem:[%s2574 + $0x74] sm:$0xf]
  %v2595 = vld [vmem:[%s2574 + $0x78] sm:$0xff]
  %v2596 = vld [vmem:[%s2574 + $0x80] sm:$0xf]
  %v2597 = vld [vmem:[%s2574 + $0x84] sm:$0xff]
  %v2598 = vld [vmem:[%s2574 + $0x8c] sm:$0xf]
  %v2599 = vld [vmem:[%s2574 + $0x90] sm:$0xff]
  %v2600 = vld [vmem:[%s2574 + $0x98] sm:$0xf]
  %v2601 = vld [vmem:[%s2574 + $0x9c] sm:$0xff]
  %v2602 = vld [vmem:[%s2574 + $0xa4] sm:$0xf]
  %v2603 = vld [vmem:[%s2574 + $0xa8] sm:$0xff]
  %v2604 = vld [vmem:[%s2574 + $0xb0] sm:$0xf]
  %v2605 = vld [vmem:[%s2574 + $0xb4] sm:$0xff]
  %v2606 = vld [vmem:[%s2574 + $0xbc] sm:$0xf]
  %v2607 = vld [vmem:[%s2574 + $0xc0] sm:$0xff]
  %v2608 = vld [vmem:[%s2574 + $0xc8] sm:$0xf]
  %v2609 = vld [vmem:[%s2574 + $0xcc] sm:$0xff]
  %v2610 = vld [vmem:[%s2574 + $0xd4] sm:$0xf]
  %v2611 = vld [vmem:[%s2574 + $0xd8] sm:$0xff]
  %v2612 = vld [vmem:[%s2574 + $0xe0] sm:$0xf]
  %v2613 = vld [vmem:[%s2574 + $0xe4] sm:$0xff]
  %v2614 = vld [vmem:[%s2574 + $0xec] sm:$0xf]
  %v2615 = vld [vmem:[%s2574 + $0xf0] sm:$0xff]
  %v2616 = vld [vmem:[%s2574 + $0xf8] sm:$0xf]
  %v2617 = vld [vmem:[%s2574 + $0xfc] sm:$0xff]
  %v2618 = vld [vmem:[%s2574 + $0x104] sm:$0xf]
  %v2619 = vld [vmem:[%s2574 + $0x108] sm:$0xff]
  %v2620 = vld [vmem:[%s2574 + $0x110] sm:$0xf]
  %v2621 = vld [vmem:[%s2574 + $0x114] sm:$0xff]
  %v2622 = vld [vmem:[%s2574 + $0x11c] sm:$0xf]
  %v2623 = vld [vmem:[%s2574 + $0x120] sm:$0xff]
  %v2624 = vld [vmem:[%s2574 + $0x128] sm:$0xf]
  %v2625 = vld [vmem:[%s2574 + $0x12c] sm:$0xff]
  %v2626 = vld [vmem:[%s2574 + $0x134] sm:$0xf]
  %v2631 = vunpack.c.l.b16 %v2570
  %v2632 = vunpack.c.h.b16 %v2570
  %v2633 = vunpack.c.l.b16 %v2571
  %v2634 = vunpack.c.h.b16 %v2571
  %v2635 = vunpack.c.l.b16 %v2572
  %v2636 = vunpack.c.h.b16 %v2572
  %v2637 = vunpack.c.l.b16 %v2573
  %v2638 = vunpack.c.h.b16 %v2573
  %v2639 = vpack.c.b16 %v2633, %v2631
  %v2640 = vpack.c.b16 %v2634, %v2632
  %v2641 = vpack.c.b16 %v2637, %v2635
  %v2642 = vpack.c.b16 %v2638, %v2636
  %v2643 = vrot.slane %v2639, 1
  %v2644 = vrot.slane %v2641, 1
  %v2645 = vsel %vm1075, %v2643, %v2644
  %v2646 = vrot.slane %v2640, 1
  %v2647 = vrot.slane %v2642, 1
  %v2648 = vsel %vm1075, %v2646, %v2647
  %v2703 = vunpack.c.l.b16 %v2575
  %v2704 = vunpack.c.h.b16 %v2575
  %v2705 = vunpack.c.l.b16 %v2576
  %v2706 = vunpack.c.l.b16 %v2577
  %v2707 = vunpack.c.h.b16 %v2577
  %v2708 = vunpack.c.l.b16 %v2578
  %v2709 = vunpack.c.l.b16 %v2579
  %v2710 = vunpack.c.h.b16 %v2579
  %v2711 = vunpack.c.l.b16 %v2580
  %v2712 = vunpack.c.l.b16 %v2581
  %v2713 = vunpack.c.h.b16 %v2581
  %v2714 = vunpack.c.l.b16 %v2582
  %v2715 = vunpack.c.l.b16 %v2583
  %v2716 = vunpack.c.h.b16 %v2583
  %v2717 = vunpack.c.l.b16 %v2584
  %v2718 = vunpack.c.l.b16 %v2585
  %v2719 = vunpack.c.h.b16 %v2585
  %v2720 = vunpack.c.l.b16 %v2586
  %v2721 = vunpack.c.l.b16 %v2587
  %v2722 = vunpack.c.h.b16 %v2587
  %v2723 = vunpack.c.l.b16 %v2588
  %v2724 = vunpack.c.l.b16 %v2589
  %v2725 = vunpack.c.h.b16 %v2589
  %v2726 = vunpack.c.l.b16 %v2590
  %v2727 = vunpack.c.l.b16 %v2591
  %v2728 = vunpack.c.h.b16 %v2591
  %v2729 = vunpack.c.l.b16 %v2592
  %v2730 = vunpack.c.l.b16 %v2593
  %v2731 = vunpack.c.h.b16 %v2593
  %v2732 = vunpack.c.l.b16 %v2594
  %v2733 = vunpack.c.l.b16 %v2595
  %v2734 = vunpack.c.h.b16 %v2595
  %v2735 = vunpack.c.l.b16 %v2596
  %v2736 = vunpack.c.l.b16 %v2597
  %v2737 = vunpack.c.h.b16 %v2597
  %v2738 = vunpack.c.l.b16 %v2598
  %v2739 = vunpack.c.l.b16 %v2599
  %v2740 = vunpack.c.h.b16 %v2599
  %v2741 = vunpack.c.l.b16 %v2600
  %v2742 = vunpack.c.l.b16 %v2601
  %v2743 = vunpack.c.h.b16 %v2601
  %v2744 = vunpack.c.l.b16 %v2602
  %v2745 = vunpack.c.l.b16 %v2603
  %v2746 = vunpack.c.h.b16 %v2603
  %v2747 = vunpack.c.l.b16 %v2604
  %v2748 = vunpack.c.l.b16 %v2605
  %v2749 = vunpack.c.h.b16 %v2605
  %v2750 = vunpack.c.l.b16 %v2606
  %v2751 = vunpack.c.l.b16 %v2607
  %v2752 = vunpack.c.h.b16 %v2607
  %v2753 = vunpack.c.l.b16 %v2608
  %v2754 = vunpack.c.l.b16 %v2609
  %v2755 = vunpack.c.h.b16 %v2609
  %v2756 = vunpack.c.l.b16 %v2610
  %v2757 = vunpack.c.l.b16 %v2611
  %v2758 = vunpack.c.h.b16 %v2611
  %v2759 = vunpack.c.l.b16 %v2612
  %v2760 = vunpack.c.l.b16 %v2613
  %v2761 = vunpack.c.h.b16 %v2613
  %v2762 = vunpack.c.l.b16 %v2614
  %v2763 = vunpack.c.l.b16 %v2615
  %v2764 = vunpack.c.h.b16 %v2615
  %v2765 = vunpack.c.l.b16 %v2616
  %v2766 = vunpack.c.l.b16 %v2617
  %v2767 = vunpack.c.h.b16 %v2617
  %v2768 = vunpack.c.l.b16 %v2618
  %v2769 = vunpack.c.l.b16 %v2619
  %v2770 = vunpack.c.h.b16 %v2619
  %v2771 = vunpack.c.l.b16 %v2620
  %v2772 = vunpack.c.l.b16 %v2621
  %v2773 = vunpack.c.h.b16 %v2621
  %v2774 = vunpack.c.l.b16 %v2622
  %v2775 = vunpack.c.l.b16 %v2623
  %v2776 = vunpack.c.h.b16 %v2623
  %v2777 = vunpack.c.l.b16 %v2624
  %v2778 = vunpack.c.l.b16 %v2625
  %v2779 = vunpack.c.h.b16 %v2625
  %v2780 = vunpack.c.l.b16 %v2626
  %v2781 = vpack.c.b16 %v2706, %v2703
  %v2782 = vpack.c.b16 %v2707, %v2704
  %v2783 = vpack.c.b16 %v2708, %v2705
  %v2784 = vpack.c.b16 %v2712, %v2709
  %v2785 = vpack.c.b16 %v2713, %v2710
  %v2786 = vpack.c.b16 %v2714, %v2711
  %v2787 = vpack.c.b16 %v2718, %v2715
  %v2788 = vpack.c.b16 %v2719, %v2716
  %v2789 = vpack.c.b16 %v2720, %v2717
  %v2790 = vpack.c.b16 %v2724, %v2721
  %v2791 = vpack.c.b16 %v2725, %v2722
  %v2792 = vpack.c.b16 %v2726, %v2723
  %v2793 = vpack.c.b16 %v2730, %v2727
  %v2794 = vpack.c.b16 %v2731, %v2728
  %v2795 = vpack.c.b16 %v2732, %v2729
  %v2796 = vpack.c.b16 %v2736, %v2733
  %v2797 = vpack.c.b16 %v2737, %v2734
  %v2798 = vpack.c.b16 %v2738, %v2735
  %v2799 = vpack.c.b16 %v2742, %v2739
  %v2800 = vpack.c.b16 %v2743, %v2740
  %v2801 = vpack.c.b16 %v2744, %v2741
  %v2802 = vpack.c.b16 %v2748, %v2745
  %v2803 = vpack.c.b16 %v2749, %v2746
  %v2804 = vpack.c.b16 %v2750, %v2747
  %v2805 = vpack.c.b16 %v2754, %v2751
  %v2806 = vpack.c.b16 %v2755, %v2752
  %v2807 = vpack.c.b16 %v2756, %v2753
  %v2808 = vpack.c.b16 %v2760, %v2757
  %v2809 = vpack.c.b16 %v2761, %v2758
  %v2810 = vpack.c.b16 %v2762, %v2759
  %v2811 = vpack.c.b16 %v2766, %v2763
  %v2812 = vpack.c.b16 %v2767, %v2764
  %v2813 = vpack.c.b16 %v2768, %v2765
  %v2814 = vpack.c.b16 %v2772, %v2769
  %v2815 = vpack.c.b16 %v2773, %v2770
  %v2816 = vpack.c.b16 %v2774, %v2771
  %v2817 = vpack.c.b16 %v2778, %v2775
  %v2818 = vpack.c.b16 %v2779, %v2776
  %v2819 = vpack.c.b16 %v2780, %v2777
  %v2860 = vsel %vm1292, %v2648, 0
  %v2863 = vsel %vm1292, %v2647, 0
  %2865 = vmatpush.bf16.msra.mxu0 %v2802
  %2866 = vmatpush.bf16.msra.mxu0 %v2799
  %2867 = vmatpush.bf16.msra.mxu0 %v2796
  %2868 = vmatpush.bf16.msra.mxu0 %v2793
  %2869 = vmatpush.bf16.msra.mxu0 %v2790
  %2870 = vmatpush.bf16.msra.mxu0 %v2787
  %2871 = vmatpush.bf16.msra.mxu0 %v2784
  %2872 = vmatpush.bf16.msra.mxu0 %v2781
  %2873 = vmatmul.bf16.gmra.mxu0 %v2645
  %v2874 = vpop.f32.mrf.mxu0
  %v2875 = vadd.f32 0.0, %v2874
  %v2876 = vpop.f32.mrf.mxu0
  %v2877 = vadd.f32 0.0, %v2876
  %2878 = vmatmul.bf16.gmra.mxu0 %v2644
  %v2879 = vpop.f32.mrf.mxu0
  %v2880 = vadd.f32 0.0, %v2879
  %v2881 = vpop.f32.mrf.mxu0
  %2882 = vdwg.mxu0
  %2883 = vmatpush.bf16.msra.mxu0 0
  %2884 = vmatpush.bf16.msra.mxu0 0
  %2885 = vmatpush.bf16.msra.mxu0 0
  %2886 = vmatpush.bf16.msra.mxu0 %v2817
  %2887 = vmatpush.bf16.msra.mxu0 %v2814
  %2888 = vmatpush.bf16.msra.mxu0 %v2811
  %2889 = vmatpush.bf16.msra.mxu0 %v2808
  %2890 = vmatpush.bf16.msra.mxu0 %v2805
  %2891 = vmatmul.bf16.gmra.mxu0 %v2860
  %v2892 = vpop.f32.mrf.mxu0
  %v2893 = vadd.f32 %v2875, %v2892
  %v2894 = vpop.f32.mrf.mxu0
  %v2895 = vadd.f32 %v2877, %v2894
  %2896 = vmatmul.bf16.gmra.mxu0 %v2863
  %v2897 = vpop.f32.mrf.mxu0
  %v2898 = vadd.f32 %v2880, %v2897
  %v2899 = vpop.f32.mrf.mxu0
  %2900 = vdwg.mxu0
  %2901 = vmatpush.bf16.msra.mxu0 %v2803
  %2902 = vmatpush.bf16.msra.mxu0 %v2800
  %2903 = vmatpush.bf16.msra.mxu0 %v2797
  %2904 = vmatpush.bf16.msra.mxu0 %v2794
  %2905 = vmatpush.bf16.msra.mxu0 %v2791
  %2906 = vmatpush.bf16.msra.mxu0 %v2788
  %2907 = vmatpush.bf16.msra.mxu0 %v2785
  %2908 = vmatpush.bf16.msra.mxu0 %v2782
  %2909 = vmatmul.bf16.gmra.mxu0 %v2645
  %v2910 = vpop.f32.mrf.mxu0
  %v2911 = vadd.f32 0.0, %v2910
  %v2912 = vpop.f32.mrf.mxu0
  %v2913 = vadd.f32 0.0, %v2912
  %2914 = vmatmul.bf16.gmra.mxu0 %v2644
  %v2915 = vpop.f32.mrf.mxu0
  %v2916 = vadd.f32 0.0, %v2915
  %v2917 = vpop.f32.mrf.mxu0
  %2918 = vdwg.mxu0
  %2919 = vmatpush.bf16.msra.mxu0 0
  %2920 = vmatpush.bf16.msra.mxu0 0
  %2921 = vmatpush.bf16.msra.mxu0 0
  %2922 = vmatpush.bf16.msra.mxu0 %v2818
  %2923 = vmatpush.bf16.msra.mxu0 %v2815
  %2924 = vmatpush.bf16.msra.mxu0 %v2812
  %2925 = vmatpush.bf16.msra.mxu0 %v2809
  %2926 = vmatpush.bf16.msra.mxu0 %v2806
  %2927 = vmatmul.bf16.gmra.mxu0 %v2860
  %v2928 = vpop.f32.mrf.mxu0
  %v2929 = vadd.f32 %v2911, %v2928
  %v2930 = vpop.f32.mrf.mxu0
  %v2931 = vadd.f32 %v2913, %v2930
  %2932 = vmatmul.bf16.gmra.mxu0 %v2863
  %v2933 = vpop.f32.mrf.mxu0
  %v2934 = vadd.f32 %v2916, %v2933
  %v2935 = vpop.f32.mrf.mxu0
  %2936 = vdwg.mxu0
  %2937 = vmatpush.bf16.msra.mxu0 %v2804
  %2938 = vmatpush.bf16.msra.mxu0 %v2801
  %2939 = vmatpush.bf16.msra.mxu0 %v2798
  %2940 = vmatpush.bf16.msra.mxu0 %v2795
  %2941 = vmatpush.bf16.msra.mxu0 %v2792
  %2942 = vmatpush.bf16.msra.mxu0 %v2789
  %2943 = vmatpush.bf16.msra.mxu0 %v2786
  %2944 = vmatpush.bf16.msra.mxu0 %v2783
  %2945 = vmatmul.bf16.gmra.mxu0 %v2645
  %v2946 = vpop.f32.mrf.mxu0
  %v2947 = vadd.f32 0.0, %v2946
  %v2948 = vpop.f32.mrf.mxu0
  %v2949 = vadd.f32 0.0, %v2948
  %2950 = vmatmul.bf16.gmra.mxu0 %v2644
  %v2951 = vpop.f32.mrf.mxu0
  %v2952 = vadd.f32 0.0, %v2951
  %v2953 = vpop.f32.mrf.mxu0
  %2954 = vdwg.mxu0
  %2955 = vmatpush.bf16.msra.mxu0 0
  %2956 = vmatpush.bf16.msra.mxu0 0
  %2957 = vmatpush.bf16.msra.mxu0 0
  %2958 = vmatpush.bf16.msra.mxu0 %v2819
  %2959 = vmatpush.bf16.msra.mxu0 %v2816
  %2960 = vmatpush.bf16.msra.mxu0 %v2813
  %2961 = vmatpush.bf16.msra.mxu0 %v2810
  %2962 = vmatpush.bf16.msra.mxu0 %v2807
  %2963 = vmatmul.bf16.gmra.mxu0 %v2860
  %v2964 = vpop.f32.mrf.mxu0
  %v2965 = vadd.f32 %v2947, %v2964
  %v2966 = vpop.f32.mrf.mxu0
  %v2967 = vadd.f32 %v2949, %v2966
  %2968 = vmatmul.bf16.gmra.mxu0 %v2863
  %v2969 = vpop.f32.mrf.mxu0
  %v2970 = vadd.f32 %v2952, %v2969
  %v2971 = vpop.f32.mrf.mxu0
  %2972 = vdwg.mxu0
  %v2973 = vadd.f32 %v2561, %v2893
  %v2974 = vadd.f32 %v2562, %v2929
  %v2975 = vadd.f32 %v2563, %v2965
  %v2976 = vadd.f32 %v2564, %v2895
  %v2977 = vadd.f32 %v2565, %v2931
  %v2978 = vadd.f32 %v2566, %v2967
  %v2979 = vadd.f32 %v2567, %v2898
  %v2980 = vadd.f32 %v2568, %v2934
  %v2981 = vadd.f32 %v2569, %v2970
  %v2982 = vld [vmem:[#allocation2 + $0x18] sm:$0xcc]
  %v2983 = vld [vmem:[#allocation2 + $0x30] sm:$0x33]
  %s2984 = scalar_lea.vmem %s1, 1560
  %v2985 = vld [vmem:[%s2984] sm:$0xff]
  %v2986 = vld [vmem:[%s2984 + $0x8] sm:$0xf]
  %v2987 = vld [vmem:[%s2984 + $0xc] sm:$0xff]
  %v2988 = vld [vmem:[%s2984 + $0x14] sm:$0xf]
  %v2989 = vld [vmem:[%s2984 + $0x18] sm:$0xff]
  %v2990 = vld [vmem:[%s2984 + $0x20] sm:$0xf]
  %v2991 = vld [vmem:[%s2984 + $0x24] sm:$0xff]
  %v2992 = vld [vmem:[%s2984 + $0x2c] sm:$0xf]
  %v2993 = vld [vmem:[%s2984 + $0x30] sm:$0xff]
  %v2994 = vld [vmem:[%s2984 + $0x38] sm:$0xf]
  %v2995 = vld [vmem:[%s2984 + $0x3c] sm:$0xff]
  %v2996 = vld [vmem:[%s2984 + $0x44] sm:$0xf]
  %v2997 = vld [vmem:[%s2984 + $0x48] sm:$0xff]
  %v2998 = vld [vmem:[%s2984 + $0x50] sm:$0xf]
  %v2999 = vld [vmem:[%s2984 + $0x54] sm:$0xff]
  %v3000 = vld [vmem:[%s2984 + $0x5c] sm:$0xf]
  %v3001 = vld [vmem:[%s2984 + $0x60] sm:$0xff]
  %v3002 = vld [vmem:[%s2984 + $0x68] sm:$0xf]
  %v3003 = vld [vmem:[%s2984 + $0x6c] sm:$0xff]
  %v3004 = vld [vmem:[%s2984 + $0x74] sm:$0xf]
  %v3005 = vld [vmem:[%s2984 + $0x78] sm:$0xff]
  %v3006 = vld [vmem:[%s2984 + $0x80] sm:$0xf]
  %v3007 = vld [vmem:[%s2984 + $0x84] sm:$0xff]
  %v3008 = vld [vmem:[%s2984 + $0x8c] sm:$0xf]
  %v3009 = vld [vmem:[%s2984 + $0x90] sm:$0xff]
  %v3010 = vld [vmem:[%s2984 + $0x98] sm:$0xf]
  %v3011 = vld [vmem:[%s2984 + $0x9c] sm:$0xff]
  %v3012 = vld [vmem:[%s2984 + $0xa4] sm:$0xf]
  %v3013 = vld [vmem:[%s2984 + $0xa8] sm:$0xff]
  %v3014 = vld [vmem:[%s2984 + $0xb0] sm:$0xf]
  %v3015 = vld [vmem:[%s2984 + $0xb4] sm:$0xff]
  %v3016 = vld [vmem:[%s2984 + $0xbc] sm:$0xf]
  %v3017 = vld [vmem:[%s2984 + $0xc0] sm:$0xff]
  %v3018 = vld [vmem:[%s2984 + $0xc8] sm:$0xf]
  %v3019 = vld [vmem:[%s2984 + $0xcc] sm:$0xff]
  %v3020 = vld [vmem:[%s2984 + $0xd4] sm:$0xf]
  %v3021 = vld [vmem:[%s2984 + $0xd8] sm:$0xff]
  %v3022 = vld [vmem:[%s2984 + $0xe0] sm:$0xf]
  %v3023 = vld [vmem:[%s2984 + $0xe4] sm:$0xff]
  %v3024 = vld [vmem:[%s2984 + $0xec] sm:$0xf]
  %v3025 = vld [vmem:[%s2984 + $0xf0] sm:$0xff]
  %v3026 = vld [vmem:[%s2984 + $0xf8] sm:$0xf]
  %v3027 = vld [vmem:[%s2984 + $0xfc] sm:$0xff]
  %v3028 = vld [vmem:[%s2984 + $0x104] sm:$0xf]
  %v3029 = vld [vmem:[%s2984 + $0x108] sm:$0xff]
  %v3030 = vld [vmem:[%s2984 + $0x110] sm:$0xf]
  %v3031 = vld [vmem:[%s2984 + $0x114] sm:$0xff]
  %v3032 = vld [vmem:[%s2984 + $0x11c] sm:$0xf]
  %v3033 = vld [vmem:[%s2984 + $0x120] sm:$0xff]
  %v3034 = vld [vmem:[%s2984 + $0x128] sm:$0xf]
  %v3035 = vld [vmem:[%s2984 + $0x12c] sm:$0xff]
  %v3036 = vld [vmem:[%s2984 + $0x134] sm:$0xf]
  %v3039 = vunpack.c.l.b16 %v2982
  %v3040 = vunpack.c.h.b16 %v2982
  %v3041 = vunpack.c.l.b16 %v2983
  %v3042 = vunpack.c.h.b16 %v2983
  %v3043 = vpack.c.b16 %v1065, %v3039
  %v3044 = vpack.c.b16 %v1066, %v3040
  %v3045 = vpack.c.b16 %v3041, %v1067
  %v3046 = vpack.c.b16 %v3042, %v1068
  %v3047 = vrot.slane %v3043, 2
  %v3048 = vrot.slane %v3045, 2
  %v3049 = vsel %vm1817, %v3047, %v3048
  %v3050 = vrot.slane %v3044, 2
  %v3051 = vrot.slane %v3046, 2
  %v3052 = vsel %vm1817, %v3050, %v3051
  %v3107 = vunpack.c.l.b16 %v2985
  %v3108 = vunpack.c.h.b16 %v2985
  %v3109 = vunpack.c.l.b16 %v2986
  %v3110 = vunpack.c.l.b16 %v2987
  %v3111 = vunpack.c.h.b16 %v2987
  %v3112 = vunpack.c.l.b16 %v2988
  %v3113 = vunpack.c.l.b16 %v2989
  %v3114 = vunpack.c.h.b16 %v2989
  %v3115 = vunpack.c.l.b16 %v2990
  %v3116 = vunpack.c.l.b16 %v2991
  %v3117 = vunpack.c.h.b16 %v2991
  %v3118 = vunpack.c.l.b16 %v2992
  %v3119 = vunpack.c.l.b16 %v2993
  %v3120 = vunpack.c.h.b16 %v2993
  %v3121 = vunpack.c.l.b16 %v2994
  %v3122 = vunpack.c.l.b16 %v2995
  %v3123 = vunpack.c.h.b16 %v2995
  %v3124 = vunpack.c.l.b16 %v2996
  %v3125 = vunpack.c.l.b16 %v2997
  %v3126 = vunpack.c.h.b16 %v2997
  %v3127 = vunpack.c.l.b16 %v2998
  %v3128 = vunpack.c.l.b16 %v2999
  %v3129 = vunpack.c.h.b16 %v2999
  %v3130 = vunpack.c.l.b16 %v3000
  %v3131 = vunpack.c.l.b16 %v3001
  %v3132 = vunpack.c.h.b16 %v3001
  %v3133 = vunpack.c.l.b16 %v3002
  %v3134 = vunpack.c.l.b16 %v3003
  %v3135 = vunpack.c.h.b16 %v3003
  %v3136 = vunpack.c.l.b16 %v3004
  %v3137 = vunpack.c.l.b16 %v3005
  %v3138 = vunpack.c.h.b16 %v3005
  %v3139 = vunpack.c.l.b16 %v3006
  %v3140 = vunpack.c.l.b16 %v3007
  %v3141 = vunpack.c.h.b16 %v3007
  %v3142 = vunpack.c.l.b16 %v3008
  %v3143 = vunpack.c.l.b16 %v3009
  %v3144 = vunpack.c.h.b16 %v3009
  %v3145 = vunpack.c.l.b16 %v3010
  %v3146 = vunpack.c.l.b16 %v3011
  %v3147 = vunpack.c.h.b16 %v3011
  %v3148 = vunpack.c.l.b16 %v3012
  %v3149 = vunpack.c.l.b16 %v3013
  %v3150 = vunpack.c.h.b16 %v3013
  %v3151 = vunpack.c.l.b16 %v3014
  %v3152 = vunpack.c.l.b16 %v3015
  %v3153 = vunpack.c.h.b16 %v3015
  %v3154 = vunpack.c.l.b16 %v3016
  %v3155 = vunpack.c.l.b16 %v3017
  %v3156 = vunpack.c.h.b16 %v3017
  %v3157 = vunpack.c.l.b16 %v3018
  %v3158 = vunpack.c.l.b16 %v3019
  %v3159 = vunpack.c.h.b16 %v3019
  %v3160 = vunpack.c.l.b16 %v3020
  %v3161 = vunpack.c.l.b16 %v3021
  %v3162 = vunpack.c.h.b16 %v3021
  %v3163 = vunpack.c.l.b16 %v3022
  %v3164 = vunpack.c.l.b16 %v3023
  %v3165 = vunpack.c.h.b16 %v3023
  %v3166 = vunpack.c.l.b16 %v3024
  %v3167 = vunpack.c.l.b16 %v3025
  %v3168 = vunpack.c.h.b16 %v3025
  %v3169 = vunpack.c.l.b16 %v3026
  %v3170 = vunpack.c.l.b16 %v3027
  %v3171 = vunpack.c.h.b16 %v3027
  %v3172 = vunpack.c.l.b16 %v3028
  %v3173 = vunpack.c.l.b16 %v3029
  %v3174 = vunpack.c.h.b16 %v3029
  %v3175 = vunpack.c.l.b16 %v3030
  %v3176 = vunpack.c.l.b16 %v3031
  %v3177 = vunpack.c.h.b16 %v3031
  %v3178 = vunpack.c.l.b16 %v3032
  %v3179 = vunpack.c.l.b16 %v3033
  %v3180 = vunpack.c.h.b16 %v3033
  %v3181 = vunpack.c.l.b16 %v3034
  %v3182 = vunpack.c.l.b16 %v3035
  %v3183 = vunpack.c.h.b16 %v3035
  %v3184 = vunpack.c.l.b16 %v3036
  %v3185 = vpack.c.b16 %v3110, %v3107
  %v3186 = vpack.c.b16 %v3111, %v3108
  %v3187 = vpack.c.b16 %v3112, %v3109
  %v3188 = vpack.c.b16 %v3116, %v3113
  %v3189 = vpack.c.b16 %v3117, %v3114
  %v3190 = vpack.c.b16 %v3118, %v3115
  %v3191 = vpack.c.b16 %v3122, %v3119
  %v3192 = vpack.c.b16 %v3123, %v3120
  %v3193 = vpack.c.b16 %v3124, %v3121
  %v3194 = vpack.c.b16 %v3128, %v3125
  %v3195 = vpack.c.b16 %v3129, %v3126
  %v3196 = vpack.c.b16 %v3130, %v3127
  %v3197 = vpack.c.b16 %v3134, %v3131
  %v3198 = vpack.c.b16 %v3135, %v3132
  %v3199 = vpack.c.b16 %v3136, %v3133
  %v3200 = vpack.c.b16 %v3140, %v3137
  %v3201 = vpack.c.b16 %v3141, %v3138
  %v3202 = vpack.c.b16 %v3142, %v3139
  %v3203 = vpack.c.b16 %v3146, %v3143
  %v3204 = vpack.c.b16 %v3147, %v3144
  %v3205 = vpack.c.b16 %v3148, %v3145
  %v3206 = vpack.c.b16 %v3152, %v3149
  %v3207 = vpack.c.b16 %v3153, %v3150
  %v3208 = vpack.c.b16 %v3154, %v3151
  %v3209 = vpack.c.b16 %v3158, %v3155
  %v3210 = vpack.c.b16 %v3159, %v3156
  %v3211 = vpack.c.b16 %v3160, %v3157
  %v3212 = vpack.c.b16 %v3164, %v3161
  %v3213 = vpack.c.b16 %v3165, %v3162
  %v3214 = vpack.c.b16 %v3166, %v3163
  %v3215 = vpack.c.b16 %v3170, %v3167
  %v3216 = vpack.c.b16 %v3171, %v3168
  %v3217 = vpack.c.b16 %v3172, %v3169
  %v3218 = vpack.c.b16 %v3176, %v3173
  %v3219 = vpack.c.b16 %v3177, %v3174
  %v3220 = vpack.c.b16 %v3178, %v3175
  %v3221 = vpack.c.b16 %v3182, %v3179
  %v3222 = vpack.c.b16 %v3183, %v3180
  %v3223 = vpack.c.b16 %v3184, %v3181
  %v3264 = vsel %vm1292, %v3052, 0
  %v3267 = vsel %vm1292, %v3051, 0
  %3269 = vmatpush.bf16.msra.mxu0 %v3206
  %3270 = vmatpush.bf16.msra.mxu0 %v3203
  %3271 = vmatpush.bf16.msra.mxu0 %v3200
  %3272 = vmatpush.bf16.msra.mxu0 %v3197
  %3273 = vmatpush.bf16.msra.mxu0 %v3194
  %3274 = vmatpush.bf16.msra.mxu0 %v3191
  %3275 = vmatpush.bf16.msra.mxu0 %v3188
  %3276 = vmatpush.bf16.msra.mxu0 %v3185
  %3277 = vmatmul.bf16.gmra.mxu0 %v3049
  %v3278 = vpop.f32.mrf.mxu0
  %v3279 = vadd.f32 0.0, %v3278
  %v3280 = vpop.f32.mrf.mxu0
  %v3281 = vadd.f32 0.0, %v3280
  %3282 = vmatmul.bf16.gmra.mxu0 %v3048
  %v3283 = vpop.f32.mrf.mxu0
  %v3284 = vadd.f32 0.0, %v3283
  %v3285 = vpop.f32.mrf.mxu0
  %3286 = vdwg.mxu0
  %3287 = vmatpush.bf16.msra.mxu0 0
  %3288 = vmatpush.bf16.msra.mxu0 0
  %3289 = vmatpush.bf16.msra.mxu0 0
  %3290 = vmatpush.bf16.msra.mxu0 %v3221
  %3291 = vmatpush.bf16.msra.mxu0 %v3218
  %3292 = vmatpush.bf16.msra.mxu0 %v3215
  %3293 = vmatpush.bf16.msra.mxu0 %v3212
  %3294 = vmatpush.bf16.msra.mxu0 %v3209
  %3295 = vmatmul.bf16.gmra.mxu0 %v3264
  %v3296 = vpop.f32.mrf.mxu0
  %v3297 = vadd.f32 %v3279, %v3296
  %v3298 = vpop.f32.mrf.mxu0
  %v3299 = vadd.f32 %v3281, %v3298
  %3300 = vmatmul.bf16.gmra.mxu0 %v3267
  %v3301 = vpop.f32.mrf.mxu0
  %v3302 = vadd.f32 %v3284, %v3301
  %v3303 = vpop.f32.mrf.mxu0
  %3304 = vdwg.mxu0
  %3305 = vmatpush.bf16.msra.mxu0 %v3207
  %3306 = vmatpush.bf16.msra.mxu0 %v3204
  %3307 = vmatpush.bf16.msra.mxu0 %v3201
  %3308 = vmatpush.bf16.msra.mxu0 %v3198
  %3309 = vmatpush.bf16.msra.mxu0 %v3195
  %3310 = vmatpush.bf16.msra.mxu0 %v3192
  %3311 = vmatpush.bf16.msra.mxu0 %v3189
  %3312 = vmatpush.bf16.msra.mxu0 %v3186
  %3313 = vmatmul.bf16.gmra.mxu0 %v3049
  %v3314 = vpop.f32.mrf.mxu0
  %v3315 = vadd.f32 0.0, %v3314
  %v3316 = vpop.f32.mrf.mxu0
  %v3317 = vadd.f32 0.0, %v3316
  %3318 = vmatmul.bf16.gmra.mxu0 %v3048
  %v3319 = vpop.f32.mrf.mxu0
  %v3320 = vadd.f32 0.0, %v3319
  %v3321 = vpop.f32.mrf.mxu0
  %3322 = vdwg.mxu0
  %3323 = vmatpush.bf16.msra.mxu0 0
  %3324 = vmatpush.bf16.msra.mxu0 0
  %3325 = vmatpush.bf16.msra.mxu0 0
  %3326 = vmatpush.bf16.msra.mxu0 %v3222
  %3327 = vmatpush.bf16.msra.mxu0 %v3219
  %3328 = vmatpush.bf16.msra.mxu0 %v3216
  %3329 = vmatpush.bf16.msra.mxu0 %v3213
  %3330 = vmatpush.bf16.msra.mxu0 %v3210
  %3331 = vmatmul.bf16.gmra.mxu0 %v3264
  %v3332 = vpop.f32.mrf.mxu0
  %v3333 = vadd.f32 %v3315, %v3332
  %v3334 = vpop.f32.mrf.mxu0
  %v3335 = vadd.f32 %v3317, %v3334
  %3336 = vmatmul.bf16.gmra.mxu0 %v3267
  %v3337 = vpop.f32.mrf.mxu0
  %v3338 = vadd.f32 %v3320, %v3337
  %v3339 = vpop.f32.mrf.mxu0
  %3340 = vdwg.mxu0
  %3341 = vmatpush.bf16.msra.mxu0 %v3208
  %3342 = vmatpush.bf16.msra.mxu0 %v3205
  %3343 = vmatpush.bf16.msra.mxu0 %v3202
  %3344 = vmatpush.bf16.msra.mxu0 %v3199
  %3345 = vmatpush.bf16.msra.mxu0 %v3196
  %3346 = vmatpush.bf16.msra.mxu0 %v3193
  %3347 = vmatpush.bf16.msra.mxu0 %v3190
  %3348 = vmatpush.bf16.msra.mxu0 %v3187
  %3349 = vmatmul.bf16.gmra.mxu0 %v3049
  %v3350 = vpop.f32.mrf.mxu0
  %v3351 = vadd.f32 0.0, %v3350
  %v3352 = vpop.f32.mrf.mxu0
  %v3353 = vadd.f32 0.0, %v3352
  %3354 = vmatmul.bf16.gmra.mxu0 %v3048
  %v3355 = vpop.f32.mrf.mxu0
  %v3356 = vadd.f32 0.0, %v3355
  %v3357 = vpop.f32.mrf.mxu0
  %3358 = vdwg.mxu0
  %3359 = vmatpush.bf16.msra.mxu0 0
  %3360 = vmatpush.bf16.msra.mxu0 0
  %3361 = vmatpush.bf16.msra.mxu0 0
  %3362 = vmatpush.bf16.msra.mxu0 %v3223
  %3363 = vmatpush.bf16.msra.mxu0 %v3220
  %3364 = vmatpush.bf16.msra.mxu0 %v3217
  %3365 = vmatpush.bf16.msra.mxu0 %v3214
  %3366 = vmatpush.bf16.msra.mxu0 %v3211
  %3367 = vmatmul.bf16.gmra.mxu0 %v3264
  %v3368 = vpop.f32.mrf.mxu0
  %v3369 = vadd.f32 %v3351, %v3368
  %v3370 = vpop.f32.mrf.mxu0
  %v3371 = vadd.f32 %v3353, %v3370
  %3372 = vmatmul.bf16.gmra.mxu0 %v3267
  %v3373 = vpop.f32.mrf.mxu0
  %v3374 = vadd.f32 %v3356, %v3373
  %v3375 = vpop.f32.mrf.mxu0
  %3376 = vdwg.mxu0
  %v3377 = vadd.f32 %v2973, %v3297
  %v3378 = vadd.f32 %v2974, %v3333
  %v3379 = vadd.f32 %v2975, %v3369
  %v3380 = vadd.f32 %v2976, %v3299
  %v3381 = vadd.f32 %v2977, %v3335
  %v3382 = vadd.f32 %v2978, %v3371
  %v3383 = vadd.f32 %v2979, %v3302
  %v3384 = vadd.f32 %v2980, %v3338
  %v3385 = vadd.f32 %v2981, %v3374
  %v3386 = vld [vmem:[#allocation2 + $0x30] sm:$0x88]
  %v3387 = vld [vmem:[#allocation2 + $0x48] sm:$0x77]
  %s3388 = scalar_lea.vmem %s1, 1872
  %v3389 = vld [vmem:[%s3388] sm:$0xff]
  %v3390 = vld [vmem:[%s3388 + $0x8] sm:$0xf]
  %v3391 = vld [vmem:[%s3388 + $0xc] sm:$0xff]
  %v3392 = vld [vmem:[%s3388 + $0x14] sm:$0xf]
  %v3393 = vld [vmem:[%s3388 + $0x18] sm:$0xff]
  %v3394 = vld [vmem:[%s3388 + $0x20] sm:$0xf]
  %v3395 = vld [vmem:[%s3388 + $0x24] sm:$0xff]
  %v3396 = vld [vmem:[%s3388 + $0x2c] sm:$0xf]
  %v3397 = vld [vmem:[%s3388 + $0x30] sm:$0xff]
  %v3398 = vld [vmem:[%s3388 + $0x38] sm:$0xf]
  %v3399 = vld [vmem:[%s3388 + $0x3c] sm:$0xff]
  %v3400 = vld [vmem:[%s3388 + $0x44] sm:$0xf]
  %v3401 = vld [vmem:[%s3388 + $0x48] sm:$0xff]
  %v3402 = vld [vmem:[%s3388 + $0x50] sm:$0xf]
  %v3403 = vld [vmem:[%s3388 + $0x54] sm:$0xff]
  %v3404 = vld [vmem:[%s3388 + $0x5c] sm:$0xf]
  %v3405 = vld [vmem:[%s3388 + $0x60] sm:$0xff]
  %v3406 = vld [vmem:[%s3388 + $0x68] sm:$0xf]
  %v3407 = vld [vmem:[%s3388 + $0x6c] sm:$0xff]
  %v3408 = vld [vmem:[%s3388 + $0x74] sm:$0xf]
  %v3409 = vld [vmem:[%s3388 + $0x78] sm:$0xff]
  %v3410 = vld [vmem:[%s3388 + $0x80] sm:$0xf]
  %v3411 = vld [vmem:[%s3388 + $0x84] sm:$0xff]
  %v3412 = vld [vmem:[%s3388 + $0x8c] sm:$0xf]
  %v3413 = vld [vmem:[%s3388 + $0x90] sm:$0xff]
  %v3414 = vld [vmem:[%s3388 + $0x98] sm:$0xf]
  %v3415 = vld [vmem:[%s3388 + $0x9c] sm:$0xff]
  %v3416 = vld [vmem:[%s3388 + $0xa4] sm:$0xf]
  %v3417 = vld [vmem:[%s3388 + $0xa8] sm:$0xff]
  %v3418 = vld [vmem:[%s3388 + $0xb0] sm:$0xf]
  %v3419 = vld [vmem:[%s3388 + $0xb4] sm:$0xff]
  %v3420 = vld [vmem:[%s3388 + $0xbc] sm:$0xf]
  %v3421 = vld [vmem:[%s3388 + $0xc0] sm:$0xff]
  %v3422 = vld [vmem:[%s3388 + $0xc8] sm:$0xf]
  %v3423 = vld [vmem:[%s3388 + $0xcc] sm:$0xff]
  %v3424 = vld [vmem:[%s3388 + $0xd4] sm:$0xf]
  %v3425 = vld [vmem:[%s3388 + $0xd8] sm:$0xff]
  %v3426 = vld [vmem:[%s3388 + $0xe0] sm:$0xf]
  %v3427 = vld [vmem:[%s3388 + $0xe4] sm:$0xff]
  %v3428 = vld [vmem:[%s3388 + $0xec] sm:$0xf]
  %v3429 = vld [vmem:[%s3388 + $0xf0] sm:$0xff]
  %v3430 = vld [vmem:[%s3388 + $0xf8] sm:$0xf]
  %v3431 = vld [vmem:[%s3388 + $0xfc] sm:$0xff]
  %v3432 = vld [vmem:[%s3388 + $0x104] sm:$0xf]
  %v3433 = vld [vmem:[%s3388 + $0x108] sm:$0xff]
  %v3434 = vld [vmem:[%s3388 + $0x110] sm:$0xf]
  %v3435 = vld [vmem:[%s3388 + $0x114] sm:$0xff]
  %v3436 = vld [vmem:[%s3388 + $0x11c] sm:$0xf]
  %v3437 = vld [vmem:[%s3388 + $0x120] sm:$0xff]
  %v3438 = vld [vmem:[%s3388 + $0x128] sm:$0xf]
  %v3439 = vld [vmem:[%s3388 + $0x12c] sm:$0xff]
  %v3440 = vld [vmem:[%s3388 + $0x134] sm:$0xf]
  %v3443 = vunpack.c.l.b16 %v3386
  %v3444 = vunpack.c.h.b16 %v3386
  %v3445 = vunpack.c.l.b16 %v3387
  %v3446 = vunpack.c.h.b16 %v3387
  %v3447 = vpack.c.b16 %v1807, %v3443
  %v3448 = vpack.c.b16 %v1808, %v3444
  %v3449 = vpack.c.b16 %v3445, %v1809
  %v3450 = vpack.c.b16 %v3446, %v1810
  %v3451 = vrot.slane %v3447, 3
  %v3452 = vrot.slane %v3449, 3
  %v3453 = vsel %vm2230, %v3451, %v3452
  %v3454 = vrot.slane %v3448, 3
  %v3455 = vrot.slane %v3450, 3
  %v3456 = vsel %vm2230, %v3454, %v3455
  %v3511 = vunpack.c.l.b16 %v3389
  %v3512 = vunpack.c.h.b16 %v3389
  %v3513 = vunpack.c.l.b16 %v3390
  %v3514 = vunpack.c.l.b16 %v3391
  %v3515 = vunpack.c.h.b16 %v3391
  %v3516 = vunpack.c.l.b16 %v3392
  %v3517 = vunpack.c.l.b16 %v3393
  %v3518 = vunpack.c.h.b16 %v3393
  %v3519 = vunpack.c.l.b16 %v3394
  %v3520 = vunpack.c.l.b16 %v3395
  %v3521 = vunpack.c.h.b16 %v3395
  %v3522 = vunpack.c.l.b16 %v3396
  %v3523 = vunpack.c.l.b16 %v3397
  %v3524 = vunpack.c.h.b16 %v3397
  %v3525 = vunpack.c.l.b16 %v3398
  %v3526 = vunpack.c.l.b16 %v3399
  %v3527 = vunpack.c.h.b16 %v3399
  %v3528 = vunpack.c.l.b16 %v3400
  %v3529 = vunpack.c.l.b16 %v3401
  %v3530 = vunpack.c.h.b16 %v3401
  %v3531 = vunpack.c.l.b16 %v3402
  %v3532 = vunpack.c.l.b16 %v3403
  %v3533 = vunpack.c.h.b16 %v3403
  %v3534 = vunpack.c.l.b16 %v3404
  %v3535 = vunpack.c.l.b16 %v3405
  %v3536 = vunpack.c.h.b16 %v3405
  %v3537 = vunpack.c.l.b16 %v3406
  %v3538 = vunpack.c.l.b16 %v3407
  %v3539 = vunpack.c.h.b16 %v3407
  %v3540 = vunpack.c.l.b16 %v3408
  %v3541 = vunpack.c.l.b16 %v3409
  %v3542 = vunpack.c.h.b16 %v3409
  %v3543 = vunpack.c.l.b16 %v3410
  %v3544 = vunpack.c.l.b16 %v3411
  %v3545 = vunpack.c.h.b16 %v3411
  %v3546 = vunpack.c.l.b16 %v3412
  %v3547 = vunpack.c.l.b16 %v3413
  %v3548 = vunpack.c.h.b16 %v3413
  %v3549 = vunpack.c.l.b16 %v3414
  %v3550 = vunpack.c.l.b16 %v3415
  %v3551 = vunpack.c.h.b16 %v3415
  %v3552 = vunpack.c.l.b16 %v3416
  %v3553 = vunpack.c.l.b16 %v3417
  %v3554 = vunpack.c.h.b16 %v3417
  %v3555 = vunpack.c.l.b16 %v3418
  %v3556 = vunpack.c.l.b16 %v3419
  %v3557 = vunpack.c.h.b16 %v3419
  %v3558 = vunpack.c.l.b16 %v3420
  %v3559 = vunpack.c.l.b16 %v3421
  %v3560 = vunpack.c.h.b16 %v3421
  %v3561 = vunpack.c.l.b16 %v3422
  %v3562 = vunpack.c.l.b16 %v3423
  %v3563 = vunpack.c.h.b16 %v3423
  %v3564 = vunpack.c.l.b16 %v3424
  %v3565 = vunpack.c.l.b16 %v3425
  %v3566 = vunpack.c.h.b16 %v3425
  %v3567 = vunpack.c.l.b16 %v3426
  %v3568 = vunpack.c.l.b16 %v3427
  %v3569 = vunpack.c.h.b16 %v3427
  %v3570 = vunpack.c.l.b16 %v3428
  %v3571 = vunpack.c.l.b16 %v3429
  %v3572 = vunpack.c.h.b16 %v3429
  %v3573 = vunpack.c.l.b16 %v3430
  %v3574 = vunpack.c.l.b16 %v3431
  %v3575 = vunpack.c.h.b16 %v3431
  %v3576 = vunpack.c.l.b16 %v3432
  %v3577 = vunpack.c.l.b16 %v3433
  %v3578 = vunpack.c.h.b16 %v3433
  %v3579 = vunpack.c.l.b16 %v3434
  %v3580 = vunpack.c.l.b16 %v3435
  %v3581 = vunpack.c.h.b16 %v3435
  %v3582 = vunpack.c.l.b16 %v3436
  %v3583 = vunpack.c.l.b16 %v3437
  %v3584 = vunpack.c.h.b16 %v3437
  %v3585 = vunpack.c.l.b16 %v3438
  %v3586 = vunpack.c.l.b16 %v3439
  %v3587 = vunpack.c.h.b16 %v3439
  %v3588 = vunpack.c.l.b16 %v3440
  %v3589 = vpack.c.b16 %v3514, %v3511
  %v3590 = vpack.c.b16 %v3515, %v3512
  %v3591 = vpack.c.b16 %v3516, %v3513
  %v3592 = vpack.c.b16 %v3520, %v3517
  %v3593 = vpack.c.b16 %v3521, %v3518
  %v3594 = vpack.c.b16 %v3522, %v3519
  %v3595 = vpack.c.b16 %v3526, %v3523
  %v3596 = vpack.c.b16 %v3527, %v3524
  %v3597 = vpack.c.b16 %v3528, %v3525
  %v3598 = vpack.c.b16 %v3532, %v3529
  %v3599 = vpack.c.b16 %v3533, %v3530
  %v3600 = vpack.c.b16 %v3534, %v3531
  %v3601 = vpack.c.b16 %v3538, %v3535
  %v3602 = vpack.c.b16 %v3539, %v3536
  %v3603 = vpack.c.b16 %v3540, %v3537
  %v3604 = vpack.c.b16 %v3544, %v3541
  %v3605 = vpack.c.b16 %v3545, %v3542
  %v3606 = vpack.c.b16 %v3546, %v3543
  %v3607 = vpack.c.b16 %v3550, %v3547
  %v3608 = vpack.c.b16 %v3551, %v3548
  %v3609 = vpack.c.b16 %v3552, %v3549
  %v3610 = vpack.c.b16 %v3556, %v3553
  %v3611 = vpack.c.b16 %v3557, %v3554
  %v3612 = vpack.c.b16 %v3558, %v3555
  %v3613 = vpack.c.b16 %v3562, %v3559
  %v3614 = vpack.c.b16 %v3563, %v3560
  %v3615 = vpack.c.b16 %v3564, %v3561
  %v3616 = vpack.c.b16 %v3568, %v3565
  %v3617 = vpack.c.b16 %v3569, %v3566
  %v3618 = vpack.c.b16 %v3570, %v3567
  %v3619 = vpack.c.b16 %v3574, %v3571
  %v3620 = vpack.c.b16 %v3575, %v3572
  %v3621 = vpack.c.b16 %v3576, %v3573
  %v3622 = vpack.c.b16 %v3580, %v3577
  %v3623 = vpack.c.b16 %v3581, %v3578
  %v3624 = vpack.c.b16 %v3582, %v3579
  %v3625 = vpack.c.b16 %v3586, %v3583
  %v3626 = vpack.c.b16 %v3587, %v3584
  %v3627 = vpack.c.b16 %v3588, %v3585
  %v3668 = vsel %vm1292, %v3456, 0
  %v3671 = vsel %vm1292, %v3455, 0
  %3673 = vmatpush.bf16.msra.mxu0 %v3610
  %3674 = vmatpush.bf16.msra.mxu0 %v3607
  %3675 = vmatpush.bf16.msra.mxu0 %v3604
  %3676 = vmatpush.bf16.msra.mxu0 %v3601
  %3677 = vmatpush.bf16.msra.mxu0 %v3598
  %3678 = vmatpush.bf16.msra.mxu0 %v3595
  %3679 = vmatpush.bf16.msra.mxu0 %v3592
  %3680 = vmatpush.bf16.msra.mxu0 %v3589
  %3681 = vmatmul.bf16.gmra.mxu0 %v3453
  %v3682 = vpop.f32.mrf.mxu0
  %v3683 = vadd.f32 0.0, %v3682
  %v3684 = vpop.f32.mrf.mxu0
  %v3685 = vadd.f32 0.0, %v3684
  %3686 = vmatmul.bf16.gmra.mxu0 %v3452
  %v3687 = vpop.f32.mrf.mxu0
  %v3688 = vadd.f32 0.0, %v3687
  %v3689 = vpop.f32.mrf.mxu0
  %3690 = vdwg.mxu0
  %3691 = vmatpush.bf16.msra.mxu0 0
  %3692 = vmatpush.bf16.msra.mxu0 0
  %3693 = vmatpush.bf16.msra.mxu0 0
  %3694 = vmatpush.bf16.msra.mxu0 %v3625
  %3695 = vmatpush.bf16.msra.mxu0 %v3622
  %3696 = vmatpush.bf16.msra.mxu0 %v3619
  %3697 = vmatpush.bf16.msra.mxu0 %v3616
  %3698 = vmatpush.bf16.msra.mxu0 %v3613
  %3699 = vmatmul.bf16.gmra.mxu0 %v3668
  %v3700 = vpop.f32.mrf.mxu0
  %v3701 = vadd.f32 %v3683, %v3700
  %v3702 = vpop.f32.mrf.mxu0
  %v3703 = vadd.f32 %v3685, %v3702
  %3704 = vmatmul.bf16.gmra.mxu0 %v3671
  %v3705 = vpop.f32.mrf.mxu0
  %v3706 = vadd.f32 %v3688, %v3705
  %v3707 = vpop.f32.mrf.mxu0
  %3708 = vdwg.mxu0
  %3709 = vmatpush.bf16.msra.mxu0 %v3611
  %3710 = vmatpush.bf16.msra.mxu0 %v3608
  %3711 = vmatpush.bf16.msra.mxu0 %v3605
  %3712 = vmatpush.bf16.msra.mxu0 %v3602
  %3713 = vmatpush.bf16.msra.mxu0 %v3599
  %3714 = vmatpush.bf16.msra.mxu0 %v3596
  %3715 = vmatpush.bf16.msra.mxu0 %v3593
  %3716 = vmatpush.bf16.msra.mxu0 %v3590
  %3717 = vmatmul.bf16.gmra.mxu0 %v3453
  %v3718 = vpop.f32.mrf.mxu0
  %v3719 = vadd.f32 0.0, %v3718
  %v3720 = vpop.f32.mrf.mxu0
  %v3721 = vadd.f32 0.0, %v3720
  %3722 = vmatmul.bf16.gmra.mxu0 %v3452
  %v3723 = vpop.f32.mrf.mxu0
  %v3724 = vadd.f32 0.0, %v3723
  %v3725 = vpop.f32.mrf.mxu0
  %3726 = vdwg.mxu0
  %3727 = vmatpush.bf16.msra.mxu0 0
  %3728 = vmatpush.bf16.msra.mxu0 0
  %3729 = vmatpush.bf16.msra.mxu0 0
  %3730 = vmatpush.bf16.msra.mxu0 %v3626
  %3731 = vmatpush.bf16.msra.mxu0 %v3623
  %3732 = vmatpush.bf16.msra.mxu0 %v3620
  %3733 = vmatpush.bf16.msra.mxu0 %v3617
  %3734 = vmatpush.bf16.msra.mxu0 %v3614
  %3735 = vmatmul.bf16.gmra.mxu0 %v3668
  %v3736 = vpop.f32.mrf.mxu0
  %v3737 = vadd.f32 %v3719, %v3736
  %v3738 = vpop.f32.mrf.mxu0
  %v3739 = vadd.f32 %v3721, %v3738
  %3740 = vmatmul.bf16.gmra.mxu0 %v3671
  %v3741 = vpop.f32.mrf.mxu0
  %v3742 = vadd.f32 %v3724, %v3741
  %v3743 = vpop.f32.mrf.mxu0
  %3744 = vdwg.mxu0
  %3745 = vmatpush.bf16.msra.mxu0 %v3612
  %3746 = vmatpush.bf16.msra.mxu0 %v3609
  %3747 = vmatpush.bf16.msra.mxu0 %v3606
  %3748 = vmatpush.bf16.msra.mxu0 %v3603
  %3749 = vmatpush.bf16.msra.mxu0 %v3600
  %3750 = vmatpush.bf16.msra.mxu0 %v3597
  %3751 = vmatpush.bf16.msra.mxu0 %v3594
  %3752 = vmatpush.bf16.msra.mxu0 %v3591
  %3753 = vmatmul.bf16.gmra.mxu0 %v3453
  %v3754 = vpop.f32.mrf.mxu0
  %v3755 = vadd.f32 0.0, %v3754
  %v3756 = vpop.f32.mrf.mxu0
  %v3757 = vadd.f32 0.0, %v3756
  %3758 = vmatmul.bf16.gmra.mxu0 %v3452
  %v3759 = vpop.f32.mrf.mxu0
  %v3760 = vadd.f32 0.0, %v3759
  %v3761 = vpop.f32.mrf.mxu0
  %3762 = vdwg.mxu0
  %3763 = vmatpush.bf16.msra.mxu0 0
  %3764 = vmatpush.bf16.msra.mxu0 0
  %3765 = vmatpush.bf16.msra.mxu0 0
  %3766 = vmatpush.bf16.msra.mxu0 %v3627
  %3767 = vmatpush.bf16.msra.mxu0 %v3624
  %3768 = vmatpush.bf16.msra.mxu0 %v3621
  %3769 = vmatpush.bf16.msra.mxu0 %v3618
  %3770 = vmatpush.bf16.msra.mxu0 %v3615
  %3771 = vmatmul.bf16.gmra.mxu0 %v3668
  %v3772 = vpop.f32.mrf.mxu0
  %v3773 = vadd.f32 %v3755, %v3772
  %v3774 = vpop.f32.mrf.mxu0
  %v3775 = vadd.f32 %v3757, %v3774
  %3776 = vmatmul.bf16.gmra.mxu0 %v3671
  %v3777 = vpop.f32.mrf.mxu0
  %v3778 = vadd.f32 %v3760, %v3777
  %v3779 = vpop.f32.mrf.mxu0
  %3780 = vdwg.mxu0
  %v3781 = vadd.f32 %v3377, %v3701
  %v3782 = vadd.f32 %v3378, %v3737
  %v3783 = vadd.f32 %v3379, %v3773
  %v3784 = vadd.f32 %v3380, %v3703
  %v3785 = vadd.f32 %v3381, %v3739
  %v3786 = vadd.f32 %v3382, %v3775
  %v3787 = vadd.f32 %v3383, %v3706
  %v3788 = vadd.f32 %v3384, %v3742
  %v3789 = vadd.f32 %v3385, %v3778
  %v3790 = vld [vmem:[#allocation2 + $0x60] sm:$0xff]
  %s3791 = scalar_lea.vmem %s1, 2184
  %v3792 = vld [vmem:[%s3791] sm:$0xff]
  %v3793 = vld [vmem:[%s3791 + $0x8] sm:$0xf]
  %v3794 = vld [vmem:[%s3791 + $0xc] sm:$0xff]
  %v3795 = vld [vmem:[%s3791 + $0x14] sm:$0xf]
  %v3796 = vld [vmem:[%s3791 + $0x18] sm:$0xff]
  %v3797 = vld [vmem:[%s3791 + $0x20] sm:$0xf]
  %v3798 = vld [vmem:[%s3791 + $0x24] sm:$0xff]
  %v3799 = vld [vmem:[%s3791 + $0x2c] sm:$0xf]
  %v3800 = vld [vmem:[%s3791 + $0x30] sm:$0xff]
  %v3801 = vld [vmem:[%s3791 + $0x38] sm:$0xf]
  %v3802 = vld [vmem:[%s3791 + $0x3c] sm:$0xff]
  %v3803 = vld [vmem:[%s3791 + $0x44] sm:$0xf]
  %v3804 = vld [vmem:[%s3791 + $0x48] sm:$0xff]
  %v3805 = vld [vmem:[%s3791 + $0x50] sm:$0xf]
  %v3806 = vld [vmem:[%s3791 + $0x54] sm:$0xff]
  %v3807 = vld [vmem:[%s3791 + $0x5c] sm:$0xf]
  %v3808 = vld [vmem:[%s3791 + $0x60] sm:$0xff]
  %v3809 = vld [vmem:[%s3791 + $0x68] sm:$0xf]
  %v3810 = vld [vmem:[%s3791 + $0x6c] sm:$0xff]
  %v3811 = vld [vmem:[%s3791 + $0x74] sm:$0xf]
  %v3812 = vld [vmem:[%s3791 + $0x78] sm:$0xff]
  %v3813 = vld [vmem:[%s3791 + $0x80] sm:$0xf]
  %v3814 = vld [vmem:[%s3791 + $0x84] sm:$0xff]
  %v3815 = vld [vmem:[%s3791 + $0x8c] sm:$0xf]
  %v3816 = vld [vmem:[%s3791 + $0x90] sm:$0xff]
  %v3817 = vld [vmem:[%s3791 + $0x98] sm:$0xf]
  %v3818 = vld [vmem:[%s3791 + $0x9c] sm:$0xff]
  %v3819 = vld [vmem:[%s3791 + $0xa4] sm:$0xf]
  %v3820 = vld [vmem:[%s3791 + $0xa8] sm:$0xff]
  %v3821 = vld [vmem:[%s3791 + $0xb0] sm:$0xf]
  %v3822 = vld [vmem:[%s3791 + $0xb4] sm:$0xff]
  %v3823 = vld [vmem:[%s3791 + $0xbc] sm:$0xf]
  %v3824 = vld [vmem:[%s3791 + $0xc0] sm:$0xff]
  %v3825 = vld [vmem:[%s3791 + $0xc8] sm:$0xf]
  %v3826 = vld [vmem:[%s3791 + $0xcc] sm:$0xff]
  %v3827 = vld [vmem:[%s3791 + $0xd4] sm:$0xf]
  %v3828 = vld [vmem:[%s3791 + $0xd8] sm:$0xff]
  %v3829 = vld [vmem:[%s3791 + $0xe0] sm:$0xf]
  %v3830 = vld [vmem:[%s3791 + $0xe4] sm:$0xff]
  %v3831 = vld [vmem:[%s3791 + $0xec] sm:$0xf]
  %v3832 = vld [vmem:[%s3791 + $0xf0] sm:$0xff]
  %v3833 = vld [vmem:[%s3791 + $0xf8] sm:$0xf]
  %v3834 = vld [vmem:[%s3791 + $0xfc] sm:$0xff]
  %v3835 = vld [vmem:[%s3791 + $0x104] sm:$0xf]
  %v3836 = vld [vmem:[%s3791 + $0x108] sm:$0xff]
  %v3837 = vld [vmem:[%s3791 + $0x110] sm:$0xf]
  %v3838 = vld [vmem:[%s3791 + $0x114] sm:$0xff]
  %v3839 = vld [vmem:[%s3791 + $0x11c] sm:$0xf]
  %v3840 = vld [vmem:[%s3791 + $0x120] sm:$0xff]
  %v3841 = vld [vmem:[%s3791 + $0x128] sm:$0xf]
  %v3842 = vld [vmem:[%s3791 + $0x12c] sm:$0xff]
  %v3843 = vld [vmem:[%s3791 + $0x134] sm:$0xf]
  %v3845 = vunpack.c.l.b16 %v3790
  %v3846 = vunpack.c.h.b16 %v3790
  %v3847 = vpack.c.b16 %v2222, %v2220
  %v3848 = vpack.c.b16 %v2223, %v2221
  %v3849 = vpack.c.b16 %v3845, %v3845
  %v3850 = vpack.c.b16 %v3846, %v3846
  %v3905 = vunpack.c.l.b16 %v3792
  %v3906 = vunpack.c.h.b16 %v3792
  %v3907 = vunpack.c.l.b16 %v3793
  %v3908 = vunpack.c.l.b16 %v3794
  %v3909 = vunpack.c.h.b16 %v3794
  %v3910 = vunpack.c.l.b16 %v3795
  %v3911 = vunpack.c.l.b16 %v3796
  %v3912 = vunpack.c.h.b16 %v3796
  %v3913 = vunpack.c.l.b16 %v3797
  %v3914 = vunpack.c.l.b16 %v3798
  %v3915 = vunpack.c.h.b16 %v3798
  %v3916 = vunpack.c.l.b16 %v3799
  %v3917 = vunpack.c.l.b16 %v3800
  %v3918 = vunpack.c.h.b16 %v3800
  %v3919 = vunpack.c.l.b16 %v3801
  %v3920 = vunpack.c.l.b16 %v3802
  %v3921 = vunpack.c.h.b16 %v3802
  %v3922 = vunpack.c.l.b16 %v3803
  %v3923 = vunpack.c.l.b16 %v3804
  %v3924 = vunpack.c.h.b16 %v3804
  %v3925 = vunpack.c.l.b16 %v3805
  %v3926 = vunpack.c.l.b16 %v3806
  %v3927 = vunpack.c.h.b16 %v3806
  %v3928 = vunpack.c.l.b16 %v3807
  %v3929 = vunpack.c.l.b16 %v3808
  %v3930 = vunpack.c.h.b16 %v3808
  %v3931 = vunpack.c.l.b16 %v3809
  %v3932 = vunpack.c.l.b16 %v3810
  %v3933 = vunpack.c.h.b16 %v3810
  %v3934 = vunpack.c.l.b16 %v3811
  %v3935 = vunpack.c.l.b16 %v3812
  %v3936 = vunpack.c.h.b16 %v3812
  %v3937 = vunpack.c.l.b16 %v3813
  %v3938 = vunpack.c.l.b16 %v3814
  %v3939 = vunpack.c.h.b16 %v3814
  %v3940 = vunpack.c.l.b16 %v3815
  %v3941 = vunpack.c.l.b16 %v3816
  %v3942 = vunpack.c.h.b16 %v3816
  %v3943 = vunpack.c.l.b16 %v3817
  %v3944 = vunpack.c.l.b16 %v3818
  %v3945 = vunpack.c.h.b16 %v3818
  %v3946 = vunpack.c.l.b16 %v3819
  %v3947 = vunpack.c.l.b16 %v3820
  %v3948 = vunpack.c.h.b16 %v3820
  %v3949 = vunpack.c.l.b16 %v3821
  %v3950 = vunpack.c.l.b16 %v3822
  %v3951 = vunpack.c.h.b16 %v3822
  %v3952 = vunpack.c.l.b16 %v3823
  %v3953 = vunpack.c.l.b16 %v3824
  %v3954 = vunpack.c.h.b16 %v3824
  %v3955 = vunpack.c.l.b16 %v3825
  %v3956 = vunpack.c.l.b16 %v3826
  %v3957 = vunpack.c.h.b16 %v3826
  %v3958 = vunpack.c.l.b16 %v3827
  %v3959 = vunpack.c.l.b16 %v3828
  %v3960 = vunpack.c.h.b16 %v3828
  %v3961 = vunpack.c.l.b16 %v3829
  %v3962 = vunpack.c.l.b16 %v3830
  %v3963 = vunpack.c.h.b16 %v3830
  %v3964 = vunpack.c.l.b16 %v3831
  %v3965 = vunpack.c.l.b16 %v3832
  %v3966 = vunpack.c.h.b16 %v3832
  %v3967 = vunpack.c.l.b16 %v3833
  %v3968 = vunpack.c.l.b16 %v3834
  %v3969 = vunpack.c.h.b16 %v3834
  %v3970 = vunpack.c.l.b16 %v3835
  %v3971 = vunpack.c.l.b16 %v3836
  %v3972 = vunpack.c.h.b16 %v3836
  %v3973 = vunpack.c.l.b16 %v3837
  %v3974 = vunpack.c.l.b16 %v3838
  %v3975 = vunpack.c.h.b16 %v3838
  %v3976 = vunpack.c.l.b16 %v3839
  %v3977 = vunpack.c.l.b16 %v3840
  %v3978 = vunpack.c.h.b16 %v3840
  %v3979 = vunpack.c.l.b16 %v3841
  %v3980 = vunpack.c.l.b16 %v3842
  %v3981 = vunpack.c.h.b16 %v3842
  %v3982 = vunpack.c.l.b16 %v3843
  %v3983 = vpack.c.b16 %v3908, %v3905
  %v3984 = vpack.c.b16 %v3909, %v3906
  %v3985 = vpack.c.b16 %v3910, %v3907
  %v3986 = vpack.c.b16 %v3914, %v3911
  %v3987 = vpack.c.b16 %v3915, %v3912
  %v3988 = vpack.c.b16 %v3916, %v3913
  %v3989 = vpack.c.b16 %v3920, %v3917
  %v3990 = vpack.c.b16 %v3921, %v3918
  %v3991 = vpack.c.b16 %v3922, %v3919
  %v3992 = vpack.c.b16 %v3926, %v3923
  %v3993 = vpack.c.b16 %v3927, %v3924
  %v3994 = vpack.c.b16 %v3928, %v3925
  %v3995 = vpack.c.b16 %v3932, %v3929
  %v3996 = vpack.c.b16 %v3933, %v3930
  %v3997 = vpack.c.b16 %v3934, %v3931
  %v3998 = vpack.c.b16 %v3938, %v3935
  %v3999 = vpack.c.b16 %v3939, %v3936
  %v4000 = vpack.c.b16 %v3940, %v3937
  %v4001 = vpack.c.b16 %v3944, %v3941
  %v4002 = vpack.c.b16 %v3945, %v3942
  %v4003 = vpack.c.b16 %v3946, %v3943
  %v4004 = vpack.c.b16 %v3950, %v3947
  %v4005 = vpack.c.b16 %v3951, %v3948
  %v4006 = vpack.c.b16 %v3952, %v3949
  %v4007 = vpack.c.b16 %v3956, %v3953
  %v4008 = vpack.c.b16 %v3957, %v3954
  %v4009 = vpack.c.b16 %v3958, %v3955
  %v4010 = vpack.c.b16 %v3962, %v3959
  %v4011 = vpack.c.b16 %v3963, %v3960
  %v4012 = vpack.c.b16 %v3964, %v3961
  %v4013 = vpack.c.b16 %v3968, %v3965
  %v4014 = vpack.c.b16 %v3969, %v3966
  %v4015 = vpack.c.b16 %v3970, %v3967
  %v4016 = vpack.c.b16 %v3974, %v3971
  %v4017 = vpack.c.b16 %v3975, %v3972
  %v4018 = vpack.c.b16 %v3976, %v3973
  %v4019 = vpack.c.b16 %v3980, %v3977
  %v4020 = vpack.c.b16 %v3981, %v3978
  %v4021 = vpack.c.b16 %v3982, %v3979
  %v4062 = vsel %vm1292, %v3848, 0
  %v4065 = vsel %vm1292, %v3850, 0
  %4067 = vmatpush.bf16.msra.mxu0 %v4004
  %4068 = vmatpush.bf16.msra.mxu0 %v4001
  %4069 = vmatpush.bf16.msra.mxu0 %v3998
  %4070 = vmatpush.bf16.msra.mxu0 %v3995
  %4071 = vmatpush.bf16.msra.mxu0 %v3992
  %4072 = vmatpush.bf16.msra.mxu0 %v3989
  %4073 = vmatpush.bf16.msra.mxu0 %v3986
  %4074 = vmatpush.bf16.msra.mxu0 %v3983
  %4075 = vmatmul.bf16.gmra.mxu0 %v3847
  %v4076 = vpop.f32.mrf.mxu0
  %v4077 = vadd.f32 0.0, %v4076
  %v4078 = vpop.f32.mrf.mxu0
  %v4079 = vadd.f32 0.0, %v4078
  %4080 = vmatmul.bf16.gmra.mxu0 %v3849
  %v4081 = vpop.f32.mrf.mxu0
  %v4082 = vadd.f32 0.0, %v4081
  %v4083 = vpop.f32.mrf.mxu0
  %4084 = vdwg.mxu0
  %4085 = vmatpush.bf16.msra.mxu0 0
  %4086 = vmatpush.bf16.msra.mxu0 0
  %4087 = vmatpush.bf16.msra.mxu0 0
  %4088 = vmatpush.bf16.msra.mxu0 %v4019
  %4089 = vmatpush.bf16.msra.mxu0 %v4016
  %4090 = vmatpush.bf16.msra.mxu0 %v4013
  %4091 = vmatpush.bf16.msra.mxu0 %v4010
  %4092 = vmatpush.bf16.msra.mxu0 %v4007
  %4093 = vmatmul.bf16.gmra.mxu0 %v4062
  %v4094 = vpop.f32.mrf.mxu0
  %v4095 = vadd.f32 %v4077, %v4094
  %v4096 = vpop.f32.mrf.mxu0
  %v4097 = vadd.f32 %v4079, %v4096
  %4098 = vmatmul.bf16.gmra.mxu0 %v4065
  %v4099 = vpop.f32.mrf.mxu0
  %v4100 = vadd.f32 %v4082, %v4099
  %v4101 = vpop.f32.mrf.mxu0
  %4102 = vdwg.mxu0
  %4103 = vmatpush.bf16.msra.mxu0 %v4005
  %4104 = vmatpush.bf16.msra.mxu0 %v4002
  %4105 = vmatpush.bf16.msra.mxu0 %v3999
  %4106 = vmatpush.bf16.msra.mxu0 %v3996
  %4107 = vmatpush.bf16.msra.mxu0 %v3993
  %4108 = vmatpush.bf16.msra.mxu0 %v3990
  %4109 = vmatpush.bf16.msra.mxu0 %v3987
  %4110 = vmatpush.bf16.msra.mxu0 %v3984
  %4111 = vmatmul.bf16.gmra.mxu0 %v3847
  %v4112 = vpop.f32.mrf.mxu0
  %v4113 = vadd.f32 0.0, %v4112
  %v4114 = vpop.f32.mrf.mxu0
  %v4115 = vadd.f32 0.0, %v4114
  %4116 = vmatmul.bf16.gmra.mxu0 %v3849
  %v4117 = vpop.f32.mrf.mxu0
  %v4118 = vadd.f32 0.0, %v4117
  %v4119 = vpop.f32.mrf.mxu0
  %4120 = vdwg.mxu0
  %4121 = vmatpush.bf16.msra.mxu0 0
  %4122 = vmatpush.bf16.msra.mxu0 0
  %4123 = vmatpush.bf16.msra.mxu0 0
  %4124 = vmatpush.bf16.msra.mxu0 %v4020
  %4125 = vmatpush.bf16.msra.mxu0 %v4017
  %4126 = vmatpush.bf16.msra.mxu0 %v4014
  %4127 = vmatpush.bf16.msra.mxu0 %v4011
  %4128 = vmatpush.bf16.msra.mxu0 %v4008
  %4129 = vmatmul.bf16.gmra.mxu0 %v4062
  %v4130 = vpop.f32.mrf.mxu0
  %v4131 = vadd.f32 %v4113, %v4130
  %v4132 = vpop.f32.mrf.mxu0
  %v4133 = vadd.f32 %v4115, %v4132
  %4134 = vmatmul.bf16.gmra.mxu0 %v4065
  %v4135 = vpop.f32.mrf.mxu0
  %v4136 = vadd.f32 %v4118, %v4135
  %v4137 = vpop.f32.mrf.mxu0
  %4138 = vdwg.mxu0
  %4139 = vmatpush.bf16.msra.mxu0 %v4006
  %4140 = vmatpush.bf16.msra.mxu0 %v4003
  %4141 = vmatpush.bf16.msra.mxu0 %v4000
  %4142 = vmatpush.bf16.msra.mxu0 %v3997
  %4143 = vmatpush.bf16.msra.mxu0 %v3994
  %4144 = vmatpush.bf16.msra.mxu0 %v3991
  %4145 = vmatpush.bf16.msra.mxu0 %v3988
  %4146 = vmatpush.bf16.msra.mxu0 %v3985
  %4147 = vmatmul.bf16.gmra.mxu0 %v3847
  %v4148 = vpop.f32.mrf.mxu0
  %v4149 = vadd.f32 0.0, %v4148
  %v4150 = vpop.f32.mrf.mxu0
  %v4151 = vadd.f32 0.0, %v4150
  %4152 = vmatmul.bf16.gmra.mxu0 %v3849
  %v4153 = vpop.f32.mrf.mxu0
  %v4154 = vadd.f32 0.0, %v4153
  %v4155 = vpop.f32.mrf.mxu0
  %4156 = vdwg.mxu0
  %4157 = vmatpush.bf16.msra.mxu0 0
  %4158 = vmatpush.bf16.msra.mxu0 0
  %4159 = vmatpush.bf16.msra.mxu0 0
  %4160 = vmatpush.bf16.msra.mxu0 %v4021
  %4161 = vmatpush.bf16.msra.mxu0 %v4018
  %4162 = vmatpush.bf16.msra.mxu0 %v4015
  %4163 = vmatpush.bf16.msra.mxu0 %v4012
  %4164 = vmatpush.bf16.msra.mxu0 %v4009
  %4165 = vmatmul.bf16.gmra.mxu0 %v4062
  %v4166 = vpop.f32.mrf.mxu0
  %v4167 = vadd.f32 %v4149, %v4166
  %v4168 = vpop.f32.mrf.mxu0
  %v4169 = vadd.f32 %v4151, %v4168
  %4170 = vmatmul.bf16.gmra.mxu0 %v4065
  %v4171 = vpop.f32.mrf.mxu0
  %v4172 = vadd.f32 %v4154, %v4171
  %v4173 = vpop.f32.mrf.mxu0
  %4174 = vdwg.mxu0
  %v4175 = vadd.f32 %v3781, %v4095
  %v4176 = vadd.f32 %v3782, %v4131
  %v4177 = vadd.f32 %v3783, %v4167
  %v4178 = vadd.f32 %v3784, %v4097
  %v4179 = vadd.f32 %v3785, %v4133
  %v4180 = vadd.f32 %v3786, %v4169
  %v4181 = vadd.f32 %v3787, %v4100
  %v4182 = vadd.f32 %v3788, %v4136
  %v4183 = vadd.f32 %v3789, %v4172
  %v4184 = vld [vmem:[%s2] sm:$0x7]
  %v4186 = vperm.slane %v4184, 0
  %v4187 = vperm.slane %v4184, 1
  %v4188 = vperm.slane %v4184, 2
  %v4192 = vadd.f32 %v4175, %v4186
  %v4193 = vadd.f32 %v4176, %v4187
  %v4194 = vadd.f32 %v4177, %v4188
  %v4195 = vadd.f32 %v4178, %v4186
  %v4196 = vadd.f32 %v4179, %v4187
  %v4197 = vadd.f32 %v4180, %v4188
  %v4198 = vadd.f32 %v4181, %v4186
  %v4199 = vadd.f32 %v4182, %v4187
  %v4200 = vadd.f32 %v4183, %v4188
  %v4201 = vmax.f32 %v4192, 0.0
  %v4202 = vmax.f32 %v4193, 0.0
  %v4203 = vmax.f32 %v4194, 0.0
  %v4204 = vmax.f32 %v4195, 0.0
  %v4205 = vmax.f32 %v4196, 0.0
  %v4206 = vmax.f32 %v4197, 0.0
  %v4207 = vmax.f32 %v4198, 0.0
  %v4208 = vmax.f32 %v4199, 0.0
  %v4209 = vmax.f32 %v4200, 0.0
  %v4210 = vpack.c.bf16 %v4202, %v4201
  %v4211 = vpack.c.bf16 %v4203, %v4203
  %4212 = vst [vmem:[#allocation3] sm:$0x11] %v4210
  %4213 = vst [vmem:[#allocation3 + $0x8] sm:$0x1] %v4211
  %v4216 = vrot.slane %v4210, 7
  %v4217 = vrot.slane %v4211, 7
  %4220 = vst [vmem:[#allocation3 + $0xc] sm:$0x44] %v4216
  %4221 = vst [vmem:[#allocation3 + $0x14] sm:$0x4] %v4217
  %v4222 = vrot.slane %v4210, 5
  %v4223 = vrot.slane %v4222, 4
  %v4224 = vrot.slane %v4211, 5
  %v4225 = vrot.slane %v4224, 4
  %4228 = vst [vmem:[#allocation3] sm:$0x22] %v4223
  %4229 = vst [vmem:[#allocation3 + $0x8] sm:$0x2] %v4225
  %4230 = vst [vmem:[#allocation3 + $0xc] sm:$0x88] %v4210
  %4231 = vst [vmem:[#allocation3 + $0x14] sm:$0x8] %v4211
  %v4232 = vpack.c.bf16 %v4205, %v4204
  %v4233 = vpack.c.bf16 %v4206, %v4206
  %v4236 = vrot.slane %v4232, 6
  %v4237 = vrot.slane %v4233, 6
  %4240 = vst [vmem:[#allocation3] sm:$0x44] %v4236
  %4241 = vst [vmem:[#allocation3 + $0x8] sm:$0x4] %v4237
  %v4242 = vrot.slane %v4232, 5
  %v4243 = vrot.slane %v4242, 4
  %v4244 = vrot.slane %v4233, 5
  %v4245 = vrot.slane %v4244, 4
  %4248 = vst [vmem:[#allocation3 + $0x18] sm:$0x11] %v4243
  %4249 = vst [vmem:[#allocation3 + $0x20] sm:$0x1] %v4245
  %v4250 = vrot.slane %v4232, 7
  %v4251 = vrot.slane %v4233, 7
  %4254 = vst [vmem:[#allocation3] sm:$0x88] %v4250
  %4255 = vst [vmem:[#allocation3 + $0x8] sm:$0x8] %v4251
  %v4256 = vrot.slane %v4236, 4
  %v4257 = vrot.slane %v4237, 4
  %4260 = vst [vmem:[#allocation3 + $0x18] sm:$0x22] %v4256
  %4261 = vst [vmem:[#allocation3 + $0x20] sm:$0x2] %v4257
  %v4262 = vpack.c.bf16 %v4208, %v4207
  %v4263 = vpack.c.bf16 %v4209, %v4209
  %4264 = vst [vmem:[#allocation3 + $0xc] sm:$0x11] %v4262
  %4265 = vst [vmem:[#allocation3 + $0x14] sm:$0x1] %v4263
  %v4268 = vrot.slane %v4262, 7
  %v4269 = vrot.slane %v4263, 7
  %4272 = vst [vmem:[#allocation3 + $0x18] sm:$0x44] %v4268
  %4273 = vst [vmem:[#allocation3 + $0x20] sm:$0x4] %v4269
  %v4274 = vrot.slane %v4262, 5
  %v4275 = vrot.slane %v4274, 4
  %v4276 = vrot.slane %v4263, 5
  %v4277 = vrot.slane %v4276, 4
  %4280 = vst [vmem:[#allocation3 + $0xc] sm:$0x22] %v4275
  %4281 = vst [vmem:[#allocation3 + $0x14] sm:$0x2] %v4277
  %4282 = vst [vmem:[#allocation3 + $0x18] sm:$0x88] %v4262
  %4283 = vst [vmem:[#allocation3 + $0x20] sm:$0x8] %v4263
  %v4284 = vld [vmem:[#allocation3] sm:$0xff]
  %v4285 = vld [vmem:[#allocation3 + $0x8] sm:$0xf]
  %v4286 = vld [vmem:[#allocation3 + $0xc] sm:$0x11]
  %v4287 = vld [vmem:[#allocation3 + $0x14] sm:$0x1]
  %v4288 = vld [vmem:[%s3] sm:$0xff]
  %v4289 = vld [vmem:[%s3 + $0x8] sm:$0xf]
  %v4290 = vld [vmem:[%s3 + $0xc] sm:$0xff]
  %v4291 = vld [vmem:[%s3 + $0x14] sm:$0xf]
  %v4292 = vld [vmem:[%s3 + $0x18] sm:$0xff]
  %v4293 = vld [vmem:[%s3 + $0x20] sm:$0xf]
  %v4294 = vld [vmem:[%s3 + $0x24] sm:$0xff]
  %v4295 = vld [vmem:[%s3 + $0x2c] sm:$0xf]
  %v4296 = vld [vmem:[%s3 + $0x30] sm:$0xff]
  %v4297 = vld [vmem:[%s3 + $0x38] sm:$0xf]
  %v4298 = vld [vmem:[%s3 + $0x3c] sm:$0xff]
  %v4299 = vld [vmem:[%s3 + $0x44] sm:$0xf]
  %v4300 = vld [vmem:[%s3 + $0x48] sm:$0xff]
  %v4301 = vld [vmem:[%s3 + $0x50] sm:$0xf]
  %v4302 = vld [vmem:[%s3 + $0x54] sm:$0xff]
  %v4303 = vld [vmem:[%s3 + $0x5c] sm:$0xf]
  %v4304 = vld [vmem:[%s3 + $0x60] sm:$0xff]
  %v4305 = vld [vmem:[%s3 + $0x68] sm:$0xf]
  %v4306 = vld [vmem:[%s3 + $0x6c] sm:$0xff]
  %v4307 = vld [vmem:[%s3 + $0x74] sm:$0xf]
  %v4308 = vld [vmem:[%s3 + $0x78] sm:$0xff]
  %v4309 = vld [vmem:[%s3 + $0x80] sm:$0xf]
  %v4310 = vld [vmem:[%s3 + $0x84] sm:$0xff]
  %v4311 = vld [vmem:[%s3 + $0x8c] sm:$0xf]
  %v4312 = vld [vmem:[%s3 + $0x90] sm:$0xff]
  %v4313 = vld [vmem:[%s3 + $0x98] sm:$0xf]
  %v4314 = vld [vmem:[%s3 + $0x9c] sm:$0xff]
  %v4315 = vld [vmem:[%s3 + $0xa4] sm:$0xf]
  %v4316 = vld [vmem:[%s3 + $0xa8] sm:$0xff]
  %v4317 = vld [vmem:[%s3 + $0xb0] sm:$0xf]
  %v4318 = vld [vmem:[%s3 + $0xb4] sm:$0xff]
  %v4319 = vld [vmem:[%s3 + $0xbc] sm:$0xf]
  %v4320 = vld [vmem:[%s3 + $0xc0] sm:$0xff]
  %v4321 = vld [vmem:[%s3 + $0xc8] sm:$0xf]
  %v4322 = vld [vmem:[%s3 + $0xcc] sm:$0xff]
  %v4323 = vld [vmem:[%s3 + $0xd4] sm:$0xf]
  %v4324 = vld [vmem:[%s3 + $0xd8] sm:$0xff]
  %v4325 = vld [vmem:[%s3 + $0xe0] sm:$0xf]
  %v4326 = vld [vmem:[%s3 + $0xe4] sm:$0xff]
  %v4327 = vld [vmem:[%s3 + $0xec] sm:$0xf]
  %v4328 = vld [vmem:[%s3 + $0xf0] sm:$0xff]
  %v4329 = vld [vmem:[%s3 + $0xf8] sm:$0xf]
  %v4330 = vld [vmem:[%s3 + $0xfc] sm:$0xff]
  %v4331 = vld [vmem:[%s3 + $0x104] sm:$0xf]
  %v4332 = vld [vmem:[%s3 + $0x108] sm:$0xff]
  %v4333 = vld [vmem:[%s3 + $0x110] sm:$0xf]
  %v4334 = vld [vmem:[%s3 + $0x114] sm:$0xff]
  %v4335 = vld [vmem:[%s3 + $0x11c] sm:$0xf]
  %v4336 = vld [vmem:[%s3 + $0x120] sm:$0xff]
  %v4337 = vld [vmem:[%s3 + $0x128] sm:$0xf]
  %v4338 = vld [vmem:[%s3 + $0x12c] sm:$0xff]
  %v4339 = vld [vmem:[%s3 + $0x134] sm:$0xf]
  %v4340 = vld [vmem:[%s3 + $0x138] sm:$0xff]
  %v4341 = vld [vmem:[%s3 + $0x140] sm:$0xf]
  %v4342 = vld [vmem:[%s3 + $0x144] sm:$0xff]
  %v4343 = vld [vmem:[%s3 + $0x14c] sm:$0xf]
  %v4344 = vld [vmem:[%s3 + $0x150] sm:$0xff]
  %v4345 = vld [vmem:[%s3 + $0x158] sm:$0xf]
  %v4346 = vld [vmem:[%s3 + $0x15c] sm:$0xff]
  %v4347 = vld [vmem:[%s3 + $0x164] sm:$0xf]
  %v4348 = vld [vmem:[%s3 + $0x168] sm:$0xff]
  %v4349 = vld [vmem:[%s3 + $0x170] sm:$0xf]
  %v4350 = vld [vmem:[%s3 + $0x174] sm:$0xff]
  %v4351 = vld [vmem:[%s3 + $0x17c] sm:$0xf]
  %v4352 = vld [vmem:[%s3 + $0x180] sm:$0xff]
  %v4353 = vld [vmem:[%s3 + $0x188] sm:$0xf]
  %v4354 = vld [vmem:[%s3 + $0x18c] sm:$0xff]
  %v4355 = vld [vmem:[%s3 + $0x194] sm:$0xf]
  %v4356 = vld [vmem:[%s3 + $0x198] sm:$0xff]
  %v4357 = vld [vmem:[%s3 + $0x1a0] sm:$0xf]
  %v4358 = vld [vmem:[%s3 + $0x1a4] sm:$0xff]
  %v4359 = vld [vmem:[%s3 + $0x1ac] sm:$0xf]
  %v4360 = vld [vmem:[%s3 + $0x1b0] sm:$0xff]
  %v4361 = vld [vmem:[%s3 + $0x1b8] sm:$0xf]
  %v4362 = vld [vmem:[%s3 + $0x1bc] sm:$0xff]
  %v4363 = vld [vmem:[%s3 + $0x1c4] sm:$0xf]
  %v4364 = vld [vmem:[%s3 + $0x1c8] sm:$0xff]
  %v4365 = vld [vmem:[%s3 + $0x1d0] sm:$0xf]
  %v4366 = vld [vmem:[%s3 + $0x1d4] sm:$0xff]
  %v4367 = vld [vmem:[%s3 + $0x1dc] sm:$0xf]
  %v4368 = vld [vmem:[%s3 + $0x1e0] sm:$0xff]
  %v4369 = vld [vmem:[%s3 + $0x1e8] sm:$0xf]
  %v4370 = vld [vmem:[%s3 + $0x1ec] sm:$0xff]
  %v4371 = vld [vmem:[%s3 + $0x1f4] sm:$0xf]
  %v4372 = vld [vmem:[%s3 + $0x1f8] sm:$0xff]
  %v4373 = vld [vmem:[%s3 + $0x200] sm:$0xf]
  %v4374 = vld [vmem:[%s3 + $0x204] sm:$0xff]
  %v4375 = vld [vmem:[%s3 + $0x20c] sm:$0xf]
  %v4376 = vld [vmem:[%s3 + $0x210] sm:$0xff]
  %v4377 = vld [vmem:[%s3 + $0x218] sm:$0xf]
  %v4378 = vld [vmem:[%s3 + $0x21c] sm:$0xff]
  %v4379 = vld [vmem:[%s3 + $0x224] sm:$0xf]
  %v4380 = vld [vmem:[%s3 + $0x228] sm:$0xff]
  %v4381 = vld [vmem:[%s3 + $0x230] sm:$0xf]
  %v4382 = vld [vmem:[%s3 + $0x234] sm:$0xff]
  %v4383 = vld [vmem:[%s3 + $0x23c] sm:$0xf]
  %v4384 = vld [vmem:[#allocation3 + $0xc] sm:$0xcc]
  %v4385 = vld [vmem:[#allocation3 + $0x14] sm:$0xc]
  %v4386 = vld [vmem:[#allocation3 + $0x18] sm:$0x77]
  %v4387 = vld [vmem:[#allocation3 + $0x20] sm:$0x7]
  %s4388 = scalar_lea.vmem %s3, 576
  %v4389 = vld [vmem:[%s4388] sm:$0xff]
  %v4390 = vld [vmem:[%s4388 + $0x8] sm:$0xf]
  %v4391 = vld [vmem:[%s4388 + $0xc] sm:$0xff]
  %v4392 = vld [vmem:[%s4388 + $0x14] sm:$0xf]
  %v4393 = vld [vmem:[%s4388 + $0x18] sm:$0xff]
  %v4394 = vld [vmem:[%s4388 + $0x20] sm:$0xf]
  %v4395 = vld [vmem:[%s4388 + $0x24] sm:$0xff]
  %v4396 = vld [vmem:[%s4388 + $0x2c] sm:$0xf]
  %v4397 = vld [vmem:[%s4388 + $0x30] sm:$0xff]
  %v4398 = vld [vmem:[%s4388 + $0x38] sm:$0xf]
  %v4399 = vld [vmem:[%s4388 + $0x3c] sm:$0xff]
  %v4400 = vld [vmem:[%s4388 + $0x44] sm:$0xf]
  %v4401 = vld [vmem:[%s4388 + $0x48] sm:$0xff]
  %v4402 = vld [vmem:[%s4388 + $0x50] sm:$0xf]
  %v4403 = vld [vmem:[%s4388 + $0x54] sm:$0xff]
  %v4404 = vld [vmem:[%s4388 + $0x5c] sm:$0xf]
  %v4405 = vld [vmem:[%s4388 + $0x60] sm:$0xff]
  %v4406 = vld [vmem:[%s4388 + $0x68] sm:$0xf]
  %v4407 = vld [vmem:[%s4388 + $0x6c] sm:$0xff]
  %v4408 = vld [vmem:[%s4388 + $0x74] sm:$0xf]
  %v4409 = vld [vmem:[%s4388 + $0x78] sm:$0xff]
  %v4410 = vld [vmem:[%s4388 + $0x80] sm:$0xf]
  %v4411 = vld [vmem:[%s4388 + $0x84] sm:$0xff]
  %v4412 = vld [vmem:[%s4388 + $0x8c] sm:$0xf]
  %v4413 = vld [vmem:[%s4388 + $0x90] sm:$0xff]
  %v4414 = vld [vmem:[%s4388 + $0x98] sm:$0xf]
  %v4415 = vld [vmem:[%s4388 + $0x9c] sm:$0xff]
  %v4416 = vld [vmem:[%s4388 + $0xa4] sm:$0xf]
  %v4417 = vld [vmem:[%s4388 + $0xa8] sm:$0xff]
  %v4418 = vld [vmem:[%s4388 + $0xb0] sm:$0xf]
  %v4419 = vld [vmem:[%s4388 + $0xb4] sm:$0xff]
  %v4420 = vld [vmem:[%s4388 + $0xbc] sm:$0xf]
  %v4421 = vld [vmem:[%s4388 + $0xc0] sm:$0xff]
  %v4422 = vld [vmem:[%s4388 + $0xc8] sm:$0xf]
  %v4423 = vld [vmem:[%s4388 + $0xcc] sm:$0xff]
  %v4424 = vld [vmem:[%s4388 + $0xd4] sm:$0xf]
  %v4425 = vld [vmem:[%s4388 + $0xd8] sm:$0xff]
  %v4426 = vld [vmem:[%s4388 + $0xe0] sm:$0xf]
  %v4427 = vld [vmem:[%s4388 + $0xe4] sm:$0xff]
  %v4428 = vld [vmem:[%s4388 + $0xec] sm:$0xf]
  %v4429 = vld [vmem:[%s4388 + $0xf0] sm:$0xff]
  %v4430 = vld [vmem:[%s4388 + $0xf8] sm:$0xf]
  %v4431 = vld [vmem:[%s4388 + $0xfc] sm:$0xff]
  %v4432 = vld [vmem:[%s4388 + $0x104] sm:$0xf]
  %v4433 = vld [vmem:[%s4388 + $0x108] sm:$0xff]
  %v4434 = vld [vmem:[%s4388 + $0x110] sm:$0xf]
  %v4435 = vld [vmem:[%s4388 + $0x114] sm:$0xff]
  %v4436 = vld [vmem:[%s4388 + $0x11c] sm:$0xf]
  %v4437 = vld [vmem:[%s4388 + $0x120] sm:$0xff]
  %v4438 = vld [vmem:[%s4388 + $0x128] sm:$0xf]
  %v4439 = vld [vmem:[%s4388 + $0x12c] sm:$0xff]
  %v4440 = vld [vmem:[%s4388 + $0x134] sm:$0xf]
  %v4441 = vld [vmem:[%s4388 + $0x138] sm:$0xff]
  %v4442 = vld [vmem:[%s4388 + $0x140] sm:$0xf]
  %v4443 = vld [vmem:[%s4388 + $0x144] sm:$0xff]
  %v4444 = vld [vmem:[%s4388 + $0x14c] sm:$0xf]
  %v4445 = vld [vmem:[%s4388 + $0x150] sm:$0xff]
  %v4446 = vld [vmem:[%s4388 + $0x158] sm:$0xf]
  %v4447 = vld [vmem:[%s4388 + $0x15c] sm:$0xff]
  %v4448 = vld [vmem:[%s4388 + $0x164] sm:$0xf]
  %v4449 = vld [vmem:[%s4388 + $0x168] sm:$0xff]
  %v4450 = vld [vmem:[%s4388 + $0x170] sm:$0xf]
  %v4451 = vld [vmem:[%s4388 + $0x174] sm:$0xff]
  %v4452 = vld [vmem:[%s4388 + $0x17c] sm:$0xf]
  %v4453 = vld [vmem:[%s4388 + $0x180] sm:$0xff]
  %v4454 = vld [vmem:[%s4388 + $0x188] sm:$0xf]
  %v4455 = vld [vmem:[%s4388 + $0x18c] sm:$0xff]
  %v4456 = vld [vmem:[%s4388 + $0x194] sm:$0xf]
  %v4457 = vld [vmem:[%s4388 + $0x198] sm:$0xff]
  %v4458 = vld [vmem:[%s4388 + $0x1a0] sm:$0xf]
  %v4459 = vld [vmem:[%s4388 + $0x1a4] sm:$0xff]
  %v4460 = vld [vmem:[%s4388 + $0x1ac] sm:$0xf]
  %v4461 = vld [vmem:[%s4388 + $0x1b0] sm:$0xff]
  %v4462 = vld [vmem:[%s4388 + $0x1b8] sm:$0xf]
  %v4463 = vld [vmem:[%s4388 + $0x1bc] sm:$0xff]
  %v4464 = vld [vmem:[%s4388 + $0x1c4] sm:$0xf]
  %v4465 = vld [vmem:[%s4388 + $0x1c8] sm:$0xff]
  %v4466 = vld [vmem:[%s4388 + $0x1d0] sm:$0xf]
  %v4467 = vld [vmem:[%s4388 + $0x1d4] sm:$0xff]
  %v4468 = vld [vmem:[%s4388 + $0x1dc] sm:$0xf]
  %v4469 = vld [vmem:[%s4388 + $0x1e0] sm:$0xff]
  %v4470 = vld [vmem:[%s4388 + $0x1e8] sm:$0xf]
  %v4471 = vld [vmem:[%s4388 + $0x1ec] sm:$0xff]
  %v4472 = vld [vmem:[%s4388 + $0x1f4] sm:$0xf]
  %v4473 = vld [vmem:[%s4388 + $0x1f8] sm:$0xff]
  %v4474 = vld [vmem:[%s4388 + $0x200] sm:$0xf]
  %v4475 = vld [vmem:[%s4388 + $0x204] sm:$0xff]
  %v4476 = vld [vmem:[%s4388 + $0x20c] sm:$0xf]
  %v4477 = vld [vmem:[%s4388 + $0x210] sm:$0xff]
  %v4478 = vld [vmem:[%s4388 + $0x218] sm:$0xf]
  %v4479 = vld [vmem:[%s4388 + $0x21c] sm:$0xff]
  %v4480 = vld [vmem:[%s4388 + $0x224] sm:$0xf]
  %v4481 = vld [vmem:[%s4388 + $0x228] sm:$0xff]
  %v4482 = vld [vmem:[%s4388 + $0x230] sm:$0xf]
  %v4483 = vld [vmem:[%s4388 + $0x234] sm:$0xff]
  %v4484 = vld [vmem:[%s4388 + $0x23c] sm:$0xf]
  %v4489 = vunpack.c.l.b16 %v4384
  %v4490 = vunpack.c.h.b16 %v4384
  %v4491 = vunpack.c.l.b16 %v4385
  %v4492 = vunpack.c.l.b16 %v4386
  %v4493 = vunpack.c.h.b16 %v4386
  %v4494 = vunpack.c.l.b16 %v4387
  %v4495 = vpack.c.b16 %v4492, %v4489
  %v4496 = vpack.c.b16 %v4493, %v4490
  %v4497 = vpack.c.b16 %v4494, %v4491
  %v4498 = vrot.slane %v4495, 2
  %v4499 = vrot.slane %v4496, 2
  %v4500 = vrot.slane %v4497, 2
  %v4600 = vunpack.c.l.b16 %v4389
  %v4601 = vunpack.c.h.b16 %v4389
  %v4602 = vunpack.c.l.b16 %v4390
  %v4603 = vunpack.c.l.b16 %v4391
  %v4604 = vunpack.c.h.b16 %v4391
  %v4605 = vunpack.c.l.b16 %v4392
  %v4606 = vunpack.c.l.b16 %v4393
  %v4607 = vunpack.c.h.b16 %v4393
  %v4608 = vunpack.c.l.b16 %v4394
  %v4609 = vunpack.c.l.b16 %v4395
  %v4610 = vunpack.c.h.b16 %v4395
  %v4611 = vunpack.c.l.b16 %v4396
  %v4612 = vunpack.c.l.b16 %v4397
  %v4613 = vunpack.c.h.b16 %v4397
  %v4614 = vunpack.c.l.b16 %v4398
  %v4615 = vunpack.c.l.b16 %v4399
  %v4616 = vunpack.c.h.b16 %v4399
  %v4617 = vunpack.c.l.b16 %v4400
  %v4618 = vunpack.c.l.b16 %v4401
  %v4619 = vunpack.c.h.b16 %v4401
  %v4620 = vunpack.c.l.b16 %v4402
  %v4621 = vunpack.c.l.b16 %v4403
  %v4622 = vunpack.c.h.b16 %v4403
  %v4623 = vunpack.c.l.b16 %v4404
  %v4624 = vunpack.c.l.b16 %v4405
  %v4625 = vunpack.c.h.b16 %v4405
  %v4626 = vunpack.c.l.b16 %v4406
  %v4627 = vunpack.c.l.b16 %v4407
  %v4628 = vunpack.c.h.b16 %v4407
  %v4629 = vunpack.c.l.b16 %v4408
  %v4630 = vunpack.c.l.b16 %v4409
  %v4631 = vunpack.c.h.b16 %v4409
  %v4632 = vunpack.c.l.b16 %v4410
  %v4633 = vunpack.c.l.b16 %v4411
  %v4634 = vunpack.c.h.b16 %v4411
  %v4635 = vunpack.c.l.b16 %v4412
  %v4636 = vunpack.c.l.b16 %v4413
  %v4637 = vunpack.c.h.b16 %v4413
  %v4638 = vunpack.c.l.b16 %v4414
  %v4639 = vunpack.c.l.b16 %v4415
  %v4640 = vunpack.c.h.b16 %v4415
  %v4641 = vunpack.c.l.b16 %v4416
  %v4642 = vunpack.c.l.b16 %v4417
  %v4643 = vunpack.c.h.b16 %v4417
  %v4644 = vunpack.c.l.b16 %v4418
  %v4645 = vunpack.c.l.b16 %v4419
  %v4646 = vunpack.c.h.b16 %v4419
  %v4647 = vunpack.c.l.b16 %v4420
  %v4648 = vunpack.c.l.b16 %v4421
  %v4649 = vunpack.c.h.b16 %v4421
  %v4650 = vunpack.c.l.b16 %v4422
  %v4651 = vunpack.c.l.b16 %v4423
  %v4652 = vunpack.c.h.b16 %v4423
  %v4653 = vunpack.c.l.b16 %v4424
  %v4654 = vunpack.c.l.b16 %v4425
  %v4655 = vunpack.c.h.b16 %v4425
  %v4656 = vunpack.c.l.b16 %v4426
  %v4657 = vunpack.c.l.b16 %v4427
  %v4658 = vunpack.c.h.b16 %v4427
  %v4659 = vunpack.c.l.b16 %v4428
  %v4660 = vunpack.c.l.b16 %v4429
  %v4661 = vunpack.c.h.b16 %v4429
  %v4662 = vunpack.c.l.b16 %v4430
  %v4663 = vunpack.c.l.b16 %v4431
  %v4664 = vunpack.c.h.b16 %v4431
  %v4665 = vunpack.c.l.b16 %v4432
  %v4666 = vunpack.c.l.b16 %v4433
  %v4667 = vunpack.c.h.b16 %v4433
  %v4668 = vunpack.c.l.b16 %v4434
  %v4669 = vunpack.c.l.b16 %v4435
  %v4670 = vunpack.c.h.b16 %v4435
  %v4671 = vunpack.c.l.b16 %v4436
  %v4672 = vunpack.c.l.b16 %v4437
  %v4673 = vunpack.c.h.b16 %v4437
  %v4674 = vunpack.c.l.b16 %v4438
  %v4675 = vunpack.c.l.b16 %v4439
  %v4676 = vunpack.c.h.b16 %v4439
  %v4677 = vunpack.c.l.b16 %v4440
  %v4678 = vunpack.c.l.b16 %v4441
  %v4679 = vunpack.c.h.b16 %v4441
  %v4680 = vunpack.c.l.b16 %v4442
  %v4681 = vunpack.c.l.b16 %v4443
  %v4682 = vunpack.c.h.b16 %v4443
  %v4683 = vunpack.c.l.b16 %v4444
  %v4684 = vunpack.c.l.b16 %v4445
  %v4685 = vunpack.c.h.b16 %v4445
  %v4686 = vunpack.c.l.b16 %v4446
  %v4687 = vunpack.c.l.b16 %v4447
  %v4688 = vunpack.c.h.b16 %v4447
  %v4689 = vunpack.c.l.b16 %v4448
  %v4690 = vunpack.c.l.b16 %v4449
  %v4691 = vunpack.c.h.b16 %v4449
  %v4692 = vunpack.c.l.b16 %v4450
  %v4693 = vunpack.c.l.b16 %v4451
  %v4694 = vunpack.c.h.b16 %v4451
  %v4695 = vunpack.c.l.b16 %v4452
  %v4696 = vunpack.c.l.b16 %v4453
  %v4697 = vunpack.c.h.b16 %v4453
  %v4698 = vunpack.c.l.b16 %v4454
  %v4699 = vunpack.c.l.b16 %v4455
  %v4700 = vunpack.c.h.b16 %v4455
  %v4701 = vunpack.c.l.b16 %v4456
  %v4702 = vunpack.c.l.b16 %v4457
  %v4703 = vunpack.c.h.b16 %v4457
  %v4704 = vunpack.c.l.b16 %v4458
  %v4705 = vunpack.c.l.b16 %v4459
  %v4706 = vunpack.c.h.b16 %v4459
  %v4707 = vunpack.c.l.b16 %v4460
  %v4708 = vunpack.c.l.b16 %v4461
  %v4709 = vunpack.c.h.b16 %v4461
  %v4710 = vunpack.c.l.b16 %v4462
  %v4711 = vunpack.c.l.b16 %v4463
  %v4712 = vunpack.c.h.b16 %v4463
  %v4713 = vunpack.c.l.b16 %v4464
  %v4714 = vunpack.c.l.b16 %v4465
  %v4715 = vunpack.c.h.b16 %v4465
  %v4716 = vunpack.c.l.b16 %v4466
  %v4717 = vunpack.c.l.b16 %v4467
  %v4718 = vunpack.c.h.b16 %v4467
  %v4719 = vunpack.c.l.b16 %v4468
  %v4720 = vunpack.c.l.b16 %v4469
  %v4721 = vunpack.c.h.b16 %v4469
  %v4722 = vunpack.c.l.b16 %v4470
  %v4723 = vunpack.c.l.b16 %v4471
  %v4724 = vunpack.c.h.b16 %v4471
  %v4725 = vunpack.c.l.b16 %v4472
  %v4726 = vunpack.c.l.b16 %v4473
  %v4727 = vunpack.c.h.b16 %v4473
  %v4728 = vunpack.c.l.b16 %v4474
  %v4729 = vunpack.c.l.b16 %v4475
  %v4730 = vunpack.c.h.b16 %v4475
  %v4731 = vunpack.c.l.b16 %v4476
  %v4732 = vunpack.c.l.b16 %v4477
  %v4733 = vunpack.c.h.b16 %v4477
  %v4734 = vunpack.c.l.b16 %v4478
  %v4735 = vunpack.c.l.b16 %v4479
  %v4736 = vunpack.c.h.b16 %v4479
  %v4737 = vunpack.c.l.b16 %v4480
  %v4738 = vunpack.c.l.b16 %v4481
  %v4739 = vunpack.c.h.b16 %v4481
  %v4740 = vunpack.c.l.b16 %v4482
  %v4741 = vunpack.c.l.b16 %v4483
  %v4742 = vunpack.c.h.b16 %v4483
  %v4743 = vunpack.c.l.b16 %v4484
  %v4744 = vpack.c.b16 %v4603, %v4600
  %v4745 = vpack.c.b16 %v4604, %v4601
  %v4746 = vpack.c.b16 %v4605, %v4602
  %v4747 = vpack.c.b16 %v4609, %v4606
  %v4748 = vpack.c.b16 %v4610, %v4607
  %v4749 = vpack.c.b16 %v4611, %v4608
  %v4750 = vpack.c.b16 %v4615, %v4612
  %v4751 = vpack.c.b16 %v4616, %v4613
  %v4752 = vpack.c.b16 %v4617, %v4614
  %v4753 = vpack.c.b16 %v4621, %v4618
  %v4754 = vpack.c.b16 %v4622, %v4619
  %v4755 = vpack.c.b16 %v4623, %v4620
  %v4756 = vpack.c.b16 %v4627, %v4624
  %v4757 = vpack.c.b16 %v4628, %v4625
  %v4758 = vpack.c.b16 %v4629, %v4626
  %v4759 = vpack.c.b16 %v4633, %v4630
  %v4760 = vpack.c.b16 %v4634, %v4631
  %v4761 = vpack.c.b16 %v4635, %v4632
  %v4762 = vpack.c.b16 %v4639, %v4636
  %v4763 = vpack.c.b16 %v4640, %v4637
  %v4764 = vpack.c.b16 %v4641, %v4638
  %v4765 = vpack.c.b16 %v4645, %v4642
  %v4766 = vpack.c.b16 %v4646, %v4643
  %v4767 = vpack.c.b16 %v4647, %v4644
  %v4768 = vpack.c.b16 %v4651, %v4648
  %v4769 = vpack.c.b16 %v4652, %v4649
  %v4770 = vpack.c.b16 %v4653, %v4650
  %v4771 = vpack.c.b16 %v4657, %v4654
  %v4772 = vpack.c.b16 %v4658, %v4655
  %v4773 = vpack.c.b16 %v4659, %v4656
  %v4774 = vpack.c.b16 %v4663, %v4660
  %v4775 = vpack.c.b16 %v4664, %v4661
  %v4776 = vpack.c.b16 %v4665, %v4662
  %v4777 = vpack.c.b16 %v4669, %v4666
  %v4778 = vpack.c.b16 %v4670, %v4667
  %v4779 = vpack.c.b16 %v4671, %v4668
  %v4780 = vpack.c.b16 %v4675, %v4672
  %v4781 = vpack.c.b16 %v4676, %v4673
  %v4782 = vpack.c.b16 %v4677, %v4674
  %v4783 = vpack.c.b16 %v4681, %v4678
  %v4784 = vpack.c.b16 %v4682, %v4679
  %v4785 = vpack.c.b16 %v4683, %v4680
  %v4786 = vpack.c.b16 %v4687, %v4684
  %v4787 = vpack.c.b16 %v4688, %v4685
  %v4788 = vpack.c.b16 %v4689, %v4686
  %v4789 = vpack.c.b16 %v4693, %v4690
  %v4790 = vpack.c.b16 %v4694, %v4691
  %v4791 = vpack.c.b16 %v4695, %v4692
  %v4792 = vpack.c.b16 %v4699, %v4696
  %v4793 = vpack.c.b16 %v4700, %v4697
  %v4794 = vpack.c.b16 %v4701, %v4698
  %v4795 = vpack.c.b16 %v4705, %v4702
  %v4796 = vpack.c.b16 %v4706, %v4703
  %v4797 = vpack.c.b16 %v4707, %v4704
  %v4798 = vpack.c.b16 %v4711, %v4708
  %v4799 = vpack.c.b16 %v4712, %v4709
  %v4800 = vpack.c.b16 %v4713, %v4710
  %v4801 = vpack.c.b16 %v4717, %v4714
  %v4802 = vpack.c.b16 %v4718, %v4715
  %v4803 = vpack.c.b16 %v4719, %v4716
  %v4804 = vpack.c.b16 %v4723, %v4720
  %v4805 = vpack.c.b16 %v4724, %v4721
  %v4806 = vpack.c.b16 %v4725, %v4722
  %v4807 = vpack.c.b16 %v4729, %v4726
  %v4808 = vpack.c.b16 %v4730, %v4727
  %v4809 = vpack.c.b16 %v4731, %v4728
  %v4810 = vpack.c.b16 %v4735, %v4732
  %v4811 = vpack.c.b16 %v4736, %v4733
  %v4812 = vpack.c.b16 %v4737, %v4734
  %v4813 = vpack.c.b16 %v4741, %v4738
  %v4814 = vpack.c.b16 %v4742, %v4739
  %v4815 = vpack.c.b16 %v4743, %v4740
  %4888 = vmatpush.bf16.msra.mxu0 %v4765
  %4889 = vmatpush.bf16.msra.mxu0 %v4762
  %4890 = vmatpush.bf16.msra.mxu0 %v4759
  %4891 = vmatpush.bf16.msra.mxu0 %v4756
  %4892 = vmatpush.bf16.msra.mxu0 %v4753
  %4893 = vmatpush.bf16.msra.mxu0 %v4750
  %4894 = vmatpush.bf16.msra.mxu0 %v4747
  %4895 = vmatpush.bf16.msra.mxu0 %v4744
  %4896 = vmatmul.bf16.gmra.mxu0 %v4498
  %v4897 = vpop.f32.mrf.mxu0
  %v4898 = vadd.f32 0.0, %v4897
  %v4899 = vpop.f32.mrf.mxu0
  %v4900 = vadd.f32 0.0, %v4899
  %4901 = vdwg.mxu0
  %4902 = vmatpush.bf16.msra.mxu0 %v4789
  %4903 = vmatpush.bf16.msra.mxu0 %v4786
  %4904 = vmatpush.bf16.msra.mxu0 %v4783
  %4905 = vmatpush.bf16.msra.mxu0 %v4780
  %4906 = vmatpush.bf16.msra.mxu0 %v4777
  %4907 = vmatpush.bf16.msra.mxu0 %v4774
  %4908 = vmatpush.bf16.msra.mxu0 %v4771
  %4909 = vmatpush.bf16.msra.mxu0 %v4768
  %4910 = vmatmul.bf16.gmra.mxu0 %v4499
  %v4911 = vpop.f32.mrf.mxu0
  %v4912 = vadd.f32 %v4898, %v4911
  %v4913 = vpop.f32.mrf.mxu0
  %v4914 = vadd.f32 %v4900, %v4913
  %4915 = vdwg.mxu0
  %4916 = vmatpush.bf16.msra.mxu0 %v4813
  %4917 = vmatpush.bf16.msra.mxu0 %v4810
  %4918 = vmatpush.bf16.msra.mxu0 %v4807
  %4919 = vmatpush.bf16.msra.mxu0 %v4804
  %4920 = vmatpush.bf16.msra.mxu0 %v4801
  %4921 = vmatpush.bf16.msra.mxu0 %v4798
  %4922 = vmatpush.bf16.msra.mxu0 %v4795
  %4923 = vmatpush.bf16.msra.mxu0 %v4792
  %4924 = vmatmul.bf16.gmra.mxu0 %v4500
  %v4925 = vpop.f32.mrf.mxu0
  %v4926 = vadd.f32 %v4912, %v4925
  %v4927 = vpop.f32.mrf.mxu0
  %v4928 = vadd.f32 %v4914, %v4927
  %4929 = vdwg.mxu0
  %4930 = vmatpush.bf16.msra.mxu0 %v4766
  %4931 = vmatpush.bf16.msra.mxu0 %v4763
  %4932 = vmatpush.bf16.msra.mxu0 %v4760
  %4933 = vmatpush.bf16.msra.mxu0 %v4757
  %4934 = vmatpush.bf16.msra.mxu0 %v4754
  %4935 = vmatpush.bf16.msra.mxu0 %v4751
  %4936 = vmatpush.bf16.msra.mxu0 %v4748
  %4937 = vmatpush.bf16.msra.mxu0 %v4745
  %4938 = vmatmul.bf16.gmra.mxu0 %v4498
  %v4939 = vpop.f32.mrf.mxu0
  %v4940 = vadd.f32 0.0, %v4939
  %v4941 = vpop.f32.mrf.mxu0
  %v4942 = vadd.f32 0.0, %v4941
  %4943 = vdwg.mxu0
  %4944 = vmatpush.bf16.msra.mxu0 %v4790
  %4945 = vmatpush.bf16.msra.mxu0 %v4787
  %4946 = vmatpush.bf16.msra.mxu0 %v4784
  %4947 = vmatpush.bf16.msra.mxu0 %v4781
  %4948 = vmatpush.bf16.msra.mxu0 %v4778
  %4949 = vmatpush.bf16.msra.mxu0 %v4775
  %4950 = vmatpush.bf16.msra.mxu0 %v4772
  %4951 = vmatpush.bf16.msra.mxu0 %v4769
  %4952 = vmatmul.bf16.gmra.mxu0 %v4499
  %v4953 = vpop.f32.mrf.mxu0
  %v4954 = vadd.f32 %v4940, %v4953
  %v4955 = vpop.f32.mrf.mxu0
  %v4956 = vadd.f32 %v4942, %v4955
  %4957 = vdwg.mxu0
  %4958 = vmatpush.bf16.msra.mxu0 %v4814
  %4959 = vmatpush.bf16.msra.mxu0 %v4811
  %4960 = vmatpush.bf16.msra.mxu0 %v4808
  %4961 = vmatpush.bf16.msra.mxu0 %v4805
  %4962 = vmatpush.bf16.msra.mxu0 %v4802
  %4963 = vmatpush.bf16.msra.mxu0 %v4799
  %4964 = vmatpush.bf16.msra.mxu0 %v4796
  %4965 = vmatpush.bf16.msra.mxu0 %v4793
  %4966 = vmatmul.bf16.gmra.mxu0 %v4500
  %v4967 = vpop.f32.mrf.mxu0
  %v4968 = vadd.f32 %v4954, %v4967
  %v4969 = vpop.f32.mrf.mxu0
  %v4970 = vadd.f32 %v4956, %v4969
  %4971 = vdwg.mxu0
  %4972 = vmatpush.bf16.msra.mxu0 %v4767
  %4973 = vmatpush.bf16.msra.mxu0 %v4764
  %4974 = vmatpush.bf16.msra.mxu0 %v4761
  %4975 = vmatpush.bf16.msra.mxu0 %v4758
  %4976 = vmatpush.bf16.msra.mxu0 %v4755
  %4977 = vmatpush.bf16.msra.mxu0 %v4752
  %4978 = vmatpush.bf16.msra.mxu0 %v4749
  %4979 = vmatpush.bf16.msra.mxu0 %v4746
  %4980 = vmatmul.bf16.gmra.mxu0 %v4498
  %v4981 = vpop.f32.mrf.mxu0
  %v4982 = vadd.f32 0.0, %v4981
  %v4983 = vpop.f32.mrf.mxu0
  %v4984 = vadd.f32 0.0, %v4983
  %4985 = vdwg.mxu0
  %4986 = vmatpush.bf16.msra.mxu0 %v4791
  %4987 = vmatpush.bf16.msra.mxu0 %v4788
  %4988 = vmatpush.bf16.msra.mxu0 %v4785
  %4989 = vmatpush.bf16.msra.mxu0 %v4782
  %4990 = vmatpush.bf16.msra.mxu0 %v4779
  %4991 = vmatpush.bf16.msra.mxu0 %v4776
  %4992 = vmatpush.bf16.msra.mxu0 %v4773
  %4993 = vmatpush.bf16.msra.mxu0 %v4770
  %4994 = vmatmul.bf16.gmra.mxu0 %v4499
  %v4995 = vpop.f32.mrf.mxu0
  %v4996 = vadd.f32 %v4982, %v4995
  %v4997 = vpop.f32.mrf.mxu0
  %v4998 = vadd.f32 %v4984, %v4997
  %4999 = vdwg.mxu0
  %5000 = vmatpush.bf16.msra.mxu0 %v4815
  %5001 = vmatpush.bf16.msra.mxu0 %v4812
  %5002 = vmatpush.bf16.msra.mxu0 %v4809
  %5003 = vmatpush.bf16.msra.mxu0 %v4806
  %5004 = vmatpush.bf16.msra.mxu0 %v4803
  %5005 = vmatpush.bf16.msra.mxu0 %v4800
  %5006 = vmatpush.bf16.msra.mxu0 %v4797
  %5007 = vmatpush.bf16.msra.mxu0 %v4794
  %5008 = vmatmul.bf16.gmra.mxu0 %v4500
  %v5009 = vpop.f32.mrf.mxu0
  %v5010 = vadd.f32 %v4996, %v5009
  %v5011 = vpop.f32.mrf.mxu0
  %v5012 = vadd.f32 %v4998, %v5011
  %5013 = vdwg.mxu0
  %v5018 = vunpack.c.l.b16 %v4284
  %v5019 = vunpack.c.h.b16 %v4284
  %v5020 = vunpack.c.l.b16 %v4285
  %v5021 = vunpack.c.l.b16 %v4286
  %v5022 = vunpack.c.h.b16 %v4286
  %v5023 = vunpack.c.l.b16 %v4287
  %v5024 = vpack.c.b16 %v5021, %v5018
  %v5025 = vpack.c.b16 %v5022, %v5019
  %v5026 = vpack.c.b16 %v5023, %v5020
  %v5126 = vunpack.c.l.b16 %v4288
  %v5127 = vunpack.c.h.b16 %v4288
  %v5128 = vunpack.c.l.b16 %v4289
  %v5129 = vunpack.c.l.b16 %v4290
  %v5130 = vunpack.c.h.b16 %v4290
  %v5131 = vunpack.c.l.b16 %v4291
  %v5132 = vunpack.c.l.b16 %v4292
  %v5133 = vunpack.c.h.b16 %v4292
  %v5134 = vunpack.c.l.b16 %v4293
  %v5135 = vunpack.c.l.b16 %v4294
  %v5136 = vunpack.c.h.b16 %v4294
  %v5137 = vunpack.c.l.b16 %v4295
  %v5138 = vunpack.c.l.b16 %v4296
  %v5139 = vunpack.c.h.b16 %v4296
  %v5140 = vunpack.c.l.b16 %v4297
  %v5141 = vunpack.c.l.b16 %v4298
  %v5142 = vunpack.c.h.b16 %v4298
  %v5143 = vunpack.c.l.b16 %v4299
  %v5144 = vunpack.c.l.b16 %v4300
  %v5145 = vunpack.c.h.b16 %v4300
  %v5146 = vunpack.c.l.b16 %v4301
  %v5147 = vunpack.c.l.b16 %v4302
  %v5148 = vunpack.c.h.b16 %v4302
  %v5149 = vunpack.c.l.b16 %v4303
  %v5150 = vunpack.c.l.b16 %v4304
  %v5151 = vunpack.c.h.b16 %v4304
  %v5152 = vunpack.c.l.b16 %v4305
  %v5153 = vunpack.c.l.b16 %v4306
  %v5154 = vunpack.c.h.b16 %v4306
  %v5155 = vunpack.c.l.b16 %v4307
  %v5156 = vunpack.c.l.b16 %v4308
  %v5157 = vunpack.c.h.b16 %v4308
  %v5158 = vunpack.c.l.b16 %v4309
  %v5159 = vunpack.c.l.b16 %v4310
  %v5160 = vunpack.c.h.b16 %v4310
  %v5161 = vunpack.c.l.b16 %v4311
  %v5162 = vunpack.c.l.b16 %v4312
  %v5163 = vunpack.c.h.b16 %v4312
  %v5164 = vunpack.c.l.b16 %v4313
  %v5165 = vunpack.c.l.b16 %v4314
  %v5166 = vunpack.c.h.b16 %v4314
  %v5167 = vunpack.c.l.b16 %v4315
  %v5168 = vunpack.c.l.b16 %v4316
  %v5169 = vunpack.c.h.b16 %v4316
  %v5170 = vunpack.c.l.b16 %v4317
  %v5171 = vunpack.c.l.b16 %v4318
  %v5172 = vunpack.c.h.b16 %v4318
  %v5173 = vunpack.c.l.b16 %v4319
  %v5174 = vunpack.c.l.b16 %v4320
  %v5175 = vunpack.c.h.b16 %v4320
  %v5176 = vunpack.c.l.b16 %v4321
  %v5177 = vunpack.c.l.b16 %v4322
  %v5178 = vunpack.c.h.b16 %v4322
  %v5179 = vunpack.c.l.b16 %v4323
  %v5180 = vunpack.c.l.b16 %v4324
  %v5181 = vunpack.c.h.b16 %v4324
  %v5182 = vunpack.c.l.b16 %v4325
  %v5183 = vunpack.c.l.b16 %v4326
  %v5184 = vunpack.c.h.b16 %v4326
  %v5185 = vunpack.c.l.b16 %v4327
  %v5186 = vunpack.c.l.b16 %v4328
  %v5187 = vunpack.c.h.b16 %v4328
  %v5188 = vunpack.c.l.b16 %v4329
  %v5189 = vunpack.c.l.b16 %v4330
  %v5190 = vunpack.c.h.b16 %v4330
  %v5191 = vunpack.c.l.b16 %v4331
  %v5192 = vunpack.c.l.b16 %v4332
  %v5193 = vunpack.c.h.b16 %v4332
  %v5194 = vunpack.c.l.b16 %v4333
  %v5195 = vunpack.c.l.b16 %v4334
  %v5196 = vunpack.c.h.b16 %v4334
  %v5197 = vunpack.c.l.b16 %v4335
  %v5198 = vunpack.c.l.b16 %v4336
  %v5199 = vunpack.c.h.b16 %v4336
  %v5200 = vunpack.c.l.b16 %v4337
  %v5201 = vunpack.c.l.b16 %v4338
  %v5202 = vunpack.c.h.b16 %v4338
  %v5203 = vunpack.c.l.b16 %v4339
  %v5204 = vunpack.c.l.b16 %v4340
  %v5205 = vunpack.c.h.b16 %v4340
  %v5206 = vunpack.c.l.b16 %v4341
  %v5207 = vunpack.c.l.b16 %v4342
  %v5208 = vunpack.c.h.b16 %v4342
  %v5209 = vunpack.c.l.b16 %v4343
  %v5210 = vunpack.c.l.b16 %v4344
  %v5211 = vunpack.c.h.b16 %v4344
  %v5212 = vunpack.c.l.b16 %v4345
  %v5213 = vunpack.c.l.b16 %v4346
  %v5214 = vunpack.c.h.b16 %v4346
  %v5215 = vunpack.c.l.b16 %v4347
  %v5216 = vunpack.c.l.b16 %v4348
  %v5217 = vunpack.c.h.b16 %v4348
  %v5218 = vunpack.c.l.b16 %v4349
  %v5219 = vunpack.c.l.b16 %v4350
  %v5220 = vunpack.c.h.b16 %v4350
  %v5221 = vunpack.c.l.b16 %v4351
  %v5222 = vunpack.c.l.b16 %v4352
  %v5223 = vunpack.c.h.b16 %v4352
  %v5224 = vunpack.c.l.b16 %v4353
  %v5225 = vunpack.c.l.b16 %v4354
  %v5226 = vunpack.c.h.b16 %v4354
  %v5227 = vunpack.c.l.b16 %v4355
  %v5228 = vunpack.c.l.b16 %v4356
  %v5229 = vunpack.c.h.b16 %v4356
  %v5230 = vunpack.c.l.b16 %v4357
  %v5231 = vunpack.c.l.b16 %v4358
  %v5232 = vunpack.c.h.b16 %v4358
  %v5233 = vunpack.c.l.b16 %v4359
  %v5234 = vunpack.c.l.b16 %v4360
  %v5235 = vunpack.c.h.b16 %v4360
  %v5236 = vunpack.c.l.b16 %v4361
  %v5237 = vunpack.c.l.b16 %v4362
  %v5238 = vunpack.c.h.b16 %v4362
  %v5239 = vunpack.c.l.b16 %v4363
  %v5240 = vunpack.c.l.b16 %v4364
  %v5241 = vunpack.c.h.b16 %v4364
  %v5242 = vunpack.c.l.b16 %v4365
  %v5243 = vunpack.c.l.b16 %v4366
  %v5244 = vunpack.c.h.b16 %v4366
  %v5245 = vunpack.c.l.b16 %v4367
  %v5246 = vunpack.c.l.b16 %v4368
  %v5247 = vunpack.c.h.b16 %v4368
  %v5248 = vunpack.c.l.b16 %v4369
  %v5249 = vunpack.c.l.b16 %v4370
  %v5250 = vunpack.c.h.b16 %v4370
  %v5251 = vunpack.c.l.b16 %v4371
  %v5252 = vunpack.c.l.b16 %v4372
  %v5253 = vunpack.c.h.b16 %v4372
  %v5254 = vunpack.c.l.b16 %v4373
  %v5255 = vunpack.c.l.b16 %v4374
  %v5256 = vunpack.c.h.b16 %v4374
  %v5257 = vunpack.c.l.b16 %v4375
  %v5258 = vunpack.c.l.b16 %v4376
  %v5259 = vunpack.c.h.b16 %v4376
  %v5260 = vunpack.c.l.b16 %v4377
  %v5261 = vunpack.c.l.b16 %v4378
  %v5262 = vunpack.c.h.b16 %v4378
  %v5263 = vunpack.c.l.b16 %v4379
  %v5264 = vunpack.c.l.b16 %v4380
  %v5265 = vunpack.c.h.b16 %v4380
  %v5266 = vunpack.c.l.b16 %v4381
  %v5267 = vunpack.c.l.b16 %v4382
  %v5268 = vunpack.c.h.b16 %v4382
  %v5269 = vunpack.c.l.b16 %v4383
  %v5270 = vpack.c.b16 %v5129, %v5126
  %v5271 = vpack.c.b16 %v5130, %v5127
  %v5272 = vpack.c.b16 %v5131, %v5128
  %v5273 = vpack.c.b16 %v5135, %v5132
  %v5274 = vpack.c.b16 %v5136, %v5133
  %v5275 = vpack.c.b16 %v5137, %v5134
  %v5276 = vpack.c.b16 %v5141, %v5138
  %v5277 = vpack.c.b16 %v5142, %v5139
  %v5278 = vpack.c.b16 %v5143, %v5140
  %v5279 = vpack.c.b16 %v5147, %v5144
  %v5280 = vpack.c.b16 %v5148, %v5145
  %v5281 = vpack.c.b16 %v5149, %v5146
  %v5282 = vpack.c.b16 %v5153, %v5150
  %v5283 = vpack.c.b16 %v5154, %v5151
  %v5284 = vpack.c.b16 %v5155, %v5152
  %v5285 = vpack.c.b16 %v5159, %v5156
  %v5286 = vpack.c.b16 %v5160, %v5157
  %v5287 = vpack.c.b16 %v5161, %v5158
  %v5288 = vpack.c.b16 %v5165, %v5162
  %v5289 = vpack.c.b16 %v5166, %v5163
  %v5290 = vpack.c.b16 %v5167, %v5164
  %v5291 = vpack.c.b16 %v5171, %v5168
  %v5292 = vpack.c.b16 %v5172, %v5169
  %v5293 = vpack.c.b16 %v5173, %v5170
  %v5294 = vpack.c.b16 %v5177, %v5174
  %v5295 = vpack.c.b16 %v5178, %v5175
  %v5296 = vpack.c.b16 %v5179, %v5176
  %v5297 = vpack.c.b16 %v5183, %v5180
  %v5298 = vpack.c.b16 %v5184, %v5181
  %v5299 = vpack.c.b16 %v5185, %v5182
  %v5300 = vpack.c.b16 %v5189, %v5186
  %v5301 = vpack.c.b16 %v5190, %v5187
  %v5302 = vpack.c.b16 %v5191, %v5188
  %v5303 = vpack.c.b16 %v5195, %v5192
  %v5304 = vpack.c.b16 %v5196, %v5193
  %v5305 = vpack.c.b16 %v5197, %v5194
  %v5306 = vpack.c.b16 %v5201, %v5198
  %v5307 = vpack.c.b16 %v5202, %v5199
  %v5308 = vpack.c.b16 %v5203, %v5200
  %v5309 = vpack.c.b16 %v5207, %v5204
  %v5310 = vpack.c.b16 %v5208, %v5205
  %v5311 = vpack.c.b16 %v5209, %v5206
  %v5312 = vpack.c.b16 %v5213, %v5210
  %v5313 = vpack.c.b16 %v5214, %v5211
  %v5314 = vpack.c.b16 %v5215, %v5212
  %v5315 = vpack.c.b16 %v5219, %v5216
  %v5316 = vpack.c.b16 %v5220, %v5217
  %v5317 = vpack.c.b16 %v5221, %v5218
  %v5318 = vpack.c.b16 %v5225, %v5222
  %v5319 = vpack.c.b16 %v5226, %v5223
  %v5320 = vpack.c.b16 %v5227, %v5224
  %v5321 = vpack.c.b16 %v5231, %v5228
  %v5322 = vpack.c.b16 %v5232, %v5229
  %v5323 = vpack.c.b16 %v5233, %v5230
  %v5324 = vpack.c.b16 %v5237, %v5234
  %v5325 = vpack.c.b16 %v5238, %v5235
  %v5326 = vpack.c.b16 %v5239, %v5236
  %v5327 = vpack.c.b16 %v5243, %v5240
  %v5328 = vpack.c.b16 %v5244, %v5241
  %v5329 = vpack.c.b16 %v5245, %v5242
  %v5330 = vpack.c.b16 %v5249, %v5246
  %v5331 = vpack.c.b16 %v5250, %v5247
  %v5332 = vpack.c.b16 %v5251, %v5248
  %v5333 = vpack.c.b16 %v5255, %v5252
  %v5334 = vpack.c.b16 %v5256, %v5253
  %v5335 = vpack.c.b16 %v5257, %v5254
  %v5336 = vpack.c.b16 %v5261, %v5258
  %v5337 = vpack.c.b16 %v5262, %v5259
  %v5338 = vpack.c.b16 %v5263, %v5260
  %v5339 = vpack.c.b16 %v5267, %v5264
  %v5340 = vpack.c.b16 %v5268, %v5265
  %v5341 = vpack.c.b16 %v5269, %v5266
  %5414 = vmatpush.bf16.msra.mxu0 %v5291
  %5415 = vmatpush.bf16.msra.mxu0 %v5288
  %5416 = vmatpush.bf16.msra.mxu0 %v5285
  %5417 = vmatpush.bf16.msra.mxu0 %v5282
  %5418 = vmatpush.bf16.msra.mxu0 %v5279
  %5419 = vmatpush.bf16.msra.mxu0 %v5276
  %5420 = vmatpush.bf16.msra.mxu0 %v5273
  %5421 = vmatpush.bf16.msra.mxu0 %v5270
  %5422 = vmatmul.bf16.gmra.mxu0 %v5024
  %v5423 = vpop.f32.mrf.mxu0
  %v5424 = vadd.f32 %v4926, %v5423
  %v5425 = vpop.f32.mrf.mxu0
  %v5426 = vadd.f32 %v4928, %v5425
  %5427 = vdwg.mxu0
  %5428 = vmatpush.bf16.msra.mxu0 %v5315
  %5429 = vmatpush.bf16.msra.mxu0 %v5312
  %5430 = vmatpush.bf16.msra.mxu0 %v5309
  %5431 = vmatpush.bf16.msra.mxu0 %v5306
  %5432 = vmatpush.bf16.msra.mxu0 %v5303
  %5433 = vmatpush.bf16.msra.mxu0 %v5300
  %5434 = vmatpush.bf16.msra.mxu0 %v5297
  %5435 = vmatpush.bf16.msra.mxu0 %v5294
  %5436 = vmatmul.bf16.gmra.mxu0 %v5025
  %v5437 = vpop.f32.mrf.mxu0
  %v5438 = vadd.f32 %v5424, %v5437
  %v5439 = vpop.f32.mrf.mxu0
  %v5440 = vadd.f32 %v5426, %v5439
  %5441 = vdwg.mxu0
  %5442 = vmatpush.bf16.msra.mxu0 %v5339
  %5443 = vmatpush.bf16.msra.mxu0 %v5336
  %5444 = vmatpush.bf16.msra.mxu0 %v5333
  %5445 = vmatpush.bf16.msra.mxu0 %v5330
  %5446 = vmatpush.bf16.msra.mxu0 %v5327
  %5447 = vmatpush.bf16.msra.mxu0 %v5324
  %5448 = vmatpush.bf16.msra.mxu0 %v5321
  %5449 = vmatpush.bf16.msra.mxu0 %v5318
  %5450 = vmatmul.bf16.gmra.mxu0 %v5026
  %v5451 = vpop.f32.mrf.mxu0
  %v5452 = vadd.f32 %v5438, %v5451
  %v5453 = vpop.f32.mrf.mxu0
  %v5454 = vadd.f32 %v5440, %v5453
  %5455 = vdwg.mxu0
  %5456 = vmatpush.bf16.msra.mxu0 %v5292
  %5457 = vmatpush.bf16.msra.mxu0 %v5289
  %5458 = vmatpush.bf16.msra.mxu0 %v5286
  %5459 = vmatpush.bf16.msra.mxu0 %v5283
  %5460 = vmatpush.bf16.msra.mxu0 %v5280
  %5461 = vmatpush.bf16.msra.mxu0 %v5277
  %5462 = vmatpush.bf16.msra.mxu0 %v5274
  %5463 = vmatpush.bf16.msra.mxu0 %v5271
  %5464 = vmatmul.bf16.gmra.mxu0 %v5024
  %v5465 = vpop.f32.mrf.mxu0
  %v5466 = vadd.f32 %v4968, %v5465
  %v5467 = vpop.f32.mrf.mxu0
  %v5468 = vadd.f32 %v4970, %v5467
  %5469 = vdwg.mxu0
  %5470 = vmatpush.bf16.msra.mxu0 %v5316
  %5471 = vmatpush.bf16.msra.mxu0 %v5313
  %5472 = vmatpush.bf16.msra.mxu0 %v5310
  %5473 = vmatpush.bf16.msra.mxu0 %v5307
  %5474 = vmatpush.bf16.msra.mxu0 %v5304
  %5475 = vmatpush.bf16.msra.mxu0 %v5301
  %5476 = vmatpush.bf16.msra.mxu0 %v5298
  %5477 = vmatpush.bf16.msra.mxu0 %v5295
  %5478 = vmatmul.bf16.gmra.mxu0 %v5025
  %v5479 = vpop.f32.mrf.mxu0
  %v5480 = vadd.f32 %v5466, %v5479
  %v5481 = vpop.f32.mrf.mxu0
  %v5482 = vadd.f32 %v5468, %v5481
  %5483 = vdwg.mxu0
  %5484 = vmatpush.bf16.msra.mxu0 %v5340
  %5485 = vmatpush.bf16.msra.mxu0 %v5337
  %5486 = vmatpush.bf16.msra.mxu0 %v5334
  %5487 = vmatpush.bf16.msra.mxu0 %v5331
  %5488 = vmatpush.bf16.msra.mxu0 %v5328
  %5489 = vmatpush.bf16.msra.mxu0 %v5325
  %5490 = vmatpush.bf16.msra.mxu0 %v5322
  %5491 = vmatpush.bf16.msra.mxu0 %v5319
  %5492 = vmatmul.bf16.gmra.mxu0 %v5026
  %v5493 = vpop.f32.mrf.mxu0
  %v5494 = vadd.f32 %v5480, %v5493
  %v5495 = vpop.f32.mrf.mxu0
  %v5496 = vadd.f32 %v5482, %v5495
  %5497 = vdwg.mxu0
  %5498 = vmatpush.bf16.msra.mxu0 %v5293
  %5499 = vmatpush.bf16.msra.mxu0 %v5290
  %5500 = vmatpush.bf16.msra.mxu0 %v5287
  %5501 = vmatpush.bf16.msra.mxu0 %v5284
  %5502 = vmatpush.bf16.msra.mxu0 %v5281
  %5503 = vmatpush.bf16.msra.mxu0 %v5278
  %5504 = vmatpush.bf16.msra.mxu0 %v5275
  %5505 = vmatpush.bf16.msra.mxu0 %v5272
  %5506 = vmatmul.bf16.gmra.mxu0 %v5024
  %v5507 = vpop.f32.mrf.mxu0
  %v5508 = vadd.f32 %v5010, %v5507
  %v5509 = vpop.f32.mrf.mxu0
  %v5510 = vadd.f32 %v5012, %v5509
  %5511 = vdwg.mxu0
  %5512 = vmatpush.bf16.msra.mxu0 %v5317
  %5513 = vmatpush.bf16.msra.mxu0 %v5314
  %5514 = vmatpush.bf16.msra.mxu0 %v5311
  %5515 = vmatpush.bf16.msra.mxu0 %v5308
  %5516 = vmatpush.bf16.msra.mxu0 %v5305
  %5517 = vmatpush.bf16.msra.mxu0 %v5302
  %5518 = vmatpush.bf16.msra.mxu0 %v5299
  %5519 = vmatpush.bf16.msra.mxu0 %v5296
  %5520 = vmatmul.bf16.gmra.mxu0 %v5025
  %v5521 = vpop.f32.mrf.mxu0
  %v5522 = vadd.f32 %v5508, %v5521
  %v5523 = vpop.f32.mrf.mxu0
  %v5524 = vadd.f32 %v5510, %v5523
  %5525 = vdwg.mxu0
  %5526 = vmatpush.bf16.msra.mxu0 %v5341
  %5527 = vmatpush.bf16.msra.mxu0 %v5338
  %5528 = vmatpush.bf16.msra.mxu0 %v5335
  %5529 = vmatpush.bf16.msra.mxu0 %v5332
  %5530 = vmatpush.bf16.msra.mxu0 %v5329
  %5531 = vmatpush.bf16.msra.mxu0 %v5326
  %5532 = vmatpush.bf16.msra.mxu0 %v5323
  %5533 = vmatpush.bf16.msra.mxu0 %v5320
  %5534 = vmatmul.bf16.gmra.mxu0 %v5026
  %v5535 = vpop.f32.mrf.mxu0
  %v5536 = vadd.f32 %v5522, %v5535
  %v5537 = vpop.f32.mrf.mxu0
  %v5538 = vadd.f32 %v5524, %v5537
  %5539 = vdwg.mxu0
  %v5540 = vld [vmem:[#allocation3] sm:$0xee]
  %v5541 = vld [vmem:[#allocation3 + $0x8] sm:$0xe]
  %v5542 = vld [vmem:[#allocation3 + $0xc] sm:$0x33]
  %v5543 = vld [vmem:[#allocation3 + $0x14] sm:$0x3]
  %s5544 = scalar_lea.vmem %s3, 1152
  %v5545 = vld [vmem:[%s5544] sm:$0xff]
  %v5546 = vld [vmem:[%s5544 + $0x8] sm:$0xf]
  %v5547 = vld [vmem:[%s5544 + $0xc] sm:$0xff]
  %v5548 = vld [vmem:[%s5544 + $0x14] sm:$0xf]
  %v5549 = vld [vmem:[%s5544 + $0x18] sm:$0xff]
  %v5550 = vld [vmem:[%s5544 + $0x20] sm:$0xf]
  %v5551 = vld [vmem:[%s5544 + $0x24] sm:$0xff]
  %v5552 = vld [vmem:[%s5544 + $0x2c] sm:$0xf]
  %v5553 = vld [vmem:[%s5544 + $0x30] sm:$0xff]
  %v5554 = vld [vmem:[%s5544 + $0x38] sm:$0xf]
  %v5555 = vld [vmem:[%s5544 + $0x3c] sm:$0xff]
  %v5556 = vld [vmem:[%s5544 + $0x44] sm:$0xf]
  %v5557 = vld [vmem:[%s5544 + $0x48] sm:$0xff]
  %v5558 = vld [vmem:[%s5544 + $0x50] sm:$0xf]
  %v5559 = vld [vmem:[%s5544 + $0x54] sm:$0xff]
  %v5560 = vld [vmem:[%s5544 + $0x5c] sm:$0xf]
  %v5561 = vld [vmem:[%s5544 + $0x60] sm:$0xff]
  %v5562 = vld [vmem:[%s5544 + $0x68] sm:$0xf]
  %v5563 = vld [vmem:[%s5544 + $0x6c] sm:$0xff]
  %v5564 = vld [vmem:[%s5544 + $0x74] sm:$0xf]
  %v5565 = vld [vmem:[%s5544 + $0x78] sm:$0xff]
  %v5566 = vld [vmem:[%s5544 + $0x80] sm:$0xf]
  %v5567 = vld [vmem:[%s5544 + $0x84] sm:$0xff]
  %v5568 = vld [vmem:[%s5544 + $0x8c] sm:$0xf]
  %v5569 = vld [vmem:[%s5544 + $0x90] sm:$0xff]
  %v5570 = vld [vmem:[%s5544 + $0x98] sm:$0xf]
  %v5571 = vld [vmem:[%s5544 + $0x9c] sm:$0xff]
  %v5572 = vld [vmem:[%s5544 + $0xa4] sm:$0xf]
  %v5573 = vld [vmem:[%s5544 + $0xa8] sm:$0xff]
  %v5574 = vld [vmem:[%s5544 + $0xb0] sm:$0xf]
  %v5575 = vld [vmem:[%s5544 + $0xb4] sm:$0xff]
  %v5576 = vld [vmem:[%s5544 + $0xbc] sm:$0xf]
  %v5577 = vld [vmem:[%s5544 + $0xc0] sm:$0xff]
  %v5578 = vld [vmem:[%s5544 + $0xc8] sm:$0xf]
  %v5579 = vld [vmem:[%s5544 + $0xcc] sm:$0xff]
  %v5580 = vld [vmem:[%s5544 + $0xd4] sm:$0xf]
  %v5581 = vld [vmem:[%s5544 + $0xd8] sm:$0xff]
  %v5582 = vld [vmem:[%s5544 + $0xe0] sm:$0xf]
  %v5583 = vld [vmem:[%s5544 + $0xe4] sm:$0xff]
  %v5584 = vld [vmem:[%s5544 + $0xec] sm:$0xf]
  %v5585 = vld [vmem:[%s5544 + $0xf0] sm:$0xff]
  %v5586 = vld [vmem:[%s5544 + $0xf8] sm:$0xf]
  %v5587 = vld [vmem:[%s5544 + $0xfc] sm:$0xff]
  %v5588 = vld [vmem:[%s5544 + $0x104] sm:$0xf]
  %v5589 = vld [vmem:[%s5544 + $0x108] sm:$0xff]
  %v5590 = vld [vmem:[%s5544 + $0x110] sm:$0xf]
  %v5591 = vld [vmem:[%s5544 + $0x114] sm:$0xff]
  %v5592 = vld [vmem:[%s5544 + $0x11c] sm:$0xf]
  %v5593 = vld [vmem:[%s5544 + $0x120] sm:$0xff]
  %v5594 = vld [vmem:[%s5544 + $0x128] sm:$0xf]
  %v5595 = vld [vmem:[%s5544 + $0x12c] sm:$0xff]
  %v5596 = vld [vmem:[%s5544 + $0x134] sm:$0xf]
  %v5597 = vld [vmem:[%s5544 + $0x138] sm:$0xff]
  %v5598 = vld [vmem:[%s5544 + $0x140] sm:$0xf]
  %v5599 = vld [vmem:[%s5544 + $0x144] sm:$0xff]
  %v5600 = vld [vmem:[%s5544 + $0x14c] sm:$0xf]
  %v5601 = vld [vmem:[%s5544 + $0x150] sm:$0xff]
  %v5602 = vld [vmem:[%s5544 + $0x158] sm:$0xf]
  %v5603 = vld [vmem:[%s5544 + $0x15c] sm:$0xff]
  %v5604 = vld [vmem:[%s5544 + $0x164] sm:$0xf]
  %v5605 = vld [vmem:[%s5544 + $0x168] sm:$0xff]
  %v5606 = vld [vmem:[%s5544 + $0x170] sm:$0xf]
  %v5607 = vld [vmem:[%s5544 + $0x174] sm:$0xff]
  %v5608 = vld [vmem:[%s5544 + $0x17c] sm:$0xf]
  %v5609 = vld [vmem:[%s5544 + $0x180] sm:$0xff]
  %v5610 = vld [vmem:[%s5544 + $0x188] sm:$0xf]
  %v5611 = vld [vmem:[%s5544 + $0x18c] sm:$0xff]
  %v5612 = vld [vmem:[%s5544 + $0x194] sm:$0xf]
  %v5613 = vld [vmem:[%s5544 + $0x198] sm:$0xff]
  %v5614 = vld [vmem:[%s5544 + $0x1a0] sm:$0xf]
  %v5615 = vld [vmem:[%s5544 + $0x1a4] sm:$0xff]
  %v5616 = vld [vmem:[%s5544 + $0x1ac] sm:$0xf]
  %v5617 = vld [vmem:[%s5544 + $0x1b0] sm:$0xff]
  %v5618 = vld [vmem:[%s5544 + $0x1b8] sm:$0xf]
  %v5619 = vld [vmem:[%s5544 + $0x1bc] sm:$0xff]
  %v5620 = vld [vmem:[%s5544 + $0x1c4] sm:$0xf]
  %v5621 = vld [vmem:[%s5544 + $0x1c8] sm:$0xff]
  %v5622 = vld [vmem:[%s5544 + $0x1d0] sm:$0xf]
  %v5623 = vld [vmem:[%s5544 + $0x1d4] sm:$0xff]
  %v5624 = vld [vmem:[%s5544 + $0x1dc] sm:$0xf]
  %v5625 = vld [vmem:[%s5544 + $0x1e0] sm:$0xff]
  %v5626 = vld [vmem:[%s5544 + $0x1e8] sm:$0xf]
  %v5627 = vld [vmem:[%s5544 + $0x1ec] sm:$0xff]
  %v5628 = vld [vmem:[%s5544 + $0x1f4] sm:$0xf]
  %v5629 = vld [vmem:[%s5544 + $0x1f8] sm:$0xff]
  %v5630 = vld [vmem:[%s5544 + $0x200] sm:$0xf]
  %v5631 = vld [vmem:[%s5544 + $0x204] sm:$0xff]
  %v5632 = vld [vmem:[%s5544 + $0x20c] sm:$0xf]
  %v5633 = vld [vmem:[%s5544 + $0x210] sm:$0xff]
  %v5634 = vld [vmem:[%s5544 + $0x218] sm:$0xf]
  %v5635 = vld [vmem:[%s5544 + $0x21c] sm:$0xff]
  %v5636 = vld [vmem:[%s5544 + $0x224] sm:$0xf]
  %v5637 = vld [vmem:[%s5544 + $0x228] sm:$0xff]
  %v5638 = vld [vmem:[%s5544 + $0x230] sm:$0xf]
  %v5639 = vld [vmem:[%s5544 + $0x234] sm:$0xff]
  %v5640 = vld [vmem:[%s5544 + $0x23c] sm:$0xf]
  %v5645 = vunpack.c.l.b16 %v5540
  %v5646 = vunpack.c.h.b16 %v5540
  %v5647 = vunpack.c.l.b16 %v5541
  %v5648 = vunpack.c.l.b16 %v5542
  %v5649 = vunpack.c.h.b16 %v5542
  %v5650 = vunpack.c.l.b16 %v5543
  %v5651 = vpack.c.b16 %v5648, %v5645
  %v5652 = vpack.c.b16 %v5649, %v5646
  %v5653 = vpack.c.b16 %v5650, %v5647
  %v5654 = vrot.slane %v5651, 1
  %v5655 = vrot.slane %v5652, 1
  %v5656 = vrot.slane %v5653, 1
  %v5756 = vunpack.c.l.b16 %v5545
  %v5757 = vunpack.c.h.b16 %v5545
  %v5758 = vunpack.c.l.b16 %v5546
  %v5759 = vunpack.c.l.b16 %v5547
  %v5760 = vunpack.c.h.b16 %v5547
  %v5761 = vunpack.c.l.b16 %v5548
  %v5762 = vunpack.c.l.b16 %v5549
  %v5763 = vunpack.c.h.b16 %v5549
  %v5764 = vunpack.c.l.b16 %v5550
  %v5765 = vunpack.c.l.b16 %v5551
  %v5766 = vunpack.c.h.b16 %v5551
  %v5767 = vunpack.c.l.b16 %v5552
  %v5768 = vunpack.c.l.b16 %v5553
  %v5769 = vunpack.c.h.b16 %v5553
  %v5770 = vunpack.c.l.b16 %v5554
  %v5771 = vunpack.c.l.b16 %v5555
  %v5772 = vunpack.c.h.b16 %v5555
  %v5773 = vunpack.c.l.b16 %v5556
  %v5774 = vunpack.c.l.b16 %v5557
  %v5775 = vunpack.c.h.b16 %v5557
  %v5776 = vunpack.c.l.b16 %v5558
  %v5777 = vunpack.c.l.b16 %v5559
  %v5778 = vunpack.c.h.b16 %v5559
  %v5779 = vunpack.c.l.b16 %v5560
  %v5780 = vunpack.c.l.b16 %v5561
  %v5781 = vunpack.c.h.b16 %v5561
  %v5782 = vunpack.c.l.b16 %v5562
  %v5783 = vunpack.c.l.b16 %v5563
  %v5784 = vunpack.c.h.b16 %v5563
  %v5785 = vunpack.c.l.b16 %v5564
  %v5786 = vunpack.c.l.b16 %v5565
  %v5787 = vunpack.c.h.b16 %v5565
  %v5788 = vunpack.c.l.b16 %v5566
  %v5789 = vunpack.c.l.b16 %v5567
  %v5790 = vunpack.c.h.b16 %v5567
  %v5791 = vunpack.c.l.b16 %v5568
  %v5792 = vunpack.c.l.b16 %v5569
  %v5793 = vunpack.c.h.b16 %v5569
  %v5794 = vunpack.c.l.b16 %v5570
  %v5795 = vunpack.c.l.b16 %v5571
  %v5796 = vunpack.c.h.b16 %v5571
  %v5797 = vunpack.c.l.b16 %v5572
  %v5798 = vunpack.c.l.b16 %v5573
  %v5799 = vunpack.c.h.b16 %v5573
  %v5800 = vunpack.c.l.b16 %v5574
  %v5801 = vunpack.c.l.b16 %v5575
  %v5802 = vunpack.c.h.b16 %v5575
  %v5803 = vunpack.c.l.b16 %v5576
  %v5804 = vunpack.c.l.b16 %v5577
  %v5805 = vunpack.c.h.b16 %v5577
  %v5806 = vunpack.c.l.b16 %v5578
  %v5807 = vunpack.c.l.b16 %v5579
  %v5808 = vunpack.c.h.b16 %v5579
  %v5809 = vunpack.c.l.b16 %v5580
  %v5810 = vunpack.c.l.b16 %v5581
  %v5811 = vunpack.c.h.b16 %v5581
  %v5812 = vunpack.c.l.b16 %v5582
  %v5813 = vunpack.c.l.b16 %v5583
  %v5814 = vunpack.c.h.b16 %v5583
  %v5815 = vunpack.c.l.b16 %v5584
  %v5816 = vunpack.c.l.b16 %v5585
  %v5817 = vunpack.c.h.b16 %v5585
  %v5818 = vunpack.c.l.b16 %v5586
  %v5819 = vunpack.c.l.b16 %v5587
  %v5820 = vunpack.c.h.b16 %v5587
  %v5821 = vunpack.c.l.b16 %v5588
  %v5822 = vunpack.c.l.b16 %v5589
  %v5823 = vunpack.c.h.b16 %v5589
  %v5824 = vunpack.c.l.b16 %v5590
  %v5825 = vunpack.c.l.b16 %v5591
  %v5826 = vunpack.c.h.b16 %v5591
  %v5827 = vunpack.c.l.b16 %v5592
  %v5828 = vunpack.c.l.b16 %v5593
  %v5829 = vunpack.c.h.b16 %v5593
  %v5830 = vunpack.c.l.b16 %v5594
  %v5831 = vunpack.c.l.b16 %v5595
  %v5832 = vunpack.c.h.b16 %v5595
  %v5833 = vunpack.c.l.b16 %v5596
  %v5834 = vunpack.c.l.b16 %v5597
  %v5835 = vunpack.c.h.b16 %v5597
  %v5836 = vunpack.c.l.b16 %v5598
  %v5837 = vunpack.c.l.b16 %v5599
  %v5838 = vunpack.c.h.b16 %v5599
  %v5839 = vunpack.c.l.b16 %v5600
  %v5840 = vunpack.c.l.b16 %v5601
  %v5841 = vunpack.c.h.b16 %v5601
  %v5842 = vunpack.c.l.b16 %v5602
  %v5843 = vunpack.c.l.b16 %v5603
  %v5844 = vunpack.c.h.b16 %v5603
  %v5845 = vunpack.c.l.b16 %v5604
  %v5846 = vunpack.c.l.b16 %v5605
  %v5847 = vunpack.c.h.b16 %v5605
  %v5848 = vunpack.c.l.b16 %v5606
  %v5849 = vunpack.c.l.b16 %v5607
  %v5850 = vunpack.c.h.b16 %v5607
  %v5851 = vunpack.c.l.b16 %v5608
  %v5852 = vunpack.c.l.b16 %v5609
  %v5853 = vunpack.c.h.b16 %v5609
  %v5854 = vunpack.c.l.b16 %v5610
  %v5855 = vunpack.c.l.b16 %v5611
  %v5856 = vunpack.c.h.b16 %v5611
  %v5857 = vunpack.c.l.b16 %v5612
  %v5858 = vunpack.c.l.b16 %v5613
  %v5859 = vunpack.c.h.b16 %v5613
  %v5860 = vunpack.c.l.b16 %v5614
  %v5861 = vunpack.c.l.b16 %v5615
  %v5862 = vunpack.c.h.b16 %v5615
  %v5863 = vunpack.c.l.b16 %v5616
  %v5864 = vunpack.c.l.b16 %v5617
  %v5865 = vunpack.c.h.b16 %v5617
  %v5866 = vunpack.c.l.b16 %v5618
  %v5867 = vunpack.c.l.b16 %v5619
  %v5868 = vunpack.c.h.b16 %v5619
  %v5869 = vunpack.c.l.b16 %v5620
  %v5870 = vunpack.c.l.b16 %v5621
  %v5871 = vunpack.c.h.b16 %v5621
  %v5872 = vunpack.c.l.b16 %v5622
  %v5873 = vunpack.c.l.b16 %v5623
  %v5874 = vunpack.c.h.b16 %v5623
  %v5875 = vunpack.c.l.b16 %v5624
  %v5876 = vunpack.c.l.b16 %v5625
  %v5877 = vunpack.c.h.b16 %v5625
  %v5878 = vunpack.c.l.b16 %v5626
  %v5879 = vunpack.c.l.b16 %v5627
  %v5880 = vunpack.c.h.b16 %v5627
  %v5881 = vunpack.c.l.b16 %v5628
  %v5882 = vunpack.c.l.b16 %v5629
  %v5883 = vunpack.c.h.b16 %v5629
  %v5884 = vunpack.c.l.b16 %v5630
  %v5885 = vunpack.c.l.b16 %v5631
  %v5886 = vunpack.c.h.b16 %v5631
  %v5887 = vunpack.c.l.b16 %v5632
  %v5888 = vunpack.c.l.b16 %v5633
  %v5889 = vunpack.c.h.b16 %v5633
  %v5890 = vunpack.c.l.b16 %v5634
  %v5891 = vunpack.c.l.b16 %v5635
  %v5892 = vunpack.c.h.b16 %v5635
  %v5893 = vunpack.c.l.b16 %v5636
  %v5894 = vunpack.c.l.b16 %v5637
  %v5895 = vunpack.c.h.b16 %v5637
  %v5896 = vunpack.c.l.b16 %v5638
  %v5897 = vunpack.c.l.b16 %v5639
  %v5898 = vunpack.c.h.b16 %v5639
  %v5899 = vunpack.c.l.b16 %v5640
  %v5900 = vpack.c.b16 %v5759, %v5756
  %v5901 = vpack.c.b16 %v5760, %v5757
  %v5902 = vpack.c.b16 %v5761, %v5758
  %v5903 = vpack.c.b16 %v5765, %v5762
  %v5904 = vpack.c.b16 %v5766, %v5763
  %v5905 = vpack.c.b16 %v5767, %v5764
  %v5906 = vpack.c.b16 %v5771, %v5768
  %v5907 = vpack.c.b16 %v5772, %v5769
  %v5908 = vpack.c.b16 %v5773, %v5770
  %v5909 = vpack.c.b16 %v5777, %v5774
  %v5910 = vpack.c.b16 %v5778, %v5775
  %v5911 = vpack.c.b16 %v5779, %v5776
  %v5912 = vpack.c.b16 %v5783, %v5780
  %v5913 = vpack.c.b16 %v5784, %v5781
  %v5914 = vpack.c.b16 %v5785, %v5782
  %v5915 = vpack.c.b16 %v5789, %v5786
  %v5916 = vpack.c.b16 %v5790, %v5787
  %v5917 = vpack.c.b16 %v5791, %v5788
  %v5918 = vpack.c.b16 %v5795, %v5792
  %v5919 = vpack.c.b16 %v5796, %v5793
  %v5920 = vpack.c.b16 %v5797, %v5794
  %v5921 = vpack.c.b16 %v5801, %v5798
  %v5922 = vpack.c.b16 %v5802, %v5799
  %v5923 = vpack.c.b16 %v5803, %v5800
  %v5924 = vpack.c.b16 %v5807, %v5804
  %v5925 = vpack.c.b16 %v5808, %v5805
  %v5926 = vpack.c.b16 %v5809, %v5806
  %v5927 = vpack.c.b16 %v5813, %v5810
  %v5928 = vpack.c.b16 %v5814, %v5811
  %v5929 = vpack.c.b16 %v5815, %v5812
  %v5930 = vpack.c.b16 %v5819, %v5816
  %v5931 = vpack.c.b16 %v5820, %v5817
  %v5932 = vpack.c.b16 %v5821, %v5818
  %v5933 = vpack.c.b16 %v5825, %v5822
  %v5934 = vpack.c.b16 %v5826, %v5823
  %v5935 = vpack.c.b16 %v5827, %v5824
  %v5936 = vpack.c.b16 %v5831, %v5828
  %v5937 = vpack.c.b16 %v5832, %v5829
  %v5938 = vpack.c.b16 %v5833, %v5830
  %v5939 = vpack.c.b16 %v5837, %v5834
  %v5940 = vpack.c.b16 %v5838, %v5835
  %v5941 = vpack.c.b16 %v5839, %v5836
  %v5942 = vpack.c.b16 %v5843, %v5840
  %v5943 = vpack.c.b16 %v5844, %v5841
  %v5944 = vpack.c.b16 %v5845, %v5842
  %v5945 = vpack.c.b16 %v5849, %v5846
  %v5946 = vpack.c.b16 %v5850, %v5847
  %v5947 = vpack.c.b16 %v5851, %v5848
  %v5948 = vpack.c.b16 %v5855, %v5852
  %v5949 = vpack.c.b16 %v5856, %v5853
  %v5950 = vpack.c.b16 %v5857, %v5854
  %v5951 = vpack.c.b16 %v5861, %v5858
  %v5952 = vpack.c.b16 %v5862, %v5859
  %v5953 = vpack.c.b16 %v5863, %v5860
  %v5954 = vpack.c.b16 %v5867, %v5864
  %v5955 = vpack.c.b16 %v5868, %v5865
  %v5956 = vpack.c.b16 %v5869, %v5866
  %v5957 = vpack.c.b16 %v5873, %v5870
  %v5958 = vpack.c.b16 %v5874, %v5871
  %v5959 = vpack.c.b16 %v5875, %v5872
  %v5960 = vpack.c.b16 %v5879, %v5876
  %v5961 = vpack.c.b16 %v5880, %v5877
  %v5962 = vpack.c.b16 %v5881, %v5878
  %v5963 = vpack.c.b16 %v5885, %v5882
  %v5964 = vpack.c.b16 %v5886, %v5883
  %v5965 = vpack.c.b16 %v5887, %v5884
  %v5966 = vpack.c.b16 %v5891, %v5888
  %v5967 = vpack.c.b16 %v5892, %v5889
  %v5968 = vpack.c.b16 %v5893, %v5890
  %v5969 = vpack.c.b16 %v5897, %v5894
  %v5970 = vpack.c.b16 %v5898, %v5895
  %v5971 = vpack.c.b16 %v5899, %v5896
  %6044 = vmatpush.bf16.msra.mxu0 %v5921
  %6045 = vmatpush.bf16.msra.mxu0 %v5918
  %6046 = vmatpush.bf16.msra.mxu0 %v5915
  %6047 = vmatpush.bf16.msra.mxu0 %v5912
  %6048 = vmatpush.bf16.msra.mxu0 %v5909
  %6049 = vmatpush.bf16.msra.mxu0 %v5906
  %6050 = vmatpush.bf16.msra.mxu0 %v5903
  %6051 = vmatpush.bf16.msra.mxu0 %v5900
  %6052 = vmatmul.bf16.gmra.mxu0 %v5654
  %v6053 = vpop.f32.mrf.mxu0
  %v6054 = vadd.f32 0.0, %v6053
  %v6055 = vpop.f32.mrf.mxu0
  %v6056 = vadd.f32 0.0, %v6055
  %6057 = vdwg.mxu0
  %6058 = vmatpush.bf16.msra.mxu0 %v5945
  %6059 = vmatpush.bf16.msra.mxu0 %v5942
  %6060 = vmatpush.bf16.msra.mxu0 %v5939
  %6061 = vmatpush.bf16.msra.mxu0 %v5936
  %6062 = vmatpush.bf16.msra.mxu0 %v5933
  %6063 = vmatpush.bf16.msra.mxu0 %v5930
  %6064 = vmatpush.bf16.msra.mxu0 %v5927
  %6065 = vmatpush.bf16.msra.mxu0 %v5924
  %6066 = vmatmul.bf16.gmra.mxu0 %v5655
  %v6067 = vpop.f32.mrf.mxu0
  %v6068 = vadd.f32 %v6054, %v6067
  %v6069 = vpop.f32.mrf.mxu0
  %v6070 = vadd.f32 %v6056, %v6069
  %6071 = vdwg.mxu0
  %6072 = vmatpush.bf16.msra.mxu0 %v5969
  %6073 = vmatpush.bf16.msra.mxu0 %v5966
  %6074 = vmatpush.bf16.msra.mxu0 %v5963
  %6075 = vmatpush.bf16.msra.mxu0 %v5960
  %6076 = vmatpush.bf16.msra.mxu0 %v5957
  %6077 = vmatpush.bf16.msra.mxu0 %v5954
  %6078 = vmatpush.bf16.msra.mxu0 %v5951
  %6079 = vmatpush.bf16.msra.mxu0 %v5948
  %6080 = vmatmul.bf16.gmra.mxu0 %v5656
  %v6081 = vpop.f32.mrf.mxu0
  %v6082 = vadd.f32 %v6068, %v6081
  %v6083 = vpop.f32.mrf.mxu0
  %v6084 = vadd.f32 %v6070, %v6083
  %6085 = vdwg.mxu0
  %6086 = vmatpush.bf16.msra.mxu0 %v5922
  %6087 = vmatpush.bf16.msra.mxu0 %v5919
  %6088 = vmatpush.bf16.msra.mxu0 %v5916
  %6089 = vmatpush.bf16.msra.mxu0 %v5913
  %6090 = vmatpush.bf16.msra.mxu0 %v5910
  %6091 = vmatpush.bf16.msra.mxu0 %v5907
  %6092 = vmatpush.bf16.msra.mxu0 %v5904
  %6093 = vmatpush.bf16.msra.mxu0 %v5901
  %6094 = vmatmul.bf16.gmra.mxu0 %v5654
  %v6095 = vpop.f32.mrf.mxu0
  %v6096 = vadd.f32 0.0, %v6095
  %v6097 = vpop.f32.mrf.mxu0
  %v6098 = vadd.f32 0.0, %v6097
  %6099 = vdwg.mxu0
  %6100 = vmatpush.bf16.msra.mxu0 %v5946
  %6101 = vmatpush.bf16.msra.mxu0 %v5943
  %6102 = vmatpush.bf16.msra.mxu0 %v5940
  %6103 = vmatpush.bf16.msra.mxu0 %v5937
  %6104 = vmatpush.bf16.msra.mxu0 %v5934
  %6105 = vmatpush.bf16.msra.mxu0 %v5931
  %6106 = vmatpush.bf16.msra.mxu0 %v5928
  %6107 = vmatpush.bf16.msra.mxu0 %v5925
  %6108 = vmatmul.bf16.gmra.mxu0 %v5655
  %v6109 = vpop.f32.mrf.mxu0
  %v6110 = vadd.f32 %v6096, %v6109
  %v6111 = vpop.f32.mrf.mxu0
  %v6112 = vadd.f32 %v6098, %v6111
  %6113 = vdwg.mxu0
  %6114 = vmatpush.bf16.msra.mxu0 %v5970
  %6115 = vmatpush.bf16.msra.mxu0 %v5967
  %6116 = vmatpush.bf16.msra.mxu0 %v5964
  %6117 = vmatpush.bf16.msra.mxu0 %v5961
  %6118 = vmatpush.bf16.msra.mxu0 %v5958
  %6119 = vmatpush.bf16.msra.mxu0 %v5955
  %6120 = vmatpush.bf16.msra.mxu0 %v5952
  %6121 = vmatpush.bf16.msra.mxu0 %v5949
  %6122 = vmatmul.bf16.gmra.mxu0 %v5656
  %v6123 = vpop.f32.mrf.mxu0
  %v6124 = vadd.f32 %v6110, %v6123
  %v6125 = vpop.f32.mrf.mxu0
  %v6126 = vadd.f32 %v6112, %v6125
  %6127 = vdwg.mxu0
  %6128 = vmatpush.bf16.msra.mxu0 %v5923
  %6129 = vmatpush.bf16.msra.mxu0 %v5920
  %6130 = vmatpush.bf16.msra.mxu0 %v5917
  %6131 = vmatpush.bf16.msra.mxu0 %v5914
  %6132 = vmatpush.bf16.msra.mxu0 %v5911
  %6133 = vmatpush.bf16.msra.mxu0 %v5908
  %6134 = vmatpush.bf16.msra.mxu0 %v5905
  %6135 = vmatpush.bf16.msra.mxu0 %v5902
  %6136 = vmatmul.bf16.gmra.mxu0 %v5654
  %v6137 = vpop.f32.mrf.mxu0
  %v6138 = vadd.f32 0.0, %v6137
  %v6139 = vpop.f32.mrf.mxu0
  %v6140 = vadd.f32 0.0, %v6139
  %6141 = vdwg.mxu0
  %6142 = vmatpush.bf16.msra.mxu0 %v5947
  %6143 = vmatpush.bf16.msra.mxu0 %v5944
  %6144 = vmatpush.bf16.msra.mxu0 %v5941
  %6145 = vmatpush.bf16.msra.mxu0 %v5938
  %6146 = vmatpush.bf16.msra.mxu0 %v5935
  %6147 = vmatpush.bf16.msra.mxu0 %v5932
  %6148 = vmatpush.bf16.msra.mxu0 %v5929
  %6149 = vmatpush.bf16.msra.mxu0 %v5926
  %6150 = vmatmul.bf16.gmra.mxu0 %v5655
  %v6151 = vpop.f32.mrf.mxu0
  %v6152 = vadd.f32 %v6138, %v6151
  %v6153 = vpop.f32.mrf.mxu0
  %v6154 = vadd.f32 %v6140, %v6153
  %6155 = vdwg.mxu0
  %6156 = vmatpush.bf16.msra.mxu0 %v5971
  %6157 = vmatpush.bf16.msra.mxu0 %v5968
  %6158 = vmatpush.bf16.msra.mxu0 %v5965
  %6159 = vmatpush.bf16.msra.mxu0 %v5962
  %6160 = vmatpush.bf16.msra.mxu0 %v5959
  %6161 = vmatpush.bf16.msra.mxu0 %v5956
  %6162 = vmatpush.bf16.msra.mxu0 %v5953
  %6163 = vmatpush.bf16.msra.mxu0 %v5950
  %6164 = vmatmul.bf16.gmra.mxu0 %v5656
  %v6165 = vpop.f32.mrf.mxu0
  %v6166 = vadd.f32 %v6152, %v6165
  %v6167 = vpop.f32.mrf.mxu0
  %v6168 = vadd.f32 %v6154, %v6167
  %6169 = vdwg.mxu0
  %v6170 = vadd.f32 %v5452, %v6082
  %v6171 = vadd.f32 %v5494, %v6124
  %v6172 = vadd.f32 %v5536, %v6166
  %v6173 = vadd.f32 %v5454, %v6084
  %v6174 = vadd.f32 %v5496, %v6126
  %v6175 = vadd.f32 %v5538, %v6168
  %v6176 = vld [vmem:[#allocation3 + $0xc] sm:$0x88]
  %v6177 = vld [vmem:[#allocation3 + $0x14] sm:$0x8]
  %v6178 = vld [vmem:[#allocation3 + $0x18] sm:$0xff]
  %v6179 = vld [vmem:[#allocation3 + $0x20] sm:$0xf]
  %s6180 = scalar_lea.vmem %s3, 1728
  %v6181 = vld [vmem:[%s6180] sm:$0xff]
  %v6182 = vld [vmem:[%s6180 + $0x8] sm:$0xf]
  %v6183 = vld [vmem:[%s6180 + $0xc] sm:$0xff]
  %v6184 = vld [vmem:[%s6180 + $0x14] sm:$0xf]
  %v6185 = vld [vmem:[%s6180 + $0x18] sm:$0xff]
  %v6186 = vld [vmem:[%s6180 + $0x20] sm:$0xf]
  %v6187 = vld [vmem:[%s6180 + $0x24] sm:$0xff]
  %v6188 = vld [vmem:[%s6180 + $0x2c] sm:$0xf]
  %v6189 = vld [vmem:[%s6180 + $0x30] sm:$0xff]
  %v6190 = vld [vmem:[%s6180 + $0x38] sm:$0xf]
  %v6191 = vld [vmem:[%s6180 + $0x3c] sm:$0xff]
  %v6192 = vld [vmem:[%s6180 + $0x44] sm:$0xf]
  %v6193 = vld [vmem:[%s6180 + $0x48] sm:$0xff]
  %v6194 = vld [vmem:[%s6180 + $0x50] sm:$0xf]
  %v6195 = vld [vmem:[%s6180 + $0x54] sm:$0xff]
  %v6196 = vld [vmem:[%s6180 + $0x5c] sm:$0xf]
  %v6197 = vld [vmem:[%s6180 + $0x60] sm:$0xff]
  %v6198 = vld [vmem:[%s6180 + $0x68] sm:$0xf]
  %v6199 = vld [vmem:[%s6180 + $0x6c] sm:$0xff]
  %v6200 = vld [vmem:[%s6180 + $0x74] sm:$0xf]
  %v6201 = vld [vmem:[%s6180 + $0x78] sm:$0xff]
  %v6202 = vld [vmem:[%s6180 + $0x80] sm:$0xf]
  %v6203 = vld [vmem:[%s6180 + $0x84] sm:$0xff]
  %v6204 = vld [vmem:[%s6180 + $0x8c] sm:$0xf]
  %v6205 = vld [vmem:[%s6180 + $0x90] sm:$0xff]
  %v6206 = vld [vmem:[%s6180 + $0x98] sm:$0xf]
  %v6207 = vld [vmem:[%s6180 + $0x9c] sm:$0xff]
  %v6208 = vld [vmem:[%s6180 + $0xa4] sm:$0xf]
  %v6209 = vld [vmem:[%s6180 + $0xa8] sm:$0xff]
  %v6210 = vld [vmem:[%s6180 + $0xb0] sm:$0xf]
  %v6211 = vld [vmem:[%s6180 + $0xb4] sm:$0xff]
  %v6212 = vld [vmem:[%s6180 + $0xbc] sm:$0xf]
  %v6213 = vld [vmem:[%s6180 + $0xc0] sm:$0xff]
  %v6214 = vld [vmem:[%s6180 + $0xc8] sm:$0xf]
  %v6215 = vld [vmem:[%s6180 + $0xcc] sm:$0xff]
  %v6216 = vld [vmem:[%s6180 + $0xd4] sm:$0xf]
  %v6217 = vld [vmem:[%s6180 + $0xd8] sm:$0xff]
  %v6218 = vld [vmem:[%s6180 + $0xe0] sm:$0xf]
  %v6219 = vld [vmem:[%s6180 + $0xe4] sm:$0xff]
  %v6220 = vld [vmem:[%s6180 + $0xec] sm:$0xf]
  %v6221 = vld [vmem:[%s6180 + $0xf0] sm:$0xff]
  %v6222 = vld [vmem:[%s6180 + $0xf8] sm:$0xf]
  %v6223 = vld [vmem:[%s6180 + $0xfc] sm:$0xff]
  %v6224 = vld [vmem:[%s6180 + $0x104] sm:$0xf]
  %v6225 = vld [vmem:[%s6180 + $0x108] sm:$0xff]
  %v6226 = vld [vmem:[%s6180 + $0x110] sm:$0xf]
  %v6227 = vld [vmem:[%s6180 + $0x114] sm:$0xff]
  %v6228 = vld [vmem:[%s6180 + $0x11c] sm:$0xf]
  %v6229 = vld [vmem:[%s6180 + $0x120] sm:$0xff]
  %v6230 = vld [vmem:[%s6180 + $0x128] sm:$0xf]
  %v6231 = vld [vmem:[%s6180 + $0x12c] sm:$0xff]
  %v6232 = vld [vmem:[%s6180 + $0x134] sm:$0xf]
  %v6233 = vld [vmem:[%s6180 + $0x138] sm:$0xff]
  %v6234 = vld [vmem:[%s6180 + $0x140] sm:$0xf]
  %v6235 = vld [vmem:[%s6180 + $0x144] sm:$0xff]
  %v6236 = vld [vmem:[%s6180 + $0x14c] sm:$0xf]
  %v6237 = vld [vmem:[%s6180 + $0x150] sm:$0xff]
  %v6238 = vld [vmem:[%s6180 + $0x158] sm:$0xf]
  %v6239 = vld [vmem:[%s6180 + $0x15c] sm:$0xff]
  %v6240 = vld [vmem:[%s6180 + $0x164] sm:$0xf]
  %v6241 = vld [vmem:[%s6180 + $0x168] sm:$0xff]
  %v6242 = vld [vmem:[%s6180 + $0x170] sm:$0xf]
  %v6243 = vld [vmem:[%s6180 + $0x174] sm:$0xff]
  %v6244 = vld [vmem:[%s6180 + $0x17c] sm:$0xf]
  %v6245 = vld [vmem:[%s6180 + $0x180] sm:$0xff]
  %v6246 = vld [vmem:[%s6180 + $0x188] sm:$0xf]
  %v6247 = vld [vmem:[%s6180 + $0x18c] sm:$0xff]
  %v6248 = vld [vmem:[%s6180 + $0x194] sm:$0xf]
  %v6249 = vld [vmem:[%s6180 + $0x198] sm:$0xff]
  %v6250 = vld [vmem:[%s6180 + $0x1a0] sm:$0xf]
  %v6251 = vld [vmem:[%s6180 + $0x1a4] sm:$0xff]
  %v6252 = vld [vmem:[%s6180 + $0x1ac] sm:$0xf]
  %v6253 = vld [vmem:[%s6180 + $0x1b0] sm:$0xff]
  %v6254 = vld [vmem:[%s6180 + $0x1b8] sm:$0xf]
  %v6255 = vld [vmem:[%s6180 + $0x1bc] sm:$0xff]
  %v6256 = vld [vmem:[%s6180 + $0x1c4] sm:$0xf]
  %v6257 = vld [vmem:[%s6180 + $0x1c8] sm:$0xff]
  %v6258 = vld [vmem:[%s6180 + $0x1d0] sm:$0xf]
  %v6259 = vld [vmem:[%s6180 + $0x1d4] sm:$0xff]
  %v6260 = vld [vmem:[%s6180 + $0x1dc] sm:$0xf]
  %v6261 = vld [vmem:[%s6180 + $0x1e0] sm:$0xff]
  %v6262 = vld [vmem:[%s6180 + $0x1e8] sm:$0xf]
  %v6263 = vld [vmem:[%s6180 + $0x1ec] sm:$0xff]
  %v6264 = vld [vmem:[%s6180 + $0x1f4] sm:$0xf]
  %v6265 = vld [vmem:[%s6180 + $0x1f8] sm:$0xff]
  %v6266 = vld [vmem:[%s6180 + $0x200] sm:$0xf]
  %v6267 = vld [vmem:[%s6180 + $0x204] sm:$0xff]
  %v6268 = vld [vmem:[%s6180 + $0x20c] sm:$0xf]
  %v6269 = vld [vmem:[%s6180 + $0x210] sm:$0xff]
  %v6270 = vld [vmem:[%s6180 + $0x218] sm:$0xf]
  %v6271 = vld [vmem:[%s6180 + $0x21c] sm:$0xff]
  %v6272 = vld [vmem:[%s6180 + $0x224] sm:$0xf]
  %v6273 = vld [vmem:[%s6180 + $0x228] sm:$0xff]
  %v6274 = vld [vmem:[%s6180 + $0x230] sm:$0xf]
  %v6275 = vld [vmem:[%s6180 + $0x234] sm:$0xff]
  %v6276 = vld [vmem:[%s6180 + $0x23c] sm:$0xf]
  %v6281 = vunpack.c.l.b16 %v6176
  %v6282 = vunpack.c.h.b16 %v6176
  %v6283 = vunpack.c.l.b16 %v6177
  %v6284 = vunpack.c.l.b16 %v6178
  %v6285 = vunpack.c.h.b16 %v6178
  %v6286 = vunpack.c.l.b16 %v6179
  %v6287 = vpack.c.b16 %v6284, %v6281
  %v6288 = vpack.c.b16 %v6285, %v6282
  %v6289 = vpack.c.b16 %v6286, %v6283
  %v6290 = vrot.slane %v6287, 3
  %v6291 = vrot.slane %v6288, 3
  %v6292 = vrot.slane %v6289, 3
  %v6392 = vunpack.c.l.b16 %v6181
  %v6393 = vunpack.c.h.b16 %v6181
  %v6394 = vunpack.c.l.b16 %v6182
  %v6395 = vunpack.c.l.b16 %v6183
  %v6396 = vunpack.c.h.b16 %v6183
  %v6397 = vunpack.c.l.b16 %v6184
  %v6398 = vunpack.c.l.b16 %v6185
  %v6399 = vunpack.c.h.b16 %v6185
  %v6400 = vunpack.c.l.b16 %v6186
  %v6401 = vunpack.c.l.b16 %v6187
  %v6402 = vunpack.c.h.b16 %v6187
  %v6403 = vunpack.c.l.b16 %v6188
  %v6404 = vunpack.c.l.b16 %v6189
  %v6405 = vunpack.c.h.b16 %v6189
  %v6406 = vunpack.c.l.b16 %v6190
  %v6407 = vunpack.c.l.b16 %v6191
  %v6408 = vunpack.c.h.b16 %v6191
  %v6409 = vunpack.c.l.b16 %v6192
  %v6410 = vunpack.c.l.b16 %v6193
  %v6411 = vunpack.c.h.b16 %v6193
  %v6412 = vunpack.c.l.b16 %v6194
  %v6413 = vunpack.c.l.b16 %v6195
  %v6414 = vunpack.c.h.b16 %v6195
  %v6415 = vunpack.c.l.b16 %v6196
  %v6416 = vunpack.c.l.b16 %v6197
  %v6417 = vunpack.c.h.b16 %v6197
  %v6418 = vunpack.c.l.b16 %v6198
  %v6419 = vunpack.c.l.b16 %v6199
  %v6420 = vunpack.c.h.b16 %v6199
  %v6421 = vunpack.c.l.b16 %v6200
  %v6422 = vunpack.c.l.b16 %v6201
  %v6423 = vunpack.c.h.b16 %v6201
  %v6424 = vunpack.c.l.b16 %v6202
  %v6425 = vunpack.c.l.b16 %v6203
  %v6426 = vunpack.c.h.b16 %v6203
  %v6427 = vunpack.c.l.b16 %v6204
  %v6428 = vunpack.c.l.b16 %v6205
  %v6429 = vunpack.c.h.b16 %v6205
  %v6430 = vunpack.c.l.b16 %v6206
  %v6431 = vunpack.c.l.b16 %v6207
  %v6432 = vunpack.c.h.b16 %v6207
  %v6433 = vunpack.c.l.b16 %v6208
  %v6434 = vunpack.c.l.b16 %v6209
  %v6435 = vunpack.c.h.b16 %v6209
  %v6436 = vunpack.c.l.b16 %v6210
  %v6437 = vunpack.c.l.b16 %v6211
  %v6438 = vunpack.c.h.b16 %v6211
  %v6439 = vunpack.c.l.b16 %v6212
  %v6440 = vunpack.c.l.b16 %v6213
  %v6441 = vunpack.c.h.b16 %v6213
  %v6442 = vunpack.c.l.b16 %v6214
  %v6443 = vunpack.c.l.b16 %v6215
  %v6444 = vunpack.c.h.b16 %v6215
  %v6445 = vunpack.c.l.b16 %v6216
  %v6446 = vunpack.c.l.b16 %v6217
  %v6447 = vunpack.c.h.b16 %v6217
  %v6448 = vunpack.c.l.b16 %v6218
  %v6449 = vunpack.c.l.b16 %v6219
  %v6450 = vunpack.c.h.b16 %v6219
  %v6451 = vunpack.c.l.b16 %v6220
  %v6452 = vunpack.c.l.b16 %v6221
  %v6453 = vunpack.c.h.b16 %v6221
  %v6454 = vunpack.c.l.b16 %v6222
  %v6455 = vunpack.c.l.b16 %v6223
  %v6456 = vunpack.c.h.b16 %v6223
  %v6457 = vunpack.c.l.b16 %v6224
  %v6458 = vunpack.c.l.b16 %v6225
  %v6459 = vunpack.c.h.b16 %v6225
  %v6460 = vunpack.c.l.b16 %v6226
  %v6461 = vunpack.c.l.b16 %v6227
  %v6462 = vunpack.c.h.b16 %v6227
  %v6463 = vunpack.c.l.b16 %v6228
  %v6464 = vunpack.c.l.b16 %v6229
  %v6465 = vunpack.c.h.b16 %v6229
  %v6466 = vunpack.c.l.b16 %v6230
  %v6467 = vunpack.c.l.b16 %v6231
  %v6468 = vunpack.c.h.b16 %v6231
  %v6469 = vunpack.c.l.b16 %v6232
  %v6470 = vunpack.c.l.b16 %v6233
  %v6471 = vunpack.c.h.b16 %v6233
  %v6472 = vunpack.c.l.b16 %v6234
  %v6473 = vunpack.c.l.b16 %v6235
  %v6474 = vunpack.c.h.b16 %v6235
  %v6475 = vunpack.c.l.b16 %v6236
  %v6476 = vunpack.c.l.b16 %v6237
  %v6477 = vunpack.c.h.b16 %v6237
  %v6478 = vunpack.c.l.b16 %v6238
  %v6479 = vunpack.c.l.b16 %v6239
  %v6480 = vunpack.c.h.b16 %v6239
  %v6481 = vunpack.c.l.b16 %v6240
  %v6482 = vunpack.c.l.b16 %v6241
  %v6483 = vunpack.c.h.b16 %v6241
  %v6484 = vunpack.c.l.b16 %v6242
  %v6485 = vunpack.c.l.b16 %v6243
  %v6486 = vunpack.c.h.b16 %v6243
  %v6487 = vunpack.c.l.b16 %v6244
  %v6488 = vunpack.c.l.b16 %v6245
  %v6489 = vunpack.c.h.b16 %v6245
  %v6490 = vunpack.c.l.b16 %v6246
  %v6491 = vunpack.c.l.b16 %v6247
  %v6492 = vunpack.c.h.b16 %v6247
  %v6493 = vunpack.c.l.b16 %v6248
  %v6494 = vunpack.c.l.b16 %v6249
  %v6495 = vunpack.c.h.b16 %v6249
  %v6496 = vunpack.c.l.b16 %v6250
  %v6497 = vunpack.c.l.b16 %v6251
  %v6498 = vunpack.c.h.b16 %v6251
  %v6499 = vunpack.c.l.b16 %v6252
  %v6500 = vunpack.c.l.b16 %v6253
  %v6501 = vunpack.c.h.b16 %v6253
  %v6502 = vunpack.c.l.b16 %v6254
  %v6503 = vunpack.c.l.b16 %v6255
  %v6504 = vunpack.c.h.b16 %v6255
  %v6505 = vunpack.c.l.b16 %v6256
  %v6506 = vunpack.c.l.b16 %v6257
  %v6507 = vunpack.c.h.b16 %v6257
  %v6508 = vunpack.c.l.b16 %v6258
  %v6509 = vunpack.c.l.b16 %v6259
  %v6510 = vunpack.c.h.b16 %v6259
  %v6511 = vunpack.c.l.b16 %v6260
  %v6512 = vunpack.c.l.b16 %v6261
  %v6513 = vunpack.c.h.b16 %v6261
  %v6514 = vunpack.c.l.b16 %v6262
  %v6515 = vunpack.c.l.b16 %v6263
  %v6516 = vunpack.c.h.b16 %v6263
  %v6517 = vunpack.c.l.b16 %v6264
  %v6518 = vunpack.c.l.b16 %v6265
  %v6519 = vunpack.c.h.b16 %v6265
  %v6520 = vunpack.c.l.b16 %v6266
  %v6521 = vunpack.c.l.b16 %v6267
  %v6522 = vunpack.c.h.b16 %v6267
  %v6523 = vunpack.c.l.b16 %v6268
  %v6524 = vunpack.c.l.b16 %v6269
  %v6525 = vunpack.c.h.b16 %v6269
  %v6526 = vunpack.c.l.b16 %v6270
  %v6527 = vunpack.c.l.b16 %v6271
  %v6528 = vunpack.c.h.b16 %v6271
  %v6529 = vunpack.c.l.b16 %v6272
  %v6530 = vunpack.c.l.b16 %v6273
  %v6531 = vunpack.c.h.b16 %v6273
  %v6532 = vunpack.c.l.b16 %v6274
  %v6533 = vunpack.c.l.b16 %v6275
  %v6534 = vunpack.c.h.b16 %v6275
  %v6535 = vunpack.c.l.b16 %v6276
  %v6536 = vpack.c.b16 %v6395, %v6392
  %v6537 = vpack.c.b16 %v6396, %v6393
  %v6538 = vpack.c.b16 %v6397, %v6394
  %v6539 = vpack.c.b16 %v6401, %v6398
  %v6540 = vpack.c.b16 %v6402, %v6399
  %v6541 = vpack.c.b16 %v6403, %v6400
  %v6542 = vpack.c.b16 %v6407, %v6404
  %v6543 = vpack.c.b16 %v6408, %v6405
  %v6544 = vpack.c.b16 %v6409, %v6406
  %v6545 = vpack.c.b16 %v6413, %v6410
  %v6546 = vpack.c.b16 %v6414, %v6411
  %v6547 = vpack.c.b16 %v6415, %v6412
  %v6548 = vpack.c.b16 %v6419, %v6416
  %v6549 = vpack.c.b16 %v6420, %v6417
  %v6550 = vpack.c.b16 %v6421, %v6418
  %v6551 = vpack.c.b16 %v6425, %v6422
  %v6552 = vpack.c.b16 %v6426, %v6423
  %v6553 = vpack.c.b16 %v6427, %v6424
  %v6554 = vpack.c.b16 %v6431, %v6428
  %v6555 = vpack.c.b16 %v6432, %v6429
  %v6556 = vpack.c.b16 %v6433, %v6430
  %v6557 = vpack.c.b16 %v6437, %v6434
  %v6558 = vpack.c.b16 %v6438, %v6435
  %v6559 = vpack.c.b16 %v6439, %v6436
  %v6560 = vpack.c.b16 %v6443, %v6440
  %v6561 = vpack.c.b16 %v6444, %v6441
  %v6562 = vpack.c.b16 %v6445, %v6442
  %v6563 = vpack.c.b16 %v6449, %v6446
  %v6564 = vpack.c.b16 %v6450, %v6447
  %v6565 = vpack.c.b16 %v6451, %v6448
  %v6566 = vpack.c.b16 %v6455, %v6452
  %v6567 = vpack.c.b16 %v6456, %v6453
  %v6568 = vpack.c.b16 %v6457, %v6454
  %v6569 = vpack.c.b16 %v6461, %v6458
  %v6570 = vpack.c.b16 %v6462, %v6459
  %v6571 = vpack.c.b16 %v6463, %v6460
  %v6572 = vpack.c.b16 %v6467, %v6464
  %v6573 = vpack.c.b16 %v6468, %v6465
  %v6574 = vpack.c.b16 %v6469, %v6466
  %v6575 = vpack.c.b16 %v6473, %v6470
  %v6576 = vpack.c.b16 %v6474, %v6471
  %v6577 = vpack.c.b16 %v6475, %v6472
  %v6578 = vpack.c.b16 %v6479, %v6476
  %v6579 = vpack.c.b16 %v6480, %v6477
  %v6580 = vpack.c.b16 %v6481, %v6478
  %v6581 = vpack.c.b16 %v6485, %v6482
  %v6582 = vpack.c.b16 %v6486, %v6483
  %v6583 = vpack.c.b16 %v6487, %v6484
  %v6584 = vpack.c.b16 %v6491, %v6488
  %v6585 = vpack.c.b16 %v6492, %v6489
  %v6586 = vpack.c.b16 %v6493, %v6490
  %v6587 = vpack.c.b16 %v6497, %v6494
  %v6588 = vpack.c.b16 %v6498, %v6495
  %v6589 = vpack.c.b16 %v6499, %v6496
  %v6590 = vpack.c.b16 %v6503, %v6500
  %v6591 = vpack.c.b16 %v6504, %v6501
  %v6592 = vpack.c.b16 %v6505, %v6502
  %v6593 = vpack.c.b16 %v6509, %v6506
  %v6594 = vpack.c.b16 %v6510, %v6507
  %v6595 = vpack.c.b16 %v6511, %v6508
  %v6596 = vpack.c.b16 %v6515, %v6512
  %v6597 = vpack.c.b16 %v6516, %v6513
  %v6598 = vpack.c.b16 %v6517, %v6514
  %v6599 = vpack.c.b16 %v6521, %v6518
  %v6600 = vpack.c.b16 %v6522, %v6519
  %v6601 = vpack.c.b16 %v6523, %v6520
  %v6602 = vpack.c.b16 %v6527, %v6524
  %v6603 = vpack.c.b16 %v6528, %v6525
  %v6604 = vpack.c.b16 %v6529, %v6526
  %v6605 = vpack.c.b16 %v6533, %v6530
  %v6606 = vpack.c.b16 %v6534, %v6531
  %v6607 = vpack.c.b16 %v6535, %v6532
  %6680 = vmatpush.bf16.msra.mxu0 %v6557
  %6681 = vmatpush.bf16.msra.mxu0 %v6554
  %6682 = vmatpush.bf16.msra.mxu0 %v6551
  %6683 = vmatpush.bf16.msra.mxu0 %v6548
  %6684 = vmatpush.bf16.msra.mxu0 %v6545
  %6685 = vmatpush.bf16.msra.mxu0 %v6542
  %6686 = vmatpush.bf16.msra.mxu0 %v6539
  %6687 = vmatpush.bf16.msra.mxu0 %v6536
  %6688 = vmatmul.bf16.gmra.mxu0 %v6290
  %v6689 = vpop.f32.mrf.mxu0
  %v6690 = vadd.f32 0.0, %v6689
  %v6691 = vpop.f32.mrf.mxu0
  %v6692 = vadd.f32 0.0, %v6691
  %6693 = vdwg.mxu0
  %6694 = vmatpush.bf16.msra.mxu0 %v6581
  %6695 = vmatpush.bf16.msra.mxu0 %v6578
  %6696 = vmatpush.bf16.msra.mxu0 %v6575
  %6697 = vmatpush.bf16.msra.mxu0 %v6572
  %6698 = vmatpush.bf16.msra.mxu0 %v6569
  %6699 = vmatpush.bf16.msra.mxu0 %v6566
  %6700 = vmatpush.bf16.msra.mxu0 %v6563
  %6701 = vmatpush.bf16.msra.mxu0 %v6560
  %6702 = vmatmul.bf16.gmra.mxu0 %v6291
  %v6703 = vpop.f32.mrf.mxu0
  %v6704 = vadd.f32 %v6690, %v6703
  %v6705 = vpop.f32.mrf.mxu0
  %v6706 = vadd.f32 %v6692, %v6705
  %6707 = vdwg.mxu0
  %6708 = vmatpush.bf16.msra.mxu0 %v6605
  %6709 = vmatpush.bf16.msra.mxu0 %v6602
  %6710 = vmatpush.bf16.msra.mxu0 %v6599
  %6711 = vmatpush.bf16.msra.mxu0 %v6596
  %6712 = vmatpush.bf16.msra.mxu0 %v6593
  %6713 = vmatpush.bf16.msra.mxu0 %v6590
  %6714 = vmatpush.bf16.msra.mxu0 %v6587
  %6715 = vmatpush.bf16.msra.mxu0 %v6584
  %6716 = vmatmul.bf16.gmra.mxu0 %v6292
  %v6717 = vpop.f32.mrf.mxu0
  %v6718 = vadd.f32 %v6704, %v6717
  %v6719 = vpop.f32.mrf.mxu0
  %v6720 = vadd.f32 %v6706, %v6719
  %6721 = vdwg.mxu0
  %6722 = vmatpush.bf16.msra.mxu0 %v6558
  %6723 = vmatpush.bf16.msra.mxu0 %v6555
  %6724 = vmatpush.bf16.msra.mxu0 %v6552
  %6725 = vmatpush.bf16.msra.mxu0 %v6549
  %6726 = vmatpush.bf16.msra.mxu0 %v6546
  %6727 = vmatpush.bf16.msra.mxu0 %v6543
  %6728 = vmatpush.bf16.msra.mxu0 %v6540
  %6729 = vmatpush.bf16.msra.mxu0 %v6537
  %6730 = vmatmul.bf16.gmra.mxu0 %v6290
  %v6731 = vpop.f32.mrf.mxu0
  %v6732 = vadd.f32 0.0, %v6731
  %v6733 = vpop.f32.mrf.mxu0
  %v6734 = vadd.f32 0.0, %v6733
  %6735 = vdwg.mxu0
  %6736 = vmatpush.bf16.msra.mxu0 %v6582
  %6737 = vmatpush.bf16.msra.mxu0 %v6579
  %6738 = vmatpush.bf16.msra.mxu0 %v6576
  %6739 = vmatpush.bf16.msra.mxu0 %v6573
  %6740 = vmatpush.bf16.msra.mxu0 %v6570
  %6741 = vmatpush.bf16.msra.mxu0 %v6567
  %6742 = vmatpush.bf16.msra.mxu0 %v6564
  %6743 = vmatpush.bf16.msra.mxu0 %v6561
  %6744 = vmatmul.bf16.gmra.mxu0 %v6291
  %v6745 = vpop.f32.mrf.mxu0
  %v6746 = vadd.f32 %v6732, %v6745
  %v6747 = vpop.f32.mrf.mxu0
  %v6748 = vadd.f32 %v6734, %v6747
  %6749 = vdwg.mxu0
  %6750 = vmatpush.bf16.msra.mxu0 %v6606
  %6751 = vmatpush.bf16.msra.mxu0 %v6603
  %6752 = vmatpush.bf16.msra.mxu0 %v6600
  %6753 = vmatpush.bf16.msra.mxu0 %v6597
  %6754 = vmatpush.bf16.msra.mxu0 %v6594
  %6755 = vmatpush.bf16.msra.mxu0 %v6591
  %6756 = vmatpush.bf16.msra.mxu0 %v6588
  %6757 = vmatpush.bf16.msra.mxu0 %v6585
  %6758 = vmatmul.bf16.gmra.mxu0 %v6292
  %v6759 = vpop.f32.mrf.mxu0
  %v6760 = vadd.f32 %v6746, %v6759
  %v6761 = vpop.f32.mrf.mxu0
  %v6762 = vadd.f32 %v6748, %v6761
  %6763 = vdwg.mxu0
  %6764 = vmatpush.bf16.msra.mxu0 %v6559
  %6765 = vmatpush.bf16.msra.mxu0 %v6556
  %6766 = vmatpush.bf16.msra.mxu0 %v6553
  %6767 = vmatpush.bf16.msra.mxu0 %v6550
  %6768 = vmatpush.bf16.msra.mxu0 %v6547
  %6769 = vmatpush.bf16.msra.mxu0 %v6544
  %6770 = vmatpush.bf16.msra.mxu0 %v6541
  %6771 = vmatpush.bf16.msra.mxu0 %v6538
  %6772 = vmatmul.bf16.gmra.mxu0 %v6290
  %v6773 = vpop.f32.mrf.mxu0
  %v6774 = vadd.f32 0.0, %v6773
  %v6775 = vpop.f32.mrf.mxu0
  %v6776 = vadd.f32 0.0, %v6775
  %6777 = vdwg.mxu0
  %6778 = vmatpush.bf16.msra.mxu0 %v6583
  %6779 = vmatpush.bf16.msra.mxu0 %v6580
  %6780 = vmatpush.bf16.msra.mxu0 %v6577
  %6781 = vmatpush.bf16.msra.mxu0 %v6574
  %6782 = vmatpush.bf16.msra.mxu0 %v6571
  %6783 = vmatpush.bf16.msra.mxu0 %v6568
  %6784 = vmatpush.bf16.msra.mxu0 %v6565
  %6785 = vmatpush.bf16.msra.mxu0 %v6562
  %6786 = vmatmul.bf16.gmra.mxu0 %v6291
  %v6787 = vpop.f32.mrf.mxu0
  %v6788 = vadd.f32 %v6774, %v6787
  %v6789 = vpop.f32.mrf.mxu0
  %v6790 = vadd.f32 %v6776, %v6789
  %6791 = vdwg.mxu0
  %6792 = vmatpush.bf16.msra.mxu0 %v6607
  %6793 = vmatpush.bf16.msra.mxu0 %v6604
  %6794 = vmatpush.bf16.msra.mxu0 %v6601
  %6795 = vmatpush.bf16.msra.mxu0 %v6598
  %6796 = vmatpush.bf16.msra.mxu0 %v6595
  %6797 = vmatpush.bf16.msra.mxu0 %v6592
  %6798 = vmatpush.bf16.msra.mxu0 %v6589
  %6799 = vmatpush.bf16.msra.mxu0 %v6586
  %6800 = vmatmul.bf16.gmra.mxu0 %v6292
  %v6801 = vpop.f32.mrf.mxu0
  %v6802 = vadd.f32 %v6788, %v6801
  %v6803 = vpop.f32.mrf.mxu0
  %v6804 = vadd.f32 %v6790, %v6803
  %6805 = vdwg.mxu0
  %v6806 = vadd.f32 %v6170, %v6718
  %v6807 = vadd.f32 %v6171, %v6760
  %v6808 = vadd.f32 %v6172, %v6802
  %v6809 = vadd.f32 %v6173, %v6720
  %v6810 = vadd.f32 %v6174, %v6762
  %v6811 = vadd.f32 %v6175, %v6804
  %v6812 = vld [vmem:[%s4] sm:$0x7]
  %v6814 = vperm.slane %v6812, 0
  %v6815 = vperm.slane %v6812, 1
  %v6816 = vperm.slane %v6812, 2
  %v6820 = vadd.f32 %v6806, %v6814
  %v6821 = vadd.f32 %v6807, %v6815
  %v6822 = vadd.f32 %v6808, %v6816
  %v6823 = vadd.f32 %v6809, %v6814
  %v6824 = vadd.f32 %v6810, %v6815
  %v6825 = vadd.f32 %v6811, %v6816
  %v6826 = vmax.f32 %v6820, 0.0
  %v6827 = vmax.f32 %v6821, 0.0
  %v6828 = vmax.f32 %v6822, 0.0
  %v6829 = vmax.f32 %v6823, 0.0
  %v6830 = vmax.f32 %v6824, 0.0
  %v6831 = vmax.f32 %v6825, 0.0
  %v6832 = vpack.c.bf16 %v6827, %v6826
  %v6833 = vpack.c.bf16 %v6828, %v6828
  %6834 = vst [vmem:[#allocation4] sm:$0x11] %v6832
  %vm6835 = vcmask 516096
  %6836 = vst.msk [vmem:[#allocation4 + $0x8] sm:$0x1] %vm6835, %v6833
  %v6839 = vrot.slane %v6832, 6
  %v6840 = vrot.slane %v6833, 6
  %6843 = vst [vmem:[#allocation4] sm:$0x88] %v6839
  %vm6844 = vcmask 519171
  %6845 = vst.msk [vmem:[#allocation4 + $0x8] sm:$0x8] %vm6844, %v6840
  %v6846 = vrot.slane %v6832, 5
  %v6847 = vrot.slane %v6846, 4
  %v6848 = vrot.slane %v6833, 5
  %v6849 = vrot.slane %v6848, 4
  %6852 = vst [vmem:[#allocation4] sm:$0x22] %v6847
  %vm6853 = vcmask 517121
  %6854 = vst.msk [vmem:[#allocation4 + $0x8] sm:$0x2] %vm6853, %v6849
  %v6855 = vrot.slane %v6832, 7
  %v6856 = vrot.slane %v6855, 4
  %v6857 = vrot.slane %v6833, 7
  %v6858 = vrot.slane %v6857, 4
  %6861 = vst [vmem:[#allocation4 + $0xc] sm:$0x11] %v6856
  %6862 = vst.msk [vmem:[#allocation4 + $0x14] sm:$0x1] %vm6835, %v6858
  %v6863 = vpack.c.bf16 %v6830, %v6829
  %v6864 = vpack.c.bf16 %v6831, %v6831
  %v6867 = vrot.slane %v6863, 6
  %v6868 = vrot.slane %v6864, 6
  %6871 = vst [vmem:[#allocation4] sm:$0x44] %v6867
  %vm6872 = vcmask 518146
  %6873 = vst.msk [vmem:[#allocation4 + $0x8] sm:$0x4] %vm6872, %v6868
  %v6874 = vld [vmem:[#allocation4] sm:$0x11]
  %v6875 = vld [vmem:[#allocation4 + $0x8] sm:$0x1]
  %v6876 = vld [vmem:[%s5] sm:$0xf]
  %v6877 = vld [vmem:[%s5 + $0x4] sm:$0xf]
  %v6878 = vld [vmem:[%s5 + $0x8] sm:$0xf]
  %v6879 = vld [vmem:[%s5 + $0xc] sm:$0xf]
  %v6880 = vld [vmem:[%s5 + $0x10] sm:$0xf]
  %v6881 = vld [vmem:[%s5 + $0x14] sm:$0xf]
  %v6882 = vld [vmem:[%s5 + $0x18] sm:$0xf]
  %v6883 = vld [vmem:[%s5 + $0x1c] sm:$0xf]
  %v6884 = vld [vmem:[%s5 + $0x20] sm:$0xf]
  %v6885 = vld [vmem:[%s5 + $0x24] sm:$0xf]
  %v6886 = vld [vmem:[%s5 + $0x28] sm:$0xf]
  %v6887 = vld [vmem:[%s5 + $0x2c] sm:$0xf]
  %v6888 = vld [vmem:[%s5 + $0x30] sm:$0xf]
  %v6889 = vld [vmem:[%s5 + $0x34] sm:$0xf]
  %v6890 = vld [vmem:[%s5 + $0x38] sm:$0xf]
  %v6891 = vld [vmem:[%s5 + $0x3c] sm:$0xf]
  %v6892 = vld [vmem:[%s5 + $0x40] sm:$0xf]
  %v6893 = vld [vmem:[%s5 + $0x44] sm:$0xf]
  %v6894 = vld [vmem:[%s5 + $0x48] sm:$0xf]
  %v6895 = vld [vmem:[%s5 + $0x4c] sm:$0xf]
  %v6896 = vld [vmem:[%s5 + $0x50] sm:$0xf]
  %v6897 = vld [vmem:[%s5 + $0x54] sm:$0xf]
  %v6898 = vld [vmem:[%s5 + $0x58] sm:$0xf]
  %v6899 = vld [vmem:[%s5 + $0x5c] sm:$0xf]
  %v6900 = vld [vmem:[%s5 + $0x60] sm:$0xf]
  %v6901 = vld [vmem:[%s5 + $0x64] sm:$0xf]
  %v6902 = vld [vmem:[%s5 + $0x68] sm:$0xf]
  %v6903 = vld [vmem:[%s5 + $0x6c] sm:$0xf]
  %v6904 = vld [vmem:[%s5 + $0x70] sm:$0xf]
  %v6905 = vld [vmem:[%s5 + $0x74] sm:$0xf]
  %v6906 = vld [vmem:[%s5 + $0x78] sm:$0xf]
  %v6907 = vld [vmem:[%s5 + $0x7c] sm:$0xf]
  %v6908 = vld [vmem:[%s5 + $0x80] sm:$0xf]
  %v6909 = vld [vmem:[%s5 + $0x84] sm:$0xf]
  %v6910 = vld [vmem:[%s5 + $0x88] sm:$0xf]
  %v6911 = vld [vmem:[%s5 + $0x8c] sm:$0xf]
  %v6912 = vld [vmem:[%s5 + $0x90] sm:$0xf]
  %v6913 = vld [vmem:[%s5 + $0x94] sm:$0xf]
  %v6914 = vld [vmem:[%s5 + $0x98] sm:$0xf]
  %v6915 = vld [vmem:[%s5 + $0x9c] sm:$0xf]
  %v6916 = vld [vmem:[#allocation4] sm:$0x88]
  %v6917 = vld [vmem:[#allocation4 + $0x8] sm:$0x8]
  %s6918 = scalar_lea.vmem %s5, 160
  %v6919 = vld [vmem:[%s6918] sm:$0xf]
  %v6920 = vld [vmem:[%s6918 + $0x4] sm:$0xf]
  %v6921 = vld [vmem:[%s6918 + $0x8] sm:$0xf]
  %v6922 = vld [vmem:[%s6918 + $0xc] sm:$0xf]
  %v6923 = vld [vmem:[%s6918 + $0x10] sm:$0xf]
  %v6924 = vld [vmem:[%s6918 + $0x14] sm:$0xf]
  %v6925 = vld [vmem:[%s6918 + $0x18] sm:$0xf]
  %v6926 = vld [vmem:[%s6918 + $0x1c] sm:$0xf]
  %v6927 = vld [vmem:[%s6918 + $0x20] sm:$0xf]
  %v6928 = vld [vmem:[%s6918 + $0x24] sm:$0xf]
  %v6929 = vld [vmem:[%s6918 + $0x28] sm:$0xf]
  %v6930 = vld [vmem:[%s6918 + $0x2c] sm:$0xf]
  %v6931 = vld [vmem:[%s6918 + $0x30] sm:$0xf]
  %v6932 = vld [vmem:[%s6918 + $0x34] sm:$0xf]
  %v6933 = vld [vmem:[%s6918 + $0x38] sm:$0xf]
  %v6934 = vld [vmem:[%s6918 + $0x3c] sm:$0xf]
  %v6935 = vld [vmem:[%s6918 + $0x40] sm:$0xf]
  %v6936 = vld [vmem:[%s6918 + $0x44] sm:$0xf]
  %v6937 = vld [vmem:[%s6918 + $0x48] sm:$0xf]
  %v6938 = vld [vmem:[%s6918 + $0x4c] sm:$0xf]
  %v6939 = vld [vmem:[%s6918 + $0x50] sm:$0xf]
  %v6940 = vld [vmem:[%s6918 + $0x54] sm:$0xf]
  %v6941 = vld [vmem:[%s6918 + $0x58] sm:$0xf]
  %v6942 = vld [vmem:[%s6918 + $0x5c] sm:$0xf]
  %v6943 = vld [vmem:[%s6918 + $0x60] sm:$0xf]
  %v6944 = vld [vmem:[%s6918 + $0x64] sm:$0xf]
  %v6945 = vld [vmem:[%s6918 + $0x68] sm:$0xf]
  %v6946 = vld [vmem:[%s6918 + $0x6c] sm:$0xf]
  %v6947 = vld [vmem:[%s6918 + $0x70] sm:$0xf]
  %v6948 = vld [vmem:[%s6918 + $0x74] sm:$0xf]
  %v6949 = vld [vmem:[%s6918 + $0x78] sm:$0xf]
  %v6950 = vld [vmem:[%s6918 + $0x7c] sm:$0xf]
  %v6951 = vld [vmem:[%s6918 + $0x80] sm:$0xf]
  %v6952 = vld [vmem:[%s6918 + $0x84] sm:$0xf]
  %v6953 = vld [vmem:[%s6918 + $0x88] sm:$0xf]
  %v6954 = vld [vmem:[%s6918 + $0x8c] sm:$0xf]
  %v6955 = vld [vmem:[%s6918 + $0x90] sm:$0xf]
  %v6956 = vld [vmem:[%s6918 + $0x94] sm:$0xf]
  %v6957 = vld [vmem:[%s6918 + $0x98] sm:$0xf]
  %v6958 = vld [vmem:[%s6918 + $0x9c] sm:$0xf]
  %v6961 = vunpack.c.l.b16 %v6916
  %v6962 = vunpack.c.h.b16 %v6916
  %v6963 = vunpack.c.l.b16 %v6917
  %v6964 = vpack.c.b16 %v6961, %v6961
  %v6965 = vpack.c.b16 %v6962, %v6962
  %v6966 = vpack.c.b16 %v6963, %v6963
  %v6967 = vrot.slane %v6964, 3
  %v6968 = vrot.slane %v6965, 3
  %v6969 = vrot.slane %v6966, 3
  %v7012 = vunpack.c.l.b16 %v6919
  %v7013 = vunpack.c.l.b16 %v6920
  %v7014 = vunpack.c.l.b16 %v6921
  %v7015 = vunpack.c.l.b16 %v6922
  %v7016 = vunpack.c.l.b16 %v6923
  %v7017 = vunpack.c.l.b16 %v6924
  %v7018 = vunpack.c.l.b16 %v6925
  %v7019 = vunpack.c.l.b16 %v6926
  %v7020 = vunpack.c.l.b16 %v6927
  %v7021 = vunpack.c.l.b16 %v6928
  %v7022 = vunpack.c.l.b16 %v6929
  %v7023 = vunpack.c.l.b16 %v6930
  %v7024 = vunpack.c.l.b16 %v6931
  %v7025 = vunpack.c.l.b16 %v6932
  %v7026 = vunpack.c.l.b16 %v6933
  %v7027 = vunpack.c.l.b16 %v6934
  %v7028 = vunpack.c.l.b16 %v6935
  %v7029 = vunpack.c.l.b16 %v6936
  %v7030 = vunpack.c.l.b16 %v6937
  %v7031 = vunpack.c.l.b16 %v6938
  %v7032 = vunpack.c.l.b16 %v6939
  %v7033 = vunpack.c.l.b16 %v6940
  %v7034 = vunpack.c.l.b16 %v6941
  %v7035 = vunpack.c.l.b16 %v6942
  %v7036 = vunpack.c.l.b16 %v6943
  %v7037 = vunpack.c.l.b16 %v6944
  %v7038 = vunpack.c.l.b16 %v6945
  %v7039 = vunpack.c.l.b16 %v6946
  %v7040 = vunpack.c.l.b16 %v6947
  %v7041 = vunpack.c.l.b16 %v6948
  %v7042 = vunpack.c.l.b16 %v6949
  %v7043 = vunpack.c.l.b16 %v6950
  %v7044 = vunpack.c.l.b16 %v6951
  %v7045 = vunpack.c.l.b16 %v6952
  %v7046 = vunpack.c.l.b16 %v6953
  %v7047 = vunpack.c.l.b16 %v6954
  %v7048 = vunpack.c.l.b16 %v6955
  %v7049 = vunpack.c.l.b16 %v6956
  %v7050 = vunpack.c.l.b16 %v6957
  %v7051 = vunpack.c.l.b16 %v6958
  %v7052 = vpack.c.b16 %v7013, %v7012
  %v7053 = vpack.c.b16 %v7015, %v7014
  %v7054 = vpack.c.b16 %v7017, %v7016
  %v7055 = vpack.c.b16 %v7019, %v7018
  %v7056 = vpack.c.b16 %v7021, %v7020
  %v7057 = vpack.c.b16 %v7023, %v7022
  %v7058 = vpack.c.b16 %v7025, %v7024
  %v7059 = vpack.c.b16 %v7027, %v7026
  %v7060 = vpack.c.b16 %v7029, %v7028
  %v7061 = vpack.c.b16 %v7031, %v7030
  %v7062 = vpack.c.b16 %v7033, %v7032
  %v7063 = vpack.c.b16 %v7035, %v7034
  %v7064 = vpack.c.b16 %v7037, %v7036
  %v7065 = vpack.c.b16 %v7039, %v7038
  %v7066 = vpack.c.b16 %v7041, %v7040
  %v7067 = vpack.c.b16 %v7043, %v7042
  %v7068 = vpack.c.b16 %v7045, %v7044
  %v7069 = vpack.c.b16 %v7047, %v7046
  %v7070 = vpack.c.b16 %v7049, %v7048
  %v7071 = vpack.c.b16 %v7051, %v7050
  %vm7092 = vcmask 523264
  %v7094 = vsel %vm7092, %v6969, 0
  %7096 = vmatpush.bf16.msra.mxu0 %v7059
  %7097 = vmatpush.bf16.msra.mxu0 %v7058
  %7098 = vmatpush.bf16.msra.mxu0 %v7057
  %7099 = vmatpush.bf16.msra.mxu0 %v7056
  %7100 = vmatpush.bf16.msra.mxu0 %v7055
  %7101 = vmatpush.bf16.msra.mxu0 %v7054
  %7102 = vmatpush.bf16.msra.mxu0 %v7053
  %7103 = vmatpush.bf16.msra.mxu0 %v7052
  %7104 = vmatmul.bf16.gmra.mxu0 %v6967
  %v7105 = vpop.f32.mrf.mxu0
  %v7106 = vadd.f32 0.0, %v7105
  %v7107 = vpop.f32.mrf.mxu0
  %7108 = vdwg.mxu0
  %7109 = vmatpush.bf16.msra.mxu0 %v7067
  %7110 = vmatpush.bf16.msra.mxu0 %v7066
  %7111 = vmatpush.bf16.msra.mxu0 %v7065
  %7112 = vmatpush.bf16.msra.mxu0 %v7064
  %7113 = vmatpush.bf16.msra.mxu0 %v7063
  %7114 = vmatpush.bf16.msra.mxu0 %v7062
  %7115 = vmatpush.bf16.msra.mxu0 %v7061
  %7116 = vmatpush.bf16.msra.mxu0 %v7060
  %7117 = vmatmul.bf16.gmra.mxu0 %v6968
  %v7118 = vpop.f32.mrf.mxu0
  %v7119 = vadd.f32 %v7106, %v7118
  %v7120 = vpop.f32.mrf.mxu0
  %7121 = vdwg.mxu0
  %7122 = vmatpush.bf16.msra.mxu0 0
  %7123 = vmatpush.bf16.msra.mxu0 0
  %7124 = vmatpush.bf16.msra.mxu0 0
  %7125 = vmatpush.bf16.msra.mxu0 0
  %7126 = vmatpush.bf16.msra.mxu0 %v7071
  %7127 = vmatpush.bf16.msra.mxu0 %v7070
  %7128 = vmatpush.bf16.msra.mxu0 %v7069
  %7129 = vmatpush.bf16.msra.mxu0 %v7068
  %7130 = vmatmul.bf16.gmra.mxu0 %v7094
  %v7131 = vpop.f32.mrf.mxu0
  %v7132 = vadd.f32 %v7119, %v7131
  %v7133 = vpop.f32.mrf.mxu0
  %7134 = vdwg.mxu0
  %v7137 = vunpack.c.l.b16 %v6874
  %v7138 = vunpack.c.h.b16 %v6874
  %v7139 = vunpack.c.l.b16 %v6875
  %v7140 = vpack.c.b16 %v7137, %v7137
  %v7141 = vpack.c.b16 %v7138, %v7138
  %v7142 = vpack.c.b16 %v7139, %v7139
  %v7185 = vunpack.c.l.b16 %v6876
  %v7186 = vunpack.c.l.b16 %v6877
  %v7187 = vunpack.c.l.b16 %v6878
  %v7188 = vunpack.c.l.b16 %v6879
  %v7189 = vunpack.c.l.b16 %v6880
  %v7190 = vunpack.c.l.b16 %v6881
  %v7191 = vunpack.c.l.b16 %v6882
  %v7192 = vunpack.c.l.b16 %v6883
  %v7193 = vunpack.c.l.b16 %v6884
  %v7194 = vunpack.c.l.b16 %v6885
  %v7195 = vunpack.c.l.b16 %v6886
  %v7196 = vunpack.c.l.b16 %v6887
  %v7197 = vunpack.c.l.b16 %v6888
  %v7198 = vunpack.c.l.b16 %v6889
  %v7199 = vunpack.c.l.b16 %v6890
  %v7200 = vunpack.c.l.b16 %v6891
  %v7201 = vunpack.c.l.b16 %v6892
  %v7202 = vunpack.c.l.b16 %v6893
  %v7203 = vunpack.c.l.b16 %v6894
  %v7204 = vunpack.c.l.b16 %v6895
  %v7205 = vunpack.c.l.b16 %v6896
  %v7206 = vunpack.c.l.b16 %v6897
  %v7207 = vunpack.c.l.b16 %v6898
  %v7208 = vunpack.c.l.b16 %v6899
  %v7209 = vunpack.c.l.b16 %v6900
  %v7210 = vunpack.c.l.b16 %v6901
  %v7211 = vunpack.c.l.b16 %v6902
  %v7212 = vunpack.c.l.b16 %v6903
  %v7213 = vunpack.c.l.b16 %v6904
  %v7214 = vunpack.c.l.b16 %v6905
  %v7215 = vunpack.c.l.b16 %v6906
  %v7216 = vunpack.c.l.b16 %v6907
  %v7217 = vunpack.c.l.b16 %v6908
  %v7218 = vunpack.c.l.b16 %v6909
  %v7219 = vunpack.c.l.b16 %v6910
  %v7220 = vunpack.c.l.b16 %v6911
  %v7221 = vunpack.c.l.b16 %v6912
  %v7222 = vunpack.c.l.b16 %v6913
  %v7223 = vunpack.c.l.b16 %v6914
  %v7224 = vunpack.c.l.b16 %v6915
  %v7225 = vpack.c.b16 %v7186, %v7185
  %v7226 = vpack.c.b16 %v7188, %v7187
  %v7227 = vpack.c.b16 %v7190, %v7189
  %v7228 = vpack.c.b16 %v7192, %v7191
  %v7229 = vpack.c.b16 %v7194, %v7193
  %v7230 = vpack.c.b16 %v7196, %v7195
  %v7231 = vpack.c.b16 %v7198, %v7197
  %v7232 = vpack.c.b16 %v7200, %v7199
  %v7233 = vpack.c.b16 %v7202, %v7201
  %v7234 = vpack.c.b16 %v7204, %v7203
  %v7235 = vpack.c.b16 %v7206, %v7205
  %v7236 = vpack.c.b16 %v7208, %v7207
  %v7237 = vpack.c.b16 %v7210, %v7209
  %v7238 = vpack.c.b16 %v7212, %v7211
  %v7239 = vpack.c.b16 %v7214, %v7213
  %v7240 = vpack.c.b16 %v7216, %v7215
  %v7241 = vpack.c.b16 %v7218, %v7217
  %v7242 = vpack.c.b16 %v7220, %v7219
  %v7243 = vpack.c.b16 %v7222, %v7221
  %v7244 = vpack.c.b16 %v7224, %v7223
  %v7266 = vsel %vm7092, %v7142, 0
  %7268 = vmatpush.bf16.msra.mxu0 %v7232
  %7269 = vmatpush.bf16.msra.mxu0 %v7231
  %7270 = vmatpush.bf16.msra.mxu0 %v7230
  %7271 = vmatpush.bf16.msra.mxu0 %v7229
  %7272 = vmatpush.bf16.msra.mxu0 %v7228
  %7273 = vmatpush.bf16.msra.mxu0 %v7227
  %7274 = vmatpush.bf16.msra.mxu0 %v7226
  %7275 = vmatpush.bf16.msra.mxu0 %v7225
  %7276 = vmatmul.bf16.gmra.mxu0 %v7140
  %v7277 = vpop.f32.mrf.mxu0
  %v7278 = vadd.f32 %v7132, %v7277
  %v7279 = vpop.f32.mrf.mxu0
  %7280 = vdwg.mxu0
  %7281 = vmatpush.bf16.msra.mxu0 %v7240
  %7282 = vmatpush.bf16.msra.mxu0 %v7239
  %7283 = vmatpush.bf16.msra.mxu0 %v7238
  %7284 = vmatpush.bf16.msra.mxu0 %v7237
  %7285 = vmatpush.bf16.msra.mxu0 %v7236
  %7286 = vmatpush.bf16.msra.mxu0 %v7235
  %7287 = vmatpush.bf16.msra.mxu0 %v7234
  %7288 = vmatpush.bf16.msra.mxu0 %v7233
  %7289 = vmatmul.bf16.gmra.mxu0 %v7141
  %v7290 = vpop.f32.mrf.mxu0
  %v7291 = vadd.f32 %v7278, %v7290
  %v7292 = vpop.f32.mrf.mxu0
  %7293 = vdwg.mxu0
  %7294 = vmatpush.bf16.msra.mxu0 0
  %7295 = vmatpush.bf16.msra.mxu0 0
  %7296 = vmatpush.bf16.msra.mxu0 0
  %7297 = vmatpush.bf16.msra.mxu0 0
  %7298 = vmatpush.bf16.msra.mxu0 %v7244
  %7299 = vmatpush.bf16.msra.mxu0 %v7243
  %7300 = vmatpush.bf16.msra.mxu0 %v7242
  %7301 = vmatpush.bf16.msra.mxu0 %v7241
  %7302 = vmatmul.bf16.gmra.mxu0 %v7266
  %v7303 = vpop.f32.mrf.mxu0
  %v7304 = vadd.f32 %v7291, %v7303
  %v7305 = vpop.f32.mrf.mxu0
  %7306 = vdwg.mxu0
  %v7307 = vld [vmem:[#allocation4] sm:$0x22]
  %v7308 = vld [vmem:[#allocation4 + $0x8] sm:$0x2]
  %s7309 = scalar_lea.vmem %s5, 320
  %v7310 = vld [vmem:[%s7309] sm:$0xf]
  %v7311 = vld [vmem:[%s7309 + $0x4] sm:$0xf]
  %v7312 = vld [vmem:[%s7309 + $0x8] sm:$0xf]
  %v7313 = vld [vmem:[%s7309 + $0xc] sm:$0xf]
  %v7314 = vld [vmem:[%s7309 + $0x10] sm:$0xf]
  %v7315 = vld [vmem:[%s7309 + $0x14] sm:$0xf]
  %v7316 = vld [vmem:[%s7309 + $0x18] sm:$0xf]
  %v7317 = vld [vmem:[%s7309 + $0x1c] sm:$0xf]
  %v7318 = vld [vmem:[%s7309 + $0x20] sm:$0xf]
  %v7319 = vld [vmem:[%s7309 + $0x24] sm:$0xf]
  %v7320 = vld [vmem:[%s7309 + $0x28] sm:$0xf]
  %v7321 = vld [vmem:[%s7309 + $0x2c] sm:$0xf]
  %v7322 = vld [vmem:[%s7309 + $0x30] sm:$0xf]
  %v7323 = vld [vmem:[%s7309 + $0x34] sm:$0xf]
  %v7324 = vld [vmem:[%s7309 + $0x38] sm:$0xf]
  %v7325 = vld [vmem:[%s7309 + $0x3c] sm:$0xf]
  %v7326 = vld [vmem:[%s7309 + $0x40] sm:$0xf]
  %v7327 = vld [vmem:[%s7309 + $0x44] sm:$0xf]
  %v7328 = vld [vmem:[%s7309 + $0x48] sm:$0xf]
  %v7329 = vld [vmem:[%s7309 + $0x4c] sm:$0xf]
  %v7330 = vld [vmem:[%s7309 + $0x50] sm:$0xf]
  %v7331 = vld [vmem:[%s7309 + $0x54] sm:$0xf]
  %v7332 = vld [vmem:[%s7309 + $0x58] sm:$0xf]
  %v7333 = vld [vmem:[%s7309 + $0x5c] sm:$0xf]
  %v7334 = vld [vmem:[%s7309 + $0x60] sm:$0xf]
  %v7335 = vld [vmem:[%s7309 + $0x64] sm:$0xf]
  %v7336 = vld [vmem:[%s7309 + $0x68] sm:$0xf]
  %v7337 = vld [vmem:[%s7309 + $0x6c] sm:$0xf]
  %v7338 = vld [vmem:[%s7309 + $0x70] sm:$0xf]
  %v7339 = vld [vmem:[%s7309 + $0x74] sm:$0xf]
  %v7340 = vld [vmem:[%s7309 + $0x78] sm:$0xf]
  %v7341 = vld [vmem:[%s7309 + $0x7c] sm:$0xf]
  %v7342 = vld [vmem:[%s7309 + $0x80] sm:$0xf]
  %v7343 = vld [vmem:[%s7309 + $0x84] sm:$0xf]
  %v7344 = vld [vmem:[%s7309 + $0x88] sm:$0xf]
  %v7345 = vld [vmem:[%s7309 + $0x8c] sm:$0xf]
  %v7346 = vld [vmem:[%s7309 + $0x90] sm:$0xf]
  %v7347 = vld [vmem:[%s7309 + $0x94] sm:$0xf]
  %v7348 = vld [vmem:[%s7309 + $0x98] sm:$0xf]
  %v7349 = vld [vmem:[%s7309 + $0x9c] sm:$0xf]
  %v7352 = vunpack.c.l.b16 %v7307
  %v7353 = vunpack.c.h.b16 %v7307
  %v7354 = vunpack.c.l.b16 %v7308
  %v7355 = vpack.c.b16 %v7352, %v7352
  %v7356 = vpack.c.b16 %v7353, %v7353
  %v7357 = vpack.c.b16 %v7354, %v7354
  %v7358 = vrot.slane %v7355, 1
  %v7359 = vrot.slane %v7356, 1
  %v7360 = vrot.slane %v7357, 1
  %v7403 = vunpack.c.l.b16 %v7310
  %v7404 = vunpack.c.l.b16 %v7311
  %v7405 = vunpack.c.l.b16 %v7312
  %v7406 = vunpack.c.l.b16 %v7313
  %v7407 = vunpack.c.l.b16 %v7314
  %v7408 = vunpack.c.l.b16 %v7315
  %v7409 = vunpack.c.l.b16 %v7316
  %v7410 = vunpack.c.l.b16 %v7317
  %v7411 = vunpack.c.l.b16 %v7318
  %v7412 = vunpack.c.l.b16 %v7319
  %v7413 = vunpack.c.l.b16 %v7320
  %v7414 = vunpack.c.l.b16 %v7321
  %v7415 = vunpack.c.l.b16 %v7322
  %v7416 = vunpack.c.l.b16 %v7323
  %v7417 = vunpack.c.l.b16 %v7324
  %v7418 = vunpack.c.l.b16 %v7325
  %v7419 = vunpack.c.l.b16 %v7326
  %v7420 = vunpack.c.l.b16 %v7327
  %v7421 = vunpack.c.l.b16 %v7328
  %v7422 = vunpack.c.l.b16 %v7329
  %v7423 = vunpack.c.l.b16 %v7330
  %v7424 = vunpack.c.l.b16 %v7331
  %v7425 = vunpack.c.l.b16 %v7332
  %v7426 = vunpack.c.l.b16 %v7333
  %v7427 = vunpack.c.l.b16 %v7334
  %v7428 = vunpack.c.l.b16 %v7335
  %v7429 = vunpack.c.l.b16 %v7336
  %v7430 = vunpack.c.l.b16 %v7337
  %v7431 = vunpack.c.l.b16 %v7338
  %v7432 = vunpack.c.l.b16 %v7339
  %v7433 = vunpack.c.l.b16 %v7340
  %v7434 = vunpack.c.l.b16 %v7341
  %v7435 = vunpack.c.l.b16 %v7342
  %v7436 = vunpack.c.l.b16 %v7343
  %v7437 = vunpack.c.l.b16 %v7344
  %v7438 = vunpack.c.l.b16 %v7345
  %v7439 = vunpack.c.l.b16 %v7346
  %v7440 = vunpack.c.l.b16 %v7347
  %v7441 = vunpack.c.l.b16 %v7348
  %v7442 = vunpack.c.l.b16 %v7349
  %v7443 = vpack.c.b16 %v7404, %v7403
  %v7444 = vpack.c.b16 %v7406, %v7405
  %v7445 = vpack.c.b16 %v7408, %v7407
  %v7446 = vpack.c.b16 %v7410, %v7409
  %v7447 = vpack.c.b16 %v7412, %v7411
  %v7448 = vpack.c.b16 %v7414, %v7413
  %v7449 = vpack.c.b16 %v7416, %v7415
  %v7450 = vpack.c.b16 %v7418, %v7417
  %v7451 = vpack.c.b16 %v7420, %v7419
  %v7452 = vpack.c.b16 %v7422, %v7421
  %v7453 = vpack.c.b16 %v7424, %v7423
  %v7454 = vpack.c.b16 %v7426, %v7425
  %v7455 = vpack.c.b16 %v7428, %v7427
  %v7456 = vpack.c.b16 %v7430, %v7429
  %v7457 = vpack.c.b16 %v7432, %v7431
  %v7458 = vpack.c.b16 %v7434, %v7433
  %v7459 = vpack.c.b16 %v7436, %v7435
  %v7460 = vpack.c.b16 %v7438, %v7437
  %v7461 = vpack.c.b16 %v7440, %v7439
  %v7462 = vpack.c.b16 %v7442, %v7441
  %v7484 = vsel %vm7092, %v7360, 0
  %7486 = vmatpush.bf16.msra.mxu0 %v7450
  %7487 = vmatpush.bf16.msra.mxu0 %v7449
  %7488 = vmatpush.bf16.msra.mxu0 %v7448
  %7489 = vmatpush.bf16.msra.mxu0 %v7447
  %7490 = vmatpush.bf16.msra.mxu0 %v7446
  %7491 = vmatpush.bf16.msra.mxu0 %v7445
  %7492 = vmatpush.bf16.msra.mxu0 %v7444
  %7493 = vmatpush.bf16.msra.mxu0 %v7443
  %7494 = vmatmul.bf16.gmra.mxu0 %v7358
  %v7495 = vpop.f32.mrf.mxu0
  %v7496 = vadd.f32 0.0, %v7495
  %v7497 = vpop.f32.mrf.mxu0
  %7498 = vdwg.mxu0
  %7499 = vmatpush.bf16.msra.mxu0 %v7458
  %7500 = vmatpush.bf16.msra.mxu0 %v7457
  %7501 = vmatpush.bf16.msra.mxu0 %v7456
  %7502 = vmatpush.bf16.msra.mxu0 %v7455
  %7503 = vmatpush.bf16.msra.mxu0 %v7454
  %7504 = vmatpush.bf16.msra.mxu0 %v7453
  %7505 = vmatpush.bf16.msra.mxu0 %v7452
  %7506 = vmatpush.bf16.msra.mxu0 %v7451
  %7507 = vmatmul.bf16.gmra.mxu0 %v7359
  %v7508 = vpop.f32.mrf.mxu0
  %v7509 = vadd.f32 %v7496, %v7508
  %v7510 = vpop.f32.mrf.mxu0
  %7511 = vdwg.mxu0
  %7512 = vmatpush.bf16.msra.mxu0 0
  %7513 = vmatpush.bf16.msra.mxu0 0
  %7514 = vmatpush.bf16.msra.mxu0 0
  %7515 = vmatpush.bf16.msra.mxu0 0
  %7516 = vmatpush.bf16.msra.mxu0 %v7462
  %7517 = vmatpush.bf16.msra.mxu0 %v7461
  %7518 = vmatpush.bf16.msra.mxu0 %v7460
  %7519 = vmatpush.bf16.msra.mxu0 %v7459
  %7520 = vmatmul.bf16.gmra.mxu0 %v7484
  %v7521 = vpop.f32.mrf.mxu0
  %v7522 = vadd.f32 %v7509, %v7521
  %v7523 = vpop.f32.mrf.mxu0
  %7524 = vdwg.mxu0
  %v7525 = vadd.f32 %v7304, %v7522
  %v7526 = vld [vmem:[#allocation4 + $0xc] sm:$0x11]
  %v7527 = vld [vmem:[#allocation4 + $0x14] sm:$0x1]
  %s7528 = scalar_lea.vmem %s5, 480
  %v7529 = vld [vmem:[%s7528] sm:$0xf]
  %v7530 = vld [vmem:[%s7528 + $0x4] sm:$0xf]
  %v7531 = vld [vmem:[%s7528 + $0x8] sm:$0xf]
  %v7532 = vld [vmem:[%s7528 + $0xc] sm:$0xf]
  %v7533 = vld [vmem:[%s7528 + $0x10] sm:$0xf]
  %v7534 = vld [vmem:[%s7528 + $0x14] sm:$0xf]
  %v7535 = vld [vmem:[%s7528 + $0x18] sm:$0xf]
  %v7536 = vld [vmem:[%s7528 + $0x1c] sm:$0xf]
  %v7537 = vld [vmem:[%s7528 + $0x20] sm:$0xf]
  %v7538 = vld [vmem:[%s7528 + $0x24] sm:$0xf]
  %v7539 = vld [vmem:[%s7528 + $0x28] sm:$0xf]
  %v7540 = vld [vmem:[%s7528 + $0x2c] sm:$0xf]
  %v7541 = vld [vmem:[%s7528 + $0x30] sm:$0xf]
  %v7542 = vld [vmem:[%s7528 + $0x34] sm:$0xf]
  %v7543 = vld [vmem:[%s7528 + $0x38] sm:$0xf]
  %v7544 = vld [vmem:[%s7528 + $0x3c] sm:$0xf]
  %v7545 = vld [vmem:[%s7528 + $0x40] sm:$0xf]
  %v7546 = vld [vmem:[%s7528 + $0x44] sm:$0xf]
  %v7547 = vld [vmem:[%s7528 + $0x48] sm:$0xf]
  %v7548 = vld [vmem:[%s7528 + $0x4c] sm:$0xf]
  %v7549 = vld [vmem:[%s7528 + $0x50] sm:$0xf]
  %v7550 = vld [vmem:[%s7528 + $0x54] sm:$0xf]
  %v7551 = vld [vmem:[%s7528 + $0x58] sm:$0xf]
  %v7552 = vld [vmem:[%s7528 + $0x5c] sm:$0xf]
  %v7553 = vld [vmem:[%s7528 + $0x60] sm:$0xf]
  %v7554 = vld [vmem:[%s7528 + $0x64] sm:$0xf]
  %v7555 = vld [vmem:[%s7528 + $0x68] sm:$0xf]
  %v7556 = vld [vmem:[%s7528 + $0x6c] sm:$0xf]
  %v7557 = vld [vmem:[%s7528 + $0x70] sm:$0xf]
  %v7558 = vld [vmem:[%s7528 + $0x74] sm:$0xf]
  %v7559 = vld [vmem:[%s7528 + $0x78] sm:$0xf]
  %v7560 = vld [vmem:[%s7528 + $0x7c] sm:$0xf]
  %v7561 = vld [vmem:[%s7528 + $0x80] sm:$0xf]
  %v7562 = vld [vmem:[%s7528 + $0x84] sm:$0xf]
  %v7563 = vld [vmem:[%s7528 + $0x88] sm:$0xf]
  %v7564 = vld [vmem:[%s7528 + $0x8c] sm:$0xf]
  %v7565 = vld [vmem:[%s7528 + $0x90] sm:$0xf]
  %v7566 = vld [vmem:[%s7528 + $0x94] sm:$0xf]
  %v7567 = vld [vmem:[%s7528 + $0x98] sm:$0xf]
  %v7568 = vld [vmem:[%s7528 + $0x9c] sm:$0xf]
  %v7571 = vunpack.c.l.b16 %v7526
  %v7572 = vunpack.c.h.b16 %v7526
  %v7573 = vunpack.c.l.b16 %v7527
  %v7574 = vpack.c.b16 %v7571, %v7571
  %v7575 = vpack.c.b16 %v7572, %v7572
  %v7576 = vpack.c.b16 %v7573, %v7573
  %v7619 = vunpack.c.l.b16 %v7529
  %v7620 = vunpack.c.l.b16 %v7530
  %v7621 = vunpack.c.l.b16 %v7531
  %v7622 = vunpack.c.l.b16 %v7532
  %v7623 = vunpack.c.l.b16 %v7533
  %v7624 = vunpack.c.l.b16 %v7534
  %v7625 = vunpack.c.l.b16 %v7535
  %v7626 = vunpack.c.l.b16 %v7536
  %v7627 = vunpack.c.l.b16 %v7537
  %v7628 = vunpack.c.l.b16 %v7538
  %v7629 = vunpack.c.l.b16 %v7539
  %v7630 = vunpack.c.l.b16 %v7540
  %v7631 = vunpack.c.l.b16 %v7541
  %v7632 = vunpack.c.l.b16 %v7542
  %v7633 = vunpack.c.l.b16 %v7543
  %v7634 = vunpack.c.l.b16 %v7544
  %v7635 = vunpack.c.l.b16 %v7545
  %v7636 = vunpack.c.l.b16 %v7546
  %v7637 = vunpack.c.l.b16 %v7547
  %v7638 = vunpack.c.l.b16 %v7548
  %v7639 = vunpack.c.l.b16 %v7549
  %v7640 = vunpack.c.l.b16 %v7550
  %v7641 = vunpack.c.l.b16 %v7551
  %v7642 = vunpack.c.l.b16 %v7552
  %v7643 = vunpack.c.l.b16 %v7553
  %v7644 = vunpack.c.l.b16 %v7554
  %v7645 = vunpack.c.l.b16 %v7555
  %v7646 = vunpack.c.l.b16 %v7556
  %v7647 = vunpack.c.l.b16 %v7557
  %v7648 = vunpack.c.l.b16 %v7558
  %v7649 = vunpack.c.l.b16 %v7559
  %v7650 = vunpack.c.l.b16 %v7560
  %v7651 = vunpack.c.l.b16 %v7561
  %v7652 = vunpack.c.l.b16 %v7562
  %v7653 = vunpack.c.l.b16 %v7563
  %v7654 = vunpack.c.l.b16 %v7564
  %v7655 = vunpack.c.l.b16 %v7565
  %v7656 = vunpack.c.l.b16 %v7566
  %v7657 = vunpack.c.l.b16 %v7567
  %v7658 = vunpack.c.l.b16 %v7568
  %v7659 = vpack.c.b16 %v7620, %v7619
  %v7660 = vpack.c.b16 %v7622, %v7621
  %v7661 = vpack.c.b16 %v7624, %v7623
  %v7662 = vpack.c.b16 %v7626, %v7625
  %v7663 = vpack.c.b16 %v7628, %v7627
  %v7664 = vpack.c.b16 %v7630, %v7629
  %v7665 = vpack.c.b16 %v7632, %v7631
  %v7666 = vpack.c.b16 %v7634, %v7633
  %v7667 = vpack.c.b16 %v7636, %v7635
  %v7668 = vpack.c.b16 %v7638, %v7637
  %v7669 = vpack.c.b16 %v7640, %v7639
  %v7670 = vpack.c.b16 %v7642, %v7641
  %v7671 = vpack.c.b16 %v7644, %v7643
  %v7672 = vpack.c.b16 %v7646, %v7645
  %v7673 = vpack.c.b16 %v7648, %v7647
  %v7674 = vpack.c.b16 %v7650, %v7649
  %v7675 = vpack.c.b16 %v7652, %v7651
  %v7676 = vpack.c.b16 %v7654, %v7653
  %v7677 = vpack.c.b16 %v7656, %v7655
  %v7678 = vpack.c.b16 %v7658, %v7657
  %v7700 = vsel %vm7092, %v7576, 0
  %7702 = vmatpush.bf16.msra.mxu0 %v7666
  %7703 = vmatpush.bf16.msra.mxu0 %v7665
  %7704 = vmatpush.bf16.msra.mxu0 %v7664
  %7705 = vmatpush.bf16.msra.mxu0 %v7663
  %7706 = vmatpush.bf16.msra.mxu0 %v7662
  %7707 = vmatpush.bf16.msra.mxu0 %v7661
  %7708 = vmatpush.bf16.msra.mxu0 %v7660
  %7709 = vmatpush.bf16.msra.mxu0 %v7659
  %7710 = vmatmul.bf16.gmra.mxu0 %v7574
  %v7711 = vpop.f32.mrf.mxu0
  %v7712 = vadd.f32 0.0, %v7711
  %v7713 = vpop.f32.mrf.mxu0
  %7714 = vdwg.mxu0
  %7715 = vmatpush.bf16.msra.mxu0 %v7674
  %7716 = vmatpush.bf16.msra.mxu0 %v7673
  %7717 = vmatpush.bf16.msra.mxu0 %v7672
  %7718 = vmatpush.bf16.msra.mxu0 %v7671
  %7719 = vmatpush.bf16.msra.mxu0 %v7670
  %7720 = vmatpush.bf16.msra.mxu0 %v7669
  %7721 = vmatpush.bf16.msra.mxu0 %v7668
  %7722 = vmatpush.bf16.msra.mxu0 %v7667
  %7723 = vmatmul.bf16.gmra.mxu0 %v7575
  %v7724 = vpop.f32.mrf.mxu0
  %v7725 = vadd.f32 %v7712, %v7724
  %v7726 = vpop.f32.mrf.mxu0
  %7727 = vdwg.mxu0
  %7728 = vmatpush.bf16.msra.mxu0 0
  %7729 = vmatpush.bf16.msra.mxu0 0
  %7730 = vmatpush.bf16.msra.mxu0 0
  %7731 = vmatpush.bf16.msra.mxu0 0
  %7732 = vmatpush.bf16.msra.mxu0 %v7678
  %7733 = vmatpush.bf16.msra.mxu0 %v7677
  %7734 = vmatpush.bf16.msra.mxu0 %v7676
  %7735 = vmatpush.bf16.msra.mxu0 %v7675
  %7736 = vmatmul.bf16.gmra.mxu0 %v7700
  %v7737 = vpop.f32.mrf.mxu0
  %v7738 = vadd.f32 %v7725, %v7737
  %v7739 = vpop.f32.mrf.mxu0
  %7740 = vdwg.mxu0
  %v7741 = vadd.f32 %v7525, %v7738
  %v7742 = vld [vmem:[%s6] sm:$0x1]
  %v7744 = vperm.slane %v7742, 0
  %v7746 = vadd.f32 %v7741, %v7744
  %v7747 = vmax.f32 %v7746, 0.0
  %v7748 = vpack.c.bf16 %v7747, %v7747
  %v7749 = vld [vmem:[%s7] sm:$0xff]
  %v7750 = vld [vmem:[%s7 + $0x8] sm:$0xff]
  %v7751 = vld [vmem:[%s7 + $0x10] sm:$0xff]
  %v7752 = vld [vmem:[%s7 + $0x18] sm:$0xff]
  %v7753 = vld [vmem:[%s7 + $0x20] sm:$0xff]
  %v7754 = vld [vmem:[%s7 + $0x28] sm:$0xff]
  %v7755 = vld [vmem:[%s7 + $0x30] sm:$0xff]
  %v7756 = vld [vmem:[%s7 + $0x38] sm:$0xff]
  %v7757 = vld [vmem:[%s7 + $0x40] sm:$0xff]
  %v7758 = vld [vmem:[%s7 + $0x48] sm:$0xff]
  %v7759 = vld [vmem:[%s7 + $0x50] sm:$0xff]
  %v7760 = vld [vmem:[%s7 + $0x58] sm:$0xff]
  %v7761 = vld [vmem:[%s7 + $0x60] sm:$0xff]
  %v7762 = vld [vmem:[%s7 + $0x68] sm:$0xff]
  %v7763 = vld [vmem:[%s7 + $0x70] sm:$0xff]
  %v7764 = vld [vmem:[%s7 + $0x78] sm:$0xff]
  %v7765 = vld [vmem:[%s8] sm:$0xf]
  %v7767 = vperm.slane %v7765, 0
  %v7768 = vperm.slane %v7765, 1
  %v7769 = vperm.slane %v7765, 2
  %v7770 = vperm.slane %v7765, 3
  %v7791 = vunpack.c.l.b16 %v7749
  %v7792 = vunpack.c.h.b16 %v7749
  %v7793 = vunpack.c.l.b16 %v7750
  %v7794 = vunpack.c.h.b16 %v7750
  %v7795 = vunpack.c.l.b16 %v7751
  %v7796 = vunpack.c.h.b16 %v7751
  %v7797 = vunpack.c.l.b16 %v7752
  %v7798 = vunpack.c.h.b16 %v7752
  %v7799 = vunpack.c.l.b16 %v7753
  %v7800 = vunpack.c.h.b16 %v7753
  %v7801 = vunpack.c.l.b16 %v7754
  %v7802 = vunpack.c.h.b16 %v7754
  %v7803 = vunpack.c.l.b16 %v7755
  %v7804 = vunpack.c.h.b16 %v7755
  %v7805 = vunpack.c.l.b16 %v7756
  %v7806 = vunpack.c.h.b16 %v7756
  %v7807 = vunpack.c.l.b16 %v7757
  %v7808 = vunpack.c.h.b16 %v7757
  %v7809 = vunpack.c.l.b16 %v7758
  %v7810 = vunpack.c.h.b16 %v7758
  %v7811 = vunpack.c.l.b16 %v7759
  %v7812 = vunpack.c.h.b16 %v7759
  %v7813 = vunpack.c.l.b16 %v7760
  %v7814 = vunpack.c.h.b16 %v7760
  %v7815 = vunpack.c.l.b16 %v7761
  %v7816 = vunpack.c.h.b16 %v7761
  %v7817 = vunpack.c.l.b16 %v7762
  %v7818 = vunpack.c.h.b16 %v7762
  %v7819 = vunpack.c.l.b16 %v7763
  %v7820 = vunpack.c.h.b16 %v7763
  %v7821 = vunpack.c.l.b16 %v7764
  %v7822 = vunpack.c.h.b16 %v7764
  %v7823 = vpack.c.b16 %v7795, %v7791
  %v7824 = vpack.c.b16 %v7796, %v7792
  %v7825 = vpack.c.b16 %v7797, %v7793
  %v7826 = vpack.c.b16 %v7798, %v7794
  %v7827 = vpack.c.b16 %v7803, %v7799
  %v7828 = vpack.c.b16 %v7804, %v7800
  %v7829 = vpack.c.b16 %v7805, %v7801
  %v7830 = vpack.c.b16 %v7806, %v7802
  %v7831 = vpack.c.b16 %v7811, %v7807
  %v7832 = vpack.c.b16 %v7812, %v7808
  %v7833 = vpack.c.b16 %v7813, %v7809
  %v7834 = vpack.c.b16 %v7814, %v7810
  %v7835 = vpack.c.b16 %v7819, %v7815
  %v7836 = vpack.c.b16 %v7820, %v7816
  %v7837 = vpack.c.b16 %v7821, %v7817
  %v7838 = vpack.c.b16 %v7822, %v7818
  %v7856 = vsel %vm7092, %v7748, 0
  %7858 = vmatpush.bf16.msra.mxu0 0
  %7859 = vmatpush.bf16.msra.mxu0 0
  %7860 = vmatpush.bf16.msra.mxu0 0
  %7861 = vmatpush.bf16.msra.mxu0 0
  %7862 = vmatpush.bf16.msra.mxu0 %v7835
  %7863 = vmatpush.bf16.msra.mxu0 %v7831
  %7864 = vmatpush.bf16.msra.mxu0 %v7827
  %7865 = vmatpush.bf16.msra.mxu0 %v7823
  %7866 = vmatmul.bf16.gmra.mxu0 %v7856
  %v7867 = vpop.f32.mrf.mxu0
  %v7868 = vadd.f32 %v7767, %v7867
  %v7869 = vpop.f32.mrf.mxu0
  %7870 = vdwg.mxu0
  %7871 = vmatpush.bf16.msra.mxu0 0
  %7872 = vmatpush.bf16.msra.mxu0 0
  %7873 = vmatpush.bf16.msra.mxu0 0
  %7874 = vmatpush.bf16.msra.mxu0 0
  %7875 = vmatpush.bf16.msra.mxu0 %v7836
  %7876 = vmatpush.bf16.msra.mxu0 %v7832
  %7877 = vmatpush.bf16.msra.mxu0 %v7828
  %7878 = vmatpush.bf16.msra.mxu0 %v7824
  %7879 = vmatmul.bf16.gmra.mxu0 %v7856
  %v7880 = vpop.f32.mrf.mxu0
  %v7881 = vadd.f32 %v7768, %v7880
  %v7882 = vpop.f32.mrf.mxu0
  %7883 = vdwg.mxu0
  %7884 = vmatpush.bf16.msra.mxu0 0
  %7885 = vmatpush.bf16.msra.mxu0 0
  %7886 = vmatpush.bf16.msra.mxu0 0
  %7887 = vmatpush.bf16.msra.mxu0 0
  %7888 = vmatpush.bf16.msra.mxu0 %v7837
  %7889 = vmatpush.bf16.msra.mxu0 %v7833
  %7890 = vmatpush.bf16.msra.mxu0 %v7829
  %7891 = vmatpush.bf16.msra.mxu0 %v7825
  %7892 = vmatmul.bf16.gmra.mxu0 %v7856
  %v7893 = vpop.f32.mrf.mxu0
  %v7894 = vadd.f32 %v7769, %v7893
  %v7895 = vpop.f32.mrf.mxu0
  %7896 = vdwg.mxu0
  %7897 = vmatpush.bf16.msra.mxu0 0
  %7898 = vmatpush.bf16.msra.mxu0 0
  %7899 = vmatpush.bf16.msra.mxu0 0
  %7900 = vmatpush.bf16.msra.mxu0 0
  %7901 = vmatpush.bf16.msra.mxu0 %v7838
  %7902 = vmatpush.bf16.msra.mxu0 %v7834
  %7903 = vmatpush.bf16.msra.mxu0 %v7830
  %7904 = vmatpush.bf16.msra.mxu0 %v7826
  %7905 = vmatmul.bf16.gmra.mxu0 %v7856
  %v7906 = vpop.f32.mrf.mxu0
  %v7907 = vadd.f32 %v7770, %v7906
  %v7908 = vpop.f32.mrf.mxu0
  %7909 = vdwg.mxu0
  %v7910 = vmax.f32 %v7868, 0.0
  %v7911 = vmax.f32 %v7881, 0.0
  %v7912 = vmax.f32 %v7894, 0.0
  %v7913 = vmax.f32 %v7907, 0.0
  %v7914 = vpack.c.bf16 %v7910, %v7910
  %v7915 = vpack.c.bf16 %v7911, %v7911
  %v7916 = vpack.c.bf16 %v7912, %v7912
  %v7917 = vpack.c.bf16 %v7913, %v7913
  %v7918 = vld [vmem:[%s9] sm:$0xf]
  %v7919 = vld [vmem:[%s9 + $0x4] sm:$0xf]
  %v7920 = vld [vmem:[%s9 + $0x8] sm:$0xf]
  %v7921 = vld [vmem:[%s9 + $0xc] sm:$0xf]
  %v7922 = vld [vmem:[%s9 + $0x10] sm:$0xf]
  %v7923 = vld [vmem:[%s9 + $0x14] sm:$0xf]
  %v7924 = vld [vmem:[%s9 + $0x18] sm:$0xf]
  %v7925 = vld [vmem:[%s9 + $0x1c] sm:$0xf]
  %v7926 = vld [vmem:[%s9 + $0x20] sm:$0xf]
  %v7927 = vld [vmem:[%s9 + $0x24] sm:$0xf]
  %v7928 = vld [vmem:[%s9 + $0x28] sm:$0xf]
  %v7929 = vld [vmem:[%s9 + $0x2c] sm:$0xf]
  %v7930 = vld [vmem:[%s9 + $0x30] sm:$0xf]
  %v7931 = vld [vmem:[%s9 + $0x34] sm:$0xf]
  %v7932 = vld [vmem:[%s9 + $0x38] sm:$0xf]
  %v7933 = vld [vmem:[%s9 + $0x3c] sm:$0xf]
  %v7934 = vld [vmem:[%s9 + $0x40] sm:$0xf]
  %v7935 = vld [vmem:[%s9 + $0x44] sm:$0xf]
  %v7936 = vld [vmem:[%s9 + $0x48] sm:$0xf]
  %v7937 = vld [vmem:[%s9 + $0x4c] sm:$0xf]
  %v7938 = vld [vmem:[%s9 + $0x50] sm:$0xf]
  %v7939 = vld [vmem:[%s9 + $0x54] sm:$0xf]
  %v7940 = vld [vmem:[%s9 + $0x58] sm:$0xf]
  %v7941 = vld [vmem:[%s9 + $0x5c] sm:$0xf]
  %v7942 = vld [vmem:[%s9 + $0x60] sm:$0xf]
  %v7943 = vld [vmem:[%s9 + $0x64] sm:$0xf]
  %v7944 = vld [vmem:[%s9 + $0x68] sm:$0xf]
  %v7945 = vld [vmem:[%s9 + $0x6c] sm:$0xf]
  %v7946 = vld [vmem:[%s9 + $0x70] sm:$0xf]
  %v7947 = vld [vmem:[%s9 + $0x74] sm:$0xf]
  %v7948 = vld [vmem:[%s9 + $0x78] sm:$0xf]
  %v7949 = vld [vmem:[%s9 + $0x7c] sm:$0xf]
  %v7950 = vld [vmem:[%s9 + $0x80] sm:$0xf]
  %v7951 = vld [vmem:[%s9 + $0x84] sm:$0xf]
  %v7952 = vld [vmem:[%s9 + $0x88] sm:$0xf]
  %v7953 = vld [vmem:[%s9 + $0x8c] sm:$0xf]
  %v7954 = vld [vmem:[%s9 + $0x90] sm:$0xf]
  %v7955 = vld [vmem:[%s9 + $0x94] sm:$0xf]
  %v7956 = vld [vmem:[%s9 + $0x98] sm:$0xf]
  %v7957 = vld [vmem:[%s9 + $0x9c] sm:$0xf]
  %v7958 = vld [vmem:[%s9 + $0xa0] sm:$0xf]
  %v7959 = vld [vmem:[%s9 + $0xa4] sm:$0xf]
  %v7960 = vld [vmem:[%s9 + $0xa8] sm:$0xf]
  %v7961 = vld [vmem:[%s9 + $0xac] sm:$0xf]
  %v7962 = vld [vmem:[%s9 + $0xb0] sm:$0xf]
  %v7963 = vld [vmem:[%s9 + $0xb4] sm:$0xf]
  %v7964 = vld [vmem:[%s9 + $0xb8] sm:$0xf]
  %v7965 = vld [vmem:[%s9 + $0xbc] sm:$0xf]
  %v7966 = vld [vmem:[%s9 + $0xc0] sm:$0xf]
  %v7967 = vld [vmem:[%s9 + $0xc4] sm:$0xf]
  %v7968 = vld [vmem:[%s9 + $0xc8] sm:$0xf]
  %v7969 = vld [vmem:[%s9 + $0xcc] sm:$0xf]
  %v7970 = vld [vmem:[%s9 + $0xd0] sm:$0xf]
  %v7971 = vld [vmem:[%s9 + $0xd4] sm:$0xf]
  %v7972 = vld [vmem:[%s9 + $0xd8] sm:$0xf]
  %v7973 = vld [vmem:[%s9 + $0xdc] sm:$0xf]
  %v7974 = vld [vmem:[%s9 + $0xe0] sm:$0xf]
  %v7975 = vld [vmem:[%s9 + $0xe4] sm:$0xf]
  %v7976 = vld [vmem:[%s9 + $0xe8] sm:$0xf]
  %v7977 = vld [vmem:[%s9 + $0xec] sm:$0xf]
  %v7978 = vld [vmem:[%s9 + $0xf0] sm:$0xf]
  %v7979 = vld [vmem:[%s9 + $0xf4] sm:$0xf]
  %v7980 = vld [vmem:[%s9 + $0xf8] sm:$0xf]
  %v7981 = vld [vmem:[%s9 + $0xfc] sm:$0xf]
  %v7982 = vld [vmem:[%s10] sm:$0x1]
  %v7984 = vperm.slane %v7982, 0
  %v8050 = vunpack.c.l.b16 %v7918
  %v8051 = vunpack.c.l.b16 %v7919
  %v8052 = vunpack.c.l.b16 %v7920
  %v8053 = vunpack.c.l.b16 %v7921
  %v8054 = vunpack.c.l.b16 %v7922
  %v8055 = vunpack.c.l.b16 %v7923
  %v8056 = vunpack.c.l.b16 %v7924
  %v8057 = vunpack.c.l.b16 %v7925
  %v8058 = vunpack.c.l.b16 %v7926
  %v8059 = vunpack.c.l.b16 %v7927
  %v8060 = vunpack.c.l.b16 %v7928
  %v8061 = vunpack.c.l.b16 %v7929
  %v8062 = vunpack.c.l.b16 %v7930
  %v8063 = vunpack.c.l.b16 %v7931
  %v8064 = vunpack.c.l.b16 %v7932
  %v8065 = vunpack.c.l.b16 %v7933
  %v8066 = vunpack.c.l.b16 %v7934
  %v8067 = vunpack.c.l.b16 %v7935
  %v8068 = vunpack.c.l.b16 %v7936
  %v8069 = vunpack.c.l.b16 %v7937
  %v8070 = vunpack.c.l.b16 %v7938
  %v8071 = vunpack.c.l.b16 %v7939
  %v8072 = vunpack.c.l.b16 %v7940
  %v8073 = vunpack.c.l.b16 %v7941
  %v8074 = vunpack.c.l.b16 %v7942
  %v8075 = vunpack.c.l.b16 %v7943
  %v8076 = vunpack.c.l.b16 %v7944
  %v8077 = vunpack.c.l.b16 %v7945
  %v8078 = vunpack.c.l.b16 %v7946
  %v8079 = vunpack.c.l.b16 %v7947
  %v8080 = vunpack.c.l.b16 %v7948
  %v8081 = vunpack.c.l.b16 %v7949
  %v8082 = vunpack.c.l.b16 %v7950
  %v8083 = vunpack.c.l.b16 %v7951
  %v8084 = vunpack.c.l.b16 %v7952
  %v8085 = vunpack.c.l.b16 %v7953
  %v8086 = vunpack.c.l.b16 %v7954
  %v8087 = vunpack.c.l.b16 %v7955
  %v8088 = vunpack.c.l.b16 %v7956
  %v8089 = vunpack.c.l.b16 %v7957
  %v8090 = vunpack.c.l.b16 %v7958
  %v8091 = vunpack.c.l.b16 %v7959
  %v8092 = vunpack.c.l.b16 %v7960
  %v8093 = vunpack.c.l.b16 %v7961
  %v8094 = vunpack.c.l.b16 %v7962
  %v8095 = vunpack.c.l.b16 %v7963
  %v8096 = vunpack.c.l.b16 %v7964
  %v8097 = vunpack.c.l.b16 %v7965
  %v8098 = vunpack.c.l.b16 %v7966
  %v8099 = vunpack.c.l.b16 %v7967
  %v8100 = vunpack.c.l.b16 %v7968
  %v8101 = vunpack.c.l.b16 %v7969
  %v8102 = vunpack.c.l.b16 %v7970
  %v8103 = vunpack.c.l.b16 %v7971
  %v8104 = vunpack.c.l.b16 %v7972
  %v8105 = vunpack.c.l.b16 %v7973
  %v8106 = vunpack.c.l.b16 %v7974
  %v8107 = vunpack.c.l.b16 %v7975
  %v8108 = vunpack.c.l.b16 %v7976
  %v8109 = vunpack.c.l.b16 %v7977
  %v8110 = vunpack.c.l.b16 %v7978
  %v8111 = vunpack.c.l.b16 %v7979
  %v8112 = vunpack.c.l.b16 %v7980
  %v8113 = vunpack.c.l.b16 %v7981
  %v8114 = vpack.c.b16 %v8051, %v8050
  %v8115 = vpack.c.b16 %v8053, %v8052
  %v8116 = vpack.c.b16 %v8055, %v8054
  %v8117 = vpack.c.b16 %v8057, %v8056
  %v8118 = vpack.c.b16 %v8059, %v8058
  %v8119 = vpack.c.b16 %v8061, %v8060
  %v8120 = vpack.c.b16 %v8063, %v8062
  %v8121 = vpack.c.b16 %v8065, %v8064
  %v8122 = vpack.c.b16 %v8067, %v8066
  %v8123 = vpack.c.b16 %v8069, %v8068
  %v8124 = vpack.c.b16 %v8071, %v8070
  %v8125 = vpack.c.b16 %v8073, %v8072
  %v8126 = vpack.c.b16 %v8075, %v8074
  %v8127 = vpack.c.b16 %v8077, %v8076
  %v8128 = vpack.c.b16 %v8079, %v8078
  %v8129 = vpack.c.b16 %v8081, %v8080
  %v8130 = vpack.c.b16 %v8083, %v8082
  %v8131 = vpack.c.b16 %v8085, %v8084
  %v8132 = vpack.c.b16 %v8087, %v8086
  %v8133 = vpack.c.b16 %v8089, %v8088
  %v8134 = vpack.c.b16 %v8091, %v8090
  %v8135 = vpack.c.b16 %v8093, %v8092
  %v8136 = vpack.c.b16 %v8095, %v8094
  %v8137 = vpack.c.b16 %v8097, %v8096
  %v8138 = vpack.c.b16 %v8099, %v8098
  %v8139 = vpack.c.b16 %v8101, %v8100
  %v8140 = vpack.c.b16 %v8103, %v8102
  %v8141 = vpack.c.b16 %v8105, %v8104
  %v8142 = vpack.c.b16 %v8107, %v8106
  %v8143 = vpack.c.b16 %v8109, %v8108
  %v8144 = vpack.c.b16 %v8111, %v8110
  %v8145 = vpack.c.b16 %v8113, %v8112
  %8178 = vmatpush.bf16.msra.mxu0 %v8121
  %8179 = vmatpush.bf16.msra.mxu0 %v8120
  %8180 = vmatpush.bf16.msra.mxu0 %v8119
  %8181 = vmatpush.bf16.msra.mxu0 %v8118
  %8182 = vmatpush.bf16.msra.mxu0 %v8117
  %8183 = vmatpush.bf16.msra.mxu0 %v8116
  %8184 = vmatpush.bf16.msra.mxu0 %v8115
  %8185 = vmatpush.bf16.msra.mxu0 %v8114
  %8186 = vmatmul.bf16.gmra.mxu0 %v7914
  %v8187 = vpop.f32.mrf.mxu0
  %v8188 = vadd.f32 %v7984, %v8187
  %v8189 = vpop.f32.mrf.mxu0
  %8190 = vdwg.mxu0
  %8191 = vmatpush.bf16.msra.mxu0 %v8129
  %8192 = vmatpush.bf16.msra.mxu0 %v8128
  %8193 = vmatpush.bf16.msra.mxu0 %v8127
  %8194 = vmatpush.bf16.msra.mxu0 %v8126
  %8195 = vmatpush.bf16.msra.mxu0 %v8125
  %8196 = vmatpush.bf16.msra.mxu0 %v8124
  %8197 = vmatpush.bf16.msra.mxu0 %v8123
  %8198 = vmatpush.bf16.msra.mxu0 %v8122
  %8199 = vmatmul.bf16.gmra.mxu0 %v7915
  %v8200 = vpop.f32.mrf.mxu0
  %v8201 = vadd.f32 %v8188, %v8200
  %v8202 = vpop.f32.mrf.mxu0
  %8203 = vdwg.mxu0
  %8204 = vmatpush.bf16.msra.mxu0 %v8137
  %8205 = vmatpush.bf16.msra.mxu0 %v8136
  %8206 = vmatpush.bf16.msra.mxu0 %v8135
  %8207 = vmatpush.bf16.msra.mxu0 %v8134
  %8208 = vmatpush.bf16.msra.mxu0 %v8133
  %8209 = vmatpush.bf16.msra.mxu0 %v8132
  %8210 = vmatpush.bf16.msra.mxu0 %v8131
  %8211 = vmatpush.bf16.msra.mxu0 %v8130
  %8212 = vmatmul.bf16.gmra.mxu0 %v7916
  %v8213 = vpop.f32.mrf.mxu0
  %v8214 = vadd.f32 %v8201, %v8213
  %v8215 = vpop.f32.mrf.mxu0
  %8216 = vdwg.mxu0
  %8217 = vmatpush.bf16.msra.mxu0 %v8145
  %8218 = vmatpush.bf16.msra.mxu0 %v8144
  %8219 = vmatpush.bf16.msra.mxu0 %v8143
  %8220 = vmatpush.bf16.msra.mxu0 %v8142
  %8221 = vmatpush.bf16.msra.mxu0 %v8141
  %8222 = vmatpush.bf16.msra.mxu0 %v8140
  %8223 = vmatpush.bf16.msra.mxu0 %v8139
  %8224 = vmatpush.bf16.msra.mxu0 %v8138
  %8225 = vmatmul.bf16.gmra.mxu0 %v7917
  %v8226 = vpop.f32.mrf.mxu0
  %v8227 = vadd.f32 %v8214, %v8226
  %v8228 = vpop.f32.mrf.mxu0
  %8229 = vdwg.mxu0
  %8230 = vst [vmem:[%s11] sm:$0x3] %v8227
  // Predicated region
  $region46: #{dqn_forward.1} parent=0 // pred_check
    _
  $region47: #{dqn_forward.1} parent=0 // pred_check_branch
    %8232 = sbr.rel (0) target = $region49
  $region48: #{dqn_forward.1} parent=0 // pred_region
    _
  $region49: #{dqn_forward.1} parent=0 // pred_fallthru
    _
  // Predicated region
  $region50: #{dqn_forward.1} parent=0 // pred_check
    _
  $region51: #{dqn_forward.1} parent=0 // pred_check_branch
    %8234 = sbr.rel (0) target = $region53
  $region52: #{dqn_forward.1} parent=0 // pred_region
    _
  $region53: #{dqn_forward.1} parent=0 // pred_fallthru
    _

</llo_original>
